<compile_context>
chip_gen: v6e
topology: v6e:2x2x1
jax: 0.10.0
libtpu: 0.0.40
codegen_flags: <defaults>
</compile_context>

<pallas_src>
import jax
import jax.numpy as jnp
import numpy as np
from jax.experimental import pallas as pl
from jax.experimental.pallas import tpu as pltpu

jax.config.update("jax_default_matmul_precision", "highest")

_FC_PAD = 128  # lane-dense padded width for the final FC output


def _lstm_fc_kernel(x_tm_ref, wih0_ref, b0_ref, wrec_ref, b1_ref,
                    fcw_ref, fcb_ref, out_ref):
    B = out_ref.shape[0]                 # sublane-padded batch
    H = wrec_ref.shape[0] // 2
    T = x_tm_ref.shape[0] // B
    H4 = 4 * H

    def apply_gates(gates, c):
        # PyTorch gate order [i, f, g, o]; i|f are contiguous so one sigmoid
        # pass covers both.  4H EUP lanes per call instead of 8H.
        sig_if = jax.nn.sigmoid(gates[:, :2 * H])
        i = sig_if[:, :H]
        f = sig_if[:, H:]
        g = jnp.tanh(gates[:, 2 * H:3 * H])
        o = jax.nn.sigmoid(gates[:, 3 * H:])
        c_new = f * c + i * g
        h_new = o * jnp.tanh(c_new)
        return h_new, c_new

    # ---- hoisted layer-0 input projection: one (T*B, D) x (D, 4H) matmul ----
    gx0 = jnp.dot(x_tm_ref[...], wih0_ref[...],
                  preferred_element_type=jnp.float32) + b0_ref[...]    # (T*B, 4H)

    wrec = wrec_ref[...]        # (2H, 8H) = [[W_hh0, W_ih1], [0, W_hh1]]
    b1 = b1_ref[...]            # (1, 4H)

    # ---- software-pipelined 2-layer recurrence ----
    # Prologue: layer-0 time 0 (h0_{-1} = 0, recurrent term vanishes).
    h0, c0 = apply_gates(gx0[0:B, :], jnp.zeros((B, H), jnp.float32))
    h1 = jnp.zeros((B, H), jnp.float32)
    c1 = jnp.zeros((B, H), jnp.float32)

    # Steady state: step s computes layer-0 time s and layer-1 time s-1 from a
    # single fused (B, 2H) x (2H, 8H) matmul.  Static unroll (T is tiny).
    # TODO(synk): for long T / large B, keep wrec resident in the MXU via
    # pltpu.matmul_push_rhs / matmul_acc_lhs instead of re-staging it per step.
    for s in range(1, T):
        hh = jnp.concatenate([h0, h1], axis=-1)                         # (B, 2H)
        fused = jnp.dot(hh, wrec, preferred_element_type=jnp.float32)   # (B, 8H)
        gates0 = gx0[s * B:(s + 1) * B, :] + fused[:, :H4]
        gates1 = b1 + fused[:, H4:]
        h0, c0 = apply_gates(gates0, c0)        # layer-0, time s
        h1, c1 = apply_gates(gates1, c1)        # layer-1, time s-1

    # Epilogue: layer-1 time T-1 consumes the final h0.
    hh = jnp.concatenate([h0, h1], axis=-1)
    fused = jnp.dot(hh, wrec, preferred_element_type=jnp.float32)
    h1, c1 = apply_gates(b1 + fused[:, H4:], c1)

    # (inter-layer dropout: inactive at inference -> identity)

    # ---- final FC: lane-dense (128-wide) and sublane-full (B_pad rows) store ----
    out_ref[...] = (jnp.dot(h1, fcw_ref[...], preferred_element_type=jnp.float32)
                    + fcb_ref[...])


def lstm_model_forward(x, params):
    """Pallas wrapper: everything resident in VMEM, single grid point.

    Shapes here are tiny (tens of KB), so no grid/tiling is needed.  If B is
    scaled up, add a batch-tile grid axis with dimension_semantics=("parallel",)
    and size the tile for the 32 MiB default scoped VMEM on v7x.
    """
    B, T, D = x.shape
    H = params["w_hh0_t"].shape[0]
    out_dim = params["fc_w_t"].shape[1]
    B_pad = max(8, ((B + 7) // 8) * 8)          # full 8-sublane rows everywhere

    # Wrapper-side layout plumbing (free): batch pad + time-major flatten.
    x_p = jnp.zeros((B_pad, T, D), jnp.float32).at[:B].set(x)
    x_tm = jnp.transpose(x_p, (1, 0, 2)).reshape(T * B_pad, D)

    # Fused recurrent weight [[W_hh0, W_ih1], [0, W_hh1]]  -> (2H, 8H).
    wrec = jnp.zeros((2 * H, 8 * H), jnp.float32)
    wrec = wrec.at[:H, :4 * H].set(params["w_hh0_t"])
    wrec = wrec.at[:H, 4 * H:].set(params["w_ih1_t"])
    wrec = wrec.at[H:, 4 * H:].set(params["w_hh1_t"])

    # Pad FC weight/bias to a 128-wide lane-dense output; slice back below.
    fcw_pad = jnp.zeros((H, _FC_PAD), jnp.float32).at[:, :out_dim].set(params["fc_w_t"])
    fcb_pad = jnp.zeros((1, _FC_PAD), jnp.float32).at[:, :out_dim].set(params["fc_b"])

    vmem = pl.BlockSpec(memory_space=pltpu.MemorySpace.VMEM)
    args = (x_tm, params["w_ih0_t"], params["b0"], wrec, params["b1"],
            fcw_pad, fcb_pad)
    out_pad = pl.pallas_call(
        _lstm_fc_kernel,
        out_shape=jax.ShapeDtypeStruct((B_pad, _FC_PAD), jnp.float32),
        in_specs=[vmem] * len(args),
        out_specs=vmem,
    )(*args)
    return out_pad[:B, :out_dim]


def init_params(key, input_dim, hidden_dim, output_dim):
    """Deterministic params matching nn.LSTM(num_layers=2) + nn.Linear shapes."""
    H = hidden_dim
    k = 1.0 / np.sqrt(H)
    keys = jax.random.split(key, 12)

    def u(kk, shape):
        return jax.random.uniform(kk, shape, jnp.float32, minval=-k, maxval=k)

    # layer 0: W_ih (4H, D_in), W_hh (4H, H), b_ih (4H,), b_hh (4H,)
    w_ih0 = u(keys[0], (4 * H, input_dim))
    w_hh0 = u(keys[1], (4 * H, H))
    b0 = u(keys[2], (4 * H,)) + u(keys[3], (4 * H,))
    # layer 1: W_ih (4H, H)
    w_ih1 = u(keys[4], (4 * H, H))
    w_hh1 = u(keys[5], (4 * H, H))
    b1 = u(keys[6], (4 * H,)) + u(keys[7], (4 * H,))
    # fc: (output_dim, H), (output_dim,)
    kf = 1.0 / np.sqrt(H)
    fc_w = jax.random.uniform(keys[8], (output_dim, H), jnp.float32, -kf, kf)
    fc_b = jax.random.uniform(keys[9], (output_dim,), jnp.float32, -kf, kf)

    return {
        "w_ih0_t": w_ih0.T, "w_hh0_t": w_hh0.T, "b0": b0.reshape(1, 4 * H),
        "w_ih1_t": w_ih1.T, "w_hh1_t": w_hh1.T, "b1": b1.reshape(1, 4 * H),
        "fc_w_t": fc_w.T, "fc_b": fc_b.reshape(1, output_dim),
    }


def lstm_model_ref(x, params):
    """Pure-JAX reference mirroring the PyTorch forward (eval mode)."""
    B, T, _ = x.shape
    H = params["w_hh0_t"].shape[0]

    def layer(inp, wih_t, whh_t, b):
        h = jnp.zeros((B, H), jnp.float32)
        c = jnp.zeros((B, H), jnp.float32)
        outs = []
        for t in range(T):
            g = inp[:, t, :] @ wih_t + h @ whh_t + b
            i = jax.nn.sigmoid(g[:, 0 * H:1 * H])
            f = jax.nn.sigmoid(g[:, 1 * H:2 * H])
            gg = jnp.tanh(g[:, 2 * H:3 * H])
            o = jax.nn.sigmoid(g[:, 3 * H:4 * H])
            c = f * c + i * gg
            h = o * jnp.tanh(c)
            outs.append(h)
        return jnp.stack(outs, axis=1)

    o0 = layer(x, params["w_ih0_t"], params["w_hh0_t"], params["b0"])
    o1 = layer(o0, params["w_ih1_t"], params["w_hh1_t"], params["b1"])
    return o1[:, -1, :] @ params["fc_w_t"] + params["fc_b"]


if __name__ == "__main__":
    B, T, D_IN, H, OUT = 2, 8, 4, 32, 1   # num_layers = 2 (hardcoded in kernel)

    key = jax.random.PRNGKey(0)
    kx, kp = jax.random.split(key)
    x = jax.random.normal(kx, (B, T, D_IN), jnp.float32)
    params = init_params(kp, D_IN, H, OUT)

    out = lstm_model_forward(x, params)
    out = jax.block_until_ready(out)

    ref = lstm_model_ref(x, params)
    np.testing.assert_allclose(np.asarray(out), np.asarray(ref),
                               rtol=1e-4, atol=1e-4)

    print("KERNEL_OK")
</pallas_src>

<mosaic_0001>
module attributes {stable_mosaic.version = 11 : i64} {
  func.func @_lstm_fc_kernel(%arg0: memref<64x4xf32, #tpu.memory_space<vmem>>, %arg1: memref<4x128xf32, #tpu.memory_space<vmem>>, %arg2: memref<1x128xf32, #tpu.memory_space<vmem>>, %arg3: memref<64x256xf32, #tpu.memory_space<vmem>>, %arg4: memref<1x128xf32, #tpu.memory_space<vmem>>, %arg5: memref<32x128xf32, #tpu.memory_space<vmem>>, %arg6: memref<1x128xf32, #tpu.memory_space<vmem>>, %arg7: memref<8x128xf32, #tpu.memory_space<vmem>>) attributes {dimension_semantics = [], scalar_prefetch = 0 : i64, scratch_operands = 0 : i64, tpu.core_type = #tpu.core_type<tc>} {
    %c0 = arith.constant 0 : index
    %c0_0 = arith.constant 0 : index
    %0 = vector.load %arg0[%c0, %c0_0] : memref<64x4xf32, #tpu.memory_space<vmem>>, vector<64x4xf32>
    %c0_1 = arith.constant 0 : index
    %c0_2 = arith.constant 0 : index
    %1 = vector.load %arg1[%c0_1, %c0_2] : memref<4x128xf32, #tpu.memory_space<vmem>>, vector<4x128xf32>
    %cst = arith.constant dense<0.000000e+00> : vector<64x128xf32>
    %2 = tpu.matmul %0, %1, %cst {dimension_numbers = #tpu.dot_dimension_numbers<[1], [0], [0], [1], [0, 0, 1, 1], [], []>, precision = #tpu.contract_precision<fp32>} : vector<64x4xf32>, vector<4x128xf32>, vector<64x128xf32> -> vector<64x128xf32>
    %c0_3 = arith.constant 0 : index
    %c0_4 = arith.constant 0 : index
    %3 = vector.load %arg2[%c0_3, %c0_4] : memref<1x128xf32, #tpu.memory_space<vmem>>, vector<1x128xf32>
    %4 = vector.broadcast %3 : vector<1x128xf32> to vector<64x128xf32>
    %5 = arith.addf %2, %4 : vector<64x128xf32>
    %c0_5 = arith.constant 0 : index
    %c0_6 = arith.constant 0 : index
    %6 = vector.load %arg3[%c0_5, %c0_6] : memref<64x256xf32, #tpu.memory_space<vmem>>, vector<64x256xf32>
    %c0_7 = arith.constant 0 : index
    %c0_8 = arith.constant 0 : index
    %7 = vector.load %arg4[%c0_7, %c0_8] : memref<1x128xf32, #tpu.memory_space<vmem>>, vector<1x128xf32>
    %8 = vector.extract_strided_slice %5 {offsets = [0, 0], sizes = [8, 128], strides = [1, 1]} : vector<64x128xf32> to vector<8x128xf32>
    %cst_9 = arith.constant 0.000000e+00 : f32
    %9 = vector.broadcast %cst_9 : f32 to vector<8x32xf32>
    %10 = vector.extract_strided_slice %8 {offsets = [0, 0], sizes = [8, 64], strides = [1, 1]} : vector<8x128xf32> to vector<8x64xf32>
    %11 = arith.negf %10 : vector<8x64xf32>
    %12 = math.exp %11 : vector<8x64xf32>
    %cst_10 = arith.constant 1.000000e+00 : f32
    %13 = vector.broadcast %cst_10 : f32 to vector<8x64xf32>
    %14 = arith.addf %13, %12 : vector<8x64xf32>
    %15 = arith.divf %13, %14 : vector<8x64xf32>
    %16 = vector.extract_strided_slice %15 {offsets = [0, 0], sizes = [8, 32], strides = [1, 1]} : vector<8x64xf32> to vector<8x32xf32>
    %17 = vector.extract_strided_slice %15 {offsets = [0, 32], sizes = [8, 32], strides = [1, 1]} : vector<8x64xf32> to vector<8x32xf32>
    %18 = vector.extract_strided_slice %8 {offsets = [0, 64], sizes = [8, 32], strides = [1, 1]} : vector<8x128xf32> to vector<8x32xf32>
    %19 = math.tanh %18 : vector<8x32xf32>
    %20 = vector.extract_strided_slice %8 {offsets = [0, 96], sizes = [8, 32], strides = [1, 1]} : vector<8x128xf32> to vector<8x32xf32>
    %21 = arith.negf %20 : vector<8x32xf32>
    %22 = math.exp %21 : vector<8x32xf32>
    %cst_11 = arith.constant 1.000000e+00 : f32
    %23 = vector.broadcast %cst_11 : f32 to vector<8x32xf32>
    %24 = arith.addf %23, %22 : vector<8x32xf32>
    %25 = arith.divf %23, %24 : vector<8x32xf32>
    %26 = arith.mulf %17, %9 : vector<8x32xf32>
    %27 = arith.mulf %16, %19 : vector<8x32xf32>
    %28 = arith.addf %26, %27 : vector<8x32xf32>
    %29 = math.tanh %28 : vector<8x32xf32>
    %30 = arith.mulf %25, %29 : vector<8x32xf32>
    %cst_12 = arith.constant 0.000000e+00 : f32
    %31 = vector.broadcast %cst_12 : f32 to vector<8x32xf32>
    %cst_13 = arith.constant 0.000000e+00 : f32
    %32 = vector.broadcast %cst_13 : f32 to vector<8x32xf32>
    %33 = tpu.concatenate %30, %31 in 1 : vector<8x32xf32>, vector<8x32xf32> -> vector<8x64xf32>
    %cst_14 = arith.constant dense<0.000000e+00> : vector<8x256xf32>
    %34 = tpu.matmul %33, %6, %cst_14 {dimension_numbers = #tpu.dot_dimension_numbers<[1], [0], [0], [1], [0, 0, 1, 1], [], []>, precision = #tpu.contract_precision<fp32>} : vector<8x64xf32>, vector<64x256xf32>, vector<8x256xf32> -> vector<8x256xf32>
    %35 = vector.extract_strided_slice %5 {offsets = [8, 0], sizes = [8, 128], strides = [1, 1]} : vector<64x128xf32> to vector<8x128xf32>
    %36 = vector.extract_strided_slice %34 {offsets = [0, 0], sizes = [8, 128], strides = [1, 1]} : vector<8x256xf32> to vector<8x128xf32>
    %37 = arith.addf %35, %36 : vector<8x128xf32>
    %38 = vector.extract_strided_slice %34 {offsets = [0, 128], sizes = [8, 128], strides = [1, 1]} : vector<8x256xf32> to vector<8x128xf32>
    %39 = vector.broadcast %7 : vector<1x128xf32> to vector<8x128xf32>
    %40 = arith.addf %39, %38 : vector<8x128xf32>
    %41 = vector.extract_strided_slice %37 {offsets = [0, 0], sizes = [8, 64], strides = [1, 1]} : vector<8x128xf32> to vector<8x64xf32>
    %42 = arith.negf %41 : vector<8x64xf32>
    %43 = math.exp %42 : vector<8x64xf32>
    %cst_15 = arith.constant 1.000000e+00 : f32
    %44 = vector.broadcast %cst_15 : f32 to vector<8x64xf32>
    %45 = arith.addf %44, %43 : vector<8x64xf32>
    %46 = arith.divf %44, %45 : vector<8x64xf32>
    %47 = vector.extract_strided_slice %46 {offsets = [0, 0], sizes = [8, 32], strides = [1, 1]} : vector<8x64xf32> to vector<8x32xf32>
    %48 = vector.extract_strided_slice %46 {offsets = [0, 32], sizes = [8, 32], strides = [1, 1]} : vector<8x64xf32> to vector<8x32xf32>
    %49 = vector.extract_strided_slice %37 {offsets = [0, 64], sizes = [8, 32], strides = [1, 1]} : vector<8x128xf32> to vector<8x32xf32>
    %50 = math.tanh %49 : vector<8x32xf32>
    %51 = vector.extract_strided_slice %37 {offsets = [0, 96], sizes = [8, 32], strides = [1, 1]} : vector<8x128xf32> to vector<8x32xf32>
    %52 = arith.negf %51 : vector<8x32xf32>
    %53 = math.exp %52 : vector<8x32xf32>
    %cst_16 = arith.constant 1.000000e+00 : f32
    %54 = vector.broadcast %cst_16 : f32 to vector<8x32xf32>
    %55 = arith.addf %54, %53 : vector<8x32xf32>
    %56 = arith.divf %54, %55 : vector<8x32xf32>
    %57 = arith.mulf %48, %28 : vector<8x32xf32>
    %58 = arith.mulf %47, %50 : vector<8x32xf32>
    %59 = arith.addf %57, %58 : vector<8x32xf32>
    %60 = math.tanh %59 : vector<8x32xf32>
    %61 = arith.mulf %56, %60 : vector<8x32xf32>
    %62 = vector.extract_strided_slice %40 {offsets = [0, 0], sizes = [8, 64], strides = [1, 1]} : vector<8x128xf32> to vector<8x64xf32>
    %63 = arith.negf %62 : vector<8x64xf32>
    %64 = math.exp %63 : vector<8x64xf32>
    %cst_17 = arith.constant 1.000000e+00 : f32
    %65 = vector.broadcast %cst_17 : f32 to vector<8x64xf32>
    %66 = arith.addf %65, %64 : vector<8x64xf32>
    %67 = arith.divf %65, %66 : vector<8x64xf32>
    %68 = vector.extract_strided_slice %67 {offsets = [0, 0], sizes = [8, 32], strides = [1, 1]} : vector<8x64xf32> to vector<8x32xf32>
    %69 = vector.extract_strided_slice %67 {offsets = [0, 32], sizes = [8, 32], strides = [1, 1]} : vector<8x64xf32> to vector<8x32xf32>
    %70 = vector.extract_strided_slice %40 {offsets = [0, 64], sizes = [8, 32], strides = [1, 1]} : vector<8x128xf32> to vector<8x32xf32>
    %71 = math.tanh %70 : vector<8x32xf32>
    %72 = vector.extract_strided_slice %40 {offsets = [0, 96], sizes = [8, 32], strides = [1, 1]} : vector<8x128xf32> to vector<8x32xf32>
    %73 = arith.negf %72 : vector<8x32xf32>
    %74 = math.exp %73 : vector<8x32xf32>
    %cst_18 = arith.constant 1.000000e+00 : f32
    %75 = vector.broadcast %cst_18 : f32 to vector<8x32xf32>
    %76 = arith.addf %75, %74 : vector<8x32xf32>
    %77 = arith.divf %75, %76 : vector<8x32xf32>
    %78 = arith.mulf %69, %32 : vector<8x32xf32>
    %79 = arith.mulf %68, %71 : vector<8x32xf32>
    %80 = arith.addf %78, %79 : vector<8x32xf32>
    %81 = math.tanh %80 : vector<8x32xf32>
    %82 = arith.mulf %77, %81 : vector<8x32xf32>
    %83 = tpu.concatenate %61, %82 in 1 : vector<8x32xf32>, vector<8x32xf32> -> vector<8x64xf32>
    %cst_19 = arith.constant dense<0.000000e+00> : vector<8x256xf32>
    %84 = tpu.matmul %83, %6, %cst_19 {dimension_numbers = #tpu.dot_dimension_numbers<[1], [0], [0], [1], [0, 0, 1, 1], [], []>, precision = #tpu.contract_precision<fp32>} : vector<8x64xf32>, vector<64x256xf32>, vector<8x256xf32> -> vector<8x256xf32>
    %85 = vector.extract_strided_slice %5 {offsets = [16, 0], sizes = [8, 128], strides = [1, 1]} : vector<64x128xf32> to vector<8x128xf32>
    %86 = vector.extract_strided_slice %84 {offsets = [0, 0], sizes = [8, 128], strides = [1, 1]} : vector<8x256xf32> to vector<8x128xf32>
    %87 = arith.addf %85, %86 : vector<8x128xf32>
    %88 = vector.extract_strided_slice %84 {offsets = [0, 128], sizes = [8, 128], strides = [1, 1]} : vector<8x256xf32> to vector<8x128xf32>
    %89 = vector.broadcast %7 : vector<1x128xf32> to vector<8x128xf32>
    %90 = arith.addf %89, %88 : vector<8x128xf32>
    %91 = vector.extract_strided_slice %87 {offsets = [0, 0], sizes = [8, 64], strides = [1, 1]} : vector<8x128xf32> to vector<8x64xf32>
    %92 = arith.negf %91 : vector<8x64xf32>
    %93 = math.exp %92 : vector<8x64xf32>
    %cst_20 = arith.constant 1.000000e+00 : f32
    %94 = vector.broadcast %cst_20 : f32 to vector<8x64xf32>
    %95 = arith.addf %94, %93 : vector<8x64xf32>
    %96 = arith.divf %94, %95 : vector<8x64xf32>
    %97 = vector.extract_strided_slice %96 {offsets = [0, 0], sizes = [8, 32], strides = [1, 1]} : vector<8x64xf32> to vector<8x32xf32>
    %98 = vector.extract_strided_slice %96 {offsets = [0, 32], sizes = [8, 32], strides = [1, 1]} : vector<8x64xf32> to vector<8x32xf32>
    %99 = vector.extract_strided_slice %87 {offsets = [0, 64], sizes = [8, 32], strides = [1, 1]} : vector<8x128xf32> to vector<8x32xf32>
    %100 = math.tanh %99 : vector<8x32xf32>
    %101 = vector.extract_strided_slice %87 {offsets = [0, 96], sizes = [8, 32], strides = [1, 1]} : vector<8x128xf32> to vector<8x32xf32>
    %102 = arith.negf %101 : vector<8x32xf32>
    %103 = math.exp %102 : vector<8x32xf32>
    %cst_21 = arith.constant 1.000000e+00 : f32
    %104 = vector.broadcast %cst_21 : f32 to vector<8x32xf32>
    %105 = arith.addf %104, %103 : vector<8x32xf32>
    %106 = arith.divf %104, %105 : vector<8x32xf32>
    %107 = arith.mulf %98, %59 : vector<8x32xf32>
    %108 = arith.mulf %97, %100 : vector<8x32xf32>
    %109 = arith.addf %107, %108 : vector<8x32xf32>
    %110 = math.tanh %109 : vector<8x32xf32>
    %111 = arith.mulf %106, %110 : vector<8x32xf32>
    %112 = vector.extract_strided_slice %90 {offsets = [0, 0], sizes = [8, 64], strides = [1, 1]} : vector<8x128xf32> to vector<8x64xf32>
    %113 = arith.negf %112 : vector<8x64xf32>
    %114 = math.exp %113 : vector<8x64xf32>
    %cst_22 = arith.constant 1.000000e+00 : f32
    %115 = vector.broadcast %cst_22 : f32 to vector<8x64xf32>
    %116 = arith.addf %115, %114 : vector<8x64xf32>
    %117 = arith.divf %115, %116 : vector<8x64xf32>
    %118 = vector.extract_strided_slice %117 {offsets = [0, 0], sizes = [8, 32], strides = [1, 1]} : vector<8x64xf32> to vector<8x32xf32>
    %119 = vector.extract_strided_slice %117 {offsets = [0, 32], sizes = [8, 32], strides = [1, 1]} : vector<8x64xf32> to vector<8x32xf32>
    %120 = vector.extract_strided_slice %90 {offsets = [0, 64], sizes = [8, 32], strides = [1, 1]} : vector<8x128xf32> to vector<8x32xf32>
    %121 = math.tanh %120 : vector<8x32xf32>
    %122 = vector.extract_strided_slice %90 {offsets = [0, 96], sizes = [8, 32], strides = [1, 1]} : vector<8x128xf32> to vector<8x32xf32>
    %123 = arith.negf %122 : vector<8x32xf32>
    %124 = math.exp %123 : vector<8x32xf32>
    %cst_23 = arith.constant 1.000000e+00 : f32
    %125 = vector.broadcast %cst_23 : f32 to vector<8x32xf32>
    %126 = arith.addf %125, %124 : vector<8x32xf32>
    %127 = arith.divf %125, %126 : vector<8x32xf32>
    %128 = arith.mulf %119, %80 : vector<8x32xf32>
    %129 = arith.mulf %118, %121 : vector<8x32xf32>
    %130 = arith.addf %128, %129 : vector<8x32xf32>
    %131 = math.tanh %130 : vector<8x32xf32>
    %132 = arith.mulf %127, %131 : vector<8x32xf32>
    %133 = tpu.concatenate %111, %132 in 1 : vector<8x32xf32>, vector<8x32xf32> -> vector<8x64xf32>
    %cst_24 = arith.constant dense<0.000000e+00> : vector<8x256xf32>
    %134 = tpu.matmul %133, %6, %cst_24 {dimension_numbers = #tpu.dot_dimension_numbers<[1], [0], [0], [1], [0, 0, 1, 1], [], []>, precision = #tpu.contract_precision<fp32>} : vector<8x64xf32>, vector<64x256xf32>, vector<8x256xf32> -> vector<8x256xf32>
    %135 = vector.extract_strided_slice %5 {offsets = [24, 0], sizes = [8, 128], strides = [1, 1]} : vector<64x128xf32> to vector<8x128xf32>
    %136 = vector.extract_strided_slice %134 {offsets = [0, 0], sizes = [8, 128], strides = [1, 1]} : vector<8x256xf32> to vector<8x128xf32>
    %137 = arith.addf %135, %136 : vector<8x128xf32>
    %138 = vector.extract_strided_slice %134 {offsets = [0, 128], sizes = [8, 128], strides = [1, 1]} : vector<8x256xf32> to vector<8x128xf32>
    %139 = vector.broadcast %7 : vector<1x128xf32> to vector<8x128xf32>
    %140 = arith.addf %139, %138 : vector<8x128xf32>
    %141 = vector.extract_strided_slice %137 {offsets = [0, 0], sizes = [8, 64], strides = [1, 1]} : vector<8x128xf32> to vector<8x64xf32>
    %142 = arith.negf %141 : vector<8x64xf32>
    %143 = math.exp %142 : vector<8x64xf32>
    %cst_25 = arith.constant 1.000000e+00 : f32
    %144 = vector.broadcast %cst_25 : f32 to vector<8x64xf32>
    %145 = arith.addf %144, %143 : vector<8x64xf32>
    %146 = arith.divf %144, %145 : vector<8x64xf32>
    %147 = vector.extract_strided_slice %146 {offsets = [0, 0], sizes = [8, 32], strides = [1, 1]} : vector<8x64xf32> to vector<8x32xf32>
    %148 = vector.extract_strided_slice %146 {offsets = [0, 32], sizes = [8, 32], strides = [1, 1]} : vector<8x64xf32> to vector<8x32xf32>
    %149 = vector.extract_strided_slice %137 {offsets = [0, 64], sizes = [8, 32], strides = [1, 1]} : vector<8x128xf32> to vector<8x32xf32>
    %150 = math.tanh %149 : vector<8x32xf32>
    %151 = vector.extract_strided_slice %137 {offsets = [0, 96], sizes = [8, 32], strides = [1, 1]} : vector<8x128xf32> to vector<8x32xf32>
    %152 = arith.negf %151 : vector<8x32xf32>
    %153 = math.exp %152 : vector<8x32xf32>
    %cst_26 = arith.constant 1.000000e+00 : f32
    %154 = vector.broadcast %cst_26 : f32 to vector<8x32xf32>
    %155 = arith.addf %154, %153 : vector<8x32xf32>
    %156 = arith.divf %154, %155 : vector<8x32xf32>
    %157 = arith.mulf %148, %109 : vector<8x32xf32>
    %158 = arith.mulf %147, %150 : vector<8x32xf32>
    %159 = arith.addf %157, %158 : vector<8x32xf32>
    %160 = math.tanh %159 : vector<8x32xf32>
    %161 = arith.mulf %156, %160 : vector<8x32xf32>
    %162 = vector.extract_strided_slice %140 {offsets = [0, 0], sizes = [8, 64], strides = [1, 1]} : vector<8x128xf32> to vector<8x64xf32>
    %163 = arith.negf %162 : vector<8x64xf32>
    %164 = math.exp %163 : vector<8x64xf32>
    %cst_27 = arith.constant 1.000000e+00 : f32
    %165 = vector.broadcast %cst_27 : f32 to vector<8x64xf32>
    %166 = arith.addf %165, %164 : vector<8x64xf32>
    %167 = arith.divf %165, %166 : vector<8x64xf32>
    %168 = vector.extract_strided_slice %167 {offsets = [0, 0], sizes = [8, 32], strides = [1, 1]} : vector<8x64xf32> to vector<8x32xf32>
    %169 = vector.extract_strided_slice %167 {offsets = [0, 32], sizes = [8, 32], strides = [1, 1]} : vector<8x64xf32> to vector<8x32xf32>
    %170 = vector.extract_strided_slice %140 {offsets = [0, 64], sizes = [8, 32], strides = [1, 1]} : vector<8x128xf32> to vector<8x32xf32>
    %171 = math.tanh %170 : vector<8x32xf32>
    %172 = vector.extract_strided_slice %140 {offsets = [0, 96], sizes = [8, 32], strides = [1, 1]} : vector<8x128xf32> to vector<8x32xf32>
    %173 = arith.negf %172 : vector<8x32xf32>
    %174 = math.exp %173 : vector<8x32xf32>
    %cst_28 = arith.constant 1.000000e+00 : f32
    %175 = vector.broadcast %cst_28 : f32 to vector<8x32xf32>
    %176 = arith.addf %175, %174 : vector<8x32xf32>
    %177 = arith.divf %175, %176 : vector<8x32xf32>
    %178 = arith.mulf %169, %130 : vector<8x32xf32>
    %179 = arith.mulf %168, %171 : vector<8x32xf32>
    %180 = arith.addf %178, %179 : vector<8x32xf32>
    %181 = math.tanh %180 : vector<8x32xf32>
    %182 = arith.mulf %177, %181 : vector<8x32xf32>
    %183 = tpu.concatenate %161, %182 in 1 : vector<8x32xf32>, vector<8x32xf32> -> vector<8x64xf32>
    %cst_29 = arith.constant dense<0.000000e+00> : vector<8x256xf32>
    %184 = tpu.matmul %183, %6, %cst_29 {dimension_numbers = #tpu.dot_dimension_numbers<[1], [0], [0], [1], [0, 0, 1, 1], [], []>, precision = #tpu.contract_precision<fp32>} : vector<8x64xf32>, vector<64x256xf32>, vector<8x256xf32> -> vector<8x256xf32>
    %185 = vector.extract_strided_slice %5 {offsets = [32, 0], sizes = [8, 128], strides = [1, 1]} : vector<64x128xf32> to vector<8x128xf32>
    %186 = vector.extract_strided_slice %184 {offsets = [0, 0], sizes = [8, 128], strides = [1, 1]} : vector<8x256xf32> to vector<8x128xf32>
    %187 = arith.addf %185, %186 : vector<8x128xf32>
    %188 = vector.extract_strided_slice %184 {offsets = [0, 128], sizes = [8, 128], strides = [1, 1]} : vector<8x256xf32> to vector<8x128xf32>
    %189 = vector.broadcast %7 : vector<1x128xf32> to vector<8x128xf32>
    %190 = arith.addf %189, %188 : vector<8x128xf32>
    %191 = vector.extract_strided_slice %187 {offsets = [0, 0], sizes = [8, 64], strides = [1, 1]} : vector<8x128xf32> to vector<8x64xf32>
    %192 = arith.negf %191 : vector<8x64xf32>
    %193 = math.exp %192 : vector<8x64xf32>
    %cst_30 = arith.constant 1.000000e+00 : f32
    %194 = vector.broadcast %cst_30 : f32 to vector<8x64xf32>
    %195 = arith.addf %194, %193 : vector<8x64xf32>
    %196 = arith.divf %194, %195 : vector<8x64xf32>
    %197 = vector.extract_strided_slice %196 {offsets = [0, 0], sizes = [8, 32], strides = [1, 1]} : vector<8x64xf32> to vector<8x32xf32>
    %198 = vector.extract_strided_slice %196 {offsets = [0, 32], sizes = [8, 32], strides = [1, 1]} : vector<8x64xf32> to vector<8x32xf32>
    %199 = vector.extract_strided_slice %187 {offsets = [0, 64], sizes = [8, 32], strides = [1, 1]} : vector<8x128xf32> to vector<8x32xf32>
    %200 = math.tanh %199 : vector<8x32xf32>
    %201 = vector.extract_strided_slice %187 {offsets = [0, 96], sizes = [8, 32], strides = [1, 1]} : vector<8x128xf32> to vector<8x32xf32>
    %202 = arith.negf %201 : vector<8x32xf32>
    %203 = math.exp %202 : vector<8x32xf32>
    %cst_31 = arith.constant 1.000000e+00 : f32
    %204 = vector.broadcast %cst_31 : f32 to vector<8x32xf32>
    %205 = arith.addf %204, %203 : vector<8x32xf32>
    %206 = arith.divf %204, %205 : vector<8x32xf32>
    %207 = arith.mulf %198, %159 : vector<8x32xf32>
    %208 = arith.mulf %197, %200 : vector<8x32xf32>
    %209 = arith.addf %207, %208 : vector<8x32xf32>
    %210 = math.tanh %209 : vector<8x32xf32>
    %211 = arith.mulf %206, %210 : vector<8x32xf32>
    %212 = vector.extract_strided_slice %190 {offsets = [0, 0], sizes = [8, 64], strides = [1, 1]} : vector<8x128xf32> to vector<8x64xf32>
    %213 = arith.negf %212 : vector<8x64xf32>
    %214 = math.exp %213 : vector<8x64xf32>
    %cst_32 = arith.constant 1.000000e+00 : f32
    %215 = vector.broadcast %cst_32 : f32 to vector<8x64xf32>
    %216 = arith.addf %215, %214 : vector<8x64xf32>
    %217 = arith.divf %215, %216 : vector<8x64xf32>
    %218 = vector.extract_strided_slice %217 {offsets = [0, 0], sizes = [8, 32], strides = [1, 1]} : vector<8x64xf32> to vector<8x32xf32>
    %219 = vector.extract_strided_slice %217 {offsets = [0, 32], sizes = [8, 32], strides = [1, 1]} : vector<8x64xf32> to vector<8x32xf32>
    %220 = vector.extract_strided_slice %190 {offsets = [0, 64], sizes = [8, 32], strides = [1, 1]} : vector<8x128xf32> to vector<8x32xf32>
    %221 = math.tanh %220 : vector<8x32xf32>
    %222 = vector.extract_strided_slice %190 {offsets = [0, 96], sizes = [8, 32], strides = [1, 1]} : vector<8x128xf32> to vector<8x32xf32>
    %223 = arith.negf %222 : vector<8x32xf32>
    %224 = math.exp %223 : vector<8x32xf32>
    %cst_33 = arith.constant 1.000000e+00 : f32
    %225 = vector.broadcast %cst_33 : f32 to vector<8x32xf32>
    %226 = arith.addf %225, %224 : vector<8x32xf32>
    %227 = arith.divf %225, %226 : vector<8x32xf32>
    %228 = arith.mulf %219, %180 : vector<8x32xf32>
    %229 = arith.mulf %218, %221 : vector<8x32xf32>
    %230 = arith.addf %228, %229 : vector<8x32xf32>
    %231 = math.tanh %230 : vector<8x32xf32>
    %232 = arith.mulf %227, %231 : vector<8x32xf32>
    %233 = tpu.concatenate %211, %232 in 1 : vector<8x32xf32>, vector<8x32xf32> -> vector<8x64xf32>
    %cst_34 = arith.constant dense<0.000000e+00> : vector<8x256xf32>
    %234 = tpu.matmul %233, %6, %cst_34 {dimension_numbers = #tpu.dot_dimension_numbers<[1], [0], [0], [1], [0, 0, 1, 1], [], []>, precision = #tpu.contract_precision<fp32>} : vector<8x64xf32>, vector<64x256xf32>, vector<8x256xf32> -> vector<8x256xf32>
    %235 = vector.extract_strided_slice %5 {offsets = [40, 0], sizes = [8, 128], strides = [1, 1]} : vector<64x128xf32> to vector<8x128xf32>
    %236 = vector.extract_strided_slice %234 {offsets = [0, 0], sizes = [8, 128], strides = [1, 1]} : vector<8x256xf32> to vector<8x128xf32>
    %237 = arith.addf %235, %236 : vector<8x128xf32>
    %238 = vector.extract_strided_slice %234 {offsets = [0, 128], sizes = [8, 128], strides = [1, 1]} : vector<8x256xf32> to vector<8x128xf32>
    %239 = vector.broadcast %7 : vector<1x128xf32> to vector<8x128xf32>
    %240 = arith.addf %239, %238 : vector<8x128xf32>
    %241 = vector.extract_strided_slice %237 {offsets = [0, 0], sizes = [8, 64], strides = [1, 1]} : vector<8x128xf32> to vector<8x64xf32>
    %242 = arith.negf %241 : vector<8x64xf32>
    %243 = math.exp %242 : vector<8x64xf32>
    %cst_35 = arith.constant 1.000000e+00 : f32
    %244 = vector.broadcast %cst_35 : f32 to vector<8x64xf32>
    %245 = arith.addf %244, %243 : vector<8x64xf32>
    %246 = arith.divf %244, %245 : vector<8x64xf32>
    %247 = vector.extract_strided_slice %246 {offsets = [0, 0], sizes = [8, 32], strides = [1, 1]} : vector<8x64xf32> to vector<8x32xf32>
    %248 = vector.extract_strided_slice %246 {offsets = [0, 32], sizes = [8, 32], strides = [1, 1]} : vector<8x64xf32> to vector<8x32xf32>
    %249 = vector.extract_strided_slice %237 {offsets = [0, 64], sizes = [8, 32], strides = [1, 1]} : vector<8x128xf32> to vector<8x32xf32>
    %250 = math.tanh %249 : vector<8x32xf32>
    %251 = vector.extract_strided_slice %237 {offsets = [0, 96], sizes = [8, 32], strides = [1, 1]} : vector<8x128xf32> to vector<8x32xf32>
    %252 = arith.negf %251 : vector<8x32xf32>
    %253 = math.exp %252 : vector<8x32xf32>
    %cst_36 = arith.constant 1.000000e+00 : f32
    %254 = vector.broadcast %cst_36 : f32 to vector<8x32xf32>
    %255 = arith.addf %254, %253 : vector<8x32xf32>
    %256 = arith.divf %254, %255 : vector<8x32xf32>
    %257 = arith.mulf %248, %209 : vector<8x32xf32>
    %258 = arith.mulf %247, %250 : vector<8x32xf32>
    %259 = arith.addf %257, %258 : vector<8x32xf32>
    %260 = math.tanh %259 : vector<8x32xf32>
    %261 = arith.mulf %256, %260 : vector<8x32xf32>
    %262 = vector.extract_strided_slice %240 {offsets = [0, 0], sizes = [8, 64], strides = [1, 1]} : vector<8x128xf32> to vector<8x64xf32>
    %263 = arith.negf %262 : vector<8x64xf32>
    %264 = math.exp %263 : vector<8x64xf32>
    %cst_37 = arith.constant 1.000000e+00 : f32
    %265 = vector.broadcast %cst_37 : f32 to vector<8x64xf32>
    %266 = arith.addf %265, %264 : vector<8x64xf32>
    %267 = arith.divf %265, %266 : vector<8x64xf32>
    %268 = vector.extract_strided_slice %267 {offsets = [0, 0], sizes = [8, 32], strides = [1, 1]} : vector<8x64xf32> to vector<8x32xf32>
    %269 = vector.extract_strided_slice %267 {offsets = [0, 32], sizes = [8, 32], strides = [1, 1]} : vector<8x64xf32> to vector<8x32xf32>
    %270 = vector.extract_strided_slice %240 {offsets = [0, 64], sizes = [8, 32], strides = [1, 1]} : vector<8x128xf32> to vector<8x32xf32>
    %271 = math.tanh %270 : vector<8x32xf32>
    %272 = vector.extract_strided_slice %240 {offsets = [0, 96], sizes = [8, 32], strides = [1, 1]} : vector<8x128xf32> to vector<8x32xf32>
    %273 = arith.negf %272 : vector<8x32xf32>
    %274 = math.exp %273 : vector<8x32xf32>
    %cst_38 = arith.constant 1.000000e+00 : f32
    %275 = vector.broadcast %cst_38 : f32 to vector<8x32xf32>
    %276 = arith.addf %275, %274 : vector<8x32xf32>
    %277 = arith.divf %275, %276 : vector<8x32xf32>
    %278 = arith.mulf %269, %230 : vector<8x32xf32>
    %279 = arith.mulf %268, %271 : vector<8x32xf32>
    %280 = arith.addf %278, %279 : vector<8x32xf32>
    %281 = math.tanh %280 : vector<8x32xf32>
    %282 = arith.mulf %277, %281 : vector<8x32xf32>
    %283 = tpu.concatenate %261, %282 in 1 : vector<8x32xf32>, vector<8x32xf32> -> vector<8x64xf32>
    %cst_39 = arith.constant dense<0.000000e+00> : vector<8x256xf32>
    %284 = tpu.matmul %283, %6, %cst_39 {dimension_numbers = #tpu.dot_dimension_numbers<[1], [0], [0], [1], [0, 0, 1, 1], [], []>, precision = #tpu.contract_precision<fp32>} : vector<8x64xf32>, vector<64x256xf32>, vector<8x256xf32> -> vector<8x256xf32>
    %285 = vector.extract_strided_slice %5 {offsets = [48, 0], sizes = [8, 128], strides = [1, 1]} : vector<64x128xf32> to vector<8x128xf32>
    %286 = vector.extract_strided_slice %284 {offsets = [0, 0], sizes = [8, 128], strides = [1, 1]} : vector<8x256xf32> to vector<8x128xf32>
    %287 = arith.addf %285, %286 : vector<8x128xf32>
    %288 = vector.extract_strided_slice %284 {offsets = [0, 128], sizes = [8, 128], strides = [1, 1]} : vector<8x256xf32> to vector<8x128xf32>
    %289 = vector.broadcast %7 : vector<1x128xf32> to vector<8x128xf32>
    %290 = arith.addf %289, %288 : vector<8x128xf32>
    %291 = vector.extract_strided_slice %287 {offsets = [0, 0], sizes = [8, 64], strides = [1, 1]} : vector<8x128xf32> to vector<8x64xf32>
    %292 = arith.negf %291 : vector<8x64xf32>
    %293 = math.exp %292 : vector<8x64xf32>
    %cst_40 = arith.constant 1.000000e+00 : f32
    %294 = vector.broadcast %cst_40 : f32 to vector<8x64xf32>
    %295 = arith.addf %294, %293 : vector<8x64xf32>
    %296 = arith.divf %294, %295 : vector<8x64xf32>
    %297 = vector.extract_strided_slice %296 {offsets = [0, 0], sizes = [8, 32], strides = [1, 1]} : vector<8x64xf32> to vector<8x32xf32>
    %298 = vector.extract_strided_slice %296 {offsets = [0, 32], sizes = [8, 32], strides = [1, 1]} : vector<8x64xf32> to vector<8x32xf32>
    %299 = vector.extract_strided_slice %287 {offsets = [0, 64], sizes = [8, 32], strides = [1, 1]} : vector<8x128xf32> to vector<8x32xf32>
    %300 = math.tanh %299 : vector<8x32xf32>
    %301 = vector.extract_strided_slice %287 {offsets = [0, 96], sizes = [8, 32], strides = [1, 1]} : vector<8x128xf32> to vector<8x32xf32>
    %302 = arith.negf %301 : vector<8x32xf32>
    %303 = math.exp %302 : vector<8x32xf32>
    %cst_41 = arith.constant 1.000000e+00 : f32
    %304 = vector.broadcast %cst_41 : f32 to vector<8x32xf32>
    %305 = arith.addf %304, %303 : vector<8x32xf32>
    %306 = arith.divf %304, %305 : vector<8x32xf32>
    %307 = arith.mulf %298, %259 : vector<8x32xf32>
    %308 = arith.mulf %297, %300 : vector<8x32xf32>
    %309 = arith.addf %307, %308 : vector<8x32xf32>
    %310 = math.tanh %309 : vector<8x32xf32>
    %311 = arith.mulf %306, %310 : vector<8x32xf32>
    %312 = vector.extract_strided_slice %290 {offsets = [0, 0], sizes = [8, 64], strides = [1, 1]} : vector<8x128xf32> to vector<8x64xf32>
    %313 = arith.negf %312 : vector<8x64xf32>
    %314 = math.exp %313 : vector<8x64xf32>
    %cst_42 = arith.constant 1.000000e+00 : f32
    %315 = vector.broadcast %cst_42 : f32 to vector<8x64xf32>
    %316 = arith.addf %315, %314 : vector<8x64xf32>
    %317 = arith.divf %315, %316 : vector<8x64xf32>
    %318 = vector.extract_strided_slice %317 {offsets = [0, 0], sizes = [8, 32], strides = [1, 1]} : vector<8x64xf32> to vector<8x32xf32>
    %319 = vector.extract_strided_slice %317 {offsets = [0, 32], sizes = [8, 32], strides = [1, 1]} : vector<8x64xf32> to vector<8x32xf32>
    %320 = vector.extract_strided_slice %290 {offsets = [0, 64], sizes = [8, 32], strides = [1, 1]} : vector<8x128xf32> to vector<8x32xf32>
    %321 = math.tanh %320 : vector<8x32xf32>
    %322 = vector.extract_strided_slice %290 {offsets = [0, 96], sizes = [8, 32], strides = [1, 1]} : vector<8x128xf32> to vector<8x32xf32>
    %323 = arith.negf %322 : vector<8x32xf32>
    %324 = math.exp %323 : vector<8x32xf32>
    %cst_43 = arith.constant 1.000000e+00 : f32
    %325 = vector.broadcast %cst_43 : f32 to vector<8x32xf32>
    %326 = arith.addf %325, %324 : vector<8x32xf32>
    %327 = arith.divf %325, %326 : vector<8x32xf32>
    %328 = arith.mulf %319, %280 : vector<8x32xf32>
    %329 = arith.mulf %318, %321 : vector<8x32xf32>
    %330 = arith.addf %328, %329 : vector<8x32xf32>
    %331 = math.tanh %330 : vector<8x32xf32>
    %332 = arith.mulf %327, %331 : vector<8x32xf32>
    %333 = tpu.concatenate %311, %332 in 1 : vector<8x32xf32>, vector<8x32xf32> -> vector<8x64xf32>
    %cst_44 = arith.constant dense<0.000000e+00> : vector<8x256xf32>
    %334 = tpu.matmul %333, %6, %cst_44 {dimension_numbers = #tpu.dot_dimension_numbers<[1], [0], [0], [1], [0, 0, 1, 1], [], []>, precision = #tpu.contract_precision<fp32>} : vector<8x64xf32>, vector<64x256xf32>, vector<8x256xf32> -> vector<8x256xf32>
    %335 = vector.extract_strided_slice %5 {offsets = [56, 0], sizes = [8, 128], strides = [1, 1]} : vector<64x128xf32> to vector<8x128xf32>
    %336 = vector.extract_strided_slice %334 {offsets = [0, 0], sizes = [8, 128], strides = [1, 1]} : vector<8x256xf32> to vector<8x128xf32>
    %337 = arith.addf %335, %336 : vector<8x128xf32>
    %338 = vector.extract_strided_slice %334 {offsets = [0, 128], sizes = [8, 128], strides = [1, 1]} : vector<8x256xf32> to vector<8x128xf32>
    %339 = vector.broadcast %7 : vector<1x128xf32> to vector<8x128xf32>
    %340 = arith.addf %339, %338 : vector<8x128xf32>
    %341 = vector.extract_strided_slice %337 {offsets = [0, 0], sizes = [8, 64], strides = [1, 1]} : vector<8x128xf32> to vector<8x64xf32>
    %342 = arith.negf %341 : vector<8x64xf32>
    %343 = math.exp %342 : vector<8x64xf32>
    %cst_45 = arith.constant 1.000000e+00 : f32
    %344 = vector.broadcast %cst_45 : f32 to vector<8x64xf32>
    %345 = arith.addf %344, %343 : vector<8x64xf32>
    %346 = arith.divf %344, %345 : vector<8x64xf32>
    %347 = vector.extract_strided_slice %346 {offsets = [0, 0], sizes = [8, 32], strides = [1, 1]} : vector<8x64xf32> to vector<8x32xf32>
    %348 = vector.extract_strided_slice %346 {offsets = [0, 32], sizes = [8, 32], strides = [1, 1]} : vector<8x64xf32> to vector<8x32xf32>
    %349 = vector.extract_strided_slice %337 {offsets = [0, 64], sizes = [8, 32], strides = [1, 1]} : vector<8x128xf32> to vector<8x32xf32>
    %350 = math.tanh %349 : vector<8x32xf32>
    %351 = vector.extract_strided_slice %337 {offsets = [0, 96], sizes = [8, 32], strides = [1, 1]} : vector<8x128xf32> to vector<8x32xf32>
    %352 = arith.negf %351 : vector<8x32xf32>
    %353 = math.exp %352 : vector<8x32xf32>
    %cst_46 = arith.constant 1.000000e+00 : f32
    %354 = vector.broadcast %cst_46 : f32 to vector<8x32xf32>
    %355 = arith.addf %354, %353 : vector<8x32xf32>
    %356 = arith.divf %354, %355 : vector<8x32xf32>
    %357 = arith.mulf %348, %309 : vector<8x32xf32>
    %358 = arith.mulf %347, %350 : vector<8x32xf32>
    %359 = arith.addf %357, %358 : vector<8x32xf32>
    %360 = math.tanh %359 : vector<8x32xf32>
    %361 = arith.mulf %356, %360 : vector<8x32xf32>
    %362 = vector.extract_strided_slice %340 {offsets = [0, 0], sizes = [8, 64], strides = [1, 1]} : vector<8x128xf32> to vector<8x64xf32>
    %363 = arith.negf %362 : vector<8x64xf32>
    %364 = math.exp %363 : vector<8x64xf32>
    %cst_47 = arith.constant 1.000000e+00 : f32
    %365 = vector.broadcast %cst_47 : f32 to vector<8x64xf32>
    %366 = arith.addf %365, %364 : vector<8x64xf32>
    %367 = arith.divf %365, %366 : vector<8x64xf32>
    %368 = vector.extract_strided_slice %367 {offsets = [0, 0], sizes = [8, 32], strides = [1, 1]} : vector<8x64xf32> to vector<8x32xf32>
    %369 = vector.extract_strided_slice %367 {offsets = [0, 32], sizes = [8, 32], strides = [1, 1]} : vector<8x64xf32> to vector<8x32xf32>
    %370 = vector.extract_strided_slice %340 {offsets = [0, 64], sizes = [8, 32], strides = [1, 1]} : vector<8x128xf32> to vector<8x32xf32>
    %371 = math.tanh %370 : vector<8x32xf32>
    %372 = vector.extract_strided_slice %340 {offsets = [0, 96], sizes = [8, 32], strides = [1, 1]} : vector<8x128xf32> to vector<8x32xf32>
    %373 = arith.negf %372 : vector<8x32xf32>
    %374 = math.exp %373 : vector<8x32xf32>
    %cst_48 = arith.constant 1.000000e+00 : f32
    %375 = vector.broadcast %cst_48 : f32 to vector<8x32xf32>
    %376 = arith.addf %375, %374 : vector<8x32xf32>
    %377 = arith.divf %375, %376 : vector<8x32xf32>
    %378 = arith.mulf %369, %330 : vector<8x32xf32>
    %379 = arith.mulf %368, %371 : vector<8x32xf32>
    %380 = arith.addf %378, %379 : vector<8x32xf32>
    %381 = math.tanh %380 : vector<8x32xf32>
    %382 = arith.mulf %377, %381 : vector<8x32xf32>
    %383 = tpu.concatenate %361, %382 in 1 : vector<8x32xf32>, vector<8x32xf32> -> vector<8x64xf32>
    %cst_49 = arith.constant dense<0.000000e+00> : vector<8x256xf32>
    %384 = tpu.matmul %383, %6, %cst_49 {dimension_numbers = #tpu.dot_dimension_numbers<[1], [0], [0], [1], [0, 0, 1, 1], [], []>, precision = #tpu.contract_precision<fp32>} : vector<8x64xf32>, vector<64x256xf32>, vector<8x256xf32> -> vector<8x256xf32>
    %385 = vector.extract_strided_slice %384 {offsets = [0, 128], sizes = [8, 128], strides = [1, 1]} : vector<8x256xf32> to vector<8x128xf32>
    %386 = vector.broadcast %7 : vector<1x128xf32> to vector<8x128xf32>
    %387 = arith.addf %386, %385 : vector<8x128xf32>
    %388 = vector.extract_strided_slice %387 {offsets = [0, 0], sizes = [8, 64], strides = [1, 1]} : vector<8x128xf32> to vector<8x64xf32>
    %389 = arith.negf %388 : vector<8x64xf32>
    %390 = math.exp %389 : vector<8x64xf32>
    %cst_50 = arith.constant 1.000000e+00 : f32
    %391 = vector.broadcast %cst_50 : f32 to vector<8x64xf32>
    %392 = arith.addf %391, %390 : vector<8x64xf32>
    %393 = arith.divf %391, %392 : vector<8x64xf32>
    %394 = vector.extract_strided_slice %393 {offsets = [0, 0], sizes = [8, 32], strides = [1, 1]} : vector<8x64xf32> to vector<8x32xf32>
    %395 = vector.extract_strided_slice %393 {offsets = [0, 32], sizes = [8, 32], strides = [1, 1]} : vector<8x64xf32> to vector<8x32xf32>
    %396 = vector.extract_strided_slice %387 {offsets = [0, 64], sizes = [8, 32], strides = [1, 1]} : vector<8x128xf32> to vector<8x32xf32>
    %397 = math.tanh %396 : vector<8x32xf32>
    %398 = vector.extract_strided_slice %387 {offsets = [0, 96], sizes = [8, 32], strides = [1, 1]} : vector<8x128xf32> to vector<8x32xf32>
    %399 = arith.negf %398 : vector<8x32xf32>
    %400 = math.exp %399 : vector<8x32xf32>
    %cst_51 = arith.constant 1.000000e+00 : f32
    %401 = vector.broadcast %cst_51 : f32 to vector<8x32xf32>
    %402 = arith.addf %401, %400 : vector<8x32xf32>
    %403 = arith.divf %401, %402 : vector<8x32xf32>
    %404 = arith.mulf %395, %380 : vector<8x32xf32>
    %405 = arith.mulf %394, %397 : vector<8x32xf32>
    %406 = arith.addf %404, %405 : vector<8x32xf32>
    %407 = math.tanh %406 : vector<8x32xf32>
    %408 = arith.mulf %403, %407 : vector<8x32xf32>
    %c0_52 = arith.constant 0 : index
    %c0_53 = arith.constant 0 : index
    %409 = vector.load %arg5[%c0_52, %c0_53] : memref<32x128xf32, #tpu.memory_space<vmem>>, vector<32x128xf32>
    %cst_54 = arith.constant dense<0.000000e+00> : vector<8x128xf32>
    %410 = tpu.matmul %408, %409, %cst_54 {dimension_numbers = #tpu.dot_dimension_numbers<[1], [0], [0], [1], [0, 0, 1, 1], [], []>, precision = #tpu.contract_precision<fp32>} : vector<8x32xf32>, vector<32x128xf32>, vector<8x128xf32> -> vector<8x128xf32>
    %c0_55 = arith.constant 0 : index
    %c0_56 = arith.constant 0 : index
    %411 = vector.load %arg6[%c0_55, %c0_56] : memref<1x128xf32, #tpu.memory_space<vmem>>, vector<1x128xf32>
    %412 = vector.broadcast %411 : vector<1x128xf32> to vector<8x128xf32>
    %413 = arith.addf %410, %412 : vector<8x128xf32>
    %c0_57 = arith.constant 0 : index
    %c0_58 = arith.constant 0 : index
    %414 = vector.load %arg7[%c0_57, %c0_58] : memref<8x128xf32, #tpu.memory_space<vmem>>, vector<8x128xf32>
    tpu.vector_store %arg7[%c0_57, %c0_58], %413 {strides = array<i32>} : memref<8x128xf32, #tpu.memory_space<vmem>>, vector<8x128xf32>,
    return
  }
}

</mosaic_0001>

<llo_original>
// kernel: tpu_custom_call.1
$region0: #{tpu_custom_call.1}
  #allocation0 [shape = 'u32[]', space=smem, size = 0x4, offset = 0x4, fixed_abs, tag = 'smem constant byte address 0x4 - core index']
  #allocation1 [shape = 'u32[144,128]{1,0:T(1,128)}', space=vmem, size = 0x12000, scoped, tag = 'internal scratch']
  %s0 = inlined_call_operand.vmem [shape: f32[64,4], index: 0, kind: input, shape index: {}]
  %s1 = inlined_call_operand.vmem [shape: f32[4,128], index: 1, kind: input, shape index: {}]
  %s2 = inlined_call_operand.vmem [shape: f32[1,128], index: 2, kind: input, shape index: {}]
  %s3 = inlined_call_operand.hbm [shape: f32[64,256], index: 3, kind: input, shape index: {}]
  %s4 = inlined_call_operand.vmem [shape: f32[1,128], index: 4, kind: input, shape index: {}]
  %s5 = inlined_call_operand.vmem [shape: f32[32,128], index: 5, kind: input, shape index: {}]
  %s6 = inlined_call_operand.vmem [shape: f32[1,128], index: 6, kind: input, shape index: {}]
  %s7 = inlined_call_operand.hbm [shape: f32[8,128], index: 7, kind: output, shape index: {}]
  %s8 = sld [smem:[#allocation0]]
  $region42: #{tpu_custom_call.1} parent=0
    _
  %s10 = ssub.s32 1, %s8
  %s11 = scalar_select 0, %s10, %s8
  $region1: #{tpu_custom_call.1} parent=0
    #allocation2 [shape = 'u8[65536]{0}', space=vmem, size = 0x10000, scoped, tag = 'input window, operand 3, single buffered']
    #allocation3 [shape = 's32[1]{0}', space=sflag, size = 0x4, scoped, tag = 'scoped memory for tpu_custom_call.1']
    #allocation4 [shape = 's32[1]{0}', space=sflag, size = 0x4, scoped, tag = 'scoped memory for tpu_custom_call.1']
    #allocation5 [shape = 'u8[4096]{0}', space=vmem, size = 0x1000, scoped, tag = 'output window, operand 0, single buffered']
    %12 = vsyncpa [#allocation3], 0
    %13 = vsyncpa [#allocation4], 0
    // Predicated region
    $region2: #{tpu_custom_call.1} parent=1 // pred_check
      _
    $region3: #{tpu_custom_call.1} parent=1 // pred_check_branch
      %15 = sbr.rel (0) target = $region5
    $region4: #{tpu_custom_call.1} parent=1 // pred_region
      _
    $region5: #{tpu_custom_call.1} parent=1 // pred_fallthru
      _
    // Predicated region
    $region6: #{tpu_custom_call.1} parent=1 // pred_check
      _
    $region7: #{tpu_custom_call.1} parent=1 // pred_check_branch
      %17 = sbr.rel (0) target = $region9
    $region8: #{tpu_custom_call.1} parent=1 // pred_region
      _
    $region9: #{tpu_custom_call.1} parent=1 // pred_fallthru
      _
    // Predicated region
    $region10: #{tpu_custom_call.1} parent=1 // pred_check
      _
    $region11: #{tpu_custom_call.1} parent=1 // pred_check_branch
      %19 = sbr.rel (0) target = $region13
    $region12: #{tpu_custom_call.1} parent=1 // pred_region
      _
    $region13: #{tpu_custom_call.1} parent=1 // pred_fallthru
      _
    // Predicated region
    $region14: #{tpu_custom_call.1} parent=1 // pred_check
      _
    $region15: #{tpu_custom_call.1} parent=1 // pred_check_branch
      %21 = sbr.rel (0) target = $region17
    $region16: #{tpu_custom_call.1} parent=1 // pred_region
      %s23 = ssub.s32 2048, 2048
      %24 = vsyncadd [#allocation3], %s23
      %s25 = sshll.u32 [#allocation2], 4
      %s26 = int_to_ptr.vmem [resolvable:$true] %s25
      %31 = dma.hbm_to_vmem [thread:$0]  %s3, 2048, %s26, [#allocation3], 256, 256, 16
    $region17: #{tpu_custom_call.1} parent=1 // pred_fallthru
      _
    // Predicated region
    $region18: #{tpu_custom_call.1} parent=1 // pred_check
      _
    $region19: #{tpu_custom_call.1} parent=1 // pred_check_branch
      %33 = sbr.rel (0) target = $region21
    $region20: #{tpu_custom_call.1} parent=1 // pred_region
      _
    $region21: #{tpu_custom_call.1} parent=1 // pred_fallthru
      _
    // Predicated region
    $region22: #{tpu_custom_call.1} parent=1 // pred_check
      _
    $region23: #{tpu_custom_call.1} parent=1 // pred_check_branch
      %35 = sbr.rel (0) target = $region25
    $region24: #{tpu_custom_call.1} parent=1 // pred_region
      _
    $region25: #{tpu_custom_call.1} parent=1 // pred_fallthru
      _
    // Predicated region
    $region26: #{tpu_custom_call.1} parent=1 // pred_check
      _
    $region27: #{tpu_custom_call.1} parent=1 // pred_check_branch
      %37 = sbr.rel (0) target = $region29
    $region28: #{tpu_custom_call.1} parent=1 // pred_region
      _
    $region29: #{tpu_custom_call.1} parent=1 // pred_fallthru
      _
    // Predicated region
    $region30: #{tpu_custom_call.1} parent=1 // pred_check
      _
    $region31: #{tpu_custom_call.1} parent=1 // pred_check_branch
      %39 = sbr.rel (0) target = $region33
    $region32: #{tpu_custom_call.1} parent=1 // pred_region
      %40 = dma.done [#allocation3], 2048
    $region33: #{tpu_custom_call.1} parent=1 // pred_fallthru
      _
    %v41 = vld [vmem:[%s0] sm:$0xff]
    %v42 = vld [vmem:[%s0 + $0x8] sm:$0xff]
    %v43 = vld [vmem:[%s0 + $0x10] sm:$0xff]
    %v44 = vld [vmem:[%s0 + $0x18] sm:$0xff]
    %v45 = vld [vmem:[%s0 + $0x20] sm:$0xff]
    %v46 = vld [vmem:[%s0 + $0x28] sm:$0xff]
    %v47 = vld [vmem:[%s0 + $0x30] sm:$0xff]
    %v48 = vld [vmem:[%s0 + $0x38] sm:$0xff]
    %v49 = vld [vmem:[%s1] sm:$0xf]
    %v50 = vld [vmem:[%s2] sm:$0x1]
    %v52 = vlaneseq
    %v53 = vshrl.u32 %v52, 7
    %v54 = vsub.s32 0, %v53
    %v55 = vrot.slane %v50, %v54
    %vm57 = vcmask 31744
    %v59 = vsel %vm57, %v41, 0
    %v62 = vsel %vm57, %v42, 0
    %v65 = vsel %vm57, %v43, 0
    %v68 = vsel %vm57, %v44, 0
    %v71 = vsel %vm57, %v45, 0
    %v74 = vsel %vm57, %v46, 0
    %v77 = vsel %vm57, %v47, 0
    %v80 = vsel %vm57, %v48, 0
    %vm82 = vcmask 1043456
    %v84 = vsel %vm82, %v49, 0
    %86 = vmatprep.subr.mxu0 0.0
    %87 = vmatpush1.msra.mxu0 0.0
    %88 = vmatprep.subr.mxu0 0.0
    %89 = vmatpush1.msra.mxu0 0.0
    %90 = vmatprep.subr.mxu0 0.0
    %91 = vmatpush1.msra.mxu0 0.0
    %92 = vmatprep.subr.mxu0 0.0
    %93 = vmatpush1.msra.mxu0 0.0
    %94 = vmatprep.subr.mxu0 0.0
    %95 = vmatpush1.msra.mxu0 0.0
    %96 = vmatprep.subr.mxu0 0.0
    %97 = vmatpush1.msra.mxu0 0.0
    %98 = vmatprep.subr.mxu0 0.0
    %99 = vmatpush1.msra.mxu0 0.0
    %100 = vmatprep.subr.mxu0 0.0
    %101 = vmatpush1.msra.mxu0 0.0
    %102 = vmatprep.subr.mxu0 0.0
    %103 = vmatpush1.msra.mxu0 0.0
    %104 = vmatprep.subr.mxu0 0.0
    %105 = vmatpush1.msra.mxu0 0.0
    %106 = vmatprep.subr.mxu0 0.0
    %107 = vmatpush1.msra.mxu0 0.0
    %108 = vmatprep.subr.mxu0 0.0
    %109 = vmatpush1.msra.mxu0 0.0
    %110 = vmatprep.subr.mxu0 0.0
    %111 = vmatpush1.msra.mxu0 0.0
    %112 = vmatprep.subr.mxu0 0.0
    %113 = vmatpush1.msra.mxu0 0.0
    %114 = vmatprep.subr.mxu0 0.0
    %115 = vmatpush1.msra.mxu0 0.0
    %116 = vmatprep.subr.mxu0 0.0
    %v117 = vand.u32 %v84, 4294901760
    %118 = vmatpush1.msra.mxu0 %v117
    %119 = vmatprep.subr.mxu0 0.0
    %120 = vmatpush2.msra.mxu0 0.0
    %121 = vmatprep.subr.mxu0 0.0
    %122 = vmatpush2.msra.mxu0 0.0
    %123 = vmatprep.subr.mxu0 0.0
    %124 = vmatpush2.msra.mxu0 0.0
    %125 = vmatprep.subr.mxu0 0.0
    %126 = vmatpush2.msra.mxu0 0.0
    %127 = vmatprep.subr.mxu0 0.0
    %128 = vmatpush2.msra.mxu0 0.0
    %129 = vmatprep.subr.mxu0 0.0
    %130 = vmatpush2.msra.mxu0 0.0
    %131 = vmatprep.subr.mxu0 0.0
    %132 = vmatpush2.msra.mxu0 0.0
    %133 = vmatprep.subr.mxu0 0.0
    %134 = vmatpush2.msra.mxu0 0.0
    %135 = vmatprep.subr.mxu0 0.0
    %136 = vmatpush2.msra.mxu0 0.0
    %137 = vmatprep.subr.mxu0 0.0
    %138 = vmatpush2.msra.mxu0 0.0
    %139 = vmatprep.subr.mxu0 0.0
    %140 = vmatpush2.msra.mxu0 0.0
    %141 = vmatprep.subr.mxu0 0.0
    %142 = vmatpush2.msra.mxu0 0.0
    %143 = vmatprep.subr.mxu0 0.0
    %144 = vmatpush2.msra.mxu0 0.0
    %145 = vmatprep.subr.mxu0 0.0
    %146 = vmatpush2.msra.mxu0 0.0
    %147 = vmatprep.subr.mxu0 0.0
    %148 = vmatpush2.msra.mxu0 0.0
    %149 = vmatprep.subr.mxu0 0.0
    %150 = vmatpush2.msra.mxu0 0.0
    %151 = vmatprep.mubr.f32.mxu0 0.0
    %v152 = vand.u32 %v59, 4294901760
    %v153 = vsub.f32 %v59, %v152
    %v154 = vand.u32 %v153, 4294901760
    %v155 = vsub.f32 %v153, %v154
    %v156 = vand.u32 %v155, 4294901760
    %157 = vmatmul.mubr.f32.gmra.mxu0 %v156
    %v158 = vpop.f32.mrf.mxu0
    %v159 = vadd.f32 %v55, %v158
    %v160 = vpop.f32.mrf.mxu0
    %161 = vmatprep.mubr.f32.mxu0 0.0
    %v162 = vand.u32 %v62, 4294901760
    %v163 = vsub.f32 %v62, %v162
    %v164 = vand.u32 %v163, 4294901760
    %v165 = vsub.f32 %v163, %v164
    %v166 = vand.u32 %v165, 4294901760
    %167 = vmatmul.mubr.f32.gmra.mxu0 %v166
    %v168 = vpop.f32.mrf.mxu0
    %v169 = vadd.f32 %v55, %v168
    %v170 = vpop.f32.mrf.mxu0
    %171 = vmatprep.mubr.f32.mxu0 0.0
    %v172 = vand.u32 %v65, 4294901760
    %v173 = vsub.f32 %v65, %v172
    %v174 = vand.u32 %v173, 4294901760
    %v175 = vsub.f32 %v173, %v174
    %v176 = vand.u32 %v175, 4294901760
    %177 = vmatmul.mubr.f32.gmra.mxu0 %v176
    %v178 = vpop.f32.mrf.mxu0
    %v179 = vadd.f32 %v55, %v178
    %v180 = vpop.f32.mrf.mxu0
    %181 = vmatprep.mubr.f32.mxu0 0.0
    %v182 = vand.u32 %v68, 4294901760
    %v183 = vsub.f32 %v68, %v182
    %v184 = vand.u32 %v183, 4294901760
    %v185 = vsub.f32 %v183, %v184
    %v186 = vand.u32 %v185, 4294901760
    %187 = vmatmul.mubr.f32.gmra.mxu0 %v186
    %v188 = vpop.f32.mrf.mxu0
    %v189 = vadd.f32 %v55, %v188
    %v190 = vpop.f32.mrf.mxu0
    %191 = vmatprep.mubr.f32.mxu0 0.0
    %v192 = vand.u32 %v71, 4294901760
    %v193 = vsub.f32 %v71, %v192
    %v194 = vand.u32 %v193, 4294901760
    %v195 = vsub.f32 %v193, %v194
    %v196 = vand.u32 %v195, 4294901760
    %197 = vmatmul.mubr.f32.gmra.mxu0 %v196
    %v198 = vpop.f32.mrf.mxu0
    %v199 = vadd.f32 %v55, %v198
    %v200 = vpop.f32.mrf.mxu0
    %201 = vmatprep.mubr.f32.mxu0 0.0
    %v202 = vand.u32 %v74, 4294901760
    %v203 = vsub.f32 %v74, %v202
    %v204 = vand.u32 %v203, 4294901760
    %v205 = vsub.f32 %v203, %v204
    %v206 = vand.u32 %v205, 4294901760
    %207 = vmatmul.mubr.f32.gmra.mxu0 %v206
    %v208 = vpop.f32.mrf.mxu0
    %v209 = vadd.f32 %v55, %v208
    %v210 = vpop.f32.mrf.mxu0
    %211 = vmatprep.mubr.f32.mxu0 0.0
    %v212 = vand.u32 %v77, 4294901760
    %v213 = vsub.f32 %v77, %v212
    %v214 = vand.u32 %v213, 4294901760
    %v215 = vsub.f32 %v213, %v214
    %v216 = vand.u32 %v215, 4294901760
    %217 = vmatmul.mubr.f32.gmra.mxu0 %v216
    %v218 = vpop.f32.mrf.mxu0
    %v219 = vadd.f32 %v55, %v218
    %v220 = vpop.f32.mrf.mxu0
    %221 = vmatprep.mubr.f32.mxu0 0.0
    %v222 = vand.u32 %v80, 4294901760
    %v223 = vsub.f32 %v80, %v222
    %v224 = vand.u32 %v223, 4294901760
    %v225 = vsub.f32 %v223, %v224
    %v226 = vand.u32 %v225, 4294901760
    %227 = vmatmul.mubr.f32.gmra.mxu0 %v226
    %v228 = vpop.f32.mrf.mxu0
    %v229 = vadd.f32 %v55, %v228
    %v230 = vpop.f32.mrf.mxu0
    %231 = vdwg.mxu0
    %232 = vmatprep.subr.mxu0 0.0
    %233 = vmatpush1.msra.mxu0 0.0
    %234 = vmatprep.subr.mxu0 0.0
    %235 = vmatpush1.msra.mxu0 0.0
    %236 = vmatprep.subr.mxu0 0.0
    %237 = vmatpush1.msra.mxu0 0.0
    %238 = vmatprep.subr.mxu0 0.0
    %239 = vmatpush1.msra.mxu0 0.0
    %240 = vmatprep.subr.mxu0 0.0
    %241 = vmatpush1.msra.mxu0 0.0
    %242 = vmatprep.subr.mxu0 0.0
    %243 = vmatpush1.msra.mxu0 0.0
    %244 = vmatprep.subr.mxu0 0.0
    %245 = vmatpush1.msra.mxu0 0.0
    %246 = vmatprep.subr.mxu0 0.0
    %247 = vmatpush1.msra.mxu0 0.0
    %248 = vmatprep.subr.mxu0 0.0
    %249 = vmatpush1.msra.mxu0 0.0
    %250 = vmatprep.subr.mxu0 0.0
    %251 = vmatpush1.msra.mxu0 0.0
    %252 = vmatprep.subr.mxu0 0.0
    %253 = vmatpush1.msra.mxu0 0.0
    %254 = vmatprep.subr.mxu0 0.0
    %255 = vmatpush1.msra.mxu0 0.0
    %256 = vmatprep.subr.mxu0 0.0
    %257 = vmatpush1.msra.mxu0 0.0
    %258 = vmatprep.subr.mxu0 0.0
    %259 = vmatpush1.msra.mxu0 0.0
    %260 = vmatprep.subr.mxu0 0.0
    %261 = vmatpush1.msra.mxu0 0.0
    %262 = vmatprep.subr.mxu0 0.0
    %v263 = vand.u32 %v84, 4294901760
    %v264 = vsub.f32 %v84, %v263
    %v265 = vand.u32 %v264, 4294901760
    %v266 = vsub.f32 %v264, %v265
    %v267 = vand.u32 %v266, 4294901760
    %268 = vmatpush1.msra.mxu0 %v267
    %269 = vmatprep.subr.mxu0 0.0
    %270 = vmatpush2.msra.mxu0 0.0
    %271 = vmatprep.subr.mxu0 0.0
    %272 = vmatpush2.msra.mxu0 0.0
    %273 = vmatprep.subr.mxu0 0.0
    %274 = vmatpush2.msra.mxu0 0.0
    %275 = vmatprep.subr.mxu0 0.0
    %276 = vmatpush2.msra.mxu0 0.0
    %277 = vmatprep.subr.mxu0 0.0
    %278 = vmatpush2.msra.mxu0 0.0
    %279 = vmatprep.subr.mxu0 0.0
    %280 = vmatpush2.msra.mxu0 0.0
    %281 = vmatprep.subr.mxu0 0.0
    %282 = vmatpush2.msra.mxu0 0.0
    %283 = vmatprep.subr.mxu0 0.0
    %284 = vmatpush2.msra.mxu0 0.0
    %285 = vmatprep.subr.mxu0 0.0
    %286 = vmatpush2.msra.mxu0 0.0
    %287 = vmatprep.subr.mxu0 0.0
    %288 = vmatpush2.msra.mxu0 0.0
    %289 = vmatprep.subr.mxu0 0.0
    %290 = vmatpush2.msra.mxu0 0.0
    %291 = vmatprep.subr.mxu0 0.0
    %292 = vmatpush2.msra.mxu0 0.0
    %293 = vmatprep.subr.mxu0 0.0
    %294 = vmatpush2.msra.mxu0 0.0
    %295 = vmatprep.subr.mxu0 0.0
    %296 = vmatpush2.msra.mxu0 0.0
    %297 = vmatprep.subr.mxu0 0.0
    %298 = vmatpush2.msra.mxu0 0.0
    %299 = vmatprep.subr.mxu0 0.0
    %300 = vmatpush2.msra.mxu0 0.0
    %301 = vmatprep.mubr.f32.mxu0 0.0
    %v302 = vand.u32 %v59, 4294901760
    %303 = vmatmul.mubr.f32.gmra.mxu0 %v302
    %v304 = vpop.f32.mrf.mxu0
    %v305 = vadd.f32 %v159, %v304
    %v306 = vpop.f32.mrf.mxu0
    %307 = vmatprep.mubr.f32.mxu0 0.0
    %v308 = vand.u32 %v62, 4294901760
    %309 = vmatmul.mubr.f32.gmra.mxu0 %v308
    %v310 = vpop.f32.mrf.mxu0
    %v311 = vadd.f32 %v169, %v310
    %v312 = vpop.f32.mrf.mxu0
    %313 = vmatprep.mubr.f32.mxu0 0.0
    %v314 = vand.u32 %v65, 4294901760
    %315 = vmatmul.mubr.f32.gmra.mxu0 %v314
    %v316 = vpop.f32.mrf.mxu0
    %v317 = vadd.f32 %v179, %v316
    %v318 = vpop.f32.mrf.mxu0
    %319 = vmatprep.mubr.f32.mxu0 0.0
    %v320 = vand.u32 %v68, 4294901760
    %321 = vmatmul.mubr.f32.gmra.mxu0 %v320
    %v322 = vpop.f32.mrf.mxu0
    %v323 = vadd.f32 %v189, %v322
    %v324 = vpop.f32.mrf.mxu0
    %325 = vmatprep.mubr.f32.mxu0 0.0
    %v326 = vand.u32 %v71, 4294901760
    %327 = vmatmul.mubr.f32.gmra.mxu0 %v326
    %v328 = vpop.f32.mrf.mxu0
    %v329 = vadd.f32 %v199, %v328
    %v330 = vpop.f32.mrf.mxu0
    %331 = vmatprep.mubr.f32.mxu0 0.0
    %v332 = vand.u32 %v74, 4294901760
    %333 = vmatmul.mubr.f32.gmra.mxu0 %v332
    %v334 = vpop.f32.mrf.mxu0
    %v335 = vadd.f32 %v209, %v334
    %v336 = vpop.f32.mrf.mxu0
    %337 = vmatprep.mubr.f32.mxu0 0.0
    %v338 = vand.u32 %v77, 4294901760
    %339 = vmatmul.mubr.f32.gmra.mxu0 %v338
    %v340 = vpop.f32.mrf.mxu0
    %v341 = vadd.f32 %v219, %v340
    %v342 = vpop.f32.mrf.mxu0
    %343 = vmatprep.mubr.f32.mxu0 0.0
    %v344 = vand.u32 %v80, 4294901760
    %345 = vmatmul.mubr.f32.gmra.mxu0 %v344
    %v346 = vpop.f32.mrf.mxu0
    %v347 = vadd.f32 %v229, %v346
    %v348 = vpop.f32.mrf.mxu0
    %349 = vdwg.mxu0
    %350 = vmatprep.subr.mxu0 0.0
    %351 = vmatpush1.msra.mxu0 0.0
    %352 = vmatprep.subr.mxu0 0.0
    %353 = vmatpush1.msra.mxu0 0.0
    %354 = vmatprep.subr.mxu0 0.0
    %355 = vmatpush1.msra.mxu0 0.0
    %356 = vmatprep.subr.mxu0 0.0
    %357 = vmatpush1.msra.mxu0 0.0
    %358 = vmatprep.subr.mxu0 0.0
    %359 = vmatpush1.msra.mxu0 0.0
    %360 = vmatprep.subr.mxu0 0.0
    %361 = vmatpush1.msra.mxu0 0.0
    %362 = vmatprep.subr.mxu0 0.0
    %363 = vmatpush1.msra.mxu0 0.0
    %364 = vmatprep.subr.mxu0 0.0
    %365 = vmatpush1.msra.mxu0 0.0
    %366 = vmatprep.subr.mxu0 0.0
    %367 = vmatpush1.msra.mxu0 0.0
    %368 = vmatprep.subr.mxu0 0.0
    %369 = vmatpush1.msra.mxu0 0.0
    %370 = vmatprep.subr.mxu0 0.0
    %371 = vmatpush1.msra.mxu0 0.0
    %372 = vmatprep.subr.mxu0 0.0
    %373 = vmatpush1.msra.mxu0 0.0
    %374 = vmatprep.subr.mxu0 0.0
    %375 = vmatpush1.msra.mxu0 0.0
    %376 = vmatprep.subr.mxu0 0.0
    %377 = vmatpush1.msra.mxu0 0.0
    %378 = vmatprep.subr.mxu0 0.0
    %379 = vmatpush1.msra.mxu0 0.0
    %380 = vmatprep.subr.mxu0 0.0
    %v381 = vand.u32 %v84, 4294901760
    %v382 = vsub.f32 %v84, %v381
    %383 = vmatpush1.msra.mxu0 %v382
    %384 = vmatprep.subr.mxu0 0.0
    %385 = vmatpush2.msra.mxu0 0.0
    %386 = vmatprep.subr.mxu0 0.0
    %387 = vmatpush2.msra.mxu0 0.0
    %388 = vmatprep.subr.mxu0 0.0
    %389 = vmatpush2.msra.mxu0 0.0
    %390 = vmatprep.subr.mxu0 0.0
    %391 = vmatpush2.msra.mxu0 0.0
    %392 = vmatprep.subr.mxu0 0.0
    %393 = vmatpush2.msra.mxu0 0.0
    %394 = vmatprep.subr.mxu0 0.0
    %395 = vmatpush2.msra.mxu0 0.0
    %396 = vmatprep.subr.mxu0 0.0
    %397 = vmatpush2.msra.mxu0 0.0
    %398 = vmatprep.subr.mxu0 0.0
    %399 = vmatpush2.msra.mxu0 0.0
    %400 = vmatprep.subr.mxu0 0.0
    %401 = vmatpush2.msra.mxu0 0.0
    %402 = vmatprep.subr.mxu0 0.0
    %403 = vmatpush2.msra.mxu0 0.0
    %404 = vmatprep.subr.mxu0 0.0
    %405 = vmatpush2.msra.mxu0 0.0
    %406 = vmatprep.subr.mxu0 0.0
    %407 = vmatpush2.msra.mxu0 0.0
    %408 = vmatprep.subr.mxu0 0.0
    %409 = vmatpush2.msra.mxu0 0.0
    %410 = vmatprep.subr.mxu0 0.0
    %411 = vmatpush2.msra.mxu0 0.0
    %412 = vmatprep.subr.mxu0 0.0
    %413 = vmatpush2.msra.mxu0 0.0
    %414 = vmatprep.subr.mxu0 0.0
    %415 = vmatpush2.msra.mxu0 0.0
    %416 = vmatprep.mubr.f32.mxu0 0.0
    %v417 = vand.u32 %v59, 4294901760
    %v418 = vsub.f32 %v59, %v417
    %419 = vmatmul.mubr.f32.gmra.mxu0 %v418
    %v420 = vpop.f32.mrf.mxu0
    %v421 = vadd.f32 %v305, %v420
    %v422 = vpop.f32.mrf.mxu0
    %423 = vmatprep.mubr.f32.mxu0 0.0
    %v424 = vand.u32 %v62, 4294901760
    %v425 = vsub.f32 %v62, %v424
    %426 = vmatmul.mubr.f32.gmra.mxu0 %v425
    %v427 = vpop.f32.mrf.mxu0
    %v428 = vadd.f32 %v311, %v427
    %v429 = vpop.f32.mrf.mxu0
    %430 = vmatprep.mubr.f32.mxu0 0.0
    %v431 = vand.u32 %v65, 4294901760
    %v432 = vsub.f32 %v65, %v431
    %433 = vmatmul.mubr.f32.gmra.mxu0 %v432
    %v434 = vpop.f32.mrf.mxu0
    %v435 = vadd.f32 %v317, %v434
    %v436 = vpop.f32.mrf.mxu0
    %437 = vmatprep.mubr.f32.mxu0 0.0
    %v438 = vand.u32 %v68, 4294901760
    %v439 = vsub.f32 %v68, %v438
    %440 = vmatmul.mubr.f32.gmra.mxu0 %v439
    %v441 = vpop.f32.mrf.mxu0
    %v442 = vadd.f32 %v323, %v441
    %v443 = vpop.f32.mrf.mxu0
    %444 = vmatprep.mubr.f32.mxu0 0.0
    %v445 = vand.u32 %v71, 4294901760
    %v446 = vsub.f32 %v71, %v445
    %447 = vmatmul.mubr.f32.gmra.mxu0 %v446
    %v448 = vpop.f32.mrf.mxu0
    %v449 = vadd.f32 %v329, %v448
    %v450 = vpop.f32.mrf.mxu0
    %451 = vmatprep.mubr.f32.mxu0 0.0
    %v452 = vand.u32 %v74, 4294901760
    %v453 = vsub.f32 %v74, %v452
    %454 = vmatmul.mubr.f32.gmra.mxu0 %v453
    %v455 = vpop.f32.mrf.mxu0
    %v456 = vadd.f32 %v335, %v455
    %v457 = vpop.f32.mrf.mxu0
    %458 = vmatprep.mubr.f32.mxu0 0.0
    %v459 = vand.u32 %v77, 4294901760
    %v460 = vsub.f32 %v77, %v459
    %461 = vmatmul.mubr.f32.gmra.mxu0 %v460
    %v462 = vpop.f32.mrf.mxu0
    %v463 = vadd.f32 %v341, %v462
    %v464 = vpop.f32.mrf.mxu0
    %465 = vmatprep.mubr.f32.mxu0 0.0
    %v466 = vand.u32 %v80, 4294901760
    %v467 = vsub.f32 %v80, %v466
    %468 = vmatmul.mubr.f32.gmra.mxu0 %v467
    %v469 = vpop.f32.mrf.mxu0
    %v470 = vadd.f32 %v347, %v469
    %v471 = vpop.f32.mrf.mxu0
    %472 = vdwg.mxu0
    %473 = vmatprep.subr.mxu0 0.0
    %474 = vmatpush1.msra.mxu0 0.0
    %475 = vmatprep.subr.mxu0 0.0
    %476 = vmatpush1.msra.mxu0 0.0
    %477 = vmatprep.subr.mxu0 0.0
    %478 = vmatpush1.msra.mxu0 0.0
    %479 = vmatprep.subr.mxu0 0.0
    %480 = vmatpush1.msra.mxu0 0.0
    %481 = vmatprep.subr.mxu0 0.0
    %482 = vmatpush1.msra.mxu0 0.0
    %483 = vmatprep.subr.mxu0 0.0
    %484 = vmatpush1.msra.mxu0 0.0
    %485 = vmatprep.subr.mxu0 0.0
    %486 = vmatpush1.msra.mxu0 0.0
    %487 = vmatprep.subr.mxu0 0.0
    %488 = vmatpush1.msra.mxu0 0.0
    %489 = vmatprep.subr.mxu0 0.0
    %490 = vmatpush1.msra.mxu0 0.0
    %491 = vmatprep.subr.mxu0 0.0
    %492 = vmatpush1.msra.mxu0 0.0
    %493 = vmatprep.subr.mxu0 0.0
    %494 = vmatpush1.msra.mxu0 0.0
    %495 = vmatprep.subr.mxu0 0.0
    %496 = vmatpush1.msra.mxu0 0.0
    %497 = vmatprep.subr.mxu0 0.0
    %498 = vmatpush1.msra.mxu0 0.0
    %499 = vmatprep.subr.mxu0 0.0
    %500 = vmatpush1.msra.mxu0 0.0
    %501 = vmatprep.subr.mxu0 0.0
    %502 = vmatpush1.msra.mxu0 0.0
    %503 = vmatprep.subr.mxu0 0.0
    %v504 = vand.u32 %v84, 4294901760
    %505 = vmatpush1.msra.mxu0 %v504
    %506 = vmatprep.subr.mxu0 0.0
    %507 = vmatpush2.msra.mxu0 0.0
    %508 = vmatprep.subr.mxu0 0.0
    %509 = vmatpush2.msra.mxu0 0.0
    %510 = vmatprep.subr.mxu0 0.0
    %511 = vmatpush2.msra.mxu0 0.0
    %512 = vmatprep.subr.mxu0 0.0
    %513 = vmatpush2.msra.mxu0 0.0
    %514 = vmatprep.subr.mxu0 0.0
    %515 = vmatpush2.msra.mxu0 0.0
    %516 = vmatprep.subr.mxu0 0.0
    %517 = vmatpush2.msra.mxu0 0.0
    %518 = vmatprep.subr.mxu0 0.0
    %519 = vmatpush2.msra.mxu0 0.0
    %520 = vmatprep.subr.mxu0 0.0
    %521 = vmatpush2.msra.mxu0 0.0
    %522 = vmatprep.subr.mxu0 0.0
    %523 = vmatpush2.msra.mxu0 0.0
    %524 = vmatprep.subr.mxu0 0.0
    %525 = vmatpush2.msra.mxu0 0.0
    %526 = vmatprep.subr.mxu0 0.0
    %527 = vmatpush2.msra.mxu0 0.0
    %528 = vmatprep.subr.mxu0 0.0
    %529 = vmatpush2.msra.mxu0 0.0
    %530 = vmatprep.subr.mxu0 0.0
    %531 = vmatpush2.msra.mxu0 0.0
    %532 = vmatprep.subr.mxu0 0.0
    %533 = vmatpush2.msra.mxu0 0.0
    %534 = vmatprep.subr.mxu0 0.0
    %535 = vmatpush2.msra.mxu0 0.0
    %536 = vmatprep.subr.mxu0 0.0
    %537 = vmatpush2.msra.mxu0 0.0
    %538 = vmatprep.mubr.f32.mxu0 0.0
    %v539 = vand.u32 %v59, 4294901760
    %v540 = vsub.f32 %v59, %v539
    %v541 = vand.u32 %v540, 4294901760
    %542 = vmatmul.mubr.f32.gmra.mxu0 %v541
    %v543 = vpop.f32.mrf.mxu0
    %v544 = vadd.f32 %v421, %v543
    %v545 = vpop.f32.mrf.mxu0
    %546 = vmatprep.mubr.f32.mxu0 0.0
    %v547 = vand.u32 %v62, 4294901760
    %v548 = vsub.f32 %v62, %v547
    %v549 = vand.u32 %v548, 4294901760
    %550 = vmatmul.mubr.f32.gmra.mxu0 %v549
    %v551 = vpop.f32.mrf.mxu0
    %v552 = vadd.f32 %v428, %v551
    %v553 = vpop.f32.mrf.mxu0
    %554 = vmatprep.mubr.f32.mxu0 0.0
    %v555 = vand.u32 %v65, 4294901760
    %v556 = vsub.f32 %v65, %v555
    %v557 = vand.u32 %v556, 4294901760
    %558 = vmatmul.mubr.f32.gmra.mxu0 %v557
    %v559 = vpop.f32.mrf.mxu0
    %v560 = vadd.f32 %v435, %v559
    %v561 = vpop.f32.mrf.mxu0
    %562 = vmatprep.mubr.f32.mxu0 0.0
    %v563 = vand.u32 %v68, 4294901760
    %v564 = vsub.f32 %v68, %v563
    %v565 = vand.u32 %v564, 4294901760
    %566 = vmatmul.mubr.f32.gmra.mxu0 %v565
    %v567 = vpop.f32.mrf.mxu0
    %v568 = vadd.f32 %v442, %v567
    %v569 = vpop.f32.mrf.mxu0
    %570 = vmatprep.mubr.f32.mxu0 0.0
    %v571 = vand.u32 %v71, 4294901760
    %v572 = vsub.f32 %v71, %v571
    %v573 = vand.u32 %v572, 4294901760
    %574 = vmatmul.mubr.f32.gmra.mxu0 %v573
    %v575 = vpop.f32.mrf.mxu0
    %v576 = vadd.f32 %v449, %v575
    %v577 = vpop.f32.mrf.mxu0
    %578 = vmatprep.mubr.f32.mxu0 0.0
    %v579 = vand.u32 %v74, 4294901760
    %v580 = vsub.f32 %v74, %v579
    %v581 = vand.u32 %v580, 4294901760
    %582 = vmatmul.mubr.f32.gmra.mxu0 %v581
    %v583 = vpop.f32.mrf.mxu0
    %v584 = vadd.f32 %v456, %v583
    %v585 = vpop.f32.mrf.mxu0
    %586 = vmatprep.mubr.f32.mxu0 0.0
    %v587 = vand.u32 %v77, 4294901760
    %v588 = vsub.f32 %v77, %v587
    %v589 = vand.u32 %v588, 4294901760
    %590 = vmatmul.mubr.f32.gmra.mxu0 %v589
    %v591 = vpop.f32.mrf.mxu0
    %v592 = vadd.f32 %v463, %v591
    %v593 = vpop.f32.mrf.mxu0
    %594 = vmatprep.mubr.f32.mxu0 0.0
    %v595 = vand.u32 %v80, 4294901760
    %v596 = vsub.f32 %v80, %v595
    %v597 = vand.u32 %v596, 4294901760
    %598 = vmatmul.mubr.f32.gmra.mxu0 %v597
    %v599 = vpop.f32.mrf.mxu0
    %v600 = vadd.f32 %v470, %v599
    %v601 = vpop.f32.mrf.mxu0
    %602 = vdwg.mxu0
    %603 = vmatprep.subr.mxu0 0.0
    %604 = vmatpush1.msra.mxu0 0.0
    %605 = vmatprep.subr.mxu0 0.0
    %606 = vmatpush1.msra.mxu0 0.0
    %607 = vmatprep.subr.mxu0 0.0
    %608 = vmatpush1.msra.mxu0 0.0
    %609 = vmatprep.subr.mxu0 0.0
    %610 = vmatpush1.msra.mxu0 0.0
    %611 = vmatprep.subr.mxu0 0.0
    %612 = vmatpush1.msra.mxu0 0.0
    %613 = vmatprep.subr.mxu0 0.0
    %614 = vmatpush1.msra.mxu0 0.0
    %615 = vmatprep.subr.mxu0 0.0
    %616 = vmatpush1.msra.mxu0 0.0
    %617 = vmatprep.subr.mxu0 0.0
    %618 = vmatpush1.msra.mxu0 0.0
    %619 = vmatprep.subr.mxu0 0.0
    %620 = vmatpush1.msra.mxu0 0.0
    %621 = vmatprep.subr.mxu0 0.0
    %622 = vmatpush1.msra.mxu0 0.0
    %623 = vmatprep.subr.mxu0 0.0
    %624 = vmatpush1.msra.mxu0 0.0
    %625 = vmatprep.subr.mxu0 0.0
    %626 = vmatpush1.msra.mxu0 0.0
    %627 = vmatprep.subr.mxu0 0.0
    %628 = vmatpush1.msra.mxu0 0.0
    %629 = vmatprep.subr.mxu0 0.0
    %630 = vmatpush1.msra.mxu0 0.0
    %631 = vmatprep.subr.mxu0 0.0
    %632 = vmatpush1.msra.mxu0 0.0
    %633 = vmatprep.subr.mxu0 0.0
    %v634 = vand.u32 %v84, 4294901760
    %v635 = vsub.f32 %v84, %v634
    %v636 = vand.u32 %v635, 4294901760
    %637 = vmatpush1.msra.mxu0 %v636
    %638 = vmatprep.subr.mxu0 0.0
    %639 = vmatpush2.msra.mxu0 0.0
    %640 = vmatprep.subr.mxu0 0.0
    %641 = vmatpush2.msra.mxu0 0.0
    %642 = vmatprep.subr.mxu0 0.0
    %643 = vmatpush2.msra.mxu0 0.0
    %644 = vmatprep.subr.mxu0 0.0
    %645 = vmatpush2.msra.mxu0 0.0
    %646 = vmatprep.subr.mxu0 0.0
    %647 = vmatpush2.msra.mxu0 0.0
    %648 = vmatprep.subr.mxu0 0.0
    %649 = vmatpush2.msra.mxu0 0.0
    %650 = vmatprep.subr.mxu0 0.0
    %651 = vmatpush2.msra.mxu0 0.0
    %652 = vmatprep.subr.mxu0 0.0
    %653 = vmatpush2.msra.mxu0 0.0
    %654 = vmatprep.subr.mxu0 0.0
    %655 = vmatpush2.msra.mxu0 0.0
    %656 = vmatprep.subr.mxu0 0.0
    %657 = vmatpush2.msra.mxu0 0.0
    %658 = vmatprep.subr.mxu0 0.0
    %659 = vmatpush2.msra.mxu0 0.0
    %660 = vmatprep.subr.mxu0 0.0
    %661 = vmatpush2.msra.mxu0 0.0
    %662 = vmatprep.subr.mxu0 0.0
    %663 = vmatpush2.msra.mxu0 0.0
    %664 = vmatprep.subr.mxu0 0.0
    %665 = vmatpush2.msra.mxu0 0.0
    %666 = vmatprep.subr.mxu0 0.0
    %667 = vmatpush2.msra.mxu0 0.0
    %668 = vmatprep.subr.mxu0 0.0
    %669 = vmatpush2.msra.mxu0 0.0
    %670 = vmatprep.mubr.f32.mxu0 0.0
    %v671 = vand.u32 %v59, 4294901760
    %672 = vmatmul.mubr.f32.gmra.mxu0 %v671
    %v673 = vpop.f32.mrf.mxu0
    %v674 = vadd.f32 %v544, %v673
    %v675 = vpop.f32.mrf.mxu0
    %676 = vmatprep.mubr.f32.mxu0 0.0
    %v677 = vand.u32 %v62, 4294901760
    %678 = vmatmul.mubr.f32.gmra.mxu0 %v677
    %v679 = vpop.f32.mrf.mxu0
    %v680 = vadd.f32 %v552, %v679
    %v681 = vpop.f32.mrf.mxu0
    %682 = vmatprep.mubr.f32.mxu0 0.0
    %v683 = vand.u32 %v65, 4294901760
    %684 = vmatmul.mubr.f32.gmra.mxu0 %v683
    %v685 = vpop.f32.mrf.mxu0
    %v686 = vadd.f32 %v560, %v685
    %v687 = vpop.f32.mrf.mxu0
    %688 = vmatprep.mubr.f32.mxu0 0.0
    %v689 = vand.u32 %v68, 4294901760
    %690 = vmatmul.mubr.f32.gmra.mxu0 %v689
    %v691 = vpop.f32.mrf.mxu0
    %v692 = vadd.f32 %v568, %v691
    %v693 = vpop.f32.mrf.mxu0
    %694 = vmatprep.mubr.f32.mxu0 0.0
    %v695 = vand.u32 %v71, 4294901760
    %696 = vmatmul.mubr.f32.gmra.mxu0 %v695
    %v697 = vpop.f32.mrf.mxu0
    %v698 = vadd.f32 %v576, %v697
    %v699 = vpop.f32.mrf.mxu0
    %700 = vmatprep.mubr.f32.mxu0 0.0
    %v701 = vand.u32 %v74, 4294901760
    %702 = vmatmul.mubr.f32.gmra.mxu0 %v701
    %v703 = vpop.f32.mrf.mxu0
    %v704 = vadd.f32 %v584, %v703
    %v705 = vpop.f32.mrf.mxu0
    %706 = vmatprep.mubr.f32.mxu0 0.0
    %v707 = vand.u32 %v77, 4294901760
    %708 = vmatmul.mubr.f32.gmra.mxu0 %v707
    %v709 = vpop.f32.mrf.mxu0
    %v710 = vadd.f32 %v592, %v709
    %v711 = vpop.f32.mrf.mxu0
    %712 = vmatprep.mubr.f32.mxu0 0.0
    %v713 = vand.u32 %v80, 4294901760
    %714 = vmatmul.mubr.f32.gmra.mxu0 %v713
    %v715 = vpop.f32.mrf.mxu0
    %v716 = vadd.f32 %v600, %v715
    %v717 = vpop.f32.mrf.mxu0
    %718 = vdwg.mxu0
    %719 = vmatprep.subr.mxu0 0.0
    %720 = vmatpush1.msra.mxu0 0.0
    %721 = vmatprep.subr.mxu0 0.0
    %722 = vmatpush1.msra.mxu0 0.0
    %723 = vmatprep.subr.mxu0 0.0
    %724 = vmatpush1.msra.mxu0 0.0
    %725 = vmatprep.subr.mxu0 0.0
    %726 = vmatpush1.msra.mxu0 0.0
    %727 = vmatprep.subr.mxu0 0.0
    %728 = vmatpush1.msra.mxu0 0.0
    %729 = vmatprep.subr.mxu0 0.0
    %730 = vmatpush1.msra.mxu0 0.0
    %731 = vmatprep.subr.mxu0 0.0
    %732 = vmatpush1.msra.mxu0 0.0
    %733 = vmatprep.subr.mxu0 0.0
    %734 = vmatpush1.msra.mxu0 0.0
    %735 = vmatprep.subr.mxu0 0.0
    %736 = vmatpush1.msra.mxu0 0.0
    %737 = vmatprep.subr.mxu0 0.0
    %738 = vmatpush1.msra.mxu0 0.0
    %739 = vmatprep.subr.mxu0 0.0
    %740 = vmatpush1.msra.mxu0 0.0
    %741 = vmatprep.subr.mxu0 0.0
    %742 = vmatpush1.msra.mxu0 0.0
    %743 = vmatprep.subr.mxu0 0.0
    %744 = vmatpush1.msra.mxu0 0.0
    %745 = vmatprep.subr.mxu0 0.0
    %746 = vmatpush1.msra.mxu0 0.0
    %747 = vmatprep.subr.mxu0 0.0
    %748 = vmatpush1.msra.mxu0 0.0
    %749 = vmatprep.subr.mxu0 0.0
    %v750 = vand.u32 %v84, 4294901760
    %751 = vmatpush1.msra.mxu0 %v750
    %752 = vmatprep.subr.mxu0 0.0
    %753 = vmatpush2.msra.mxu0 0.0
    %754 = vmatprep.subr.mxu0 0.0
    %755 = vmatpush2.msra.mxu0 0.0
    %756 = vmatprep.subr.mxu0 0.0
    %757 = vmatpush2.msra.mxu0 0.0
    %758 = vmatprep.subr.mxu0 0.0
    %759 = vmatpush2.msra.mxu0 0.0
    %760 = vmatprep.subr.mxu0 0.0
    %761 = vmatpush2.msra.mxu0 0.0
    %762 = vmatprep.subr.mxu0 0.0
    %763 = vmatpush2.msra.mxu0 0.0
    %764 = vmatprep.subr.mxu0 0.0
    %765 = vmatpush2.msra.mxu0 0.0
    %766 = vmatprep.subr.mxu0 0.0
    %767 = vmatpush2.msra.mxu0 0.0
    %768 = vmatprep.subr.mxu0 0.0
    %769 = vmatpush2.msra.mxu0 0.0
    %770 = vmatprep.subr.mxu0 0.0
    %771 = vmatpush2.msra.mxu0 0.0
    %772 = vmatprep.subr.mxu0 0.0
    %773 = vmatpush2.msra.mxu0 0.0
    %774 = vmatprep.subr.mxu0 0.0
    %775 = vmatpush2.msra.mxu0 0.0
    %776 = vmatprep.subr.mxu0 0.0
    %777 = vmatpush2.msra.mxu0 0.0
    %778 = vmatprep.subr.mxu0 0.0
    %779 = vmatpush2.msra.mxu0 0.0
    %780 = vmatprep.subr.mxu0 0.0
    %781 = vmatpush2.msra.mxu0 0.0
    %782 = vmatprep.subr.mxu0 0.0
    %783 = vmatpush2.msra.mxu0 0.0
    %784 = vmatprep.mubr.f32.mxu0 0.0
    %v785 = vand.u32 %v59, 4294901760
    %786 = vmatmul.mubr.f32.gmra.mxu0 %v785
    %v787 = vpop.f32.mrf.mxu0
    %v788 = vadd.f32 %v674, %v787
    %v789 = vpop.f32.mrf.mxu0
    %790 = vmatprep.mubr.f32.mxu0 0.0
    %v791 = vand.u32 %v62, 4294901760
    %792 = vmatmul.mubr.f32.gmra.mxu0 %v791
    %v793 = vpop.f32.mrf.mxu0
    %v794 = vadd.f32 %v680, %v793
    %v795 = vpop.f32.mrf.mxu0
    %796 = vmatprep.mubr.f32.mxu0 0.0
    %v797 = vand.u32 %v65, 4294901760
    %798 = vmatmul.mubr.f32.gmra.mxu0 %v797
    %v799 = vpop.f32.mrf.mxu0
    %v800 = vadd.f32 %v686, %v799
    %v801 = vpop.f32.mrf.mxu0
    %802 = vmatprep.mubr.f32.mxu0 0.0
    %v803 = vand.u32 %v68, 4294901760
    %804 = vmatmul.mubr.f32.gmra.mxu0 %v803
    %v805 = vpop.f32.mrf.mxu0
    %v806 = vadd.f32 %v692, %v805
    %v807 = vpop.f32.mrf.mxu0
    %808 = vmatprep.mubr.f32.mxu0 0.0
    %v809 = vand.u32 %v71, 4294901760
    %810 = vmatmul.mubr.f32.gmra.mxu0 %v809
    %v811 = vpop.f32.mrf.mxu0
    %v812 = vadd.f32 %v698, %v811
    %v813 = vpop.f32.mrf.mxu0
    %814 = vmatprep.mubr.f32.mxu0 0.0
    %v815 = vand.u32 %v74, 4294901760
    %816 = vmatmul.mubr.f32.gmra.mxu0 %v815
    %v817 = vpop.f32.mrf.mxu0
    %v818 = vadd.f32 %v704, %v817
    %v819 = vpop.f32.mrf.mxu0
    %820 = vmatprep.mubr.f32.mxu0 0.0
    %v821 = vand.u32 %v77, 4294901760
    %822 = vmatmul.mubr.f32.gmra.mxu0 %v821
    %v823 = vpop.f32.mrf.mxu0
    %v824 = vadd.f32 %v710, %v823
    %v825 = vpop.f32.mrf.mxu0
    %826 = vmatprep.mubr.f32.mxu0 0.0
    %v827 = vand.u32 %v80, 4294901760
    %828 = vmatmul.mubr.f32.gmra.mxu0 %v827
    %v829 = vpop.f32.mrf.mxu0
    %v830 = vadd.f32 %v716, %v829
    %v831 = vpop.f32.mrf.mxu0
    %832 = vdwg.mxu0
    %v833 = vld [vmem:[#allocation2] sm:$0xff]
    %v834 = vld [vmem:[#allocation2 + $0x8] sm:$0xff]
    %v835 = vld [vmem:[#allocation2 + $0x10] sm:$0xff]
    %v836 = vld [vmem:[#allocation2 + $0x18] sm:$0xff]
    %v837 = vld [vmem:[#allocation2 + $0x20] sm:$0xff]
    %v838 = vld [vmem:[#allocation2 + $0x28] sm:$0xff]
    %v839 = vld [vmem:[#allocation2 + $0x30] sm:$0xff]
    %v840 = vld [vmem:[#allocation2 + $0x38] sm:$0xff]
    %v841 = vld [vmem:[#allocation2 + $0x40] sm:$0xff]
    %v842 = vld [vmem:[#allocation2 + $0x48] sm:$0xff]
    %v843 = vld [vmem:[#allocation2 + $0x50] sm:$0xff]
    %v844 = vld [vmem:[#allocation2 + $0x58] sm:$0xff]
    %v845 = vld [vmem:[#allocation2 + $0x60] sm:$0xff]
    %v846 = vld [vmem:[#allocation2 + $0x68] sm:$0xff]
    %v847 = vld [vmem:[#allocation2 + $0x70] sm:$0xff]
    %v848 = vld [vmem:[#allocation2 + $0x78] sm:$0xff]
    %v849 = vld [vmem:[%s4] sm:$0x1]
    %v850 = vxor.u32 %v788, 2147483648
    %v851 = vmul.f32 %v850, 1.442695
    %v852 = vpow.pop %v851
    %v853 = vadd.f32 %v852, 1.0
    %v854 = vrcp.pop %v853
    %v855 = vmul.f32 1.0, %v854
    %v856 = vtanh.pop %v788
    %v857 = vmul.f32 %v855, 0.0
    %859 = vrot.lane.b32.xlu0 %v856, 64
    %v860 = vpop.permute.xlu0 %859
    %v862 = vmul.f32 %v855, %v860
    %864 = vrot.lane.b32.xlu0 %v862, 32
    %v865 = vpop.permute.xlu0 %864
    %v867 = vadd.f32 %v857, %v865
    %v868 = vtanh.pop %v867
    %870 = vrot.lane.b32.xlu0 %v868, 64
    %v871 = vpop.permute.xlu0 %870
    %v873 = vmul.f32 %v855, %v871
    %875 = vrot.lane.b32.xlu0 %v873, 32
    %v876 = vpop.permute.xlu0 %875
    %vm878 = vcmask 261120
    %v879 = vsel %vm878, %v876, 0.0
    %vm880 = vcmask 523264
    %v882 = vsel %vm880, %v879, 0
    %884 = vmatprep.subr.mxu0 0.0
    %885 = vmatpush1.msra.mxu0 0.0
    %886 = vmatprep.subr.mxu0 0.0
    %887 = vmatpush1.msra.mxu0 0.0
    %888 = vmatprep.subr.mxu0 0.0
    %889 = vmatpush1.msra.mxu0 0.0
    %890 = vmatprep.subr.mxu0 0.0
    %891 = vmatpush1.msra.mxu0 0.0
    %892 = vmatprep.subr.mxu0 0.0
    %893 = vmatpush1.msra.mxu0 0.0
    %894 = vmatprep.subr.mxu0 0.0
    %895 = vmatpush1.msra.mxu0 0.0
    %896 = vmatprep.subr.mxu0 0.0
    %897 = vmatpush1.msra.mxu0 0.0
    %898 = vmatprep.subr.mxu0 0.0
    %899 = vmatpush1.msra.mxu0 0.0
    %v900 = vand.u32 %v848, 4294901760
    %901 = vmatprep.subr.mxu0 %v900
    %v902 = vand.u32 %v847, 4294901760
    %903 = vmatpush1.msra.mxu0 %v902
    %v904 = vand.u32 %v846, 4294901760
    %905 = vmatprep.subr.mxu0 %v904
    %v906 = vand.u32 %v845, 4294901760
    %907 = vmatpush1.msra.mxu0 %v906
    %v908 = vand.u32 %v844, 4294901760
    %909 = vmatprep.subr.mxu0 %v908
    %v910 = vand.u32 %v843, 4294901760
    %911 = vmatpush1.msra.mxu0 %v910
    %v912 = vand.u32 %v842, 4294901760
    %913 = vmatprep.subr.mxu0 %v912
    %v914 = vand.u32 %v841, 4294901760
    %915 = vmatpush1.msra.mxu0 %v914
    %v916 = vand.u32 %v840, 4294901760
    %917 = vmatprep.subr.mxu0 %v916
    %v918 = vand.u32 %v839, 4294901760
    %919 = vmatpush1.msra.mxu0 %v918
    %v920 = vand.u32 %v838, 4294901760
    %921 = vmatprep.subr.mxu0 %v920
    %v922 = vand.u32 %v837, 4294901760
    %923 = vmatpush1.msra.mxu0 %v922
    %v924 = vand.u32 %v836, 4294901760
    %925 = vmatprep.subr.mxu0 %v924
    %v926 = vand.u32 %v835, 4294901760
    %927 = vmatpush1.msra.mxu0 %v926
    %v928 = vand.u32 %v834, 4294901760
    %929 = vmatprep.subr.mxu0 %v928
    %v930 = vand.u32 %v833, 4294901760
    %931 = vmatpush1.msra.mxu0 %v930
    %932 = vmatprep.subr.mxu0 0.0
    %933 = vmatpush2.msra.mxu0 0.0
    %934 = vmatprep.subr.mxu0 0.0
    %935 = vmatpush2.msra.mxu0 0.0
    %936 = vmatprep.subr.mxu0 0.0
    %937 = vmatpush2.msra.mxu0 0.0
    %938 = vmatprep.subr.mxu0 0.0
    %939 = vmatpush2.msra.mxu0 0.0
    %940 = vmatprep.subr.mxu0 0.0
    %941 = vmatpush2.msra.mxu0 0.0
    %942 = vmatprep.subr.mxu0 0.0
    %943 = vmatpush2.msra.mxu0 0.0
    %944 = vmatprep.subr.mxu0 0.0
    %945 = vmatpush2.msra.mxu0 0.0
    %946 = vmatprep.subr.mxu0 0.0
    %947 = vmatpush2.msra.mxu0 0.0
    %948 = vmatprep.subr.mxu0 0.0
    %949 = vmatpush2.msra.mxu0 0.0
    %950 = vmatprep.subr.mxu0 0.0
    %951 = vmatpush2.msra.mxu0 0.0
    %952 = vmatprep.subr.mxu0 0.0
    %953 = vmatpush2.msra.mxu0 0.0
    %954 = vmatprep.subr.mxu0 0.0
    %955 = vmatpush2.msra.mxu0 0.0
    %956 = vmatprep.subr.mxu0 0.0
    %957 = vmatpush2.msra.mxu0 0.0
    %958 = vmatprep.subr.mxu0 0.0
    %959 = vmatpush2.msra.mxu0 0.0
    %960 = vmatprep.subr.mxu0 0.0
    %961 = vmatpush2.msra.mxu0 0.0
    %962 = vmatprep.subr.mxu0 0.0
    %963 = vmatpush2.msra.mxu0 0.0
    %964 = vmatprep.mubr.f32.mxu0 0.0
    %v965 = vand.u32 %v882, 4294901760
    %v966 = vsub.f32 %v882, %v965
    %v967 = vand.u32 %v966, 4294901760
    %v968 = vsub.f32 %v966, %v967
    %v969 = vand.u32 %v968, 4294901760
    %970 = vmatmul.mubr.f32.gmra.mxu0 %v969
    %v971 = vpop.f32.mrf.mxu0
    %v972 = vadd.f32 0.0, %v971
    %v973 = vpop.f32.mrf.mxu0
    %v974 = vadd.f32 0.0, %v973
    %975 = vdwg.mxu0
    %976 = vmatprep.subr.mxu0 0.0
    %977 = vmatpush1.msra.mxu0 0.0
    %978 = vmatprep.subr.mxu0 0.0
    %979 = vmatpush1.msra.mxu0 0.0
    %980 = vmatprep.subr.mxu0 0.0
    %981 = vmatpush1.msra.mxu0 0.0
    %982 = vmatprep.subr.mxu0 0.0
    %983 = vmatpush1.msra.mxu0 0.0
    %984 = vmatprep.subr.mxu0 0.0
    %985 = vmatpush1.msra.mxu0 0.0
    %986 = vmatprep.subr.mxu0 0.0
    %987 = vmatpush1.msra.mxu0 0.0
    %988 = vmatprep.subr.mxu0 0.0
    %989 = vmatpush1.msra.mxu0 0.0
    %990 = vmatprep.subr.mxu0 0.0
    %991 = vmatpush1.msra.mxu0 0.0
    %v992 = vand.u32 %v848, 4294901760
    %v993 = vsub.f32 %v848, %v992
    %v994 = vand.u32 %v993, 4294901760
    %v995 = vsub.f32 %v993, %v994
    %v996 = vand.u32 %v995, 4294901760
    %997 = vmatprep.subr.mxu0 %v996
    %v998 = vand.u32 %v847, 4294901760
    %v999 = vsub.f32 %v847, %v998
    %v1000 = vand.u32 %v999, 4294901760
    %v1001 = vsub.f32 %v999, %v1000
    %v1002 = vand.u32 %v1001, 4294901760
    %1003 = vmatpush1.msra.mxu0 %v1002
    %v1004 = vand.u32 %v846, 4294901760
    %v1005 = vsub.f32 %v846, %v1004
    %v1006 = vand.u32 %v1005, 4294901760
    %v1007 = vsub.f32 %v1005, %v1006
    %v1008 = vand.u32 %v1007, 4294901760
    %1009 = vmatprep.subr.mxu0 %v1008
    %v1010 = vand.u32 %v845, 4294901760
    %v1011 = vsub.f32 %v845, %v1010
    %v1012 = vand.u32 %v1011, 4294901760
    %v1013 = vsub.f32 %v1011, %v1012
    %v1014 = vand.u32 %v1013, 4294901760
    %1015 = vmatpush1.msra.mxu0 %v1014
    %v1016 = vand.u32 %v844, 4294901760
    %v1017 = vsub.f32 %v844, %v1016
    %v1018 = vand.u32 %v1017, 4294901760
    %v1019 = vsub.f32 %v1017, %v1018
    %v1020 = vand.u32 %v1019, 4294901760
    %1021 = vmatprep.subr.mxu0 %v1020
    %v1022 = vand.u32 %v843, 4294901760
    %v1023 = vsub.f32 %v843, %v1022
    %v1024 = vand.u32 %v1023, 4294901760
    %v1025 = vsub.f32 %v1023, %v1024
    %v1026 = vand.u32 %v1025, 4294901760
    %1027 = vmatpush1.msra.mxu0 %v1026
    %v1028 = vand.u32 %v842, 4294901760
    %v1029 = vsub.f32 %v842, %v1028
    %v1030 = vand.u32 %v1029, 4294901760
    %v1031 = vsub.f32 %v1029, %v1030
    %v1032 = vand.u32 %v1031, 4294901760
    %1033 = vmatprep.subr.mxu0 %v1032
    %v1034 = vand.u32 %v841, 4294901760
    %v1035 = vsub.f32 %v841, %v1034
    %v1036 = vand.u32 %v1035, 4294901760
    %v1037 = vsub.f32 %v1035, %v1036
    %v1038 = vand.u32 %v1037, 4294901760
    %1039 = vmatpush1.msra.mxu0 %v1038
    %v1040 = vand.u32 %v840, 4294901760
    %v1041 = vsub.f32 %v840, %v1040
    %v1042 = vand.u32 %v1041, 4294901760
    %v1043 = vsub.f32 %v1041, %v1042
    %v1044 = vand.u32 %v1043, 4294901760
    %1045 = vmatprep.subr.mxu0 %v1044
    %v1046 = vand.u32 %v839, 4294901760
    %v1047 = vsub.f32 %v839, %v1046
    %v1048 = vand.u32 %v1047, 4294901760
    %v1049 = vsub.f32 %v1047, %v1048
    %v1050 = vand.u32 %v1049, 4294901760
    %1051 = vmatpush1.msra.mxu0 %v1050
    %v1052 = vand.u32 %v838, 4294901760
    %v1053 = vsub.f32 %v838, %v1052
    %v1054 = vand.u32 %v1053, 4294901760
    %v1055 = vsub.f32 %v1053, %v1054
    %v1056 = vand.u32 %v1055, 4294901760
    %1057 = vmatprep.subr.mxu0 %v1056
    %v1058 = vand.u32 %v837, 4294901760
    %v1059 = vsub.f32 %v837, %v1058
    %v1060 = vand.u32 %v1059, 4294901760
    %v1061 = vsub.f32 %v1059, %v1060
    %v1062 = vand.u32 %v1061, 4294901760
    %1063 = vmatpush1.msra.mxu0 %v1062
    %v1064 = vand.u32 %v836, 4294901760
    %v1065 = vsub.f32 %v836, %v1064
    %v1066 = vand.u32 %v1065, 4294901760
    %v1067 = vsub.f32 %v1065, %v1066
    %v1068 = vand.u32 %v1067, 4294901760
    %1069 = vmatprep.subr.mxu0 %v1068
    %v1070 = vand.u32 %v835, 4294901760
    %v1071 = vsub.f32 %v835, %v1070
    %v1072 = vand.u32 %v1071, 4294901760
    %v1073 = vsub.f32 %v1071, %v1072
    %v1074 = vand.u32 %v1073, 4294901760
    %1075 = vmatpush1.msra.mxu0 %v1074
    %v1076 = vand.u32 %v834, 4294901760
    %v1077 = vsub.f32 %v834, %v1076
    %v1078 = vand.u32 %v1077, 4294901760
    %v1079 = vsub.f32 %v1077, %v1078
    %v1080 = vand.u32 %v1079, 4294901760
    %1081 = vmatprep.subr.mxu0 %v1080
    %v1082 = vand.u32 %v833, 4294901760
    %v1083 = vsub.f32 %v833, %v1082
    %v1084 = vand.u32 %v1083, 4294901760
    %v1085 = vsub.f32 %v1083, %v1084
    %v1086 = vand.u32 %v1085, 4294901760
    %1087 = vmatpush1.msra.mxu0 %v1086
    %1088 = vmatprep.subr.mxu0 0.0
    %1089 = vmatpush2.msra.mxu0 0.0
    %1090 = vmatprep.subr.mxu0 0.0
    %1091 = vmatpush2.msra.mxu0 0.0
    %1092 = vmatprep.subr.mxu0 0.0
    %1093 = vmatpush2.msra.mxu0 0.0
    %1094 = vmatprep.subr.mxu0 0.0
    %1095 = vmatpush2.msra.mxu0 0.0
    %1096 = vmatprep.subr.mxu0 0.0
    %1097 = vmatpush2.msra.mxu0 0.0
    %1098 = vmatprep.subr.mxu0 0.0
    %1099 = vmatpush2.msra.mxu0 0.0
    %1100 = vmatprep.subr.mxu0 0.0
    %1101 = vmatpush2.msra.mxu0 0.0
    %1102 = vmatprep.subr.mxu0 0.0
    %1103 = vmatpush2.msra.mxu0 0.0
    %1104 = vmatprep.subr.mxu0 0.0
    %1105 = vmatpush2.msra.mxu0 0.0
    %1106 = vmatprep.subr.mxu0 0.0
    %1107 = vmatpush2.msra.mxu0 0.0
    %1108 = vmatprep.subr.mxu0 0.0
    %1109 = vmatpush2.msra.mxu0 0.0
    %1110 = vmatprep.subr.mxu0 0.0
    %1111 = vmatpush2.msra.mxu0 0.0
    %1112 = vmatprep.subr.mxu0 0.0
    %1113 = vmatpush2.msra.mxu0 0.0
    %1114 = vmatprep.subr.mxu0 0.0
    %1115 = vmatpush2.msra.mxu0 0.0
    %1116 = vmatprep.subr.mxu0 0.0
    %1117 = vmatpush2.msra.mxu0 0.0
    %1118 = vmatprep.subr.mxu0 0.0
    %1119 = vmatpush2.msra.mxu0 0.0
    %1120 = vmatprep.mubr.f32.mxu0 0.0
    %v1121 = vand.u32 %v882, 4294901760
    %1122 = vmatmul.mubr.f32.gmra.mxu0 %v1121
    %v1123 = vpop.f32.mrf.mxu0
    %v1124 = vadd.f32 %v972, %v1123
    %v1125 = vpop.f32.mrf.mxu0
    %v1126 = vadd.f32 %v974, %v1125
    %1127 = vdwg.mxu0
    %1128 = vmatprep.subr.mxu0 0.0
    %1129 = vmatpush1.msra.mxu0 0.0
    %1130 = vmatprep.subr.mxu0 0.0
    %1131 = vmatpush1.msra.mxu0 0.0
    %1132 = vmatprep.subr.mxu0 0.0
    %1133 = vmatpush1.msra.mxu0 0.0
    %1134 = vmatprep.subr.mxu0 0.0
    %1135 = vmatpush1.msra.mxu0 0.0
    %1136 = vmatprep.subr.mxu0 0.0
    %1137 = vmatpush1.msra.mxu0 0.0
    %1138 = vmatprep.subr.mxu0 0.0
    %1139 = vmatpush1.msra.mxu0 0.0
    %1140 = vmatprep.subr.mxu0 0.0
    %1141 = vmatpush1.msra.mxu0 0.0
    %1142 = vmatprep.subr.mxu0 0.0
    %1143 = vmatpush1.msra.mxu0 0.0
    %v1144 = vand.u32 %v848, 4294901760
    %v1145 = vsub.f32 %v848, %v1144
    %1146 = vmatprep.subr.mxu0 %v1145
    %v1147 = vand.u32 %v847, 4294901760
    %v1148 = vsub.f32 %v847, %v1147
    %1149 = vmatpush1.msra.mxu0 %v1148
    %v1150 = vand.u32 %v846, 4294901760
    %v1151 = vsub.f32 %v846, %v1150
    %1152 = vmatprep.subr.mxu0 %v1151
    %v1153 = vand.u32 %v845, 4294901760
    %v1154 = vsub.f32 %v845, %v1153
    %1155 = vmatpush1.msra.mxu0 %v1154
    %v1156 = vand.u32 %v844, 4294901760
    %v1157 = vsub.f32 %v844, %v1156
    %1158 = vmatprep.subr.mxu0 %v1157
    %v1159 = vand.u32 %v843, 4294901760
    %v1160 = vsub.f32 %v843, %v1159
    %1161 = vmatpush1.msra.mxu0 %v1160
    %v1162 = vand.u32 %v842, 4294901760
    %v1163 = vsub.f32 %v842, %v1162
    %1164 = vmatprep.subr.mxu0 %v1163
    %v1165 = vand.u32 %v841, 4294901760
    %v1166 = vsub.f32 %v841, %v1165
    %1167 = vmatpush1.msra.mxu0 %v1166
    %v1168 = vand.u32 %v840, 4294901760
    %v1169 = vsub.f32 %v840, %v1168
    %1170 = vmatprep.subr.mxu0 %v1169
    %v1171 = vand.u32 %v839, 4294901760
    %v1172 = vsub.f32 %v839, %v1171
    %1173 = vmatpush1.msra.mxu0 %v1172
    %v1174 = vand.u32 %v838, 4294901760
    %v1175 = vsub.f32 %v838, %v1174
    %1176 = vmatprep.subr.mxu0 %v1175
    %v1177 = vand.u32 %v837, 4294901760
    %v1178 = vsub.f32 %v837, %v1177
    %1179 = vmatpush1.msra.mxu0 %v1178
    %v1180 = vand.u32 %v836, 4294901760
    %v1181 = vsub.f32 %v836, %v1180
    %1182 = vmatprep.subr.mxu0 %v1181
    %v1183 = vand.u32 %v835, 4294901760
    %v1184 = vsub.f32 %v835, %v1183
    %1185 = vmatpush1.msra.mxu0 %v1184
    %v1186 = vand.u32 %v834, 4294901760
    %v1187 = vsub.f32 %v834, %v1186
    %1188 = vmatprep.subr.mxu0 %v1187
    %v1189 = vand.u32 %v833, 4294901760
    %v1190 = vsub.f32 %v833, %v1189
    %1191 = vmatpush1.msra.mxu0 %v1190
    %1192 = vmatprep.subr.mxu0 0.0
    %1193 = vmatpush2.msra.mxu0 0.0
    %1194 = vmatprep.subr.mxu0 0.0
    %1195 = vmatpush2.msra.mxu0 0.0
    %1196 = vmatprep.subr.mxu0 0.0
    %1197 = vmatpush2.msra.mxu0 0.0
    %1198 = vmatprep.subr.mxu0 0.0
    %1199 = vmatpush2.msra.mxu0 0.0
    %1200 = vmatprep.subr.mxu0 0.0
    %1201 = vmatpush2.msra.mxu0 0.0
    %1202 = vmatprep.subr.mxu0 0.0
    %1203 = vmatpush2.msra.mxu0 0.0
    %1204 = vmatprep.subr.mxu0 0.0
    %1205 = vmatpush2.msra.mxu0 0.0
    %1206 = vmatprep.subr.mxu0 0.0
    %1207 = vmatpush2.msra.mxu0 0.0
    %1208 = vmatprep.subr.mxu0 0.0
    %1209 = vmatpush2.msra.mxu0 0.0
    %1210 = vmatprep.subr.mxu0 0.0
    %1211 = vmatpush2.msra.mxu0 0.0
    %1212 = vmatprep.subr.mxu0 0.0
    %1213 = vmatpush2.msra.mxu0 0.0
    %1214 = vmatprep.subr.mxu0 0.0
    %1215 = vmatpush2.msra.mxu0 0.0
    %1216 = vmatprep.subr.mxu0 0.0
    %1217 = vmatpush2.msra.mxu0 0.0
    %1218 = vmatprep.subr.mxu0 0.0
    %1219 = vmatpush2.msra.mxu0 0.0
    %1220 = vmatprep.subr.mxu0 0.0
    %1221 = vmatpush2.msra.mxu0 0.0
    %1222 = vmatprep.subr.mxu0 0.0
    %1223 = vmatpush2.msra.mxu0 0.0
    %1224 = vmatprep.mubr.f32.mxu0 0.0
    %v1225 = vand.u32 %v882, 4294901760
    %v1226 = vsub.f32 %v882, %v1225
    %1227 = vmatmul.mubr.f32.gmra.mxu0 %v1226
    %v1228 = vpop.f32.mrf.mxu0
    %v1229 = vadd.f32 %v1124, %v1228
    %v1230 = vpop.f32.mrf.mxu0
    %v1231 = vadd.f32 %v1126, %v1230
    %1232 = vdwg.mxu0
    %1233 = vmatprep.subr.mxu0 0.0
    %1234 = vmatpush1.msra.mxu0 0.0
    %1235 = vmatprep.subr.mxu0 0.0
    %1236 = vmatpush1.msra.mxu0 0.0
    %1237 = vmatprep.subr.mxu0 0.0
    %1238 = vmatpush1.msra.mxu0 0.0
    %1239 = vmatprep.subr.mxu0 0.0
    %1240 = vmatpush1.msra.mxu0 0.0
    %1241 = vmatprep.subr.mxu0 0.0
    %1242 = vmatpush1.msra.mxu0 0.0
    %1243 = vmatprep.subr.mxu0 0.0
    %1244 = vmatpush1.msra.mxu0 0.0
    %1245 = vmatprep.subr.mxu0 0.0
    %1246 = vmatpush1.msra.mxu0 0.0
    %1247 = vmatprep.subr.mxu0 0.0
    %1248 = vmatpush1.msra.mxu0 0.0
    %v1249 = vand.u32 %v848, 4294901760
    %1250 = vmatprep.subr.mxu0 %v1249
    %v1251 = vand.u32 %v847, 4294901760
    %1252 = vmatpush1.msra.mxu0 %v1251
    %v1253 = vand.u32 %v846, 4294901760
    %1254 = vmatprep.subr.mxu0 %v1253
    %v1255 = vand.u32 %v845, 4294901760
    %1256 = vmatpush1.msra.mxu0 %v1255
    %v1257 = vand.u32 %v844, 4294901760
    %1258 = vmatprep.subr.mxu0 %v1257
    %v1259 = vand.u32 %v843, 4294901760
    %1260 = vmatpush1.msra.mxu0 %v1259
    %v1261 = vand.u32 %v842, 4294901760
    %1262 = vmatprep.subr.mxu0 %v1261
    %v1263 = vand.u32 %v841, 4294901760
    %1264 = vmatpush1.msra.mxu0 %v1263
    %v1265 = vand.u32 %v840, 4294901760
    %1266 = vmatprep.subr.mxu0 %v1265
    %v1267 = vand.u32 %v839, 4294901760
    %1268 = vmatpush1.msra.mxu0 %v1267
    %v1269 = vand.u32 %v838, 4294901760
    %1270 = vmatprep.subr.mxu0 %v1269
    %v1271 = vand.u32 %v837, 4294901760
    %1272 = vmatpush1.msra.mxu0 %v1271
    %v1273 = vand.u32 %v836, 4294901760
    %1274 = vmatprep.subr.mxu0 %v1273
    %v1275 = vand.u32 %v835, 4294901760
    %1276 = vmatpush1.msra.mxu0 %v1275
    %v1277 = vand.u32 %v834, 4294901760
    %1278 = vmatprep.subr.mxu0 %v1277
    %v1279 = vand.u32 %v833, 4294901760
    %1280 = vmatpush1.msra.mxu0 %v1279
    %1281 = vmatprep.subr.mxu0 0.0
    %1282 = vmatpush2.msra.mxu0 0.0
    %1283 = vmatprep.subr.mxu0 0.0
    %1284 = vmatpush2.msra.mxu0 0.0
    %1285 = vmatprep.subr.mxu0 0.0
    %1286 = vmatpush2.msra.mxu0 0.0
    %1287 = vmatprep.subr.mxu0 0.0
    %1288 = vmatpush2.msra.mxu0 0.0
    %1289 = vmatprep.subr.mxu0 0.0
    %1290 = vmatpush2.msra.mxu0 0.0
    %1291 = vmatprep.subr.mxu0 0.0
    %1292 = vmatpush2.msra.mxu0 0.0
    %1293 = vmatprep.subr.mxu0 0.0
    %1294 = vmatpush2.msra.mxu0 0.0
    %1295 = vmatprep.subr.mxu0 0.0
    %1296 = vmatpush2.msra.mxu0 0.0
    %1297 = vmatprep.subr.mxu0 0.0
    %1298 = vmatpush2.msra.mxu0 0.0
    %1299 = vmatprep.subr.mxu0 0.0
    %1300 = vmatpush2.msra.mxu0 0.0
    %1301 = vmatprep.subr.mxu0 0.0
    %1302 = vmatpush2.msra.mxu0 0.0
    %1303 = vmatprep.subr.mxu0 0.0
    %1304 = vmatpush2.msra.mxu0 0.0
    %1305 = vmatprep.subr.mxu0 0.0
    %1306 = vmatpush2.msra.mxu0 0.0
    %1307 = vmatprep.subr.mxu0 0.0
    %1308 = vmatpush2.msra.mxu0 0.0
    %1309 = vmatprep.subr.mxu0 0.0
    %1310 = vmatpush2.msra.mxu0 0.0
    %1311 = vmatprep.subr.mxu0 0.0
    %1312 = vmatpush2.msra.mxu0 0.0
    %1313 = vmatprep.mubr.f32.mxu0 0.0
    %v1314 = vand.u32 %v882, 4294901760
    %v1315 = vsub.f32 %v882, %v1314
    %v1316 = vand.u32 %v1315, 4294901760
    %1317 = vmatmul.mubr.f32.gmra.mxu0 %v1316
    %v1318 = vpop.f32.mrf.mxu0
    %v1319 = vadd.f32 %v1229, %v1318
    %v1320 = vpop.f32.mrf.mxu0
    %v1321 = vadd.f32 %v1231, %v1320
    %1322 = vdwg.mxu0
    %1323 = vmatprep.subr.mxu0 0.0
    %1324 = vmatpush1.msra.mxu0 0.0
    %1325 = vmatprep.subr.mxu0 0.0
    %1326 = vmatpush1.msra.mxu0 0.0
    %1327 = vmatprep.subr.mxu0 0.0
    %1328 = vmatpush1.msra.mxu0 0.0
    %1329 = vmatprep.subr.mxu0 0.0
    %1330 = vmatpush1.msra.mxu0 0.0
    %1331 = vmatprep.subr.mxu0 0.0
    %1332 = vmatpush1.msra.mxu0 0.0
    %1333 = vmatprep.subr.mxu0 0.0
    %1334 = vmatpush1.msra.mxu0 0.0
    %1335 = vmatprep.subr.mxu0 0.0
    %1336 = vmatpush1.msra.mxu0 0.0
    %1337 = vmatprep.subr.mxu0 0.0
    %1338 = vmatpush1.msra.mxu0 0.0
    %v1339 = vand.u32 %v848, 4294901760
    %v1340 = vsub.f32 %v848, %v1339
    %v1341 = vand.u32 %v1340, 4294901760
    %1342 = vmatprep.subr.mxu0 %v1341
    %v1343 = vand.u32 %v847, 4294901760
    %v1344 = vsub.f32 %v847, %v1343
    %v1345 = vand.u32 %v1344, 4294901760
    %1346 = vmatpush1.msra.mxu0 %v1345
    %v1347 = vand.u32 %v846, 4294901760
    %v1348 = vsub.f32 %v846, %v1347
    %v1349 = vand.u32 %v1348, 4294901760
    %1350 = vmatprep.subr.mxu0 %v1349
    %v1351 = vand.u32 %v845, 4294901760
    %v1352 = vsub.f32 %v845, %v1351
    %v1353 = vand.u32 %v1352, 4294901760
    %1354 = vmatpush1.msra.mxu0 %v1353
    %v1355 = vand.u32 %v844, 4294901760
    %v1356 = vsub.f32 %v844, %v1355
    %v1357 = vand.u32 %v1356, 4294901760
    %1358 = vmatprep.subr.mxu0 %v1357
    %v1359 = vand.u32 %v843, 4294901760
    %v1360 = vsub.f32 %v843, %v1359
    %v1361 = vand.u32 %v1360, 4294901760
    %1362 = vmatpush1.msra.mxu0 %v1361
    %v1363 = vand.u32 %v842, 4294901760
    %v1364 = vsub.f32 %v842, %v1363
    %v1365 = vand.u32 %v1364, 4294901760
    %1366 = vmatprep.subr.mxu0 %v1365
    %v1367 = vand.u32 %v841, 4294901760
    %v1368 = vsub.f32 %v841, %v1367
    %v1369 = vand.u32 %v1368, 4294901760
    %1370 = vmatpush1.msra.mxu0 %v1369
    %v1371 = vand.u32 %v840, 4294901760
    %v1372 = vsub.f32 %v840, %v1371
    %v1373 = vand.u32 %v1372, 4294901760
    %1374 = vmatprep.subr.mxu0 %v1373
    %v1375 = vand.u32 %v839, 4294901760
    %v1376 = vsub.f32 %v839, %v1375
    %v1377 = vand.u32 %v1376, 4294901760
    %1378 = vmatpush1.msra.mxu0 %v1377
    %v1379 = vand.u32 %v838, 4294901760
    %v1380 = vsub.f32 %v838, %v1379
    %v1381 = vand.u32 %v1380, 4294901760
    %1382 = vmatprep.subr.mxu0 %v1381
    %v1383 = vand.u32 %v837, 4294901760
    %v1384 = vsub.f32 %v837, %v1383
    %v1385 = vand.u32 %v1384, 4294901760
    %1386 = vmatpush1.msra.mxu0 %v1385
    %v1387 = vand.u32 %v836, 4294901760
    %v1388 = vsub.f32 %v836, %v1387
    %v1389 = vand.u32 %v1388, 4294901760
    %1390 = vmatprep.subr.mxu0 %v1389
    %v1391 = vand.u32 %v835, 4294901760
    %v1392 = vsub.f32 %v835, %v1391
    %v1393 = vand.u32 %v1392, 4294901760
    %1394 = vmatpush1.msra.mxu0 %v1393
    %v1395 = vand.u32 %v834, 4294901760
    %v1396 = vsub.f32 %v834, %v1395
    %v1397 = vand.u32 %v1396, 4294901760
    %1398 = vmatprep.subr.mxu0 %v1397
    %v1399 = vand.u32 %v833, 4294901760
    %v1400 = vsub.f32 %v833, %v1399
    %v1401 = vand.u32 %v1400, 4294901760
    %1402 = vmatpush1.msra.mxu0 %v1401
    %1403 = vmatprep.subr.mxu0 0.0
    %1404 = vmatpush2.msra.mxu0 0.0
    %1405 = vmatprep.subr.mxu0 0.0
    %1406 = vmatpush2.msra.mxu0 0.0
    %1407 = vmatprep.subr.mxu0 0.0
    %1408 = vmatpush2.msra.mxu0 0.0
    %1409 = vmatprep.subr.mxu0 0.0
    %1410 = vmatpush2.msra.mxu0 0.0
    %1411 = vmatprep.subr.mxu0 0.0
    %1412 = vmatpush2.msra.mxu0 0.0
    %1413 = vmatprep.subr.mxu0 0.0
    %1414 = vmatpush2.msra.mxu0 0.0
    %1415 = vmatprep.subr.mxu0 0.0
    %1416 = vmatpush2.msra.mxu0 0.0
    %1417 = vmatprep.subr.mxu0 0.0
    %1418 = vmatpush2.msra.mxu0 0.0
    %1419 = vmatprep.subr.mxu0 0.0
    %1420 = vmatpush2.msra.mxu0 0.0
    %1421 = vmatprep.subr.mxu0 0.0
    %1422 = vmatpush2.msra.mxu0 0.0
    %1423 = vmatprep.subr.mxu0 0.0
    %1424 = vmatpush2.msra.mxu0 0.0
    %1425 = vmatprep.subr.mxu0 0.0
    %1426 = vmatpush2.msra.mxu0 0.0
    %1427 = vmatprep.subr.mxu0 0.0
    %1428 = vmatpush2.msra.mxu0 0.0
    %1429 = vmatprep.subr.mxu0 0.0
    %1430 = vmatpush2.msra.mxu0 0.0
    %1431 = vmatprep.subr.mxu0 0.0
    %1432 = vmatpush2.msra.mxu0 0.0
    %1433 = vmatprep.subr.mxu0 0.0
    %1434 = vmatpush2.msra.mxu0 0.0
    %1435 = vmatprep.mubr.f32.mxu0 0.0
    %v1436 = vand.u32 %v882, 4294901760
    %1437 = vmatmul.mubr.f32.gmra.mxu0 %v1436
    %v1438 = vpop.f32.mrf.mxu0
    %v1439 = vadd.f32 %v1319, %v1438
    %v1440 = vpop.f32.mrf.mxu0
    %v1441 = vadd.f32 %v1321, %v1440
    %1442 = vdwg.mxu0
    %1443 = vmatprep.subr.mxu0 0.0
    %1444 = vmatpush1.msra.mxu0 0.0
    %1445 = vmatprep.subr.mxu0 0.0
    %1446 = vmatpush1.msra.mxu0 0.0
    %1447 = vmatprep.subr.mxu0 0.0
    %1448 = vmatpush1.msra.mxu0 0.0
    %1449 = vmatprep.subr.mxu0 0.0
    %1450 = vmatpush1.msra.mxu0 0.0
    %1451 = vmatprep.subr.mxu0 0.0
    %1452 = vmatpush1.msra.mxu0 0.0
    %1453 = vmatprep.subr.mxu0 0.0
    %1454 = vmatpush1.msra.mxu0 0.0
    %1455 = vmatprep.subr.mxu0 0.0
    %1456 = vmatpush1.msra.mxu0 0.0
    %1457 = vmatprep.subr.mxu0 0.0
    %1458 = vmatpush1.msra.mxu0 0.0
    %v1459 = vand.u32 %v848, 4294901760
    %1460 = vmatprep.subr.mxu0 %v1459
    %v1461 = vand.u32 %v847, 4294901760
    %1462 = vmatpush1.msra.mxu0 %v1461
    %v1463 = vand.u32 %v846, 4294901760
    %1464 = vmatprep.subr.mxu0 %v1463
    %v1465 = vand.u32 %v845, 4294901760
    %1466 = vmatpush1.msra.mxu0 %v1465
    %v1467 = vand.u32 %v844, 4294901760
    %1468 = vmatprep.subr.mxu0 %v1467
    %v1469 = vand.u32 %v843, 4294901760
    %1470 = vmatpush1.msra.mxu0 %v1469
    %v1471 = vand.u32 %v842, 4294901760
    %1472 = vmatprep.subr.mxu0 %v1471
    %v1473 = vand.u32 %v841, 4294901760
    %1474 = vmatpush1.msra.mxu0 %v1473
    %v1475 = vand.u32 %v840, 4294901760
    %1476 = vmatprep.subr.mxu0 %v1475
    %v1477 = vand.u32 %v839, 4294901760
    %1478 = vmatpush1.msra.mxu0 %v1477
    %v1479 = vand.u32 %v838, 4294901760
    %1480 = vmatprep.subr.mxu0 %v1479
    %v1481 = vand.u32 %v837, 4294901760
    %1482 = vmatpush1.msra.mxu0 %v1481
    %v1483 = vand.u32 %v836, 4294901760
    %1484 = vmatprep.subr.mxu0 %v1483
    %v1485 = vand.u32 %v835, 4294901760
    %1486 = vmatpush1.msra.mxu0 %v1485
    %v1487 = vand.u32 %v834, 4294901760
    %1488 = vmatprep.subr.mxu0 %v1487
    %v1489 = vand.u32 %v833, 4294901760
    %1490 = vmatpush1.msra.mxu0 %v1489
    %1491 = vmatprep.subr.mxu0 0.0
    %1492 = vmatpush2.msra.mxu0 0.0
    %1493 = vmatprep.subr.mxu0 0.0
    %1494 = vmatpush2.msra.mxu0 0.0
    %1495 = vmatprep.subr.mxu0 0.0
    %1496 = vmatpush2.msra.mxu0 0.0
    %1497 = vmatprep.subr.mxu0 0.0
    %1498 = vmatpush2.msra.mxu0 0.0
    %1499 = vmatprep.subr.mxu0 0.0
    %1500 = vmatpush2.msra.mxu0 0.0
    %1501 = vmatprep.subr.mxu0 0.0
    %1502 = vmatpush2.msra.mxu0 0.0
    %1503 = vmatprep.subr.mxu0 0.0
    %1504 = vmatpush2.msra.mxu0 0.0
    %1505 = vmatprep.subr.mxu0 0.0
    %1506 = vmatpush2.msra.mxu0 0.0
    %1507 = vmatprep.subr.mxu0 0.0
    %1508 = vmatpush2.msra.mxu0 0.0
    %1509 = vmatprep.subr.mxu0 0.0
    %1510 = vmatpush2.msra.mxu0 0.0
    %1511 = vmatprep.subr.mxu0 0.0
    %1512 = vmatpush2.msra.mxu0 0.0
    %1513 = vmatprep.subr.mxu0 0.0
    %1514 = vmatpush2.msra.mxu0 0.0
    %1515 = vmatprep.subr.mxu0 0.0
    %1516 = vmatpush2.msra.mxu0 0.0
    %1517 = vmatprep.subr.mxu0 0.0
    %1518 = vmatpush2.msra.mxu0 0.0
    %1519 = vmatprep.subr.mxu0 0.0
    %1520 = vmatpush2.msra.mxu0 0.0
    %1521 = vmatprep.subr.mxu0 0.0
    %1522 = vmatpush2.msra.mxu0 0.0
    %1523 = vmatprep.mubr.f32.mxu0 0.0
    %v1524 = vand.u32 %v882, 4294901760
    %1525 = vmatmul.mubr.f32.gmra.mxu0 %v1524
    %v1526 = vpop.f32.mrf.mxu0
    %v1527 = vadd.f32 %v1439, %v1526
    %v1528 = vpop.f32.mrf.mxu0
    %v1529 = vadd.f32 %v1441, %v1528
    %1530 = vdwg.mxu0
    %v1531 = vadd.f32 %v794, %v1527
    %v1533 = vlaneseq
    %v1534 = vshrl.u32 %v1533, 7
    %v1535 = vsub.s32 0, %v1534
    %v1536 = vrot.slane %v849, %v1535
    %v1538 = vadd.f32 %v1536, %v1529
    %v1539 = vxor.u32 %v1531, 2147483648
    %v1540 = vmul.f32 %v1539, 1.442695
    %v1541 = vpow.pop %v1540
    %v1542 = vadd.f32 %v1541, 1.0
    %v1543 = vrcp.pop %v1542
    %v1544 = vmul.f32 1.0, %v1543
    %v1545 = vtanh.pop %v1531
    %v1546 = vmul.f32 %v1544, %v867
    %1548 = vrot.lane.b32.xlu0 %v1545, 64
    %v1549 = vpop.permute.xlu0 %1548
    %v1551 = vmul.f32 %v1544, %v1549
    %1553 = vrot.lane.b32.xlu0 %v1551, 32
    %v1554 = vpop.permute.xlu0 %1553
    %v1556 = vadd.f32 %v1546, %v1554
    %v1557 = vtanh.pop %v1556
    %1559 = vrot.lane.b32.xlu0 %v1557, 64
    %v1560 = vpop.permute.xlu0 %1559
    %v1562 = vmul.f32 %v1544, %v1560
    %v1563 = vxor.u32 %v1538, 2147483648
    %v1564 = vmul.f32 %v1563, 1.442695
    %v1565 = vpow.pop %v1564
    %v1566 = vadd.f32 %v1565, 1.0
    %v1567 = vrcp.pop %v1566
    %v1568 = vmul.f32 1.0, %v1567
    %v1569 = vtanh.pop %v1538
    %v1570 = vmul.f32 %v1568, 0.0
    %1572 = vrot.lane.b32.xlu0 %v1569, 64
    %v1573 = vpop.permute.xlu0 %1572
    %v1575 = vmul.f32 %v1568, %v1573
    %1577 = vrot.lane.b32.xlu0 %v1575, 32
    %v1578 = vpop.permute.xlu0 %1577
    %v1580 = vadd.f32 %v1570, %v1578
    %v1581 = vtanh.pop %v1580
    %1583 = vrot.lane.b32.xlu0 %v1581, 64
    %v1584 = vpop.permute.xlu0 %1583
    %v1586 = vmul.f32 %v1568, %v1584
    %1588 = vrot.lane.b32.xlu0 %v1562, 32
    %v1589 = vpop.permute.xlu0 %1588
    %1592 = vrot.lane.b32.xlu0 %v1586, 64
    %v1593 = vpop.permute.xlu0 %1592
    %v1595 = vsel %vm878, %v1589, %v1593
    %v1597 = vsel %vm880, %v1595, 0
    %1599 = vmatprep.subr.mxu0 0.0
    %1600 = vmatpush1.msra.mxu0 0.0
    %1601 = vmatprep.subr.mxu0 0.0
    %1602 = vmatpush1.msra.mxu0 0.0
    %1603 = vmatprep.subr.mxu0 0.0
    %1604 = vmatpush1.msra.mxu0 0.0
    %1605 = vmatprep.subr.mxu0 0.0
    %1606 = vmatpush1.msra.mxu0 0.0
    %1607 = vmatprep.subr.mxu0 0.0
    %1608 = vmatpush1.msra.mxu0 0.0
    %1609 = vmatprep.subr.mxu0 0.0
    %1610 = vmatpush1.msra.mxu0 0.0
    %1611 = vmatprep.subr.mxu0 0.0
    %1612 = vmatpush1.msra.mxu0 0.0
    %1613 = vmatprep.subr.mxu0 0.0
    %1614 = vmatpush1.msra.mxu0 0.0
    %v1615 = vand.u32 %v848, 4294901760
    %1616 = vmatprep.subr.mxu0 %v1615
    %v1617 = vand.u32 %v847, 4294901760
    %1618 = vmatpush1.msra.mxu0 %v1617
    %v1619 = vand.u32 %v846, 4294901760
    %1620 = vmatprep.subr.mxu0 %v1619
    %v1621 = vand.u32 %v845, 4294901760
    %1622 = vmatpush1.msra.mxu0 %v1621
    %v1623 = vand.u32 %v844, 4294901760
    %1624 = vmatprep.subr.mxu0 %v1623
    %v1625 = vand.u32 %v843, 4294901760
    %1626 = vmatpush1.msra.mxu0 %v1625
    %v1627 = vand.u32 %v842, 4294901760
    %1628 = vmatprep.subr.mxu0 %v1627
    %v1629 = vand.u32 %v841, 4294901760
    %1630 = vmatpush1.msra.mxu0 %v1629
    %v1631 = vand.u32 %v840, 4294901760
    %1632 = vmatprep.subr.mxu0 %v1631
    %v1633 = vand.u32 %v839, 4294901760
    %1634 = vmatpush1.msra.mxu0 %v1633
    %v1635 = vand.u32 %v838, 4294901760
    %1636 = vmatprep.subr.mxu0 %v1635
    %v1637 = vand.u32 %v837, 4294901760
    %1638 = vmatpush1.msra.mxu0 %v1637
    %v1639 = vand.u32 %v836, 4294901760
    %1640 = vmatprep.subr.mxu0 %v1639
    %v1641 = vand.u32 %v835, 4294901760
    %1642 = vmatpush1.msra.mxu0 %v1641
    %v1643 = vand.u32 %v834, 4294901760
    %1644 = vmatprep.subr.mxu0 %v1643
    %v1645 = vand.u32 %v833, 4294901760
    %1646 = vmatpush1.msra.mxu0 %v1645
    %1647 = vmatprep.subr.mxu0 0.0
    %1648 = vmatpush2.msra.mxu0 0.0
    %1649 = vmatprep.subr.mxu0 0.0
    %1650 = vmatpush2.msra.mxu0 0.0
    %1651 = vmatprep.subr.mxu0 0.0
    %1652 = vmatpush2.msra.mxu0 0.0
    %1653 = vmatprep.subr.mxu0 0.0
    %1654 = vmatpush2.msra.mxu0 0.0
    %1655 = vmatprep.subr.mxu0 0.0
    %1656 = vmatpush2.msra.mxu0 0.0
    %1657 = vmatprep.subr.mxu0 0.0
    %1658 = vmatpush2.msra.mxu0 0.0
    %1659 = vmatprep.subr.mxu0 0.0
    %1660 = vmatpush2.msra.mxu0 0.0
    %1661 = vmatprep.subr.mxu0 0.0
    %1662 = vmatpush2.msra.mxu0 0.0
    %1663 = vmatprep.subr.mxu0 0.0
    %1664 = vmatpush2.msra.mxu0 0.0
    %1665 = vmatprep.subr.mxu0 0.0
    %1666 = vmatpush2.msra.mxu0 0.0
    %1667 = vmatprep.subr.mxu0 0.0
    %1668 = vmatpush2.msra.mxu0 0.0
    %1669 = vmatprep.subr.mxu0 0.0
    %1670 = vmatpush2.msra.mxu0 0.0
    %1671 = vmatprep.subr.mxu0 0.0
    %1672 = vmatpush2.msra.mxu0 0.0
    %1673 = vmatprep.subr.mxu0 0.0
    %1674 = vmatpush2.msra.mxu0 0.0
    %1675 = vmatprep.subr.mxu0 0.0
    %1676 = vmatpush2.msra.mxu0 0.0
    %1677 = vmatprep.subr.mxu0 0.0
    %1678 = vmatpush2.msra.mxu0 0.0
    %1679 = vmatprep.mubr.f32.mxu0 0.0
    %v1680 = vand.u32 %v1597, 4294901760
    %v1681 = vsub.f32 %v1597, %v1680
    %v1682 = vand.u32 %v1681, 4294901760
    %v1683 = vsub.f32 %v1681, %v1682
    %v1684 = vand.u32 %v1683, 4294901760
    %1685 = vmatmul.mubr.f32.gmra.mxu0 %v1684
    %v1686 = vpop.f32.mrf.mxu0
    %v1687 = vadd.f32 0.0, %v1686
    %v1688 = vpop.f32.mrf.mxu0
    %v1689 = vadd.f32 0.0, %v1688
    %1690 = vdwg.mxu0
    %1691 = vmatprep.subr.mxu0 0.0
    %1692 = vmatpush1.msra.mxu0 0.0
    %1693 = vmatprep.subr.mxu0 0.0
    %1694 = vmatpush1.msra.mxu0 0.0
    %1695 = vmatprep.subr.mxu0 0.0
    %1696 = vmatpush1.msra.mxu0 0.0
    %1697 = vmatprep.subr.mxu0 0.0
    %1698 = vmatpush1.msra.mxu0 0.0
    %1699 = vmatprep.subr.mxu0 0.0
    %1700 = vmatpush1.msra.mxu0 0.0
    %1701 = vmatprep.subr.mxu0 0.0
    %1702 = vmatpush1.msra.mxu0 0.0
    %1703 = vmatprep.subr.mxu0 0.0
    %1704 = vmatpush1.msra.mxu0 0.0
    %1705 = vmatprep.subr.mxu0 0.0
    %1706 = vmatpush1.msra.mxu0 0.0
    %v1707 = vand.u32 %v848, 4294901760
    %v1708 = vsub.f32 %v848, %v1707
    %v1709 = vand.u32 %v1708, 4294901760
    %v1710 = vsub.f32 %v1708, %v1709
    %v1711 = vand.u32 %v1710, 4294901760
    %1712 = vmatprep.subr.mxu0 %v1711
    %v1713 = vand.u32 %v847, 4294901760
    %v1714 = vsub.f32 %v847, %v1713
    %v1715 = vand.u32 %v1714, 4294901760
    %v1716 = vsub.f32 %v1714, %v1715
    %v1717 = vand.u32 %v1716, 4294901760
    %1718 = vmatpush1.msra.mxu0 %v1717
    %v1719 = vand.u32 %v846, 4294901760
    %v1720 = vsub.f32 %v846, %v1719
    %v1721 = vand.u32 %v1720, 4294901760
    %v1722 = vsub.f32 %v1720, %v1721
    %v1723 = vand.u32 %v1722, 4294901760
    %1724 = vmatprep.subr.mxu0 %v1723
    %v1725 = vand.u32 %v845, 4294901760
    %v1726 = vsub.f32 %v845, %v1725
    %v1727 = vand.u32 %v1726, 4294901760
    %v1728 = vsub.f32 %v1726, %v1727
    %v1729 = vand.u32 %v1728, 4294901760
    %1730 = vmatpush1.msra.mxu0 %v1729
    %v1731 = vand.u32 %v844, 4294901760
    %v1732 = vsub.f32 %v844, %v1731
    %v1733 = vand.u32 %v1732, 4294901760
    %v1734 = vsub.f32 %v1732, %v1733
    %v1735 = vand.u32 %v1734, 4294901760
    %1736 = vmatprep.subr.mxu0 %v1735
    %v1737 = vand.u32 %v843, 4294901760
    %v1738 = vsub.f32 %v843, %v1737
    %v1739 = vand.u32 %v1738, 4294901760
    %v1740 = vsub.f32 %v1738, %v1739
    %v1741 = vand.u32 %v1740, 4294901760
    %1742 = vmatpush1.msra.mxu0 %v1741
    %v1743 = vand.u32 %v842, 4294901760
    %v1744 = vsub.f32 %v842, %v1743
    %v1745 = vand.u32 %v1744, 4294901760
    %v1746 = vsub.f32 %v1744, %v1745
    %v1747 = vand.u32 %v1746, 4294901760
    %1748 = vmatprep.subr.mxu0 %v1747
    %v1749 = vand.u32 %v841, 4294901760
    %v1750 = vsub.f32 %v841, %v1749
    %v1751 = vand.u32 %v1750, 4294901760
    %v1752 = vsub.f32 %v1750, %v1751
    %v1753 = vand.u32 %v1752, 4294901760
    %1754 = vmatpush1.msra.mxu0 %v1753
    %v1755 = vand.u32 %v840, 4294901760
    %v1756 = vsub.f32 %v840, %v1755
    %v1757 = vand.u32 %v1756, 4294901760
    %v1758 = vsub.f32 %v1756, %v1757
    %v1759 = vand.u32 %v1758, 4294901760
    %1760 = vmatprep.subr.mxu0 %v1759
    %v1761 = vand.u32 %v839, 4294901760
    %v1762 = vsub.f32 %v839, %v1761
    %v1763 = vand.u32 %v1762, 4294901760
    %v1764 = vsub.f32 %v1762, %v1763
    %v1765 = vand.u32 %v1764, 4294901760
    %1766 = vmatpush1.msra.mxu0 %v1765
    %v1767 = vand.u32 %v838, 4294901760
    %v1768 = vsub.f32 %v838, %v1767
    %v1769 = vand.u32 %v1768, 4294901760
    %v1770 = vsub.f32 %v1768, %v1769
    %v1771 = vand.u32 %v1770, 4294901760
    %1772 = vmatprep.subr.mxu0 %v1771
    %v1773 = vand.u32 %v837, 4294901760
    %v1774 = vsub.f32 %v837, %v1773
    %v1775 = vand.u32 %v1774, 4294901760
    %v1776 = vsub.f32 %v1774, %v1775
    %v1777 = vand.u32 %v1776, 4294901760
    %1778 = vmatpush1.msra.mxu0 %v1777
    %v1779 = vand.u32 %v836, 4294901760
    %v1780 = vsub.f32 %v836, %v1779
    %v1781 = vand.u32 %v1780, 4294901760
    %v1782 = vsub.f32 %v1780, %v1781
    %v1783 = vand.u32 %v1782, 4294901760
    %1784 = vmatprep.subr.mxu0 %v1783
    %v1785 = vand.u32 %v835, 4294901760
    %v1786 = vsub.f32 %v835, %v1785
    %v1787 = vand.u32 %v1786, 4294901760
    %v1788 = vsub.f32 %v1786, %v1787
    %v1789 = vand.u32 %v1788, 4294901760
    %1790 = vmatpush1.msra.mxu0 %v1789
    %v1791 = vand.u32 %v834, 4294901760
    %v1792 = vsub.f32 %v834, %v1791
    %v1793 = vand.u32 %v1792, 4294901760
    %v1794 = vsub.f32 %v1792, %v1793
    %v1795 = vand.u32 %v1794, 4294901760
    %1796 = vmatprep.subr.mxu0 %v1795
    %v1797 = vand.u32 %v833, 4294901760
    %v1798 = vsub.f32 %v833, %v1797
    %v1799 = vand.u32 %v1798, 4294901760
    %v1800 = vsub.f32 %v1798, %v1799
    %v1801 = vand.u32 %v1800, 4294901760
    %1802 = vmatpush1.msra.mxu0 %v1801
    %1803 = vmatprep.subr.mxu0 0.0
    %1804 = vmatpush2.msra.mxu0 0.0
    %1805 = vmatprep.subr.mxu0 0.0
    %1806 = vmatpush2.msra.mxu0 0.0
    %1807 = vmatprep.subr.mxu0 0.0
    %1808 = vmatpush2.msra.mxu0 0.0
    %1809 = vmatprep.subr.mxu0 0.0
    %1810 = vmatpush2.msra.mxu0 0.0
    %1811 = vmatprep.subr.mxu0 0.0
    %1812 = vmatpush2.msra.mxu0 0.0
    %1813 = vmatprep.subr.mxu0 0.0
    %1814 = vmatpush2.msra.mxu0 0.0
    %1815 = vmatprep.subr.mxu0 0.0
    %1816 = vmatpush2.msra.mxu0 0.0
    %1817 = vmatprep.subr.mxu0 0.0
    %1818 = vmatpush2.msra.mxu0 0.0
    %1819 = vmatprep.subr.mxu0 0.0
    %1820 = vmatpush2.msra.mxu0 0.0
    %1821 = vmatprep.subr.mxu0 0.0
    %1822 = vmatpush2.msra.mxu0 0.0
    %1823 = vmatprep.subr.mxu0 0.0
    %1824 = vmatpush2.msra.mxu0 0.0
    %1825 = vmatprep.subr.mxu0 0.0
    %1826 = vmatpush2.msra.mxu0 0.0
    %1827 = vmatprep.subr.mxu0 0.0
    %1828 = vmatpush2.msra.mxu0 0.0
    %1829 = vmatprep.subr.mxu0 0.0
    %1830 = vmatpush2.msra.mxu0 0.0
    %1831 = vmatprep.subr.mxu0 0.0
    %1832 = vmatpush2.msra.mxu0 0.0
    %1833 = vmatprep.subr.mxu0 0.0
    %1834 = vmatpush2.msra.mxu0 0.0
    %1835 = vmatprep.mubr.f32.mxu0 0.0
    %v1836 = vand.u32 %v1597, 4294901760
    %1837 = vmatmul.mubr.f32.gmra.mxu0 %v1836
    %v1838 = vpop.f32.mrf.mxu0
    %v1839 = vadd.f32 %v1687, %v1838
    %v1840 = vpop.f32.mrf.mxu0
    %v1841 = vadd.f32 %v1689, %v1840
    %1842 = vdwg.mxu0
    %1843 = vmatprep.subr.mxu0 0.0
    %1844 = vmatpush1.msra.mxu0 0.0
    %1845 = vmatprep.subr.mxu0 0.0
    %1846 = vmatpush1.msra.mxu0 0.0
    %1847 = vmatprep.subr.mxu0 0.0
    %1848 = vmatpush1.msra.mxu0 0.0
    %1849 = vmatprep.subr.mxu0 0.0
    %1850 = vmatpush1.msra.mxu0 0.0
    %1851 = vmatprep.subr.mxu0 0.0
    %1852 = vmatpush1.msra.mxu0 0.0
    %1853 = vmatprep.subr.mxu0 0.0
    %1854 = vmatpush1.msra.mxu0 0.0
    %1855 = vmatprep.subr.mxu0 0.0
    %1856 = vmatpush1.msra.mxu0 0.0
    %1857 = vmatprep.subr.mxu0 0.0
    %1858 = vmatpush1.msra.mxu0 0.0
    %v1859 = vand.u32 %v848, 4294901760
    %v1860 = vsub.f32 %v848, %v1859
    %1861 = vmatprep.subr.mxu0 %v1860
    %v1862 = vand.u32 %v847, 4294901760
    %v1863 = vsub.f32 %v847, %v1862
    %1864 = vmatpush1.msra.mxu0 %v1863
    %v1865 = vand.u32 %v846, 4294901760
    %v1866 = vsub.f32 %v846, %v1865
    %1867 = vmatprep.subr.mxu0 %v1866
    %v1868 = vand.u32 %v845, 4294901760
    %v1869 = vsub.f32 %v845, %v1868
    %1870 = vmatpush1.msra.mxu0 %v1869
    %v1871 = vand.u32 %v844, 4294901760
    %v1872 = vsub.f32 %v844, %v1871
    %1873 = vmatprep.subr.mxu0 %v1872
    %v1874 = vand.u32 %v843, 4294901760
    %v1875 = vsub.f32 %v843, %v1874
    %1876 = vmatpush1.msra.mxu0 %v1875
    %v1877 = vand.u32 %v842, 4294901760
    %v1878 = vsub.f32 %v842, %v1877
    %1879 = vmatprep.subr.mxu0 %v1878
    %v1880 = vand.u32 %v841, 4294901760
    %v1881 = vsub.f32 %v841, %v1880
    %1882 = vmatpush1.msra.mxu0 %v1881
    %v1883 = vand.u32 %v840, 4294901760
    %v1884 = vsub.f32 %v840, %v1883
    %1885 = vmatprep.subr.mxu0 %v1884
    %v1886 = vand.u32 %v839, 4294901760
    %v1887 = vsub.f32 %v839, %v1886
    %1888 = vmatpush1.msra.mxu0 %v1887
    %v1889 = vand.u32 %v838, 4294901760
    %v1890 = vsub.f32 %v838, %v1889
    %1891 = vmatprep.subr.mxu0 %v1890
    %v1892 = vand.u32 %v837, 4294901760
    %v1893 = vsub.f32 %v837, %v1892
    %1894 = vmatpush1.msra.mxu0 %v1893
    %v1895 = vand.u32 %v836, 4294901760
    %v1896 = vsub.f32 %v836, %v1895
    %1897 = vmatprep.subr.mxu0 %v1896
    %v1898 = vand.u32 %v835, 4294901760
    %v1899 = vsub.f32 %v835, %v1898
    %1900 = vmatpush1.msra.mxu0 %v1899
    %v1901 = vand.u32 %v834, 4294901760
    %v1902 = vsub.f32 %v834, %v1901
    %1903 = vmatprep.subr.mxu0 %v1902
    %v1904 = vand.u32 %v833, 4294901760
    %v1905 = vsub.f32 %v833, %v1904
    %1906 = vmatpush1.msra.mxu0 %v1905
    %1907 = vmatprep.subr.mxu0 0.0
    %1908 = vmatpush2.msra.mxu0 0.0
    %1909 = vmatprep.subr.mxu0 0.0
    %1910 = vmatpush2.msra.mxu0 0.0
    %1911 = vmatprep.subr.mxu0 0.0
    %1912 = vmatpush2.msra.mxu0 0.0
    %1913 = vmatprep.subr.mxu0 0.0
    %1914 = vmatpush2.msra.mxu0 0.0
    %1915 = vmatprep.subr.mxu0 0.0
    %1916 = vmatpush2.msra.mxu0 0.0
    %1917 = vmatprep.subr.mxu0 0.0
    %1918 = vmatpush2.msra.mxu0 0.0
    %1919 = vmatprep.subr.mxu0 0.0
    %1920 = vmatpush2.msra.mxu0 0.0
    %1921 = vmatprep.subr.mxu0 0.0
    %1922 = vmatpush2.msra.mxu0 0.0
    %1923 = vmatprep.subr.mxu0 0.0
    %1924 = vmatpush2.msra.mxu0 0.0
    %1925 = vmatprep.subr.mxu0 0.0
    %1926 = vmatpush2.msra.mxu0 0.0
    %1927 = vmatprep.subr.mxu0 0.0
    %1928 = vmatpush2.msra.mxu0 0.0
    %1929 = vmatprep.subr.mxu0 0.0
    %1930 = vmatpush2.msra.mxu0 0.0
    %1931 = vmatprep.subr.mxu0 0.0
    %1932 = vmatpush2.msra.mxu0 0.0
    %1933 = vmatprep.subr.mxu0 0.0
    %1934 = vmatpush2.msra.mxu0 0.0
    %1935 = vmatprep.subr.mxu0 0.0
    %1936 = vmatpush2.msra.mxu0 0.0
    %1937 = vmatprep.subr.mxu0 0.0
    %1938 = vmatpush2.msra.mxu0 0.0
    %1939 = vmatprep.mubr.f32.mxu0 0.0
    %v1940 = vand.u32 %v1597, 4294901760
    %v1941 = vsub.f32 %v1597, %v1940
    %1942 = vmatmul.mubr.f32.gmra.mxu0 %v1941
    %v1943 = vpop.f32.mrf.mxu0
    %v1944 = vadd.f32 %v1839, %v1943
    %v1945 = vpop.f32.mrf.mxu0
    %v1946 = vadd.f32 %v1841, %v1945
    %1947 = vdwg.mxu0
    %1948 = vmatprep.subr.mxu0 0.0
    %1949 = vmatpush1.msra.mxu0 0.0
    %1950 = vmatprep.subr.mxu0 0.0
    %1951 = vmatpush1.msra.mxu0 0.0
    %1952 = vmatprep.subr.mxu0 0.0
    %1953 = vmatpush1.msra.mxu0 0.0
    %1954 = vmatprep.subr.mxu0 0.0
    %1955 = vmatpush1.msra.mxu0 0.0
    %1956 = vmatprep.subr.mxu0 0.0
    %1957 = vmatpush1.msra.mxu0 0.0
    %1958 = vmatprep.subr.mxu0 0.0
    %1959 = vmatpush1.msra.mxu0 0.0
    %1960 = vmatprep.subr.mxu0 0.0
    %1961 = vmatpush1.msra.mxu0 0.0
    %1962 = vmatprep.subr.mxu0 0.0
    %1963 = vmatpush1.msra.mxu0 0.0
    %v1964 = vand.u32 %v848, 4294901760
    %1965 = vmatprep.subr.mxu0 %v1964
    %v1966 = vand.u32 %v847, 4294901760
    %1967 = vmatpush1.msra.mxu0 %v1966
    %v1968 = vand.u32 %v846, 4294901760
    %1969 = vmatprep.subr.mxu0 %v1968
    %v1970 = vand.u32 %v845, 4294901760
    %1971 = vmatpush1.msra.mxu0 %v1970
    %v1972 = vand.u32 %v844, 4294901760
    %1973 = vmatprep.subr.mxu0 %v1972
    %v1974 = vand.u32 %v843, 4294901760
    %1975 = vmatpush1.msra.mxu0 %v1974
    %v1976 = vand.u32 %v842, 4294901760
    %1977 = vmatprep.subr.mxu0 %v1976
    %v1978 = vand.u32 %v841, 4294901760
    %1979 = vmatpush1.msra.mxu0 %v1978
    %v1980 = vand.u32 %v840, 4294901760
    %1981 = vmatprep.subr.mxu0 %v1980
    %v1982 = vand.u32 %v839, 4294901760
    %1983 = vmatpush1.msra.mxu0 %v1982
    %v1984 = vand.u32 %v838, 4294901760
    %1985 = vmatprep.subr.mxu0 %v1984
    %v1986 = vand.u32 %v837, 4294901760
    %1987 = vmatpush1.msra.mxu0 %v1986
    %v1988 = vand.u32 %v836, 4294901760
    %1989 = vmatprep.subr.mxu0 %v1988
    %v1990 = vand.u32 %v835, 4294901760
    %1991 = vmatpush1.msra.mxu0 %v1990
    %v1992 = vand.u32 %v834, 4294901760
    %1993 = vmatprep.subr.mxu0 %v1992
    %v1994 = vand.u32 %v833, 4294901760
    %1995 = vmatpush1.msra.mxu0 %v1994
    %1996 = vmatprep.subr.mxu0 0.0
    %1997 = vmatpush2.msra.mxu0 0.0
    %1998 = vmatprep.subr.mxu0 0.0
    %1999 = vmatpush2.msra.mxu0 0.0
    %2000 = vmatprep.subr.mxu0 0.0
    %2001 = vmatpush2.msra.mxu0 0.0
    %2002 = vmatprep.subr.mxu0 0.0
    %2003 = vmatpush2.msra.mxu0 0.0
    %2004 = vmatprep.subr.mxu0 0.0
    %2005 = vmatpush2.msra.mxu0 0.0
    %2006 = vmatprep.subr.mxu0 0.0
    %2007 = vmatpush2.msra.mxu0 0.0
    %2008 = vmatprep.subr.mxu0 0.0
    %2009 = vmatpush2.msra.mxu0 0.0
    %2010 = vmatprep.subr.mxu0 0.0
    %2011 = vmatpush2.msra.mxu0 0.0
    %2012 = vmatprep.subr.mxu0 0.0
    %2013 = vmatpush2.msra.mxu0 0.0
    %2014 = vmatprep.subr.mxu0 0.0
    %2015 = vmatpush2.msra.mxu0 0.0
    %2016 = vmatprep.subr.mxu0 0.0
    %2017 = vmatpush2.msra.mxu0 0.0
    %2018 = vmatprep.subr.mxu0 0.0
    %2019 = vmatpush2.msra.mxu0 0.0
    %2020 = vmatprep.subr.mxu0 0.0
    %2021 = vmatpush2.msra.mxu0 0.0
    %2022 = vmatprep.subr.mxu0 0.0
    %2023 = vmatpush2.msra.mxu0 0.0
    %2024 = vmatprep.subr.mxu0 0.0
    %2025 = vmatpush2.msra.mxu0 0.0
    %2026 = vmatprep.subr.mxu0 0.0
    %2027 = vmatpush2.msra.mxu0 0.0
    %2028 = vmatprep.mubr.f32.mxu0 0.0
    %v2029 = vand.u32 %v1597, 4294901760
    %v2030 = vsub.f32 %v1597, %v2029
    %v2031 = vand.u32 %v2030, 4294901760
    %2032 = vmatmul.mubr.f32.gmra.mxu0 %v2031
    %v2033 = vpop.f32.mrf.mxu0
    %v2034 = vadd.f32 %v1944, %v2033
    %v2035 = vpop.f32.mrf.mxu0
    %v2036 = vadd.f32 %v1946, %v2035
    %2037 = vdwg.mxu0
    %2038 = vmatprep.subr.mxu0 0.0
    %2039 = vmatpush1.msra.mxu0 0.0
    %2040 = vmatprep.subr.mxu0 0.0
    %2041 = vmatpush1.msra.mxu0 0.0
    %2042 = vmatprep.subr.mxu0 0.0
    %2043 = vmatpush1.msra.mxu0 0.0
    %2044 = vmatprep.subr.mxu0 0.0
    %2045 = vmatpush1.msra.mxu0 0.0
    %2046 = vmatprep.subr.mxu0 0.0
    %2047 = vmatpush1.msra.mxu0 0.0
    %2048 = vmatprep.subr.mxu0 0.0
    %2049 = vmatpush1.msra.mxu0 0.0
    %2050 = vmatprep.subr.mxu0 0.0
    %2051 = vmatpush1.msra.mxu0 0.0
    %2052 = vmatprep.subr.mxu0 0.0
    %2053 = vmatpush1.msra.mxu0 0.0
    %v2054 = vand.u32 %v848, 4294901760
    %v2055 = vsub.f32 %v848, %v2054
    %v2056 = vand.u32 %v2055, 4294901760
    %2057 = vmatprep.subr.mxu0 %v2056
    %v2058 = vand.u32 %v847, 4294901760
    %v2059 = vsub.f32 %v847, %v2058
    %v2060 = vand.u32 %v2059, 4294901760
    %2061 = vmatpush1.msra.mxu0 %v2060
    %v2062 = vand.u32 %v846, 4294901760
    %v2063 = vsub.f32 %v846, %v2062
    %v2064 = vand.u32 %v2063, 4294901760
    %2065 = vmatprep.subr.mxu0 %v2064
    %v2066 = vand.u32 %v845, 4294901760
    %v2067 = vsub.f32 %v845, %v2066
    %v2068 = vand.u32 %v2067, 4294901760
    %2069 = vmatpush1.msra.mxu0 %v2068
    %v2070 = vand.u32 %v844, 4294901760
    %v2071 = vsub.f32 %v844, %v2070
    %v2072 = vand.u32 %v2071, 4294901760
    %2073 = vmatprep.subr.mxu0 %v2072
    %v2074 = vand.u32 %v843, 4294901760
    %v2075 = vsub.f32 %v843, %v2074
    %v2076 = vand.u32 %v2075, 4294901760
    %2077 = vmatpush1.msra.mxu0 %v2076
    %v2078 = vand.u32 %v842, 4294901760
    %v2079 = vsub.f32 %v842, %v2078
    %v2080 = vand.u32 %v2079, 4294901760
    %2081 = vmatprep.subr.mxu0 %v2080
    %v2082 = vand.u32 %v841, 4294901760
    %v2083 = vsub.f32 %v841, %v2082
    %v2084 = vand.u32 %v2083, 4294901760
    %2085 = vmatpush1.msra.mxu0 %v2084
    %v2086 = vand.u32 %v840, 4294901760
    %v2087 = vsub.f32 %v840, %v2086
    %v2088 = vand.u32 %v2087, 4294901760
    %2089 = vmatprep.subr.mxu0 %v2088
    %v2090 = vand.u32 %v839, 4294901760
    %v2091 = vsub.f32 %v839, %v2090
    %v2092 = vand.u32 %v2091, 4294901760
    %2093 = vmatpush1.msra.mxu0 %v2092
    %v2094 = vand.u32 %v838, 4294901760
    %v2095 = vsub.f32 %v838, %v2094
    %v2096 = vand.u32 %v2095, 4294901760
    %2097 = vmatprep.subr.mxu0 %v2096
    %v2098 = vand.u32 %v837, 4294901760
    %v2099 = vsub.f32 %v837, %v2098
    %v2100 = vand.u32 %v2099, 4294901760
    %2101 = vmatpush1.msra.mxu0 %v2100
    %v2102 = vand.u32 %v836, 4294901760
    %v2103 = vsub.f32 %v836, %v2102
    %v2104 = vand.u32 %v2103, 4294901760
    %2105 = vmatprep.subr.mxu0 %v2104
    %v2106 = vand.u32 %v835, 4294901760
    %v2107 = vsub.f32 %v835, %v2106
    %v2108 = vand.u32 %v2107, 4294901760
    %2109 = vmatpush1.msra.mxu0 %v2108
    %v2110 = vand.u32 %v834, 4294901760
    %v2111 = vsub.f32 %v834, %v2110
    %v2112 = vand.u32 %v2111, 4294901760
    %2113 = vmatprep.subr.mxu0 %v2112
    %v2114 = vand.u32 %v833, 4294901760
    %v2115 = vsub.f32 %v833, %v2114
    %v2116 = vand.u32 %v2115, 4294901760
    %2117 = vmatpush1.msra.mxu0 %v2116
    %2118 = vmatprep.subr.mxu0 0.0
    %2119 = vmatpush2.msra.mxu0 0.0
    %2120 = vmatprep.subr.mxu0 0.0
    %2121 = vmatpush2.msra.mxu0 0.0
    %2122 = vmatprep.subr.mxu0 0.0
    %2123 = vmatpush2.msra.mxu0 0.0
    %2124 = vmatprep.subr.mxu0 0.0
    %2125 = vmatpush2.msra.mxu0 0.0
    %2126 = vmatprep.subr.mxu0 0.0
    %2127 = vmatpush2.msra.mxu0 0.0
    %2128 = vmatprep.subr.mxu0 0.0
    %2129 = vmatpush2.msra.mxu0 0.0
    %2130 = vmatprep.subr.mxu0 0.0
    %2131 = vmatpush2.msra.mxu0 0.0
    %2132 = vmatprep.subr.mxu0 0.0
    %2133 = vmatpush2.msra.mxu0 0.0
    %2134 = vmatprep.subr.mxu0 0.0
    %2135 = vmatpush2.msra.mxu0 0.0
    %2136 = vmatprep.subr.mxu0 0.0
    %2137 = vmatpush2.msra.mxu0 0.0
    %2138 = vmatprep.subr.mxu0 0.0
    %2139 = vmatpush2.msra.mxu0 0.0
    %2140 = vmatprep.subr.mxu0 0.0
    %2141 = vmatpush2.msra.mxu0 0.0
    %2142 = vmatprep.subr.mxu0 0.0
    %2143 = vmatpush2.msra.mxu0 0.0
    %2144 = vmatprep.subr.mxu0 0.0
    %2145 = vmatpush2.msra.mxu0 0.0
    %2146 = vmatprep.subr.mxu0 0.0
    %2147 = vmatpush2.msra.mxu0 0.0
    %2148 = vmatprep.subr.mxu0 0.0
    %2149 = vmatpush2.msra.mxu0 0.0
    %2150 = vmatprep.mubr.f32.mxu0 0.0
    %v2151 = vand.u32 %v1597, 4294901760
    %2152 = vmatmul.mubr.f32.gmra.mxu0 %v2151
    %v2153 = vpop.f32.mrf.mxu0
    %v2154 = vadd.f32 %v2034, %v2153
    %v2155 = vpop.f32.mrf.mxu0
    %v2156 = vadd.f32 %v2036, %v2155
    %2157 = vdwg.mxu0
    %2158 = vmatprep.subr.mxu0 0.0
    %2159 = vmatpush1.msra.mxu0 0.0
    %2160 = vmatprep.subr.mxu0 0.0
    %2161 = vmatpush1.msra.mxu0 0.0
    %2162 = vmatprep.subr.mxu0 0.0
    %2163 = vmatpush1.msra.mxu0 0.0
    %2164 = vmatprep.subr.mxu0 0.0
    %2165 = vmatpush1.msra.mxu0 0.0
    %2166 = vmatprep.subr.mxu0 0.0
    %2167 = vmatpush1.msra.mxu0 0.0
    %2168 = vmatprep.subr.mxu0 0.0
    %2169 = vmatpush1.msra.mxu0 0.0
    %2170 = vmatprep.subr.mxu0 0.0
    %2171 = vmatpush1.msra.mxu0 0.0
    %2172 = vmatprep.subr.mxu0 0.0
    %2173 = vmatpush1.msra.mxu0 0.0
    %v2174 = vand.u32 %v848, 4294901760
    %2175 = vmatprep.subr.mxu0 %v2174
    %v2176 = vand.u32 %v847, 4294901760
    %2177 = vmatpush1.msra.mxu0 %v2176
    %v2178 = vand.u32 %v846, 4294901760
    %2179 = vmatprep.subr.mxu0 %v2178
    %v2180 = vand.u32 %v845, 4294901760
    %2181 = vmatpush1.msra.mxu0 %v2180
    %v2182 = vand.u32 %v844, 4294901760
    %2183 = vmatprep.subr.mxu0 %v2182
    %v2184 = vand.u32 %v843, 4294901760
    %2185 = vmatpush1.msra.mxu0 %v2184
    %v2186 = vand.u32 %v842, 4294901760
    %2187 = vmatprep.subr.mxu0 %v2186
    %v2188 = vand.u32 %v841, 4294901760
    %2189 = vmatpush1.msra.mxu0 %v2188
    %v2190 = vand.u32 %v840, 4294901760
    %2191 = vmatprep.subr.mxu0 %v2190
    %v2192 = vand.u32 %v839, 4294901760
    %2193 = vmatpush1.msra.mxu0 %v2192
    %v2194 = vand.u32 %v838, 4294901760
    %2195 = vmatprep.subr.mxu0 %v2194
    %v2196 = vand.u32 %v837, 4294901760
    %2197 = vmatpush1.msra.mxu0 %v2196
    %v2198 = vand.u32 %v836, 4294901760
    %2199 = vmatprep.subr.mxu0 %v2198
    %v2200 = vand.u32 %v835, 4294901760
    %2201 = vmatpush1.msra.mxu0 %v2200
    %v2202 = vand.u32 %v834, 4294901760
    %2203 = vmatprep.subr.mxu0 %v2202
    %v2204 = vand.u32 %v833, 4294901760
    %2205 = vmatpush1.msra.mxu0 %v2204
    %2206 = vmatprep.subr.mxu0 0.0
    %2207 = vmatpush2.msra.mxu0 0.0
    %2208 = vmatprep.subr.mxu0 0.0
    %2209 = vmatpush2.msra.mxu0 0.0
    %2210 = vmatprep.subr.mxu0 0.0
    %2211 = vmatpush2.msra.mxu0 0.0
    %2212 = vmatprep.subr.mxu0 0.0
    %2213 = vmatpush2.msra.mxu0 0.0
    %2214 = vmatprep.subr.mxu0 0.0
    %2215 = vmatpush2.msra.mxu0 0.0
    %2216 = vmatprep.subr.mxu0 0.0
    %2217 = vmatpush2.msra.mxu0 0.0
    %2218 = vmatprep.subr.mxu0 0.0
    %2219 = vmatpush2.msra.mxu0 0.0
    %2220 = vmatprep.subr.mxu0 0.0
    %2221 = vmatpush2.msra.mxu0 0.0
    %2222 = vmatprep.subr.mxu0 0.0
    %2223 = vmatpush2.msra.mxu0 0.0
    %2224 = vmatprep.subr.mxu0 0.0
    %2225 = vmatpush2.msra.mxu0 0.0
    %2226 = vmatprep.subr.mxu0 0.0
    %2227 = vmatpush2.msra.mxu0 0.0
    %2228 = vmatprep.subr.mxu0 0.0
    %2229 = vmatpush2.msra.mxu0 0.0
    %2230 = vmatprep.subr.mxu0 0.0
    %2231 = vmatpush2.msra.mxu0 0.0
    %2232 = vmatprep.subr.mxu0 0.0
    %2233 = vmatpush2.msra.mxu0 0.0
    %2234 = vmatprep.subr.mxu0 0.0
    %2235 = vmatpush2.msra.mxu0 0.0
    %2236 = vmatprep.subr.mxu0 0.0
    %2237 = vmatpush2.msra.mxu0 0.0
    %2238 = vmatprep.mubr.f32.mxu0 0.0
    %v2239 = vand.u32 %v1597, 4294901760
    %2240 = vmatmul.mubr.f32.gmra.mxu0 %v2239
    %v2241 = vpop.f32.mrf.mxu0
    %v2242 = vadd.f32 %v2154, %v2241
    %v2243 = vpop.f32.mrf.mxu0
    %v2244 = vadd.f32 %v2156, %v2243
    %2245 = vdwg.mxu0
    %v2246 = vadd.f32 %v800, %v2242
    %v2247 = vadd.f32 %v1536, %v2244
    %v2248 = vxor.u32 %v2246, 2147483648
    %v2249 = vmul.f32 %v2248, 1.442695
    %v2250 = vpow.pop %v2249
    %v2251 = vadd.f32 %v2250, 1.0
    %v2252 = vrcp.pop %v2251
    %v2253 = vmul.f32 1.0, %v2252
    %v2254 = vtanh.pop %v2246
    %v2255 = vmul.f32 %v2253, %v1556
    %2257 = vrot.lane.b32.xlu0 %v2254, 64
    %v2258 = vpop.permute.xlu0 %2257
    %v2260 = vmul.f32 %v2253, %v2258
    %2262 = vrot.lane.b32.xlu0 %v2260, 32
    %v2263 = vpop.permute.xlu0 %2262
    %v2265 = vadd.f32 %v2255, %v2263
    %v2266 = vtanh.pop %v2265
    %2268 = vrot.lane.b32.xlu0 %v2266, 64
    %v2269 = vpop.permute.xlu0 %2268
    %v2271 = vmul.f32 %v2253, %v2269
    %v2272 = vxor.u32 %v2247, 2147483648
    %v2273 = vmul.f32 %v2272, 1.442695
    %v2274 = vpow.pop %v2273
    %v2275 = vadd.f32 %v2274, 1.0
    %v2276 = vrcp.pop %v2275
    %v2277 = vmul.f32 1.0, %v2276
    %v2278 = vtanh.pop %v2247
    %v2279 = vmul.f32 %v2277, %v1580
    %2281 = vrot.lane.b32.xlu0 %v2278, 64
    %v2282 = vpop.permute.xlu0 %2281
    %v2284 = vmul.f32 %v2277, %v2282
    %2286 = vrot.lane.b32.xlu0 %v2284, 32
    %v2287 = vpop.permute.xlu0 %2286
    %v2289 = vadd.f32 %v2279, %v2287
    %v2290 = vtanh.pop %v2289
    %2292 = vrot.lane.b32.xlu0 %v2290, 64
    %v2293 = vpop.permute.xlu0 %2292
    %v2295 = vmul.f32 %v2277, %v2293
    %2297 = vrot.lane.b32.xlu0 %v2271, 32
    %v2298 = vpop.permute.xlu0 %2297
    %2301 = vrot.lane.b32.xlu0 %v2295, 64
    %v2302 = vpop.permute.xlu0 %2301
    %v2304 = vsel %vm878, %v2298, %v2302
    %v2306 = vsel %vm880, %v2304, 0
    %2308 = vmatprep.subr.mxu0 0.0
    %2309 = vmatpush1.msra.mxu0 0.0
    %2310 = vmatprep.subr.mxu0 0.0
    %2311 = vmatpush1.msra.mxu0 0.0
    %2312 = vmatprep.subr.mxu0 0.0
    %2313 = vmatpush1.msra.mxu0 0.0
    %2314 = vmatprep.subr.mxu0 0.0
    %2315 = vmatpush1.msra.mxu0 0.0
    %2316 = vmatprep.subr.mxu0 0.0
    %2317 = vmatpush1.msra.mxu0 0.0
    %2318 = vmatprep.subr.mxu0 0.0
    %2319 = vmatpush1.msra.mxu0 0.0
    %2320 = vmatprep.subr.mxu0 0.0
    %2321 = vmatpush1.msra.mxu0 0.0
    %2322 = vmatprep.subr.mxu0 0.0
    %2323 = vmatpush1.msra.mxu0 0.0
    %v2324 = vand.u32 %v848, 4294901760
    %2325 = vmatprep.subr.mxu0 %v2324
    %v2326 = vand.u32 %v847, 4294901760
    %2327 = vmatpush1.msra.mxu0 %v2326
    %v2328 = vand.u32 %v846, 4294901760
    %2329 = vmatprep.subr.mxu0 %v2328
    %v2330 = vand.u32 %v845, 4294901760
    %2331 = vmatpush1.msra.mxu0 %v2330
    %v2332 = vand.u32 %v844, 4294901760
    %2333 = vmatprep.subr.mxu0 %v2332
    %v2334 = vand.u32 %v843, 4294901760
    %2335 = vmatpush1.msra.mxu0 %v2334
    %v2336 = vand.u32 %v842, 4294901760
    %2337 = vmatprep.subr.mxu0 %v2336
    %v2338 = vand.u32 %v841, 4294901760
    %2339 = vmatpush1.msra.mxu0 %v2338
    %v2340 = vand.u32 %v840, 4294901760
    %2341 = vmatprep.subr.mxu0 %v2340
    %v2342 = vand.u32 %v839, 4294901760
    %2343 = vmatpush1.msra.mxu0 %v2342
    %v2344 = vand.u32 %v838, 4294901760
    %2345 = vmatprep.subr.mxu0 %v2344
    %v2346 = vand.u32 %v837, 4294901760
    %2347 = vmatpush1.msra.mxu0 %v2346
    %v2348 = vand.u32 %v836, 4294901760
    %2349 = vmatprep.subr.mxu0 %v2348
    %v2350 = vand.u32 %v835, 4294901760
    %2351 = vmatpush1.msra.mxu0 %v2350
    %v2352 = vand.u32 %v834, 4294901760
    %2353 = vmatprep.subr.mxu0 %v2352
    %v2354 = vand.u32 %v833, 4294901760
    %2355 = vmatpush1.msra.mxu0 %v2354
    %2356 = vmatprep.subr.mxu0 0.0
    %2357 = vmatpush2.msra.mxu0 0.0
    %2358 = vmatprep.subr.mxu0 0.0
    %2359 = vmatpush2.msra.mxu0 0.0
    %2360 = vmatprep.subr.mxu0 0.0
    %2361 = vmatpush2.msra.mxu0 0.0
    %2362 = vmatprep.subr.mxu0 0.0
    %2363 = vmatpush2.msra.mxu0 0.0
    %2364 = vmatprep.subr.mxu0 0.0
    %2365 = vmatpush2.msra.mxu0 0.0
    %2366 = vmatprep.subr.mxu0 0.0
    %2367 = vmatpush2.msra.mxu0 0.0
    %2368 = vmatprep.subr.mxu0 0.0
    %2369 = vmatpush2.msra.mxu0 0.0
    %2370 = vmatprep.subr.mxu0 0.0
    %2371 = vmatpush2.msra.mxu0 0.0
    %2372 = vmatprep.subr.mxu0 0.0
    %2373 = vmatpush2.msra.mxu0 0.0
    %2374 = vmatprep.subr.mxu0 0.0
    %2375 = vmatpush2.msra.mxu0 0.0
    %2376 = vmatprep.subr.mxu0 0.0
    %2377 = vmatpush2.msra.mxu0 0.0
    %2378 = vmatprep.subr.mxu0 0.0
    %2379 = vmatpush2.msra.mxu0 0.0
    %2380 = vmatprep.subr.mxu0 0.0
    %2381 = vmatpush2.msra.mxu0 0.0
    %2382 = vmatprep.subr.mxu0 0.0
    %2383 = vmatpush2.msra.mxu0 0.0
    %2384 = vmatprep.subr.mxu0 0.0
    %2385 = vmatpush2.msra.mxu0 0.0
    %2386 = vmatprep.subr.mxu0 0.0
    %2387 = vmatpush2.msra.mxu0 0.0
    %2388 = vmatprep.mubr.f32.mxu0 0.0
    %v2389 = vand.u32 %v2306, 4294901760
    %v2390 = vsub.f32 %v2306, %v2389
    %v2391 = vand.u32 %v2390, 4294901760
    %v2392 = vsub.f32 %v2390, %v2391
    %v2393 = vand.u32 %v2392, 4294901760
    %2394 = vmatmul.mubr.f32.gmra.mxu0 %v2393
    %v2395 = vpop.f32.mrf.mxu0
    %v2396 = vadd.f32 0.0, %v2395
    %v2397 = vpop.f32.mrf.mxu0
    %v2398 = vadd.f32 0.0, %v2397
    %2399 = vdwg.mxu0
    %2400 = vmatprep.subr.mxu0 0.0
    %2401 = vmatpush1.msra.mxu0 0.0
    %2402 = vmatprep.subr.mxu0 0.0
    %2403 = vmatpush1.msra.mxu0 0.0
    %2404 = vmatprep.subr.mxu0 0.0
    %2405 = vmatpush1.msra.mxu0 0.0
    %2406 = vmatprep.subr.mxu0 0.0
    %2407 = vmatpush1.msra.mxu0 0.0
    %2408 = vmatprep.subr.mxu0 0.0
    %2409 = vmatpush1.msra.mxu0 0.0
    %2410 = vmatprep.subr.mxu0 0.0
    %2411 = vmatpush1.msra.mxu0 0.0
    %2412 = vmatprep.subr.mxu0 0.0
    %2413 = vmatpush1.msra.mxu0 0.0
    %2414 = vmatprep.subr.mxu0 0.0
    %2415 = vmatpush1.msra.mxu0 0.0
    %v2416 = vand.u32 %v848, 4294901760
    %v2417 = vsub.f32 %v848, %v2416
    %v2418 = vand.u32 %v2417, 4294901760
    %v2419 = vsub.f32 %v2417, %v2418
    %v2420 = vand.u32 %v2419, 4294901760
    %2421 = vmatprep.subr.mxu0 %v2420
    %v2422 = vand.u32 %v847, 4294901760
    %v2423 = vsub.f32 %v847, %v2422
    %v2424 = vand.u32 %v2423, 4294901760
    %v2425 = vsub.f32 %v2423, %v2424
    %v2426 = vand.u32 %v2425, 4294901760
    %2427 = vmatpush1.msra.mxu0 %v2426
    %v2428 = vand.u32 %v846, 4294901760
    %v2429 = vsub.f32 %v846, %v2428
    %v2430 = vand.u32 %v2429, 4294901760
    %v2431 = vsub.f32 %v2429, %v2430
    %v2432 = vand.u32 %v2431, 4294901760
    %2433 = vmatprep.subr.mxu0 %v2432
    %v2434 = vand.u32 %v845, 4294901760
    %v2435 = vsub.f32 %v845, %v2434
    %v2436 = vand.u32 %v2435, 4294901760
    %v2437 = vsub.f32 %v2435, %v2436
    %v2438 = vand.u32 %v2437, 4294901760
    %2439 = vmatpush1.msra.mxu0 %v2438
    %v2440 = vand.u32 %v844, 4294901760
    %v2441 = vsub.f32 %v844, %v2440
    %v2442 = vand.u32 %v2441, 4294901760
    %v2443 = vsub.f32 %v2441, %v2442
    %v2444 = vand.u32 %v2443, 4294901760
    %2445 = vmatprep.subr.mxu0 %v2444
    %v2446 = vand.u32 %v843, 4294901760
    %v2447 = vsub.f32 %v843, %v2446
    %v2448 = vand.u32 %v2447, 4294901760
    %v2449 = vsub.f32 %v2447, %v2448
    %v2450 = vand.u32 %v2449, 4294901760
    %2451 = vmatpush1.msra.mxu0 %v2450
    %v2452 = vand.u32 %v842, 4294901760
    %v2453 = vsub.f32 %v842, %v2452
    %v2454 = vand.u32 %v2453, 4294901760
    %v2455 = vsub.f32 %v2453, %v2454
    %v2456 = vand.u32 %v2455, 4294901760
    %2457 = vmatprep.subr.mxu0 %v2456
    %v2458 = vand.u32 %v841, 4294901760
    %v2459 = vsub.f32 %v841, %v2458
    %v2460 = vand.u32 %v2459, 4294901760
    %v2461 = vsub.f32 %v2459, %v2460
    %v2462 = vand.u32 %v2461, 4294901760
    %2463 = vmatpush1.msra.mxu0 %v2462
    %v2464 = vand.u32 %v840, 4294901760
    %v2465 = vsub.f32 %v840, %v2464
    %v2466 = vand.u32 %v2465, 4294901760
    %v2467 = vsub.f32 %v2465, %v2466
    %v2468 = vand.u32 %v2467, 4294901760
    %2469 = vmatprep.subr.mxu0 %v2468
    %v2470 = vand.u32 %v839, 4294901760
    %v2471 = vsub.f32 %v839, %v2470
    %v2472 = vand.u32 %v2471, 4294901760
    %v2473 = vsub.f32 %v2471, %v2472
    %v2474 = vand.u32 %v2473, 4294901760
    %2475 = vmatpush1.msra.mxu0 %v2474
    %v2476 = vand.u32 %v838, 4294901760
    %v2477 = vsub.f32 %v838, %v2476
    %v2478 = vand.u32 %v2477, 4294901760
    %v2479 = vsub.f32 %v2477, %v2478
    %v2480 = vand.u32 %v2479, 4294901760
    %2481 = vmatprep.subr.mxu0 %v2480
    %v2482 = vand.u32 %v837, 4294901760
    %v2483 = vsub.f32 %v837, %v2482
    %v2484 = vand.u32 %v2483, 4294901760
    %v2485 = vsub.f32 %v2483, %v2484
    %v2486 = vand.u32 %v2485, 4294901760
    %2487 = vmatpush1.msra.mxu0 %v2486
    %v2488 = vand.u32 %v836, 4294901760
    %v2489 = vsub.f32 %v836, %v2488
    %v2490 = vand.u32 %v2489, 4294901760
    %v2491 = vsub.f32 %v2489, %v2490
    %v2492 = vand.u32 %v2491, 4294901760
    %2493 = vmatprep.subr.mxu0 %v2492
    %v2494 = vand.u32 %v835, 4294901760
    %v2495 = vsub.f32 %v835, %v2494
    %v2496 = vand.u32 %v2495, 4294901760
    %v2497 = vsub.f32 %v2495, %v2496
    %v2498 = vand.u32 %v2497, 4294901760
    %2499 = vmatpush1.msra.mxu0 %v2498
    %v2500 = vand.u32 %v834, 4294901760
    %v2501 = vsub.f32 %v834, %v2500
    %v2502 = vand.u32 %v2501, 4294901760
    %v2503 = vsub.f32 %v2501, %v2502
    %v2504 = vand.u32 %v2503, 4294901760
    %2505 = vmatprep.subr.mxu0 %v2504
    %v2506 = vand.u32 %v833, 4294901760
    %v2507 = vsub.f32 %v833, %v2506
    %v2508 = vand.u32 %v2507, 4294901760
    %v2509 = vsub.f32 %v2507, %v2508
    %v2510 = vand.u32 %v2509, 4294901760
    %2511 = vmatpush1.msra.mxu0 %v2510
    %2512 = vmatprep.subr.mxu0 0.0
    %2513 = vmatpush2.msra.mxu0 0.0
    %2514 = vmatprep.subr.mxu0 0.0
    %2515 = vmatpush2.msra.mxu0 0.0
    %2516 = vmatprep.subr.mxu0 0.0
    %2517 = vmatpush2.msra.mxu0 0.0
    %2518 = vmatprep.subr.mxu0 0.0
    %2519 = vmatpush2.msra.mxu0 0.0
    %2520 = vmatprep.subr.mxu0 0.0
    %2521 = vmatpush2.msra.mxu0 0.0
    %2522 = vmatprep.subr.mxu0 0.0
    %2523 = vmatpush2.msra.mxu0 0.0
    %2524 = vmatprep.subr.mxu0 0.0
    %2525 = vmatpush2.msra.mxu0 0.0
    %2526 = vmatprep.subr.mxu0 0.0
    %2527 = vmatpush2.msra.mxu0 0.0
    %2528 = vmatprep.subr.mxu0 0.0
    %2529 = vmatpush2.msra.mxu0 0.0
    %2530 = vmatprep.subr.mxu0 0.0
    %2531 = vmatpush2.msra.mxu0 0.0
    %2532 = vmatprep.subr.mxu0 0.0
    %2533 = vmatpush2.msra.mxu0 0.0
    %2534 = vmatprep.subr.mxu0 0.0
    %2535 = vmatpush2.msra.mxu0 0.0
    %2536 = vmatprep.subr.mxu0 0.0
    %2537 = vmatpush2.msra.mxu0 0.0
    %2538 = vmatprep.subr.mxu0 0.0
    %2539 = vmatpush2.msra.mxu0 0.0
    %2540 = vmatprep.subr.mxu0 0.0
    %2541 = vmatpush2.msra.mxu0 0.0
    %2542 = vmatprep.subr.mxu0 0.0
    %2543 = vmatpush2.msra.mxu0 0.0
    %2544 = vmatprep.mubr.f32.mxu0 0.0
    %v2545 = vand.u32 %v2306, 4294901760
    %2546 = vmatmul.mubr.f32.gmra.mxu0 %v2545
    %v2547 = vpop.f32.mrf.mxu0
    %v2548 = vadd.f32 %v2396, %v2547
    %v2549 = vpop.f32.mrf.mxu0
    %v2550 = vadd.f32 %v2398, %v2549
    %2551 = vdwg.mxu0
    %2552 = vmatprep.subr.mxu0 0.0
    %2553 = vmatpush1.msra.mxu0 0.0
    %2554 = vmatprep.subr.mxu0 0.0
    %2555 = vmatpush1.msra.mxu0 0.0
    %2556 = vmatprep.subr.mxu0 0.0
    %2557 = vmatpush1.msra.mxu0 0.0
    %2558 = vmatprep.subr.mxu0 0.0
    %2559 = vmatpush1.msra.mxu0 0.0
    %2560 = vmatprep.subr.mxu0 0.0
    %2561 = vmatpush1.msra.mxu0 0.0
    %2562 = vmatprep.subr.mxu0 0.0
    %2563 = vmatpush1.msra.mxu0 0.0
    %2564 = vmatprep.subr.mxu0 0.0
    %2565 = vmatpush1.msra.mxu0 0.0
    %2566 = vmatprep.subr.mxu0 0.0
    %2567 = vmatpush1.msra.mxu0 0.0
    %v2568 = vand.u32 %v848, 4294901760
    %v2569 = vsub.f32 %v848, %v2568
    %2570 = vmatprep.subr.mxu0 %v2569
    %v2571 = vand.u32 %v847, 4294901760
    %v2572 = vsub.f32 %v847, %v2571
    %2573 = vmatpush1.msra.mxu0 %v2572
    %v2574 = vand.u32 %v846, 4294901760
    %v2575 = vsub.f32 %v846, %v2574
    %2576 = vmatprep.subr.mxu0 %v2575
    %v2577 = vand.u32 %v845, 4294901760
    %v2578 = vsub.f32 %v845, %v2577
    %2579 = vmatpush1.msra.mxu0 %v2578
    %v2580 = vand.u32 %v844, 4294901760
    %v2581 = vsub.f32 %v844, %v2580
    %2582 = vmatprep.subr.mxu0 %v2581
    %v2583 = vand.u32 %v843, 4294901760
    %v2584 = vsub.f32 %v843, %v2583
    %2585 = vmatpush1.msra.mxu0 %v2584
    %v2586 = vand.u32 %v842, 4294901760
    %v2587 = vsub.f32 %v842, %v2586
    %2588 = vmatprep.subr.mxu0 %v2587
    %v2589 = vand.u32 %v841, 4294901760
    %v2590 = vsub.f32 %v841, %v2589
    %2591 = vmatpush1.msra.mxu0 %v2590
    %v2592 = vand.u32 %v840, 4294901760
    %v2593 = vsub.f32 %v840, %v2592
    %2594 = vmatprep.subr.mxu0 %v2593
    %v2595 = vand.u32 %v839, 4294901760
    %v2596 = vsub.f32 %v839, %v2595
    %2597 = vmatpush1.msra.mxu0 %v2596
    %v2598 = vand.u32 %v838, 4294901760
    %v2599 = vsub.f32 %v838, %v2598
    %2600 = vmatprep.subr.mxu0 %v2599
    %v2601 = vand.u32 %v837, 4294901760
    %v2602 = vsub.f32 %v837, %v2601
    %2603 = vmatpush1.msra.mxu0 %v2602
    %v2604 = vand.u32 %v836, 4294901760
    %v2605 = vsub.f32 %v836, %v2604
    %2606 = vmatprep.subr.mxu0 %v2605
    %v2607 = vand.u32 %v835, 4294901760
    %v2608 = vsub.f32 %v835, %v2607
    %2609 = vmatpush1.msra.mxu0 %v2608
    %v2610 = vand.u32 %v834, 4294901760
    %v2611 = vsub.f32 %v834, %v2610
    %2612 = vmatprep.subr.mxu0 %v2611
    %v2613 = vand.u32 %v833, 4294901760
    %v2614 = vsub.f32 %v833, %v2613
    %2615 = vmatpush1.msra.mxu0 %v2614
    %2616 = vmatprep.subr.mxu0 0.0
    %2617 = vmatpush2.msra.mxu0 0.0
    %2618 = vmatprep.subr.mxu0 0.0
    %2619 = vmatpush2.msra.mxu0 0.0
    %2620 = vmatprep.subr.mxu0 0.0
    %2621 = vmatpush2.msra.mxu0 0.0
    %2622 = vmatprep.subr.mxu0 0.0
    %2623 = vmatpush2.msra.mxu0 0.0
    %2624 = vmatprep.subr.mxu0 0.0
    %2625 = vmatpush2.msra.mxu0 0.0
    %2626 = vmatprep.subr.mxu0 0.0
    %2627 = vmatpush2.msra.mxu0 0.0
    %2628 = vmatprep.subr.mxu0 0.0
    %2629 = vmatpush2.msra.mxu0 0.0
    %2630 = vmatprep.subr.mxu0 0.0
    %2631 = vmatpush2.msra.mxu0 0.0
    %2632 = vmatprep.subr.mxu0 0.0
    %2633 = vmatpush2.msra.mxu0 0.0
    %2634 = vmatprep.subr.mxu0 0.0
    %2635 = vmatpush2.msra.mxu0 0.0
    %2636 = vmatprep.subr.mxu0 0.0
    %2637 = vmatpush2.msra.mxu0 0.0
    %2638 = vmatprep.subr.mxu0 0.0
    %2639 = vmatpush2.msra.mxu0 0.0
    %2640 = vmatprep.subr.mxu0 0.0
    %2641 = vmatpush2.msra.mxu0 0.0
    %2642 = vmatprep.subr.mxu0 0.0
    %2643 = vmatpush2.msra.mxu0 0.0
    %2644 = vmatprep.subr.mxu0 0.0
    %2645 = vmatpush2.msra.mxu0 0.0
    %2646 = vmatprep.subr.mxu0 0.0
    %2647 = vmatpush2.msra.mxu0 0.0
    %2648 = vmatprep.mubr.f32.mxu0 0.0
    %v2649 = vand.u32 %v2306, 4294901760
    %v2650 = vsub.f32 %v2306, %v2649
    %2651 = vmatmul.mubr.f32.gmra.mxu0 %v2650
    %v2652 = vpop.f32.mrf.mxu0
    %v2653 = vadd.f32 %v2548, %v2652
    %v2654 = vpop.f32.mrf.mxu0
    %v2655 = vadd.f32 %v2550, %v2654
    %2656 = vdwg.mxu0
    %2657 = vmatprep.subr.mxu0 0.0
    %2658 = vmatpush1.msra.mxu0 0.0
    %2659 = vmatprep.subr.mxu0 0.0
    %2660 = vmatpush1.msra.mxu0 0.0
    %2661 = vmatprep.subr.mxu0 0.0
    %2662 = vmatpush1.msra.mxu0 0.0
    %2663 = vmatprep.subr.mxu0 0.0
    %2664 = vmatpush1.msra.mxu0 0.0
    %2665 = vmatprep.subr.mxu0 0.0
    %2666 = vmatpush1.msra.mxu0 0.0
    %2667 = vmatprep.subr.mxu0 0.0
    %2668 = vmatpush1.msra.mxu0 0.0
    %2669 = vmatprep.subr.mxu0 0.0
    %2670 = vmatpush1.msra.mxu0 0.0
    %2671 = vmatprep.subr.mxu0 0.0
    %2672 = vmatpush1.msra.mxu0 0.0
    %v2673 = vand.u32 %v848, 4294901760
    %2674 = vmatprep.subr.mxu0 %v2673
    %v2675 = vand.u32 %v847, 4294901760
    %2676 = vmatpush1.msra.mxu0 %v2675
    %v2677 = vand.u32 %v846, 4294901760
    %2678 = vmatprep.subr.mxu0 %v2677
    %v2679 = vand.u32 %v845, 4294901760
    %2680 = vmatpush1.msra.mxu0 %v2679
    %v2681 = vand.u32 %v844, 4294901760
    %2682 = vmatprep.subr.mxu0 %v2681
    %v2683 = vand.u32 %v843, 4294901760
    %2684 = vmatpush1.msra.mxu0 %v2683
    %v2685 = vand.u32 %v842, 4294901760
    %2686 = vmatprep.subr.mxu0 %v2685
    %v2687 = vand.u32 %v841, 4294901760
    %2688 = vmatpush1.msra.mxu0 %v2687
    %v2689 = vand.u32 %v840, 4294901760
    %2690 = vmatprep.subr.mxu0 %v2689
    %v2691 = vand.u32 %v839, 4294901760
    %2692 = vmatpush1.msra.mxu0 %v2691
    %v2693 = vand.u32 %v838, 4294901760
    %2694 = vmatprep.subr.mxu0 %v2693
    %v2695 = vand.u32 %v837, 4294901760
    %2696 = vmatpush1.msra.mxu0 %v2695
    %v2697 = vand.u32 %v836, 4294901760
    %2698 = vmatprep.subr.mxu0 %v2697
    %v2699 = vand.u32 %v835, 4294901760
    %2700 = vmatpush1.msra.mxu0 %v2699
    %v2701 = vand.u32 %v834, 4294901760
    %2702 = vmatprep.subr.mxu0 %v2701
    %v2703 = vand.u32 %v833, 4294901760
    %2704 = vmatpush1.msra.mxu0 %v2703
    %2705 = vmatprep.subr.mxu0 0.0
    %2706 = vmatpush2.msra.mxu0 0.0
    %2707 = vmatprep.subr.mxu0 0.0
    %2708 = vmatpush2.msra.mxu0 0.0
    %2709 = vmatprep.subr.mxu0 0.0
    %2710 = vmatpush2.msra.mxu0 0.0
    %2711 = vmatprep.subr.mxu0 0.0
    %2712 = vmatpush2.msra.mxu0 0.0
    %2713 = vmatprep.subr.mxu0 0.0
    %2714 = vmatpush2.msra.mxu0 0.0
    %2715 = vmatprep.subr.mxu0 0.0
    %2716 = vmatpush2.msra.mxu0 0.0
    %2717 = vmatprep.subr.mxu0 0.0
    %2718 = vmatpush2.msra.mxu0 0.0
    %2719 = vmatprep.subr.mxu0 0.0
    %2720 = vmatpush2.msra.mxu0 0.0
    %2721 = vmatprep.subr.mxu0 0.0
    %2722 = vmatpush2.msra.mxu0 0.0
    %2723 = vmatprep.subr.mxu0 0.0
    %2724 = vmatpush2.msra.mxu0 0.0
    %2725 = vmatprep.subr.mxu0 0.0
    %2726 = vmatpush2.msra.mxu0 0.0
    %2727 = vmatprep.subr.mxu0 0.0
    %2728 = vmatpush2.msra.mxu0 0.0
    %2729 = vmatprep.subr.mxu0 0.0
    %2730 = vmatpush2.msra.mxu0 0.0
    %2731 = vmatprep.subr.mxu0 0.0
    %2732 = vmatpush2.msra.mxu0 0.0
    %2733 = vmatprep.subr.mxu0 0.0
    %2734 = vmatpush2.msra.mxu0 0.0
    %2735 = vmatprep.subr.mxu0 0.0
    %2736 = vmatpush2.msra.mxu0 0.0
    %2737 = vmatprep.mubr.f32.mxu0 0.0
    %v2738 = vand.u32 %v2306, 4294901760
    %v2739 = vsub.f32 %v2306, %v2738
    %v2740 = vand.u32 %v2739, 4294901760
    %2741 = vmatmul.mubr.f32.gmra.mxu0 %v2740
    %v2742 = vpop.f32.mrf.mxu0
    %v2743 = vadd.f32 %v2653, %v2742
    %v2744 = vpop.f32.mrf.mxu0
    %v2745 = vadd.f32 %v2655, %v2744
    %2746 = vdwg.mxu0
    %2747 = vmatprep.subr.mxu0 0.0
    %2748 = vmatpush1.msra.mxu0 0.0
    %2749 = vmatprep.subr.mxu0 0.0
    %2750 = vmatpush1.msra.mxu0 0.0
    %2751 = vmatprep.subr.mxu0 0.0
    %2752 = vmatpush1.msra.mxu0 0.0
    %2753 = vmatprep.subr.mxu0 0.0
    %2754 = vmatpush1.msra.mxu0 0.0
    %2755 = vmatprep.subr.mxu0 0.0
    %2756 = vmatpush1.msra.mxu0 0.0
    %2757 = vmatprep.subr.mxu0 0.0
    %2758 = vmatpush1.msra.mxu0 0.0
    %2759 = vmatprep.subr.mxu0 0.0
    %2760 = vmatpush1.msra.mxu0 0.0
    %2761 = vmatprep.subr.mxu0 0.0
    %2762 = vmatpush1.msra.mxu0 0.0
    %v2763 = vand.u32 %v848, 4294901760
    %v2764 = vsub.f32 %v848, %v2763
    %v2765 = vand.u32 %v2764, 4294901760
    %2766 = vmatprep.subr.mxu0 %v2765
    %v2767 = vand.u32 %v847, 4294901760
    %v2768 = vsub.f32 %v847, %v2767
    %v2769 = vand.u32 %v2768, 4294901760
    %2770 = vmatpush1.msra.mxu0 %v2769
    %v2771 = vand.u32 %v846, 4294901760
    %v2772 = vsub.f32 %v846, %v2771
    %v2773 = vand.u32 %v2772, 4294901760
    %2774 = vmatprep.subr.mxu0 %v2773
    %v2775 = vand.u32 %v845, 4294901760
    %v2776 = vsub.f32 %v845, %v2775
    %v2777 = vand.u32 %v2776, 4294901760
    %2778 = vmatpush1.msra.mxu0 %v2777
    %v2779 = vand.u32 %v844, 4294901760
    %v2780 = vsub.f32 %v844, %v2779
    %v2781 = vand.u32 %v2780, 4294901760
    %2782 = vmatprep.subr.mxu0 %v2781
    %v2783 = vand.u32 %v843, 4294901760
    %v2784 = vsub.f32 %v843, %v2783
    %v2785 = vand.u32 %v2784, 4294901760
    %2786 = vmatpush1.msra.mxu0 %v2785
    %v2787 = vand.u32 %v842, 4294901760
    %v2788 = vsub.f32 %v842, %v2787
    %v2789 = vand.u32 %v2788, 4294901760
    %2790 = vmatprep.subr.mxu0 %v2789
    %v2791 = vand.u32 %v841, 4294901760
    %v2792 = vsub.f32 %v841, %v2791
    %v2793 = vand.u32 %v2792, 4294901760
    %2794 = vmatpush1.msra.mxu0 %v2793
    %v2795 = vand.u32 %v840, 4294901760
    %v2796 = vsub.f32 %v840, %v2795
    %v2797 = vand.u32 %v2796, 4294901760
    %2798 = vmatprep.subr.mxu0 %v2797
    %v2799 = vand.u32 %v839, 4294901760
    %v2800 = vsub.f32 %v839, %v2799
    %v2801 = vand.u32 %v2800, 4294901760
    %2802 = vmatpush1.msra.mxu0 %v2801
    %v2803 = vand.u32 %v838, 4294901760
    %v2804 = vsub.f32 %v838, %v2803
    %v2805 = vand.u32 %v2804, 4294901760
    %2806 = vmatprep.subr.mxu0 %v2805
    %v2807 = vand.u32 %v837, 4294901760
    %v2808 = vsub.f32 %v837, %v2807
    %v2809 = vand.u32 %v2808, 4294901760
    %2810 = vmatpush1.msra.mxu0 %v2809
    %v2811 = vand.u32 %v836, 4294901760
    %v2812 = vsub.f32 %v836, %v2811
    %v2813 = vand.u32 %v2812, 4294901760
    %2814 = vmatprep.subr.mxu0 %v2813
    %v2815 = vand.u32 %v835, 4294901760
    %v2816 = vsub.f32 %v835, %v2815
    %v2817 = vand.u32 %v2816, 4294901760
    %2818 = vmatpush1.msra.mxu0 %v2817
    %v2819 = vand.u32 %v834, 4294901760
    %v2820 = vsub.f32 %v834, %v2819
    %v2821 = vand.u32 %v2820, 4294901760
    %2822 = vmatprep.subr.mxu0 %v2821
    %v2823 = vand.u32 %v833, 4294901760
    %v2824 = vsub.f32 %v833, %v2823
    %v2825 = vand.u32 %v2824, 4294901760
    %2826 = vmatpush1.msra.mxu0 %v2825
    %2827 = vmatprep.subr.mxu0 0.0
    %2828 = vmatpush2.msra.mxu0 0.0
    %2829 = vmatprep.subr.mxu0 0.0
    %2830 = vmatpush2.msra.mxu0 0.0
    %2831 = vmatprep.subr.mxu0 0.0
    %2832 = vmatpush2.msra.mxu0 0.0
    %2833 = vmatprep.subr.mxu0 0.0
    %2834 = vmatpush2.msra.mxu0 0.0
    %2835 = vmatprep.subr.mxu0 0.0
    %2836 = vmatpush2.msra.mxu0 0.0
    %2837 = vmatprep.subr.mxu0 0.0
    %2838 = vmatpush2.msra.mxu0 0.0
    %2839 = vmatprep.subr.mxu0 0.0
    %2840 = vmatpush2.msra.mxu0 0.0
    %2841 = vmatprep.subr.mxu0 0.0
    %2842 = vmatpush2.msra.mxu0 0.0
    %2843 = vmatprep.subr.mxu0 0.0
    %2844 = vmatpush2.msra.mxu0 0.0
    %2845 = vmatprep.subr.mxu0 0.0
    %2846 = vmatpush2.msra.mxu0 0.0
    %2847 = vmatprep.subr.mxu0 0.0
    %2848 = vmatpush2.msra.mxu0 0.0
    %2849 = vmatprep.subr.mxu0 0.0
    %2850 = vmatpush2.msra.mxu0 0.0
    %2851 = vmatprep.subr.mxu0 0.0
    %2852 = vmatpush2.msra.mxu0 0.0
    %2853 = vmatprep.subr.mxu0 0.0
    %2854 = vmatpush2.msra.mxu0 0.0
    %2855 = vmatprep.subr.mxu0 0.0
    %2856 = vmatpush2.msra.mxu0 0.0
    %2857 = vmatprep.subr.mxu0 0.0
    %2858 = vmatpush2.msra.mxu0 0.0
    %2859 = vmatprep.mubr.f32.mxu0 0.0
    %v2860 = vand.u32 %v2306, 4294901760
    %2861 = vmatmul.mubr.f32.gmra.mxu0 %v2860
    %v2862 = vpop.f32.mrf.mxu0
    %v2863 = vadd.f32 %v2743, %v2862
    %v2864 = vpop.f32.mrf.mxu0
    %v2865 = vadd.f32 %v2745, %v2864
    %2866 = vdwg.mxu0
    %2867 = vmatprep.subr.mxu0 0.0
    %2868 = vmatpush1.msra.mxu0 0.0
    %2869 = vmatprep.subr.mxu0 0.0
    %2870 = vmatpush1.msra.mxu0 0.0
    %2871 = vmatprep.subr.mxu0 0.0
    %2872 = vmatpush1.msra.mxu0 0.0
    %2873 = vmatprep.subr.mxu0 0.0
    %2874 = vmatpush1.msra.mxu0 0.0
    %2875 = vmatprep.subr.mxu0 0.0
    %2876 = vmatpush1.msra.mxu0 0.0
    %2877 = vmatprep.subr.mxu0 0.0
    %2878 = vmatpush1.msra.mxu0 0.0
    %2879 = vmatprep.subr.mxu0 0.0
    %2880 = vmatpush1.msra.mxu0 0.0
    %2881 = vmatprep.subr.mxu0 0.0
    %2882 = vmatpush1.msra.mxu0 0.0
    %v2883 = vand.u32 %v848, 4294901760
    %2884 = vmatprep.subr.mxu0 %v2883
    %v2885 = vand.u32 %v847, 4294901760
    %2886 = vmatpush1.msra.mxu0 %v2885
    %v2887 = vand.u32 %v846, 4294901760
    %2888 = vmatprep.subr.mxu0 %v2887
    %v2889 = vand.u32 %v845, 4294901760
    %2890 = vmatpush1.msra.mxu0 %v2889
    %v2891 = vand.u32 %v844, 4294901760
    %2892 = vmatprep.subr.mxu0 %v2891
    %v2893 = vand.u32 %v843, 4294901760
    %2894 = vmatpush1.msra.mxu0 %v2893
    %v2895 = vand.u32 %v842, 4294901760
    %2896 = vmatprep.subr.mxu0 %v2895
    %v2897 = vand.u32 %v841, 4294901760
    %2898 = vmatpush1.msra.mxu0 %v2897
    %v2899 = vand.u32 %v840, 4294901760
    %2900 = vmatprep.subr.mxu0 %v2899
    %v2901 = vand.u32 %v839, 4294901760
    %2902 = vmatpush1.msra.mxu0 %v2901
    %v2903 = vand.u32 %v838, 4294901760
    %2904 = vmatprep.subr.mxu0 %v2903
    %v2905 = vand.u32 %v837, 4294901760
    %2906 = vmatpush1.msra.mxu0 %v2905
    %v2907 = vand.u32 %v836, 4294901760
    %2908 = vmatprep.subr.mxu0 %v2907
    %v2909 = vand.u32 %v835, 4294901760
    %2910 = vmatpush1.msra.mxu0 %v2909
    %v2911 = vand.u32 %v834, 4294901760
    %2912 = vmatprep.subr.mxu0 %v2911
    %v2913 = vand.u32 %v833, 4294901760
    %2914 = vmatpush1.msra.mxu0 %v2913
    %2915 = vmatprep.subr.mxu0 0.0
    %2916 = vmatpush2.msra.mxu0 0.0
    %2917 = vmatprep.subr.mxu0 0.0
    %2918 = vmatpush2.msra.mxu0 0.0
    %2919 = vmatprep.subr.mxu0 0.0
    %2920 = vmatpush2.msra.mxu0 0.0
    %2921 = vmatprep.subr.mxu0 0.0
    %2922 = vmatpush2.msra.mxu0 0.0
    %2923 = vmatprep.subr.mxu0 0.0
    %2924 = vmatpush2.msra.mxu0 0.0
    %2925 = vmatprep.subr.mxu0 0.0
    %2926 = vmatpush2.msra.mxu0 0.0
    %2927 = vmatprep.subr.mxu0 0.0
    %2928 = vmatpush2.msra.mxu0 0.0
    %2929 = vmatprep.subr.mxu0 0.0
    %2930 = vmatpush2.msra.mxu0 0.0
    %2931 = vmatprep.subr.mxu0 0.0
    %2932 = vmatpush2.msra.mxu0 0.0
    %2933 = vmatprep.subr.mxu0 0.0
    %2934 = vmatpush2.msra.mxu0 0.0
    %2935 = vmatprep.subr.mxu0 0.0
    %2936 = vmatpush2.msra.mxu0 0.0
    %2937 = vmatprep.subr.mxu0 0.0
    %2938 = vmatpush2.msra.mxu0 0.0
    %2939 = vmatprep.subr.mxu0 0.0
    %2940 = vmatpush2.msra.mxu0 0.0
    %2941 = vmatprep.subr.mxu0 0.0
    %2942 = vmatpush2.msra.mxu0 0.0
    %2943 = vmatprep.subr.mxu0 0.0
    %2944 = vmatpush2.msra.mxu0 0.0
    %2945 = vmatprep.subr.mxu0 0.0
    %2946 = vmatpush2.msra.mxu0 0.0
    %2947 = vmatprep.mubr.f32.mxu0 0.0
    %v2948 = vand.u32 %v2306, 4294901760
    %2949 = vmatmul.mubr.f32.gmra.mxu0 %v2948
    %v2950 = vpop.f32.mrf.mxu0
    %v2951 = vadd.f32 %v2863, %v2950
    %v2952 = vpop.f32.mrf.mxu0
    %v2953 = vadd.f32 %v2865, %v2952
    %2954 = vdwg.mxu0
    %v2955 = vadd.f32 %v806, %v2951
    %v2956 = vadd.f32 %v1536, %v2953
    %v2957 = vxor.u32 %v2955, 2147483648
    %v2958 = vmul.f32 %v2957, 1.442695
    %v2959 = vpow.pop %v2958
    %v2960 = vadd.f32 %v2959, 1.0
    %v2961 = vrcp.pop %v2960
    %v2962 = vmul.f32 1.0, %v2961
    %v2963 = vtanh.pop %v2955
    %v2964 = vmul.f32 %v2962, %v2265
    %2966 = vrot.lane.b32.xlu0 %v2963, 64
    %v2967 = vpop.permute.xlu0 %2966
    %v2969 = vmul.f32 %v2962, %v2967
    %2971 = vrot.lane.b32.xlu0 %v2969, 32
    %v2972 = vpop.permute.xlu0 %2971
    %v2974 = vadd.f32 %v2964, %v2972
    %v2975 = vtanh.pop %v2974
    %2977 = vrot.lane.b32.xlu0 %v2975, 64
    %v2978 = vpop.permute.xlu0 %2977
    %v2980 = vmul.f32 %v2962, %v2978
    %v2981 = vxor.u32 %v2956, 2147483648
    %v2982 = vmul.f32 %v2981, 1.442695
    %v2983 = vpow.pop %v2982
    %v2984 = vadd.f32 %v2983, 1.0
    %v2985 = vrcp.pop %v2984
    %v2986 = vmul.f32 1.0, %v2985
    %v2987 = vtanh.pop %v2956
    %v2988 = vmul.f32 %v2986, %v2289
    %2990 = vrot.lane.b32.xlu0 %v2987, 64
    %v2991 = vpop.permute.xlu0 %2990
    %v2993 = vmul.f32 %v2986, %v2991
    %2995 = vrot.lane.b32.xlu0 %v2993, 32
    %v2996 = vpop.permute.xlu0 %2995
    %v2998 = vadd.f32 %v2988, %v2996
    %v2999 = vtanh.pop %v2998
    %3001 = vrot.lane.b32.xlu0 %v2999, 64
    %v3002 = vpop.permute.xlu0 %3001
    %v3004 = vmul.f32 %v2986, %v3002
    %3006 = vrot.lane.b32.xlu0 %v2980, 32
    %v3007 = vpop.permute.xlu0 %3006
    %3010 = vrot.lane.b32.xlu0 %v3004, 64
    %v3011 = vpop.permute.xlu0 %3010
    %v3013 = vsel %vm878, %v3007, %v3011
    %v3015 = vsel %vm880, %v3013, 0
    %3017 = vmatprep.subr.mxu0 0.0
    %3018 = vmatpush1.msra.mxu0 0.0
    %3019 = vmatprep.subr.mxu0 0.0
    %3020 = vmatpush1.msra.mxu0 0.0
    %3021 = vmatprep.subr.mxu0 0.0
    %3022 = vmatpush1.msra.mxu0 0.0
    %3023 = vmatprep.subr.mxu0 0.0
    %3024 = vmatpush1.msra.mxu0 0.0
    %3025 = vmatprep.subr.mxu0 0.0
    %3026 = vmatpush1.msra.mxu0 0.0
    %3027 = vmatprep.subr.mxu0 0.0
    %3028 = vmatpush1.msra.mxu0 0.0
    %3029 = vmatprep.subr.mxu0 0.0
    %3030 = vmatpush1.msra.mxu0 0.0
    %3031 = vmatprep.subr.mxu0 0.0
    %3032 = vmatpush1.msra.mxu0 0.0
    %v3033 = vand.u32 %v848, 4294901760
    %3034 = vmatprep.subr.mxu0 %v3033
    %v3035 = vand.u32 %v847, 4294901760
    %3036 = vmatpush1.msra.mxu0 %v3035
    %v3037 = vand.u32 %v846, 4294901760
    %3038 = vmatprep.subr.mxu0 %v3037
    %v3039 = vand.u32 %v845, 4294901760
    %3040 = vmatpush1.msra.mxu0 %v3039
    %v3041 = vand.u32 %v844, 4294901760
    %3042 = vmatprep.subr.mxu0 %v3041
    %v3043 = vand.u32 %v843, 4294901760
    %3044 = vmatpush1.msra.mxu0 %v3043
    %v3045 = vand.u32 %v842, 4294901760
    %3046 = vmatprep.subr.mxu0 %v3045
    %v3047 = vand.u32 %v841, 4294901760
    %3048 = vmatpush1.msra.mxu0 %v3047
    %v3049 = vand.u32 %v840, 4294901760
    %3050 = vmatprep.subr.mxu0 %v3049
    %v3051 = vand.u32 %v839, 4294901760
    %3052 = vmatpush1.msra.mxu0 %v3051
    %v3053 = vand.u32 %v838, 4294901760
    %3054 = vmatprep.subr.mxu0 %v3053
    %v3055 = vand.u32 %v837, 4294901760
    %3056 = vmatpush1.msra.mxu0 %v3055
    %v3057 = vand.u32 %v836, 4294901760
    %3058 = vmatprep.subr.mxu0 %v3057
    %v3059 = vand.u32 %v835, 4294901760
    %3060 = vmatpush1.msra.mxu0 %v3059
    %v3061 = vand.u32 %v834, 4294901760
    %3062 = vmatprep.subr.mxu0 %v3061
    %v3063 = vand.u32 %v833, 4294901760
    %3064 = vmatpush1.msra.mxu0 %v3063
    %3065 = vmatprep.subr.mxu0 0.0
    %3066 = vmatpush2.msra.mxu0 0.0
    %3067 = vmatprep.subr.mxu0 0.0
    %3068 = vmatpush2.msra.mxu0 0.0
    %3069 = vmatprep.subr.mxu0 0.0
    %3070 = vmatpush2.msra.mxu0 0.0
    %3071 = vmatprep.subr.mxu0 0.0
    %3072 = vmatpush2.msra.mxu0 0.0
    %3073 = vmatprep.subr.mxu0 0.0
    %3074 = vmatpush2.msra.mxu0 0.0
    %3075 = vmatprep.subr.mxu0 0.0
    %3076 = vmatpush2.msra.mxu0 0.0
    %3077 = vmatprep.subr.mxu0 0.0
    %3078 = vmatpush2.msra.mxu0 0.0
    %3079 = vmatprep.subr.mxu0 0.0
    %3080 = vmatpush2.msra.mxu0 0.0
    %3081 = vmatprep.subr.mxu0 0.0
    %3082 = vmatpush2.msra.mxu0 0.0
    %3083 = vmatprep.subr.mxu0 0.0
    %3084 = vmatpush2.msra.mxu0 0.0
    %3085 = vmatprep.subr.mxu0 0.0
    %3086 = vmatpush2.msra.mxu0 0.0
    %3087 = vmatprep.subr.mxu0 0.0
    %3088 = vmatpush2.msra.mxu0 0.0
    %3089 = vmatprep.subr.mxu0 0.0
    %3090 = vmatpush2.msra.mxu0 0.0
    %3091 = vmatprep.subr.mxu0 0.0
    %3092 = vmatpush2.msra.mxu0 0.0
    %3093 = vmatprep.subr.mxu0 0.0
    %3094 = vmatpush2.msra.mxu0 0.0
    %3095 = vmatprep.subr.mxu0 0.0
    %3096 = vmatpush2.msra.mxu0 0.0
    %3097 = vmatprep.mubr.f32.mxu0 0.0
    %v3098 = vand.u32 %v3015, 4294901760
    %v3099 = vsub.f32 %v3015, %v3098
    %v3100 = vand.u32 %v3099, 4294901760
    %v3101 = vsub.f32 %v3099, %v3100
    %v3102 = vand.u32 %v3101, 4294901760
    %3103 = vmatmul.mubr.f32.gmra.mxu0 %v3102
    %v3104 = vpop.f32.mrf.mxu0
    %v3105 = vadd.f32 0.0, %v3104
    %v3106 = vpop.f32.mrf.mxu0
    %v3107 = vadd.f32 0.0, %v3106
    %3108 = vdwg.mxu0
    %3109 = vmatprep.subr.mxu0 0.0
    %3110 = vmatpush1.msra.mxu0 0.0
    %3111 = vmatprep.subr.mxu0 0.0
    %3112 = vmatpush1.msra.mxu0 0.0
    %3113 = vmatprep.subr.mxu0 0.0
    %3114 = vmatpush1.msra.mxu0 0.0
    %3115 = vmatprep.subr.mxu0 0.0
    %3116 = vmatpush1.msra.mxu0 0.0
    %3117 = vmatprep.subr.mxu0 0.0
    %3118 = vmatpush1.msra.mxu0 0.0
    %3119 = vmatprep.subr.mxu0 0.0
    %3120 = vmatpush1.msra.mxu0 0.0
    %3121 = vmatprep.subr.mxu0 0.0
    %3122 = vmatpush1.msra.mxu0 0.0
    %3123 = vmatprep.subr.mxu0 0.0
    %3124 = vmatpush1.msra.mxu0 0.0
    %v3125 = vand.u32 %v848, 4294901760
    %v3126 = vsub.f32 %v848, %v3125
    %v3127 = vand.u32 %v3126, 4294901760
    %v3128 = vsub.f32 %v3126, %v3127
    %v3129 = vand.u32 %v3128, 4294901760
    %3130 = vmatprep.subr.mxu0 %v3129
    %v3131 = vand.u32 %v847, 4294901760
    %v3132 = vsub.f32 %v847, %v3131
    %v3133 = vand.u32 %v3132, 4294901760
    %v3134 = vsub.f32 %v3132, %v3133
    %v3135 = vand.u32 %v3134, 4294901760
    %3136 = vmatpush1.msra.mxu0 %v3135
    %v3137 = vand.u32 %v846, 4294901760
    %v3138 = vsub.f32 %v846, %v3137
    %v3139 = vand.u32 %v3138, 4294901760
    %v3140 = vsub.f32 %v3138, %v3139
    %v3141 = vand.u32 %v3140, 4294901760
    %3142 = vmatprep.subr.mxu0 %v3141
    %v3143 = vand.u32 %v845, 4294901760
    %v3144 = vsub.f32 %v845, %v3143
    %v3145 = vand.u32 %v3144, 4294901760
    %v3146 = vsub.f32 %v3144, %v3145
    %v3147 = vand.u32 %v3146, 4294901760
    %3148 = vmatpush1.msra.mxu0 %v3147
    %v3149 = vand.u32 %v844, 4294901760
    %v3150 = vsub.f32 %v844, %v3149
    %v3151 = vand.u32 %v3150, 4294901760
    %v3152 = vsub.f32 %v3150, %v3151
    %v3153 = vand.u32 %v3152, 4294901760
    %3154 = vmatprep.subr.mxu0 %v3153
    %v3155 = vand.u32 %v843, 4294901760
    %v3156 = vsub.f32 %v843, %v3155
    %v3157 = vand.u32 %v3156, 4294901760
    %v3158 = vsub.f32 %v3156, %v3157
    %v3159 = vand.u32 %v3158, 4294901760
    %3160 = vmatpush1.msra.mxu0 %v3159
    %v3161 = vand.u32 %v842, 4294901760
    %v3162 = vsub.f32 %v842, %v3161
    %v3163 = vand.u32 %v3162, 4294901760
    %v3164 = vsub.f32 %v3162, %v3163
    %v3165 = vand.u32 %v3164, 4294901760
    %3166 = vmatprep.subr.mxu0 %v3165
    %v3167 = vand.u32 %v841, 4294901760
    %v3168 = vsub.f32 %v841, %v3167
    %v3169 = vand.u32 %v3168, 4294901760
    %v3170 = vsub.f32 %v3168, %v3169
    %v3171 = vand.u32 %v3170, 4294901760
    %3172 = vmatpush1.msra.mxu0 %v3171
    %v3173 = vand.u32 %v840, 4294901760
    %v3174 = vsub.f32 %v840, %v3173
    %v3175 = vand.u32 %v3174, 4294901760
    %v3176 = vsub.f32 %v3174, %v3175
    %v3177 = vand.u32 %v3176, 4294901760
    %3178 = vmatprep.subr.mxu0 %v3177
    %v3179 = vand.u32 %v839, 4294901760
    %v3180 = vsub.f32 %v839, %v3179
    %v3181 = vand.u32 %v3180, 4294901760
    %v3182 = vsub.f32 %v3180, %v3181
    %v3183 = vand.u32 %v3182, 4294901760
    %3184 = vmatpush1.msra.mxu0 %v3183
    %v3185 = vand.u32 %v838, 4294901760
    %v3186 = vsub.f32 %v838, %v3185
    %v3187 = vand.u32 %v3186, 4294901760
    %v3188 = vsub.f32 %v3186, %v3187
    %v3189 = vand.u32 %v3188, 4294901760
    %3190 = vmatprep.subr.mxu0 %v3189
    %v3191 = vand.u32 %v837, 4294901760
    %v3192 = vsub.f32 %v837, %v3191
    %v3193 = vand.u32 %v3192, 4294901760
    %v3194 = vsub.f32 %v3192, %v3193
    %v3195 = vand.u32 %v3194, 4294901760
    %3196 = vmatpush1.msra.mxu0 %v3195
    %v3197 = vand.u32 %v836, 4294901760
    %v3198 = vsub.f32 %v836, %v3197
    %v3199 = vand.u32 %v3198, 4294901760
    %v3200 = vsub.f32 %v3198, %v3199
    %v3201 = vand.u32 %v3200, 4294901760
    %3202 = vmatprep.subr.mxu0 %v3201
    %v3203 = vand.u32 %v835, 4294901760
    %v3204 = vsub.f32 %v835, %v3203
    %v3205 = vand.u32 %v3204, 4294901760
    %v3206 = vsub.f32 %v3204, %v3205
    %v3207 = vand.u32 %v3206, 4294901760
    %3208 = vmatpush1.msra.mxu0 %v3207
    %v3209 = vand.u32 %v834, 4294901760
    %v3210 = vsub.f32 %v834, %v3209
    %v3211 = vand.u32 %v3210, 4294901760
    %v3212 = vsub.f32 %v3210, %v3211
    %v3213 = vand.u32 %v3212, 4294901760
    %3214 = vmatprep.subr.mxu0 %v3213
    %v3215 = vand.u32 %v833, 4294901760
    %v3216 = vsub.f32 %v833, %v3215
    %v3217 = vand.u32 %v3216, 4294901760
    %v3218 = vsub.f32 %v3216, %v3217
    %v3219 = vand.u32 %v3218, 4294901760
    %3220 = vmatpush1.msra.mxu0 %v3219
    %3221 = vmatprep.subr.mxu0 0.0
    %3222 = vmatpush2.msra.mxu0 0.0
    %3223 = vmatprep.subr.mxu0 0.0
    %3224 = vmatpush2.msra.mxu0 0.0
    %3225 = vmatprep.subr.mxu0 0.0
    %3226 = vmatpush2.msra.mxu0 0.0
    %3227 = vmatprep.subr.mxu0 0.0
    %3228 = vmatpush2.msra.mxu0 0.0
    %3229 = vmatprep.subr.mxu0 0.0
    %3230 = vmatpush2.msra.mxu0 0.0
    %3231 = vmatprep.subr.mxu0 0.0
    %3232 = vmatpush2.msra.mxu0 0.0
    %3233 = vmatprep.subr.mxu0 0.0
    %3234 = vmatpush2.msra.mxu0 0.0
    %3235 = vmatprep.subr.mxu0 0.0
    %3236 = vmatpush2.msra.mxu0 0.0
    %3237 = vmatprep.subr.mxu0 0.0
    %3238 = vmatpush2.msra.mxu0 0.0
    %3239 = vmatprep.subr.mxu0 0.0
    %3240 = vmatpush2.msra.mxu0 0.0
    %3241 = vmatprep.subr.mxu0 0.0
    %3242 = vmatpush2.msra.mxu0 0.0
    %3243 = vmatprep.subr.mxu0 0.0
    %3244 = vmatpush2.msra.mxu0 0.0
    %3245 = vmatprep.subr.mxu0 0.0
    %3246 = vmatpush2.msra.mxu0 0.0
    %3247 = vmatprep.subr.mxu0 0.0
    %3248 = vmatpush2.msra.mxu0 0.0
    %3249 = vmatprep.subr.mxu0 0.0
    %3250 = vmatpush2.msra.mxu0 0.0
    %3251 = vmatprep.subr.mxu0 0.0
    %3252 = vmatpush2.msra.mxu0 0.0
    %3253 = vmatprep.mubr.f32.mxu0 0.0
    %v3254 = vand.u32 %v3015, 4294901760
    %3255 = vmatmul.mubr.f32.gmra.mxu0 %v3254
    %v3256 = vpop.f32.mrf.mxu0
    %v3257 = vadd.f32 %v3105, %v3256
    %v3258 = vpop.f32.mrf.mxu0
    %v3259 = vadd.f32 %v3107, %v3258
    %3260 = vdwg.mxu0
    %3261 = vmatprep.subr.mxu0 0.0
    %3262 = vmatpush1.msra.mxu0 0.0
    %3263 = vmatprep.subr.mxu0 0.0
    %3264 = vmatpush1.msra.mxu0 0.0
    %3265 = vmatprep.subr.mxu0 0.0
    %3266 = vmatpush1.msra.mxu0 0.0
    %3267 = vmatprep.subr.mxu0 0.0
    %3268 = vmatpush1.msra.mxu0 0.0
    %3269 = vmatprep.subr.mxu0 0.0
    %3270 = vmatpush1.msra.mxu0 0.0
    %3271 = vmatprep.subr.mxu0 0.0
    %3272 = vmatpush1.msra.mxu0 0.0
    %3273 = vmatprep.subr.mxu0 0.0
    %3274 = vmatpush1.msra.mxu0 0.0
    %3275 = vmatprep.subr.mxu0 0.0
    %3276 = vmatpush1.msra.mxu0 0.0
    %v3277 = vand.u32 %v848, 4294901760
    %v3278 = vsub.f32 %v848, %v3277
    %3279 = vmatprep.subr.mxu0 %v3278
    %v3280 = vand.u32 %v847, 4294901760
    %v3281 = vsub.f32 %v847, %v3280
    %3282 = vmatpush1.msra.mxu0 %v3281
    %v3283 = vand.u32 %v846, 4294901760
    %v3284 = vsub.f32 %v846, %v3283
    %3285 = vmatprep.subr.mxu0 %v3284
    %v3286 = vand.u32 %v845, 4294901760
    %v3287 = vsub.f32 %v845, %v3286
    %3288 = vmatpush1.msra.mxu0 %v3287
    %v3289 = vand.u32 %v844, 4294901760
    %v3290 = vsub.f32 %v844, %v3289
    %3291 = vmatprep.subr.mxu0 %v3290
    %v3292 = vand.u32 %v843, 4294901760
    %v3293 = vsub.f32 %v843, %v3292
    %3294 = vmatpush1.msra.mxu0 %v3293
    %v3295 = vand.u32 %v842, 4294901760
    %v3296 = vsub.f32 %v842, %v3295
    %3297 = vmatprep.subr.mxu0 %v3296
    %v3298 = vand.u32 %v841, 4294901760
    %v3299 = vsub.f32 %v841, %v3298
    %3300 = vmatpush1.msra.mxu0 %v3299
    %v3301 = vand.u32 %v840, 4294901760
    %v3302 = vsub.f32 %v840, %v3301
    %3303 = vmatprep.subr.mxu0 %v3302
    %v3304 = vand.u32 %v839, 4294901760
    %v3305 = vsub.f32 %v839, %v3304
    %3306 = vmatpush1.msra.mxu0 %v3305
    %v3307 = vand.u32 %v838, 4294901760
    %v3308 = vsub.f32 %v838, %v3307
    %3309 = vmatprep.subr.mxu0 %v3308
    %v3310 = vand.u32 %v837, 4294901760
    %v3311 = vsub.f32 %v837, %v3310
    %3312 = vmatpush1.msra.mxu0 %v3311
    %v3313 = vand.u32 %v836, 4294901760
    %v3314 = vsub.f32 %v836, %v3313
    %3315 = vmatprep.subr.mxu0 %v3314
    %v3316 = vand.u32 %v835, 4294901760
    %v3317 = vsub.f32 %v835, %v3316
    %3318 = vmatpush1.msra.mxu0 %v3317
    %v3319 = vand.u32 %v834, 4294901760
    %v3320 = vsub.f32 %v834, %v3319
    %3321 = vmatprep.subr.mxu0 %v3320
    %v3322 = vand.u32 %v833, 4294901760
    %v3323 = vsub.f32 %v833, %v3322
    %3324 = vmatpush1.msra.mxu0 %v3323
    %3325 = vmatprep.subr.mxu0 0.0
    %3326 = vmatpush2.msra.mxu0 0.0
    %3327 = vmatprep.subr.mxu0 0.0
    %3328 = vmatpush2.msra.mxu0 0.0
    %3329 = vmatprep.subr.mxu0 0.0
    %3330 = vmatpush2.msra.mxu0 0.0
    %3331 = vmatprep.subr.mxu0 0.0
    %3332 = vmatpush2.msra.mxu0 0.0
    %3333 = vmatprep.subr.mxu0 0.0
    %3334 = vmatpush2.msra.mxu0 0.0
    %3335 = vmatprep.subr.mxu0 0.0
    %3336 = vmatpush2.msra.mxu0 0.0
    %3337 = vmatprep.subr.mxu0 0.0
    %3338 = vmatpush2.msra.mxu0 0.0
    %3339 = vmatprep.subr.mxu0 0.0
    %3340 = vmatpush2.msra.mxu0 0.0
    %3341 = vmatprep.subr.mxu0 0.0
    %3342 = vmatpush2.msra.mxu0 0.0
    %3343 = vmatprep.subr.mxu0 0.0
    %3344 = vmatpush2.msra.mxu0 0.0
    %3345 = vmatprep.subr.mxu0 0.0
    %3346 = vmatpush2.msra.mxu0 0.0
    %3347 = vmatprep.subr.mxu0 0.0
    %3348 = vmatpush2.msra.mxu0 0.0
    %3349 = vmatprep.subr.mxu0 0.0
    %3350 = vmatpush2.msra.mxu0 0.0
    %3351 = vmatprep.subr.mxu0 0.0
    %3352 = vmatpush2.msra.mxu0 0.0
    %3353 = vmatprep.subr.mxu0 0.0
    %3354 = vmatpush2.msra.mxu0 0.0
    %3355 = vmatprep.subr.mxu0 0.0
    %3356 = vmatpush2.msra.mxu0 0.0
    %3357 = vmatprep.mubr.f32.mxu0 0.0
    %v3358 = vand.u32 %v3015, 4294901760
    %v3359 = vsub.f32 %v3015, %v3358
    %3360 = vmatmul.mubr.f32.gmra.mxu0 %v3359
    %v3361 = vpop.f32.mrf.mxu0
    %v3362 = vadd.f32 %v3257, %v3361
    %v3363 = vpop.f32.mrf.mxu0
    %v3364 = vadd.f32 %v3259, %v3363
    %3365 = vdwg.mxu0
    %3366 = vmatprep.subr.mxu0 0.0
    %3367 = vmatpush1.msra.mxu0 0.0
    %3368 = vmatprep.subr.mxu0 0.0
    %3369 = vmatpush1.msra.mxu0 0.0
    %3370 = vmatprep.subr.mxu0 0.0
    %3371 = vmatpush1.msra.mxu0 0.0
    %3372 = vmatprep.subr.mxu0 0.0
    %3373 = vmatpush1.msra.mxu0 0.0
    %3374 = vmatprep.subr.mxu0 0.0
    %3375 = vmatpush1.msra.mxu0 0.0
    %3376 = vmatprep.subr.mxu0 0.0
    %3377 = vmatpush1.msra.mxu0 0.0
    %3378 = vmatprep.subr.mxu0 0.0
    %3379 = vmatpush1.msra.mxu0 0.0
    %3380 = vmatprep.subr.mxu0 0.0
    %3381 = vmatpush1.msra.mxu0 0.0
    %v3382 = vand.u32 %v848, 4294901760
    %3383 = vmatprep.subr.mxu0 %v3382
    %v3384 = vand.u32 %v847, 4294901760
    %3385 = vmatpush1.msra.mxu0 %v3384
    %v3386 = vand.u32 %v846, 4294901760
    %3387 = vmatprep.subr.mxu0 %v3386
    %v3388 = vand.u32 %v845, 4294901760
    %3389 = vmatpush1.msra.mxu0 %v3388
    %v3390 = vand.u32 %v844, 4294901760
    %3391 = vmatprep.subr.mxu0 %v3390
    %v3392 = vand.u32 %v843, 4294901760
    %3393 = vmatpush1.msra.mxu0 %v3392
    %v3394 = vand.u32 %v842, 4294901760
    %3395 = vmatprep.subr.mxu0 %v3394
    %v3396 = vand.u32 %v841, 4294901760
    %3397 = vmatpush1.msra.mxu0 %v3396
    %v3398 = vand.u32 %v840, 4294901760
    %3399 = vmatprep.subr.mxu0 %v3398
    %v3400 = vand.u32 %v839, 4294901760
    %3401 = vmatpush1.msra.mxu0 %v3400
    %v3402 = vand.u32 %v838, 4294901760
    %3403 = vmatprep.subr.mxu0 %v3402
    %v3404 = vand.u32 %v837, 4294901760
    %3405 = vmatpush1.msra.mxu0 %v3404
    %v3406 = vand.u32 %v836, 4294901760
    %3407 = vmatprep.subr.mxu0 %v3406
    %v3408 = vand.u32 %v835, 4294901760
    %3409 = vmatpush1.msra.mxu0 %v3408
    %v3410 = vand.u32 %v834, 4294901760
    %3411 = vmatprep.subr.mxu0 %v3410
    %v3412 = vand.u32 %v833, 4294901760
    %3413 = vmatpush1.msra.mxu0 %v3412
    %3414 = vmatprep.subr.mxu0 0.0
    %3415 = vmatpush2.msra.mxu0 0.0
    %3416 = vmatprep.subr.mxu0 0.0
    %3417 = vmatpush2.msra.mxu0 0.0
    %3418 = vmatprep.subr.mxu0 0.0
    %3419 = vmatpush2.msra.mxu0 0.0
    %3420 = vmatprep.subr.mxu0 0.0
    %3421 = vmatpush2.msra.mxu0 0.0
    %3422 = vmatprep.subr.mxu0 0.0
    %3423 = vmatpush2.msra.mxu0 0.0
    %3424 = vmatprep.subr.mxu0 0.0
    %3425 = vmatpush2.msra.mxu0 0.0
    %3426 = vmatprep.subr.mxu0 0.0
    %3427 = vmatpush2.msra.mxu0 0.0
    %3428 = vmatprep.subr.mxu0 0.0
    %3429 = vmatpush2.msra.mxu0 0.0
    %3430 = vmatprep.subr.mxu0 0.0
    %3431 = vmatpush2.msra.mxu0 0.0
    %3432 = vmatprep.subr.mxu0 0.0
    %3433 = vmatpush2.msra.mxu0 0.0
    %3434 = vmatprep.subr.mxu0 0.0
    %3435 = vmatpush2.msra.mxu0 0.0
    %3436 = vmatprep.subr.mxu0 0.0
    %3437 = vmatpush2.msra.mxu0 0.0
    %3438 = vmatprep.subr.mxu0 0.0
    %3439 = vmatpush2.msra.mxu0 0.0
    %3440 = vmatprep.subr.mxu0 0.0
    %3441 = vmatpush2.msra.mxu0 0.0
    %3442 = vmatprep.subr.mxu0 0.0
    %3443 = vmatpush2.msra.mxu0 0.0
    %3444 = vmatprep.subr.mxu0 0.0
    %3445 = vmatpush2.msra.mxu0 0.0
    %3446 = vmatprep.mubr.f32.mxu0 0.0
    %v3447 = vand.u32 %v3015, 4294901760
    %v3448 = vsub.f32 %v3015, %v3447
    %v3449 = vand.u32 %v3448, 4294901760
    %3450 = vmatmul.mubr.f32.gmra.mxu0 %v3449
    %v3451 = vpop.f32.mrf.mxu0
    %v3452 = vadd.f32 %v3362, %v3451
    %v3453 = vpop.f32.mrf.mxu0
    %v3454 = vadd.f32 %v3364, %v3453
    %3455 = vdwg.mxu0
    %3456 = vmatprep.subr.mxu0 0.0
    %3457 = vmatpush1.msra.mxu0 0.0
    %3458 = vmatprep.subr.mxu0 0.0
    %3459 = vmatpush1.msra.mxu0 0.0
    %3460 = vmatprep.subr.mxu0 0.0
    %3461 = vmatpush1.msra.mxu0 0.0
    %3462 = vmatprep.subr.mxu0 0.0
    %3463 = vmatpush1.msra.mxu0 0.0
    %3464 = vmatprep.subr.mxu0 0.0
    %3465 = vmatpush1.msra.mxu0 0.0
    %3466 = vmatprep.subr.mxu0 0.0
    %3467 = vmatpush1.msra.mxu0 0.0
    %3468 = vmatprep.subr.mxu0 0.0
    %3469 = vmatpush1.msra.mxu0 0.0
    %3470 = vmatprep.subr.mxu0 0.0
    %3471 = vmatpush1.msra.mxu0 0.0
    %v3472 = vand.u32 %v848, 4294901760
    %v3473 = vsub.f32 %v848, %v3472
    %v3474 = vand.u32 %v3473, 4294901760
    %3475 = vmatprep.subr.mxu0 %v3474
    %v3476 = vand.u32 %v847, 4294901760
    %v3477 = vsub.f32 %v847, %v3476
    %v3478 = vand.u32 %v3477, 4294901760
    %3479 = vmatpush1.msra.mxu0 %v3478
    %v3480 = vand.u32 %v846, 4294901760
    %v3481 = vsub.f32 %v846, %v3480
    %v3482 = vand.u32 %v3481, 4294901760
    %3483 = vmatprep.subr.mxu0 %v3482
    %v3484 = vand.u32 %v845, 4294901760
    %v3485 = vsub.f32 %v845, %v3484
    %v3486 = vand.u32 %v3485, 4294901760
    %3487 = vmatpush1.msra.mxu0 %v3486
    %v3488 = vand.u32 %v844, 4294901760
    %v3489 = vsub.f32 %v844, %v3488
    %v3490 = vand.u32 %v3489, 4294901760
    %3491 = vmatprep.subr.mxu0 %v3490
    %v3492 = vand.u32 %v843, 4294901760
    %v3493 = vsub.f32 %v843, %v3492
    %v3494 = vand.u32 %v3493, 4294901760
    %3495 = vmatpush1.msra.mxu0 %v3494
    %v3496 = vand.u32 %v842, 4294901760
    %v3497 = vsub.f32 %v842, %v3496
    %v3498 = vand.u32 %v3497, 4294901760
    %3499 = vmatprep.subr.mxu0 %v3498
    %v3500 = vand.u32 %v841, 4294901760
    %v3501 = vsub.f32 %v841, %v3500
    %v3502 = vand.u32 %v3501, 4294901760
    %3503 = vmatpush1.msra.mxu0 %v3502
    %v3504 = vand.u32 %v840, 4294901760
    %v3505 = vsub.f32 %v840, %v3504
    %v3506 = vand.u32 %v3505, 4294901760
    %3507 = vmatprep.subr.mxu0 %v3506
    %v3508 = vand.u32 %v839, 4294901760
    %v3509 = vsub.f32 %v839, %v3508
    %v3510 = vand.u32 %v3509, 4294901760
    %3511 = vmatpush1.msra.mxu0 %v3510
    %v3512 = vand.u32 %v838, 4294901760
    %v3513 = vsub.f32 %v838, %v3512
    %v3514 = vand.u32 %v3513, 4294901760
    %3515 = vmatprep.subr.mxu0 %v3514
    %v3516 = vand.u32 %v837, 4294901760
    %v3517 = vsub.f32 %v837, %v3516
    %v3518 = vand.u32 %v3517, 4294901760
    %3519 = vmatpush1.msra.mxu0 %v3518
    %v3520 = vand.u32 %v836, 4294901760
    %v3521 = vsub.f32 %v836, %v3520
    %v3522 = vand.u32 %v3521, 4294901760
    %3523 = vmatprep.subr.mxu0 %v3522
    %v3524 = vand.u32 %v835, 4294901760
    %v3525 = vsub.f32 %v835, %v3524
    %v3526 = vand.u32 %v3525, 4294901760
    %3527 = vmatpush1.msra.mxu0 %v3526
    %v3528 = vand.u32 %v834, 4294901760
    %v3529 = vsub.f32 %v834, %v3528
    %v3530 = vand.u32 %v3529, 4294901760
    %3531 = vmatprep.subr.mxu0 %v3530
    %v3532 = vand.u32 %v833, 4294901760
    %v3533 = vsub.f32 %v833, %v3532
    %v3534 = vand.u32 %v3533, 4294901760
    %3535 = vmatpush1.msra.mxu0 %v3534
    %3536 = vmatprep.subr.mxu0 0.0
    %3537 = vmatpush2.msra.mxu0 0.0
    %3538 = vmatprep.subr.mxu0 0.0
    %3539 = vmatpush2.msra.mxu0 0.0
    %3540 = vmatprep.subr.mxu0 0.0
    %3541 = vmatpush2.msra.mxu0 0.0
    %3542 = vmatprep.subr.mxu0 0.0
    %3543 = vmatpush2.msra.mxu0 0.0
    %3544 = vmatprep.subr.mxu0 0.0
    %3545 = vmatpush2.msra.mxu0 0.0
    %3546 = vmatprep.subr.mxu0 0.0
    %3547 = vmatpush2.msra.mxu0 0.0
    %3548 = vmatprep.subr.mxu0 0.0
    %3549 = vmatpush2.msra.mxu0 0.0
    %3550 = vmatprep.subr.mxu0 0.0
    %3551 = vmatpush2.msra.mxu0 0.0
    %3552 = vmatprep.subr.mxu0 0.0
    %3553 = vmatpush2.msra.mxu0 0.0
    %3554 = vmatprep.subr.mxu0 0.0
    %3555 = vmatpush2.msra.mxu0 0.0
    %3556 = vmatprep.subr.mxu0 0.0
    %3557 = vmatpush2.msra.mxu0 0.0
    %3558 = vmatprep.subr.mxu0 0.0
    %3559 = vmatpush2.msra.mxu0 0.0
    %3560 = vmatprep.subr.mxu0 0.0
    %3561 = vmatpush2.msra.mxu0 0.0
    %3562 = vmatprep.subr.mxu0 0.0
    %3563 = vmatpush2.msra.mxu0 0.0
    %3564 = vmatprep.subr.mxu0 0.0
    %3565 = vmatpush2.msra.mxu0 0.0
    %3566 = vmatprep.subr.mxu0 0.0
    %3567 = vmatpush2.msra.mxu0 0.0
    %3568 = vmatprep.mubr.f32.mxu0 0.0
    %v3569 = vand.u32 %v3015, 4294901760
    %3570 = vmatmul.mubr.f32.gmra.mxu0 %v3569
    %v3571 = vpop.f32.mrf.mxu0
    %v3572 = vadd.f32 %v3452, %v3571
    %v3573 = vpop.f32.mrf.mxu0
    %v3574 = vadd.f32 %v3454, %v3573
    %3575 = vdwg.mxu0
    %3576 = vmatprep.subr.mxu0 0.0
    %3577 = vmatpush1.msra.mxu0 0.0
    %3578 = vmatprep.subr.mxu0 0.0
    %3579 = vmatpush1.msra.mxu0 0.0
    %3580 = vmatprep.subr.mxu0 0.0
    %3581 = vmatpush1.msra.mxu0 0.0
    %3582 = vmatprep.subr.mxu0 0.0
    %3583 = vmatpush1.msra.mxu0 0.0
    %3584 = vmatprep.subr.mxu0 0.0
    %3585 = vmatpush1.msra.mxu0 0.0
    %3586 = vmatprep.subr.mxu0 0.0
    %3587 = vmatpush1.msra.mxu0 0.0
    %3588 = vmatprep.subr.mxu0 0.0
    %3589 = vmatpush1.msra.mxu0 0.0
    %3590 = vmatprep.subr.mxu0 0.0
    %3591 = vmatpush1.msra.mxu0 0.0
    %v3592 = vand.u32 %v848, 4294901760
    %3593 = vmatprep.subr.mxu0 %v3592
    %v3594 = vand.u32 %v847, 4294901760
    %3595 = vmatpush1.msra.mxu0 %v3594
    %v3596 = vand.u32 %v846, 4294901760
    %3597 = vmatprep.subr.mxu0 %v3596
    %v3598 = vand.u32 %v845, 4294901760
    %3599 = vmatpush1.msra.mxu0 %v3598
    %v3600 = vand.u32 %v844, 4294901760
    %3601 = vmatprep.subr.mxu0 %v3600
    %v3602 = vand.u32 %v843, 4294901760
    %3603 = vmatpush1.msra.mxu0 %v3602
    %v3604 = vand.u32 %v842, 4294901760
    %3605 = vmatprep.subr.mxu0 %v3604
    %v3606 = vand.u32 %v841, 4294901760
    %3607 = vmatpush1.msra.mxu0 %v3606
    %v3608 = vand.u32 %v840, 4294901760
    %3609 = vmatprep.subr.mxu0 %v3608
    %v3610 = vand.u32 %v839, 4294901760
    %3611 = vmatpush1.msra.mxu0 %v3610
    %v3612 = vand.u32 %v838, 4294901760
    %3613 = vmatprep.subr.mxu0 %v3612
    %v3614 = vand.u32 %v837, 4294901760
    %3615 = vmatpush1.msra.mxu0 %v3614
    %v3616 = vand.u32 %v836, 4294901760
    %3617 = vmatprep.subr.mxu0 %v3616
    %v3618 = vand.u32 %v835, 4294901760
    %3619 = vmatpush1.msra.mxu0 %v3618
    %v3620 = vand.u32 %v834, 4294901760
    %3621 = vmatprep.subr.mxu0 %v3620
    %v3622 = vand.u32 %v833, 4294901760
    %3623 = vmatpush1.msra.mxu0 %v3622
    %3624 = vmatprep.subr.mxu0 0.0
    %3625 = vmatpush2.msra.mxu0 0.0
    %3626 = vmatprep.subr.mxu0 0.0
    %3627 = vmatpush2.msra.mxu0 0.0
    %3628 = vmatprep.subr.mxu0 0.0
    %3629 = vmatpush2.msra.mxu0 0.0
    %3630 = vmatprep.subr.mxu0 0.0
    %3631 = vmatpush2.msra.mxu0 0.0
    %3632 = vmatprep.subr.mxu0 0.0
    %3633 = vmatpush2.msra.mxu0 0.0
    %3634 = vmatprep.subr.mxu0 0.0
    %3635 = vmatpush2.msra.mxu0 0.0
    %3636 = vmatprep.subr.mxu0 0.0
    %3637 = vmatpush2.msra.mxu0 0.0
    %3638 = vmatprep.subr.mxu0 0.0
    %3639 = vmatpush2.msra.mxu0 0.0
    %3640 = vmatprep.subr.mxu0 0.0
    %3641 = vmatpush2.msra.mxu0 0.0
    %3642 = vmatprep.subr.mxu0 0.0
    %3643 = vmatpush2.msra.mxu0 0.0
    %3644 = vmatprep.subr.mxu0 0.0
    %3645 = vmatpush2.msra.mxu0 0.0
    %3646 = vmatprep.subr.mxu0 0.0
    %3647 = vmatpush2.msra.mxu0 0.0
    %3648 = vmatprep.subr.mxu0 0.0
    %3649 = vmatpush2.msra.mxu0 0.0
    %3650 = vmatprep.subr.mxu0 0.0
    %3651 = vmatpush2.msra.mxu0 0.0
    %3652 = vmatprep.subr.mxu0 0.0
    %3653 = vmatpush2.msra.mxu0 0.0
    %3654 = vmatprep.subr.mxu0 0.0
    %3655 = vmatpush2.msra.mxu0 0.0
    %3656 = vmatprep.mubr.f32.mxu0 0.0
    %v3657 = vand.u32 %v3015, 4294901760
    %3658 = vmatmul.mubr.f32.gmra.mxu0 %v3657
    %v3659 = vpop.f32.mrf.mxu0
    %v3660 = vadd.f32 %v3572, %v3659
    %v3661 = vpop.f32.mrf.mxu0
    %v3662 = vadd.f32 %v3574, %v3661
    %3663 = vdwg.mxu0
    %v3664 = vadd.f32 %v812, %v3660
    %v3665 = vadd.f32 %v1536, %v3662
    %v3666 = vxor.u32 %v3664, 2147483648
    %v3667 = vmul.f32 %v3666, 1.442695
    %v3668 = vpow.pop %v3667
    %v3669 = vadd.f32 %v3668, 1.0
    %v3670 = vrcp.pop %v3669
    %v3671 = vmul.f32 1.0, %v3670
    %v3672 = vtanh.pop %v3664
    %v3673 = vmul.f32 %v3671, %v2974
    %3675 = vrot.lane.b32.xlu0 %v3672, 64
    %v3676 = vpop.permute.xlu0 %3675
    %v3678 = vmul.f32 %v3671, %v3676
    %3680 = vrot.lane.b32.xlu0 %v3678, 32
    %v3681 = vpop.permute.xlu0 %3680
    %v3683 = vadd.f32 %v3673, %v3681
    %v3684 = vtanh.pop %v3683
    %3686 = vrot.lane.b32.xlu0 %v3684, 64
    %v3687 = vpop.permute.xlu0 %3686
    %v3689 = vmul.f32 %v3671, %v3687
    %v3690 = vxor.u32 %v3665, 2147483648
    %v3691 = vmul.f32 %v3690, 1.442695
    %v3692 = vpow.pop %v3691
    %v3693 = vadd.f32 %v3692, 1.0
    %v3694 = vrcp.pop %v3693
    %v3695 = vmul.f32 1.0, %v3694
    %v3696 = vtanh.pop %v3665
    %v3697 = vmul.f32 %v3695, %v2998
    %3699 = vrot.lane.b32.xlu0 %v3696, 64
    %v3700 = vpop.permute.xlu0 %3699
    %v3702 = vmul.f32 %v3695, %v3700
    %3704 = vrot.lane.b32.xlu0 %v3702, 32
    %v3705 = vpop.permute.xlu0 %3704
    %v3707 = vadd.f32 %v3697, %v3705
    %v3708 = vtanh.pop %v3707
    %3710 = vrot.lane.b32.xlu0 %v3708, 64
    %v3711 = vpop.permute.xlu0 %3710
    %v3713 = vmul.f32 %v3695, %v3711
    %3715 = vrot.lane.b32.xlu0 %v3689, 32
    %v3716 = vpop.permute.xlu0 %3715
    %3719 = vrot.lane.b32.xlu0 %v3713, 64
    %v3720 = vpop.permute.xlu0 %3719
    %v3722 = vsel %vm878, %v3716, %v3720
    %v3724 = vsel %vm880, %v3722, 0
    %3726 = vmatprep.subr.mxu0 0.0
    %3727 = vmatpush1.msra.mxu0 0.0
    %3728 = vmatprep.subr.mxu0 0.0
    %3729 = vmatpush1.msra.mxu0 0.0
    %3730 = vmatprep.subr.mxu0 0.0
    %3731 = vmatpush1.msra.mxu0 0.0
    %3732 = vmatprep.subr.mxu0 0.0
    %3733 = vmatpush1.msra.mxu0 0.0
    %3734 = vmatprep.subr.mxu0 0.0
    %3735 = vmatpush1.msra.mxu0 0.0
    %3736 = vmatprep.subr.mxu0 0.0
    %3737 = vmatpush1.msra.mxu0 0.0
    %3738 = vmatprep.subr.mxu0 0.0
    %3739 = vmatpush1.msra.mxu0 0.0
    %3740 = vmatprep.subr.mxu0 0.0
    %3741 = vmatpush1.msra.mxu0 0.0
    %v3742 = vand.u32 %v848, 4294901760
    %3743 = vmatprep.subr.mxu0 %v3742
    %v3744 = vand.u32 %v847, 4294901760
    %3745 = vmatpush1.msra.mxu0 %v3744
    %v3746 = vand.u32 %v846, 4294901760
    %3747 = vmatprep.subr.mxu0 %v3746
    %v3748 = vand.u32 %v845, 4294901760
    %3749 = vmatpush1.msra.mxu0 %v3748
    %v3750 = vand.u32 %v844, 4294901760
    %3751 = vmatprep.subr.mxu0 %v3750
    %v3752 = vand.u32 %v843, 4294901760
    %3753 = vmatpush1.msra.mxu0 %v3752
    %v3754 = vand.u32 %v842, 4294901760
    %3755 = vmatprep.subr.mxu0 %v3754
    %v3756 = vand.u32 %v841, 4294901760
    %3757 = vmatpush1.msra.mxu0 %v3756
    %v3758 = vand.u32 %v840, 4294901760
    %3759 = vmatprep.subr.mxu0 %v3758
    %v3760 = vand.u32 %v839, 4294901760
    %3761 = vmatpush1.msra.mxu0 %v3760
    %v3762 = vand.u32 %v838, 4294901760
    %3763 = vmatprep.subr.mxu0 %v3762
    %v3764 = vand.u32 %v837, 4294901760
    %3765 = vmatpush1.msra.mxu0 %v3764
    %v3766 = vand.u32 %v836, 4294901760
    %3767 = vmatprep.subr.mxu0 %v3766
    %v3768 = vand.u32 %v835, 4294901760
    %3769 = vmatpush1.msra.mxu0 %v3768
    %v3770 = vand.u32 %v834, 4294901760
    %3771 = vmatprep.subr.mxu0 %v3770
    %v3772 = vand.u32 %v833, 4294901760
    %3773 = vmatpush1.msra.mxu0 %v3772
    %3774 = vmatprep.subr.mxu0 0.0
    %3775 = vmatpush2.msra.mxu0 0.0
    %3776 = vmatprep.subr.mxu0 0.0
    %3777 = vmatpush2.msra.mxu0 0.0
    %3778 = vmatprep.subr.mxu0 0.0
    %3779 = vmatpush2.msra.mxu0 0.0
    %3780 = vmatprep.subr.mxu0 0.0
    %3781 = vmatpush2.msra.mxu0 0.0
    %3782 = vmatprep.subr.mxu0 0.0
    %3783 = vmatpush2.msra.mxu0 0.0
    %3784 = vmatprep.subr.mxu0 0.0
    %3785 = vmatpush2.msra.mxu0 0.0
    %3786 = vmatprep.subr.mxu0 0.0
    %3787 = vmatpush2.msra.mxu0 0.0
    %3788 = vmatprep.subr.mxu0 0.0
    %3789 = vmatpush2.msra.mxu0 0.0
    %3790 = vmatprep.subr.mxu0 0.0
    %3791 = vmatpush2.msra.mxu0 0.0
    %3792 = vmatprep.subr.mxu0 0.0
    %3793 = vmatpush2.msra.mxu0 0.0
    %3794 = vmatprep.subr.mxu0 0.0
    %3795 = vmatpush2.msra.mxu0 0.0
    %3796 = vmatprep.subr.mxu0 0.0
    %3797 = vmatpush2.msra.mxu0 0.0
    %3798 = vmatprep.subr.mxu0 0.0
    %3799 = vmatpush2.msra.mxu0 0.0
    %3800 = vmatprep.subr.mxu0 0.0
    %3801 = vmatpush2.msra.mxu0 0.0
    %3802 = vmatprep.subr.mxu0 0.0
    %3803 = vmatpush2.msra.mxu0 0.0
    %3804 = vmatprep.subr.mxu0 0.0
    %3805 = vmatpush2.msra.mxu0 0.0
    %3806 = vmatprep.mubr.f32.mxu0 0.0
    %v3807 = vand.u32 %v3724, 4294901760
    %v3808 = vsub.f32 %v3724, %v3807
    %v3809 = vand.u32 %v3808, 4294901760
    %v3810 = vsub.f32 %v3808, %v3809
    %v3811 = vand.u32 %v3810, 4294901760
    %3812 = vmatmul.mubr.f32.gmra.mxu0 %v3811
    %v3813 = vpop.f32.mrf.mxu0
    %v3814 = vadd.f32 0.0, %v3813
    %v3815 = vpop.f32.mrf.mxu0
    %v3816 = vadd.f32 0.0, %v3815
    %3817 = vdwg.mxu0
    %3818 = vmatprep.subr.mxu0 0.0
    %3819 = vmatpush1.msra.mxu0 0.0
    %3820 = vmatprep.subr.mxu0 0.0
    %3821 = vmatpush1.msra.mxu0 0.0
    %3822 = vmatprep.subr.mxu0 0.0
    %3823 = vmatpush1.msra.mxu0 0.0
    %3824 = vmatprep.subr.mxu0 0.0
    %3825 = vmatpush1.msra.mxu0 0.0
    %3826 = vmatprep.subr.mxu0 0.0
    %3827 = vmatpush1.msra.mxu0 0.0
    %3828 = vmatprep.subr.mxu0 0.0
    %3829 = vmatpush1.msra.mxu0 0.0
    %3830 = vmatprep.subr.mxu0 0.0
    %3831 = vmatpush1.msra.mxu0 0.0
    %3832 = vmatprep.subr.mxu0 0.0
    %3833 = vmatpush1.msra.mxu0 0.0
    %v3834 = vand.u32 %v848, 4294901760
    %v3835 = vsub.f32 %v848, %v3834
    %v3836 = vand.u32 %v3835, 4294901760
    %v3837 = vsub.f32 %v3835, %v3836
    %v3838 = vand.u32 %v3837, 4294901760
    %3839 = vmatprep.subr.mxu0 %v3838
    %v3840 = vand.u32 %v847, 4294901760
    %v3841 = vsub.f32 %v847, %v3840
    %v3842 = vand.u32 %v3841, 4294901760
    %v3843 = vsub.f32 %v3841, %v3842
    %v3844 = vand.u32 %v3843, 4294901760
    %3845 = vmatpush1.msra.mxu0 %v3844
    %v3846 = vand.u32 %v846, 4294901760
    %v3847 = vsub.f32 %v846, %v3846
    %v3848 = vand.u32 %v3847, 4294901760
    %v3849 = vsub.f32 %v3847, %v3848
    %v3850 = vand.u32 %v3849, 4294901760
    %3851 = vmatprep.subr.mxu0 %v3850
    %v3852 = vand.u32 %v845, 4294901760
    %v3853 = vsub.f32 %v845, %v3852
    %v3854 = vand.u32 %v3853, 4294901760
    %v3855 = vsub.f32 %v3853, %v3854
    %v3856 = vand.u32 %v3855, 4294901760
    %3857 = vmatpush1.msra.mxu0 %v3856
    %v3858 = vand.u32 %v844, 4294901760
    %v3859 = vsub.f32 %v844, %v3858
    %v3860 = vand.u32 %v3859, 4294901760
    %v3861 = vsub.f32 %v3859, %v3860
    %v3862 = vand.u32 %v3861, 4294901760
    %3863 = vmatprep.subr.mxu0 %v3862
    %v3864 = vand.u32 %v843, 4294901760
    %v3865 = vsub.f32 %v843, %v3864
    %v3866 = vand.u32 %v3865, 4294901760
    %v3867 = vsub.f32 %v3865, %v3866
    %v3868 = vand.u32 %v3867, 4294901760
    %3869 = vmatpush1.msra.mxu0 %v3868
    %v3870 = vand.u32 %v842, 4294901760
    %v3871 = vsub.f32 %v842, %v3870
    %v3872 = vand.u32 %v3871, 4294901760
    %v3873 = vsub.f32 %v3871, %v3872
    %v3874 = vand.u32 %v3873, 4294901760
    %3875 = vmatprep.subr.mxu0 %v3874
    %v3876 = vand.u32 %v841, 4294901760
    %v3877 = vsub.f32 %v841, %v3876
    %v3878 = vand.u32 %v3877, 4294901760
    %v3879 = vsub.f32 %v3877, %v3878
    %v3880 = vand.u32 %v3879, 4294901760
    %3881 = vmatpush1.msra.mxu0 %v3880
    %v3882 = vand.u32 %v840, 4294901760
    %v3883 = vsub.f32 %v840, %v3882
    %v3884 = vand.u32 %v3883, 4294901760
    %v3885 = vsub.f32 %v3883, %v3884
    %v3886 = vand.u32 %v3885, 4294901760
    %3887 = vmatprep.subr.mxu0 %v3886
    %v3888 = vand.u32 %v839, 4294901760
    %v3889 = vsub.f32 %v839, %v3888
    %v3890 = vand.u32 %v3889, 4294901760
    %v3891 = vsub.f32 %v3889, %v3890
    %v3892 = vand.u32 %v3891, 4294901760
    %3893 = vmatpush1.msra.mxu0 %v3892
    %v3894 = vand.u32 %v838, 4294901760
    %v3895 = vsub.f32 %v838, %v3894
    %v3896 = vand.u32 %v3895, 4294901760
    %v3897 = vsub.f32 %v3895, %v3896
    %v3898 = vand.u32 %v3897, 4294901760
    %3899 = vmatprep.subr.mxu0 %v3898
    %v3900 = vand.u32 %v837, 4294901760
    %v3901 = vsub.f32 %v837, %v3900
    %v3902 = vand.u32 %v3901, 4294901760
    %v3903 = vsub.f32 %v3901, %v3902
    %v3904 = vand.u32 %v3903, 4294901760
    %3905 = vmatpush1.msra.mxu0 %v3904
    %v3906 = vand.u32 %v836, 4294901760
    %v3907 = vsub.f32 %v836, %v3906
    %v3908 = vand.u32 %v3907, 4294901760
    %v3909 = vsub.f32 %v3907, %v3908
    %v3910 = vand.u32 %v3909, 4294901760
    %3911 = vmatprep.subr.mxu0 %v3910
    %v3912 = vand.u32 %v835, 4294901760
    %v3913 = vsub.f32 %v835, %v3912
    %v3914 = vand.u32 %v3913, 4294901760
    %v3915 = vsub.f32 %v3913, %v3914
    %v3916 = vand.u32 %v3915, 4294901760
    %3917 = vmatpush1.msra.mxu0 %v3916
    %v3918 = vand.u32 %v834, 4294901760
    %v3919 = vsub.f32 %v834, %v3918
    %v3920 = vand.u32 %v3919, 4294901760
    %v3921 = vsub.f32 %v3919, %v3920
    %v3922 = vand.u32 %v3921, 4294901760
    %3923 = vmatprep.subr.mxu0 %v3922
    %v3924 = vand.u32 %v833, 4294901760
    %v3925 = vsub.f32 %v833, %v3924
    %v3926 = vand.u32 %v3925, 4294901760
    %v3927 = vsub.f32 %v3925, %v3926
    %v3928 = vand.u32 %v3927, 4294901760
    %3929 = vmatpush1.msra.mxu0 %v3928
    %3930 = vmatprep.subr.mxu0 0.0
    %3931 = vmatpush2.msra.mxu0 0.0
    %3932 = vmatprep.subr.mxu0 0.0
    %3933 = vmatpush2.msra.mxu0 0.0
    %3934 = vmatprep.subr.mxu0 0.0
    %3935 = vmatpush2.msra.mxu0 0.0
    %3936 = vmatprep.subr.mxu0 0.0
    %3937 = vmatpush2.msra.mxu0 0.0
    %3938 = vmatprep.subr.mxu0 0.0
    %3939 = vmatpush2.msra.mxu0 0.0
    %3940 = vmatprep.subr.mxu0 0.0
    %3941 = vmatpush2.msra.mxu0 0.0
    %3942 = vmatprep.subr.mxu0 0.0
    %3943 = vmatpush2.msra.mxu0 0.0
    %3944 = vmatprep.subr.mxu0 0.0
    %3945 = vmatpush2.msra.mxu0 0.0
    %3946 = vmatprep.subr.mxu0 0.0
    %3947 = vmatpush2.msra.mxu0 0.0
    %3948 = vmatprep.subr.mxu0 0.0
    %3949 = vmatpush2.msra.mxu0 0.0
    %3950 = vmatprep.subr.mxu0 0.0
    %3951 = vmatpush2.msra.mxu0 0.0
    %3952 = vmatprep.subr.mxu0 0.0
    %3953 = vmatpush2.msra.mxu0 0.0
    %3954 = vmatprep.subr.mxu0 0.0
    %3955 = vmatpush2.msra.mxu0 0.0
    %3956 = vmatprep.subr.mxu0 0.0
    %3957 = vmatpush2.msra.mxu0 0.0
    %3958 = vmatprep.subr.mxu0 0.0
    %3959 = vmatpush2.msra.mxu0 0.0
    %3960 = vmatprep.subr.mxu0 0.0
    %3961 = vmatpush2.msra.mxu0 0.0
    %3962 = vmatprep.mubr.f32.mxu0 0.0
    %v3963 = vand.u32 %v3724, 4294901760
    %3964 = vmatmul.mubr.f32.gmra.mxu0 %v3963
    %v3965 = vpop.f32.mrf.mxu0
    %v3966 = vadd.f32 %v3814, %v3965
    %v3967 = vpop.f32.mrf.mxu0
    %v3968 = vadd.f32 %v3816, %v3967
    %3969 = vdwg.mxu0
    %3970 = vmatprep.subr.mxu0 0.0
    %3971 = vmatpush1.msra.mxu0 0.0
    %3972 = vmatprep.subr.mxu0 0.0
    %3973 = vmatpush1.msra.mxu0 0.0
    %3974 = vmatprep.subr.mxu0 0.0
    %3975 = vmatpush1.msra.mxu0 0.0
    %3976 = vmatprep.subr.mxu0 0.0
    %3977 = vmatpush1.msra.mxu0 0.0
    %3978 = vmatprep.subr.mxu0 0.0
    %3979 = vmatpush1.msra.mxu0 0.0
    %3980 = vmatprep.subr.mxu0 0.0
    %3981 = vmatpush1.msra.mxu0 0.0
    %3982 = vmatprep.subr.mxu0 0.0
    %3983 = vmatpush1.msra.mxu0 0.0
    %3984 = vmatprep.subr.mxu0 0.0
    %3985 = vmatpush1.msra.mxu0 0.0
    %v3986 = vand.u32 %v848, 4294901760
    %v3987 = vsub.f32 %v848, %v3986
    %3988 = vmatprep.subr.mxu0 %v3987
    %v3989 = vand.u32 %v847, 4294901760
    %v3990 = vsub.f32 %v847, %v3989
    %3991 = vmatpush1.msra.mxu0 %v3990
    %v3992 = vand.u32 %v846, 4294901760
    %v3993 = vsub.f32 %v846, %v3992
    %3994 = vmatprep.subr.mxu0 %v3993
    %v3995 = vand.u32 %v845, 4294901760
    %v3996 = vsub.f32 %v845, %v3995
    %3997 = vmatpush1.msra.mxu0 %v3996
    %v3998 = vand.u32 %v844, 4294901760
    %v3999 = vsub.f32 %v844, %v3998
    %4000 = vmatprep.subr.mxu0 %v3999
    %v4001 = vand.u32 %v843, 4294901760
    %v4002 = vsub.f32 %v843, %v4001
    %4003 = vmatpush1.msra.mxu0 %v4002
    %v4004 = vand.u32 %v842, 4294901760
    %v4005 = vsub.f32 %v842, %v4004
    %4006 = vmatprep.subr.mxu0 %v4005
    %v4007 = vand.u32 %v841, 4294901760
    %v4008 = vsub.f32 %v841, %v4007
    %4009 = vmatpush1.msra.mxu0 %v4008
    %v4010 = vand.u32 %v840, 4294901760
    %v4011 = vsub.f32 %v840, %v4010
    %4012 = vmatprep.subr.mxu0 %v4011
    %v4013 = vand.u32 %v839, 4294901760
    %v4014 = vsub.f32 %v839, %v4013
    %4015 = vmatpush1.msra.mxu0 %v4014
    %v4016 = vand.u32 %v838, 4294901760
    %v4017 = vsub.f32 %v838, %v4016
    %4018 = vmatprep.subr.mxu0 %v4017
    %v4019 = vand.u32 %v837, 4294901760
    %v4020 = vsub.f32 %v837, %v4019
    %4021 = vmatpush1.msra.mxu0 %v4020
    %v4022 = vand.u32 %v836, 4294901760
    %v4023 = vsub.f32 %v836, %v4022
    %4024 = vmatprep.subr.mxu0 %v4023
    %v4025 = vand.u32 %v835, 4294901760
    %v4026 = vsub.f32 %v835, %v4025
    %4027 = vmatpush1.msra.mxu0 %v4026
    %v4028 = vand.u32 %v834, 4294901760
    %v4029 = vsub.f32 %v834, %v4028
    %4030 = vmatprep.subr.mxu0 %v4029
    %v4031 = vand.u32 %v833, 4294901760
    %v4032 = vsub.f32 %v833, %v4031
    %4033 = vmatpush1.msra.mxu0 %v4032
    %4034 = vmatprep.subr.mxu0 0.0
    %4035 = vmatpush2.msra.mxu0 0.0
    %4036 = vmatprep.subr.mxu0 0.0
    %4037 = vmatpush2.msra.mxu0 0.0
    %4038 = vmatprep.subr.mxu0 0.0
    %4039 = vmatpush2.msra.mxu0 0.0
    %4040 = vmatprep.subr.mxu0 0.0
    %4041 = vmatpush2.msra.mxu0 0.0
    %4042 = vmatprep.subr.mxu0 0.0
    %4043 = vmatpush2.msra.mxu0 0.0
    %4044 = vmatprep.subr.mxu0 0.0
    %4045 = vmatpush2.msra.mxu0 0.0
    %4046 = vmatprep.subr.mxu0 0.0
    %4047 = vmatpush2.msra.mxu0 0.0
    %4048 = vmatprep.subr.mxu0 0.0
    %4049 = vmatpush2.msra.mxu0 0.0
    %4050 = vmatprep.subr.mxu0 0.0
    %4051 = vmatpush2.msra.mxu0 0.0
    %4052 = vmatprep.subr.mxu0 0.0
    %4053 = vmatpush2.msra.mxu0 0.0
    %4054 = vmatprep.subr.mxu0 0.0
    %4055 = vmatpush2.msra.mxu0 0.0
    %4056 = vmatprep.subr.mxu0 0.0
    %4057 = vmatpush2.msra.mxu0 0.0
    %4058 = vmatprep.subr.mxu0 0.0
    %4059 = vmatpush2.msra.mxu0 0.0
    %4060 = vmatprep.subr.mxu0 0.0
    %4061 = vmatpush2.msra.mxu0 0.0
    %4062 = vmatprep.subr.mxu0 0.0
    %4063 = vmatpush2.msra.mxu0 0.0
    %4064 = vmatprep.subr.mxu0 0.0
    %4065 = vmatpush2.msra.mxu0 0.0
    %4066 = vmatprep.mubr.f32.mxu0 0.0
    %v4067 = vand.u32 %v3724, 4294901760
    %v4068 = vsub.f32 %v3724, %v4067
    %4069 = vmatmul.mubr.f32.gmra.mxu0 %v4068
    %v4070 = vpop.f32.mrf.mxu0
    %v4071 = vadd.f32 %v3966, %v4070
    %v4072 = vpop.f32.mrf.mxu0
    %v4073 = vadd.f32 %v3968, %v4072
    %4074 = vdwg.mxu0
    %4075 = vmatprep.subr.mxu0 0.0
    %4076 = vmatpush1.msra.mxu0 0.0
    %4077 = vmatprep.subr.mxu0 0.0
    %4078 = vmatpush1.msra.mxu0 0.0
    %4079 = vmatprep.subr.mxu0 0.0
    %4080 = vmatpush1.msra.mxu0 0.0
    %4081 = vmatprep.subr.mxu0 0.0
    %4082 = vmatpush1.msra.mxu0 0.0
    %4083 = vmatprep.subr.mxu0 0.0
    %4084 = vmatpush1.msra.mxu0 0.0
    %4085 = vmatprep.subr.mxu0 0.0
    %4086 = vmatpush1.msra.mxu0 0.0
    %4087 = vmatprep.subr.mxu0 0.0
    %4088 = vmatpush1.msra.mxu0 0.0
    %4089 = vmatprep.subr.mxu0 0.0
    %4090 = vmatpush1.msra.mxu0 0.0
    %v4091 = vand.u32 %v848, 4294901760
    %4092 = vmatprep.subr.mxu0 %v4091
    %v4093 = vand.u32 %v847, 4294901760
    %4094 = vmatpush1.msra.mxu0 %v4093
    %v4095 = vand.u32 %v846, 4294901760
    %4096 = vmatprep.subr.mxu0 %v4095
    %v4097 = vand.u32 %v845, 4294901760
    %4098 = vmatpush1.msra.mxu0 %v4097
    %v4099 = vand.u32 %v844, 4294901760
    %4100 = vmatprep.subr.mxu0 %v4099
    %v4101 = vand.u32 %v843, 4294901760
    %4102 = vmatpush1.msra.mxu0 %v4101
    %v4103 = vand.u32 %v842, 4294901760
    %4104 = vmatprep.subr.mxu0 %v4103
    %v4105 = vand.u32 %v841, 4294901760
    %4106 = vmatpush1.msra.mxu0 %v4105
    %v4107 = vand.u32 %v840, 4294901760
    %4108 = vmatprep.subr.mxu0 %v4107
    %v4109 = vand.u32 %v839, 4294901760
    %4110 = vmatpush1.msra.mxu0 %v4109
    %v4111 = vand.u32 %v838, 4294901760
    %4112 = vmatprep.subr.mxu0 %v4111
    %v4113 = vand.u32 %v837, 4294901760
    %4114 = vmatpush1.msra.mxu0 %v4113
    %v4115 = vand.u32 %v836, 4294901760
    %4116 = vmatprep.subr.mxu0 %v4115
    %v4117 = vand.u32 %v835, 4294901760
    %4118 = vmatpush1.msra.mxu0 %v4117
    %v4119 = vand.u32 %v834, 4294901760
    %4120 = vmatprep.subr.mxu0 %v4119
    %v4121 = vand.u32 %v833, 4294901760
    %4122 = vmatpush1.msra.mxu0 %v4121
    %4123 = vmatprep.subr.mxu0 0.0
    %4124 = vmatpush2.msra.mxu0 0.0
    %4125 = vmatprep.subr.mxu0 0.0
    %4126 = vmatpush2.msra.mxu0 0.0
    %4127 = vmatprep.subr.mxu0 0.0
    %4128 = vmatpush2.msra.mxu0 0.0
    %4129 = vmatprep.subr.mxu0 0.0
    %4130 = vmatpush2.msra.mxu0 0.0
    %4131 = vmatprep.subr.mxu0 0.0
    %4132 = vmatpush2.msra.mxu0 0.0
    %4133 = vmatprep.subr.mxu0 0.0
    %4134 = vmatpush2.msra.mxu0 0.0
    %4135 = vmatprep.subr.mxu0 0.0
    %4136 = vmatpush2.msra.mxu0 0.0
    %4137 = vmatprep.subr.mxu0 0.0
    %4138 = vmatpush2.msra.mxu0 0.0
    %4139 = vmatprep.subr.mxu0 0.0
    %4140 = vmatpush2.msra.mxu0 0.0
    %4141 = vmatprep.subr.mxu0 0.0
    %4142 = vmatpush2.msra.mxu0 0.0
    %4143 = vmatprep.subr.mxu0 0.0
    %4144 = vmatpush2.msra.mxu0 0.0
    %4145 = vmatprep.subr.mxu0 0.0
    %4146 = vmatpush2.msra.mxu0 0.0
    %4147 = vmatprep.subr.mxu0 0.0
    %4148 = vmatpush2.msra.mxu0 0.0
    %4149 = vmatprep.subr.mxu0 0.0
    %4150 = vmatpush2.msra.mxu0 0.0
    %4151 = vmatprep.subr.mxu0 0.0
    %4152 = vmatpush2.msra.mxu0 0.0
    %4153 = vmatprep.subr.mxu0 0.0
    %4154 = vmatpush2.msra.mxu0 0.0
    %4155 = vmatprep.mubr.f32.mxu0 0.0
    %v4156 = vand.u32 %v3724, 4294901760
    %v4157 = vsub.f32 %v3724, %v4156
    %v4158 = vand.u32 %v4157, 4294901760
    %4159 = vmatmul.mubr.f32.gmra.mxu0 %v4158
    %v4160 = vpop.f32.mrf.mxu0
    %v4161 = vadd.f32 %v4071, %v4160
    %v4162 = vpop.f32.mrf.mxu0
    %v4163 = vadd.f32 %v4073, %v4162
    %4164 = vdwg.mxu0
    %4165 = vmatprep.subr.mxu0 0.0
    %4166 = vmatpush1.msra.mxu0 0.0
    %4167 = vmatprep.subr.mxu0 0.0
    %4168 = vmatpush1.msra.mxu0 0.0
    %4169 = vmatprep.subr.mxu0 0.0
    %4170 = vmatpush1.msra.mxu0 0.0
    %4171 = vmatprep.subr.mxu0 0.0
    %4172 = vmatpush1.msra.mxu0 0.0
    %4173 = vmatprep.subr.mxu0 0.0
    %4174 = vmatpush1.msra.mxu0 0.0
    %4175 = vmatprep.subr.mxu0 0.0
    %4176 = vmatpush1.msra.mxu0 0.0
    %4177 = vmatprep.subr.mxu0 0.0
    %4178 = vmatpush1.msra.mxu0 0.0
    %4179 = vmatprep.subr.mxu0 0.0
    %4180 = vmatpush1.msra.mxu0 0.0
    %v4181 = vand.u32 %v848, 4294901760
    %v4182 = vsub.f32 %v848, %v4181
    %v4183 = vand.u32 %v4182, 4294901760
    %4184 = vmatprep.subr.mxu0 %v4183
    %v4185 = vand.u32 %v847, 4294901760
    %v4186 = vsub.f32 %v847, %v4185
    %v4187 = vand.u32 %v4186, 4294901760
    %4188 = vmatpush1.msra.mxu0 %v4187
    %v4189 = vand.u32 %v846, 4294901760
    %v4190 = vsub.f32 %v846, %v4189
    %v4191 = vand.u32 %v4190, 4294901760
    %4192 = vmatprep.subr.mxu0 %v4191
    %v4193 = vand.u32 %v845, 4294901760
    %v4194 = vsub.f32 %v845, %v4193
    %v4195 = vand.u32 %v4194, 4294901760
    %4196 = vmatpush1.msra.mxu0 %v4195
    %v4197 = vand.u32 %v844, 4294901760
    %v4198 = vsub.f32 %v844, %v4197
    %v4199 = vand.u32 %v4198, 4294901760
    %4200 = vmatprep.subr.mxu0 %v4199
    %v4201 = vand.u32 %v843, 4294901760
    %v4202 = vsub.f32 %v843, %v4201
    %v4203 = vand.u32 %v4202, 4294901760
    %4204 = vmatpush1.msra.mxu0 %v4203
    %v4205 = vand.u32 %v842, 4294901760
    %v4206 = vsub.f32 %v842, %v4205
    %v4207 = vand.u32 %v4206, 4294901760
    %4208 = vmatprep.subr.mxu0 %v4207
    %v4209 = vand.u32 %v841, 4294901760
    %v4210 = vsub.f32 %v841, %v4209
    %v4211 = vand.u32 %v4210, 4294901760
    %4212 = vmatpush1.msra.mxu0 %v4211
    %v4213 = vand.u32 %v840, 4294901760
    %v4214 = vsub.f32 %v840, %v4213
    %v4215 = vand.u32 %v4214, 4294901760
    %4216 = vmatprep.subr.mxu0 %v4215
    %v4217 = vand.u32 %v839, 4294901760
    %v4218 = vsub.f32 %v839, %v4217
    %v4219 = vand.u32 %v4218, 4294901760
    %4220 = vmatpush1.msra.mxu0 %v4219
    %v4221 = vand.u32 %v838, 4294901760
    %v4222 = vsub.f32 %v838, %v4221
    %v4223 = vand.u32 %v4222, 4294901760
    %4224 = vmatprep.subr.mxu0 %v4223
    %v4225 = vand.u32 %v837, 4294901760
    %v4226 = vsub.f32 %v837, %v4225
    %v4227 = vand.u32 %v4226, 4294901760
    %4228 = vmatpush1.msra.mxu0 %v4227
    %v4229 = vand.u32 %v836, 4294901760
    %v4230 = vsub.f32 %v836, %v4229
    %v4231 = vand.u32 %v4230, 4294901760
    %4232 = vmatprep.subr.mxu0 %v4231
    %v4233 = vand.u32 %v835, 4294901760
    %v4234 = vsub.f32 %v835, %v4233
    %v4235 = vand.u32 %v4234, 4294901760
    %4236 = vmatpush1.msra.mxu0 %v4235
    %v4237 = vand.u32 %v834, 4294901760
    %v4238 = vsub.f32 %v834, %v4237
    %v4239 = vand.u32 %v4238, 4294901760
    %4240 = vmatprep.subr.mxu0 %v4239
    %v4241 = vand.u32 %v833, 4294901760
    %v4242 = vsub.f32 %v833, %v4241
    %v4243 = vand.u32 %v4242, 4294901760
    %4244 = vmatpush1.msra.mxu0 %v4243
    %4245 = vmatprep.subr.mxu0 0.0
    %4246 = vmatpush2.msra.mxu0 0.0
    %4247 = vmatprep.subr.mxu0 0.0
    %4248 = vmatpush2.msra.mxu0 0.0
    %4249 = vmatprep.subr.mxu0 0.0
    %4250 = vmatpush2.msra.mxu0 0.0
    %4251 = vmatprep.subr.mxu0 0.0
    %4252 = vmatpush2.msra.mxu0 0.0
    %4253 = vmatprep.subr.mxu0 0.0
    %4254 = vmatpush2.msra.mxu0 0.0
    %4255 = vmatprep.subr.mxu0 0.0
    %4256 = vmatpush2.msra.mxu0 0.0
    %4257 = vmatprep.subr.mxu0 0.0
    %4258 = vmatpush2.msra.mxu0 0.0
    %4259 = vmatprep.subr.mxu0 0.0
    %4260 = vmatpush2.msra.mxu0 0.0
    %4261 = vmatprep.subr.mxu0 0.0
    %4262 = vmatpush2.msra.mxu0 0.0
    %4263 = vmatprep.subr.mxu0 0.0
    %4264 = vmatpush2.msra.mxu0 0.0
    %4265 = vmatprep.subr.mxu0 0.0
    %4266 = vmatpush2.msra.mxu0 0.0
    %4267 = vmatprep.subr.mxu0 0.0
    %4268 = vmatpush2.msra.mxu0 0.0
    %4269 = vmatprep.subr.mxu0 0.0
    %4270 = vmatpush2.msra.mxu0 0.0
    %4271 = vmatprep.subr.mxu0 0.0
    %4272 = vmatpush2.msra.mxu0 0.0
    %4273 = vmatprep.subr.mxu0 0.0
    %4274 = vmatpush2.msra.mxu0 0.0
    %4275 = vmatprep.subr.mxu0 0.0
    %4276 = vmatpush2.msra.mxu0 0.0
    %4277 = vmatprep.mubr.f32.mxu0 0.0
    %v4278 = vand.u32 %v3724, 4294901760
    %4279 = vmatmul.mubr.f32.gmra.mxu0 %v4278
    %v4280 = vpop.f32.mrf.mxu0
    %v4281 = vadd.f32 %v4161, %v4280
    %v4282 = vpop.f32.mrf.mxu0
    %v4283 = vadd.f32 %v4163, %v4282
    %4284 = vdwg.mxu0
    %4285 = vmatprep.subr.mxu0 0.0
    %4286 = vmatpush1.msra.mxu0 0.0
    %4287 = vmatprep.subr.mxu0 0.0
    %4288 = vmatpush1.msra.mxu0 0.0
    %4289 = vmatprep.subr.mxu0 0.0
    %4290 = vmatpush1.msra.mxu0 0.0
    %4291 = vmatprep.subr.mxu0 0.0
    %4292 = vmatpush1.msra.mxu0 0.0
    %4293 = vmatprep.subr.mxu0 0.0
    %4294 = vmatpush1.msra.mxu0 0.0
    %4295 = vmatprep.subr.mxu0 0.0
    %4296 = vmatpush1.msra.mxu0 0.0
    %4297 = vmatprep.subr.mxu0 0.0
    %4298 = vmatpush1.msra.mxu0 0.0
    %4299 = vmatprep.subr.mxu0 0.0
    %4300 = vmatpush1.msra.mxu0 0.0
    %v4301 = vand.u32 %v848, 4294901760
    %4302 = vmatprep.subr.mxu0 %v4301
    %v4303 = vand.u32 %v847, 4294901760
    %4304 = vmatpush1.msra.mxu0 %v4303
    %v4305 = vand.u32 %v846, 4294901760
    %4306 = vmatprep.subr.mxu0 %v4305
    %v4307 = vand.u32 %v845, 4294901760
    %4308 = vmatpush1.msra.mxu0 %v4307
    %v4309 = vand.u32 %v844, 4294901760
    %4310 = vmatprep.subr.mxu0 %v4309
    %v4311 = vand.u32 %v843, 4294901760
    %4312 = vmatpush1.msra.mxu0 %v4311
    %v4313 = vand.u32 %v842, 4294901760
    %4314 = vmatprep.subr.mxu0 %v4313
    %v4315 = vand.u32 %v841, 4294901760
    %4316 = vmatpush1.msra.mxu0 %v4315
    %v4317 = vand.u32 %v840, 4294901760
    %4318 = vmatprep.subr.mxu0 %v4317
    %v4319 = vand.u32 %v839, 4294901760
    %4320 = vmatpush1.msra.mxu0 %v4319
    %v4321 = vand.u32 %v838, 4294901760
    %4322 = vmatprep.subr.mxu0 %v4321
    %v4323 = vand.u32 %v837, 4294901760
    %4324 = vmatpush1.msra.mxu0 %v4323
    %v4325 = vand.u32 %v836, 4294901760
    %4326 = vmatprep.subr.mxu0 %v4325
    %v4327 = vand.u32 %v835, 4294901760
    %4328 = vmatpush1.msra.mxu0 %v4327
    %v4329 = vand.u32 %v834, 4294901760
    %4330 = vmatprep.subr.mxu0 %v4329
    %v4331 = vand.u32 %v833, 4294901760
    %4332 = vmatpush1.msra.mxu0 %v4331
    %4333 = vmatprep.subr.mxu0 0.0
    %4334 = vmatpush2.msra.mxu0 0.0
    %4335 = vmatprep.subr.mxu0 0.0
    %4336 = vmatpush2.msra.mxu0 0.0
    %4337 = vmatprep.subr.mxu0 0.0
    %4338 = vmatpush2.msra.mxu0 0.0
    %4339 = vmatprep.subr.mxu0 0.0
    %4340 = vmatpush2.msra.mxu0 0.0
    %4341 = vmatprep.subr.mxu0 0.0
    %4342 = vmatpush2.msra.mxu0 0.0
    %4343 = vmatprep.subr.mxu0 0.0
    %4344 = vmatpush2.msra.mxu0 0.0
    %4345 = vmatprep.subr.mxu0 0.0
    %4346 = vmatpush2.msra.mxu0 0.0
    %4347 = vmatprep.subr.mxu0 0.0
    %4348 = vmatpush2.msra.mxu0 0.0
    %4349 = vmatprep.subr.mxu0 0.0
    %4350 = vmatpush2.msra.mxu0 0.0
    %4351 = vmatprep.subr.mxu0 0.0
    %4352 = vmatpush2.msra.mxu0 0.0
    %4353 = vmatprep.subr.mxu0 0.0
    %4354 = vmatpush2.msra.mxu0 0.0
    %4355 = vmatprep.subr.mxu0 0.0
    %4356 = vmatpush2.msra.mxu0 0.0
    %4357 = vmatprep.subr.mxu0 0.0
    %4358 = vmatpush2.msra.mxu0 0.0
    %4359 = vmatprep.subr.mxu0 0.0
    %4360 = vmatpush2.msra.mxu0 0.0
    %4361 = vmatprep.subr.mxu0 0.0
    %4362 = vmatpush2.msra.mxu0 0.0
    %4363 = vmatprep.subr.mxu0 0.0
    %4364 = vmatpush2.msra.mxu0 0.0
    %4365 = vmatprep.mubr.f32.mxu0 0.0
    %v4366 = vand.u32 %v3724, 4294901760
    %4367 = vmatmul.mubr.f32.gmra.mxu0 %v4366
    %v4368 = vpop.f32.mrf.mxu0
    %v4369 = vadd.f32 %v4281, %v4368
    %v4370 = vpop.f32.mrf.mxu0
    %v4371 = vadd.f32 %v4283, %v4370
    %4372 = vdwg.mxu0
    %v4373 = vadd.f32 %v818, %v4369
    %v4374 = vadd.f32 %v1536, %v4371
    %v4375 = vxor.u32 %v4373, 2147483648
    %v4376 = vmul.f32 %v4375, 1.442695
    %v4377 = vpow.pop %v4376
    %v4378 = vadd.f32 %v4377, 1.0
    %v4379 = vrcp.pop %v4378
    %v4380 = vmul.f32 1.0, %v4379
    %v4381 = vtanh.pop %v4373
    %v4382 = vmul.f32 %v4380, %v3683
    %4384 = vrot.lane.b32.xlu0 %v4381, 64
    %v4385 = vpop.permute.xlu0 %4384
    %v4387 = vmul.f32 %v4380, %v4385
    %4389 = vrot.lane.b32.xlu0 %v4387, 32
    %v4390 = vpop.permute.xlu0 %4389
    %v4392 = vadd.f32 %v4382, %v4390
    %v4393 = vtanh.pop %v4392
    %4395 = vrot.lane.b32.xlu0 %v4393, 64
    %v4396 = vpop.permute.xlu0 %4395
    %v4398 = vmul.f32 %v4380, %v4396
    %v4399 = vxor.u32 %v4374, 2147483648
    %v4400 = vmul.f32 %v4399, 1.442695
    %v4401 = vpow.pop %v4400
    %v4402 = vadd.f32 %v4401, 1.0
    %v4403 = vrcp.pop %v4402
    %v4404 = vmul.f32 1.0, %v4403
    %v4405 = vtanh.pop %v4374
    %v4406 = vmul.f32 %v4404, %v3707
    %4408 = vrot.lane.b32.xlu0 %v4405, 64
    %v4409 = vpop.permute.xlu0 %4408
    %v4411 = vmul.f32 %v4404, %v4409
    %4413 = vrot.lane.b32.xlu0 %v4411, 32
    %v4414 = vpop.permute.xlu0 %4413
    %v4416 = vadd.f32 %v4406, %v4414
    %v4417 = vtanh.pop %v4416
    %4419 = vrot.lane.b32.xlu0 %v4417, 64
    %v4420 = vpop.permute.xlu0 %4419
    %v4422 = vmul.f32 %v4404, %v4420
    %4424 = vrot.lane.b32.xlu0 %v4398, 32
    %v4425 = vpop.permute.xlu0 %4424
    %4428 = vrot.lane.b32.xlu0 %v4422, 64
    %v4429 = vpop.permute.xlu0 %4428
    %v4431 = vsel %vm878, %v4425, %v4429
    %v4433 = vsel %vm880, %v4431, 0
    %4435 = vmatprep.subr.mxu0 0.0
    %4436 = vmatpush1.msra.mxu0 0.0
    %4437 = vmatprep.subr.mxu0 0.0
    %4438 = vmatpush1.msra.mxu0 0.0
    %4439 = vmatprep.subr.mxu0 0.0
    %4440 = vmatpush1.msra.mxu0 0.0
    %4441 = vmatprep.subr.mxu0 0.0
    %4442 = vmatpush1.msra.mxu0 0.0
    %4443 = vmatprep.subr.mxu0 0.0
    %4444 = vmatpush1.msra.mxu0 0.0
    %4445 = vmatprep.subr.mxu0 0.0
    %4446 = vmatpush1.msra.mxu0 0.0
    %4447 = vmatprep.subr.mxu0 0.0
    %4448 = vmatpush1.msra.mxu0 0.0
    %4449 = vmatprep.subr.mxu0 0.0
    %4450 = vmatpush1.msra.mxu0 0.0
    %v4451 = vand.u32 %v848, 4294901760
    %4452 = vmatprep.subr.mxu0 %v4451
    %v4453 = vand.u32 %v847, 4294901760
    %4454 = vmatpush1.msra.mxu0 %v4453
    %v4455 = vand.u32 %v846, 4294901760
    %4456 = vmatprep.subr.mxu0 %v4455
    %v4457 = vand.u32 %v845, 4294901760
    %4458 = vmatpush1.msra.mxu0 %v4457
    %v4459 = vand.u32 %v844, 4294901760
    %4460 = vmatprep.subr.mxu0 %v4459
    %v4461 = vand.u32 %v843, 4294901760
    %4462 = vmatpush1.msra.mxu0 %v4461
    %v4463 = vand.u32 %v842, 4294901760
    %4464 = vmatprep.subr.mxu0 %v4463
    %v4465 = vand.u32 %v841, 4294901760
    %4466 = vmatpush1.msra.mxu0 %v4465
    %v4467 = vand.u32 %v840, 4294901760
    %4468 = vmatprep.subr.mxu0 %v4467
    %v4469 = vand.u32 %v839, 4294901760
    %4470 = vmatpush1.msra.mxu0 %v4469
    %v4471 = vand.u32 %v838, 4294901760
    %4472 = vmatprep.subr.mxu0 %v4471
    %v4473 = vand.u32 %v837, 4294901760
    %4474 = vmatpush1.msra.mxu0 %v4473
    %v4475 = vand.u32 %v836, 4294901760
    %4476 = vmatprep.subr.mxu0 %v4475
    %v4477 = vand.u32 %v835, 4294901760
    %4478 = vmatpush1.msra.mxu0 %v4477
    %v4479 = vand.u32 %v834, 4294901760
    %4480 = vmatprep.subr.mxu0 %v4479
    %v4481 = vand.u32 %v833, 4294901760
    %4482 = vmatpush1.msra.mxu0 %v4481
    %4483 = vmatprep.subr.mxu0 0.0
    %4484 = vmatpush2.msra.mxu0 0.0
    %4485 = vmatprep.subr.mxu0 0.0
    %4486 = vmatpush2.msra.mxu0 0.0
    %4487 = vmatprep.subr.mxu0 0.0
    %4488 = vmatpush2.msra.mxu0 0.0
    %4489 = vmatprep.subr.mxu0 0.0
    %4490 = vmatpush2.msra.mxu0 0.0
    %4491 = vmatprep.subr.mxu0 0.0
    %4492 = vmatpush2.msra.mxu0 0.0
    %4493 = vmatprep.subr.mxu0 0.0
    %4494 = vmatpush2.msra.mxu0 0.0
    %4495 = vmatprep.subr.mxu0 0.0
    %4496 = vmatpush2.msra.mxu0 0.0
    %4497 = vmatprep.subr.mxu0 0.0
    %4498 = vmatpush2.msra.mxu0 0.0
    %4499 = vmatprep.subr.mxu0 0.0
    %4500 = vmatpush2.msra.mxu0 0.0
    %4501 = vmatprep.subr.mxu0 0.0
    %4502 = vmatpush2.msra.mxu0 0.0
    %4503 = vmatprep.subr.mxu0 0.0
    %4504 = vmatpush2.msra.mxu0 0.0
    %4505 = vmatprep.subr.mxu0 0.0
    %4506 = vmatpush2.msra.mxu0 0.0
    %4507 = vmatprep.subr.mxu0 0.0
    %4508 = vmatpush2.msra.mxu0 0.0
    %4509 = vmatprep.subr.mxu0 0.0
    %4510 = vmatpush2.msra.mxu0 0.0
    %4511 = vmatprep.subr.mxu0 0.0
    %4512 = vmatpush2.msra.mxu0 0.0
    %4513 = vmatprep.subr.mxu0 0.0
    %4514 = vmatpush2.msra.mxu0 0.0
    %4515 = vmatprep.mubr.f32.mxu0 0.0
    %v4516 = vand.u32 %v4433, 4294901760
    %v4517 = vsub.f32 %v4433, %v4516
    %v4518 = vand.u32 %v4517, 4294901760
    %v4519 = vsub.f32 %v4517, %v4518
    %v4520 = vand.u32 %v4519, 4294901760
    %4521 = vmatmul.mubr.f32.gmra.mxu0 %v4520
    %v4522 = vpop.f32.mrf.mxu0
    %v4523 = vadd.f32 0.0, %v4522
    %v4524 = vpop.f32.mrf.mxu0
    %v4525 = vadd.f32 0.0, %v4524
    %4526 = vdwg.mxu0
    %4527 = vmatprep.subr.mxu0 0.0
    %4528 = vmatpush1.msra.mxu0 0.0
    %4529 = vmatprep.subr.mxu0 0.0
    %4530 = vmatpush1.msra.mxu0 0.0
    %4531 = vmatprep.subr.mxu0 0.0
    %4532 = vmatpush1.msra.mxu0 0.0
    %4533 = vmatprep.subr.mxu0 0.0
    %4534 = vmatpush1.msra.mxu0 0.0
    %4535 = vmatprep.subr.mxu0 0.0
    %4536 = vmatpush1.msra.mxu0 0.0
    %4537 = vmatprep.subr.mxu0 0.0
    %4538 = vmatpush1.msra.mxu0 0.0
    %4539 = vmatprep.subr.mxu0 0.0
    %4540 = vmatpush1.msra.mxu0 0.0
    %4541 = vmatprep.subr.mxu0 0.0
    %4542 = vmatpush1.msra.mxu0 0.0
    %v4543 = vand.u32 %v848, 4294901760
    %v4544 = vsub.f32 %v848, %v4543
    %v4545 = vand.u32 %v4544, 4294901760
    %v4546 = vsub.f32 %v4544, %v4545
    %v4547 = vand.u32 %v4546, 4294901760
    %4548 = vmatprep.subr.mxu0 %v4547
    %v4549 = vand.u32 %v847, 4294901760
    %v4550 = vsub.f32 %v847, %v4549
    %v4551 = vand.u32 %v4550, 4294901760
    %v4552 = vsub.f32 %v4550, %v4551
    %v4553 = vand.u32 %v4552, 4294901760
    %4554 = vmatpush1.msra.mxu0 %v4553
    %v4555 = vand.u32 %v846, 4294901760
    %v4556 = vsub.f32 %v846, %v4555
    %v4557 = vand.u32 %v4556, 4294901760
    %v4558 = vsub.f32 %v4556, %v4557
    %v4559 = vand.u32 %v4558, 4294901760
    %4560 = vmatprep.subr.mxu0 %v4559
    %v4561 = vand.u32 %v845, 4294901760
    %v4562 = vsub.f32 %v845, %v4561
    %v4563 = vand.u32 %v4562, 4294901760
    %v4564 = vsub.f32 %v4562, %v4563
    %v4565 = vand.u32 %v4564, 4294901760
    %4566 = vmatpush1.msra.mxu0 %v4565
    %v4567 = vand.u32 %v844, 4294901760
    %v4568 = vsub.f32 %v844, %v4567
    %v4569 = vand.u32 %v4568, 4294901760
    %v4570 = vsub.f32 %v4568, %v4569
    %v4571 = vand.u32 %v4570, 4294901760
    %4572 = vmatprep.subr.mxu0 %v4571
    %v4573 = vand.u32 %v843, 4294901760
    %v4574 = vsub.f32 %v843, %v4573
    %v4575 = vand.u32 %v4574, 4294901760
    %v4576 = vsub.f32 %v4574, %v4575
    %v4577 = vand.u32 %v4576, 4294901760
    %4578 = vmatpush1.msra.mxu0 %v4577
    %v4579 = vand.u32 %v842, 4294901760
    %v4580 = vsub.f32 %v842, %v4579
    %v4581 = vand.u32 %v4580, 4294901760
    %v4582 = vsub.f32 %v4580, %v4581
    %v4583 = vand.u32 %v4582, 4294901760
    %4584 = vmatprep.subr.mxu0 %v4583
    %v4585 = vand.u32 %v841, 4294901760
    %v4586 = vsub.f32 %v841, %v4585
    %v4587 = vand.u32 %v4586, 4294901760
    %v4588 = vsub.f32 %v4586, %v4587
    %v4589 = vand.u32 %v4588, 4294901760
    %4590 = vmatpush1.msra.mxu0 %v4589
    %v4591 = vand.u32 %v840, 4294901760
    %v4592 = vsub.f32 %v840, %v4591
    %v4593 = vand.u32 %v4592, 4294901760
    %v4594 = vsub.f32 %v4592, %v4593
    %v4595 = vand.u32 %v4594, 4294901760
    %4596 = vmatprep.subr.mxu0 %v4595
    %v4597 = vand.u32 %v839, 4294901760
    %v4598 = vsub.f32 %v839, %v4597
    %v4599 = vand.u32 %v4598, 4294901760
    %v4600 = vsub.f32 %v4598, %v4599
    %v4601 = vand.u32 %v4600, 4294901760
    %4602 = vmatpush1.msra.mxu0 %v4601
    %v4603 = vand.u32 %v838, 4294901760
    %v4604 = vsub.f32 %v838, %v4603
    %v4605 = vand.u32 %v4604, 4294901760
    %v4606 = vsub.f32 %v4604, %v4605
    %v4607 = vand.u32 %v4606, 4294901760
    %4608 = vmatprep.subr.mxu0 %v4607
    %v4609 = vand.u32 %v837, 4294901760
    %v4610 = vsub.f32 %v837, %v4609
    %v4611 = vand.u32 %v4610, 4294901760
    %v4612 = vsub.f32 %v4610, %v4611
    %v4613 = vand.u32 %v4612, 4294901760
    %4614 = vmatpush1.msra.mxu0 %v4613
    %v4615 = vand.u32 %v836, 4294901760
    %v4616 = vsub.f32 %v836, %v4615
    %v4617 = vand.u32 %v4616, 4294901760
    %v4618 = vsub.f32 %v4616, %v4617
    %v4619 = vand.u32 %v4618, 4294901760
    %4620 = vmatprep.subr.mxu0 %v4619
    %v4621 = vand.u32 %v835, 4294901760
    %v4622 = vsub.f32 %v835, %v4621
    %v4623 = vand.u32 %v4622, 4294901760
    %v4624 = vsub.f32 %v4622, %v4623
    %v4625 = vand.u32 %v4624, 4294901760
    %4626 = vmatpush1.msra.mxu0 %v4625
    %v4627 = vand.u32 %v834, 4294901760
    %v4628 = vsub.f32 %v834, %v4627
    %v4629 = vand.u32 %v4628, 4294901760
    %v4630 = vsub.f32 %v4628, %v4629
    %v4631 = vand.u32 %v4630, 4294901760
    %4632 = vmatprep.subr.mxu0 %v4631
    %v4633 = vand.u32 %v833, 4294901760
    %v4634 = vsub.f32 %v833, %v4633
    %v4635 = vand.u32 %v4634, 4294901760
    %v4636 = vsub.f32 %v4634, %v4635
    %v4637 = vand.u32 %v4636, 4294901760
    %4638 = vmatpush1.msra.mxu0 %v4637
    %4639 = vmatprep.subr.mxu0 0.0
    %4640 = vmatpush2.msra.mxu0 0.0
    %4641 = vmatprep.subr.mxu0 0.0
    %4642 = vmatpush2.msra.mxu0 0.0
    %4643 = vmatprep.subr.mxu0 0.0
    %4644 = vmatpush2.msra.mxu0 0.0
    %4645 = vmatprep.subr.mxu0 0.0
    %4646 = vmatpush2.msra.mxu0 0.0
    %4647 = vmatprep.subr.mxu0 0.0
    %4648 = vmatpush2.msra.mxu0 0.0
    %4649 = vmatprep.subr.mxu0 0.0
    %4650 = vmatpush2.msra.mxu0 0.0
    %4651 = vmatprep.subr.mxu0 0.0
    %4652 = vmatpush2.msra.mxu0 0.0
    %4653 = vmatprep.subr.mxu0 0.0
    %4654 = vmatpush2.msra.mxu0 0.0
    %4655 = vmatprep.subr.mxu0 0.0
    %4656 = vmatpush2.msra.mxu0 0.0
    %4657 = vmatprep.subr.mxu0 0.0
    %4658 = vmatpush2.msra.mxu0 0.0
    %4659 = vmatprep.subr.mxu0 0.0
    %4660 = vmatpush2.msra.mxu0 0.0
    %4661 = vmatprep.subr.mxu0 0.0
    %4662 = vmatpush2.msra.mxu0 0.0
    %4663 = vmatprep.subr.mxu0 0.0
    %4664 = vmatpush2.msra.mxu0 0.0
    %4665 = vmatprep.subr.mxu0 0.0
    %4666 = vmatpush2.msra.mxu0 0.0
    %4667 = vmatprep.subr.mxu0 0.0
    %4668 = vmatpush2.msra.mxu0 0.0
    %4669 = vmatprep.subr.mxu0 0.0
    %4670 = vmatpush2.msra.mxu0 0.0
    %4671 = vmatprep.mubr.f32.mxu0 0.0
    %v4672 = vand.u32 %v4433, 4294901760
    %4673 = vmatmul.mubr.f32.gmra.mxu0 %v4672
    %v4674 = vpop.f32.mrf.mxu0
    %v4675 = vadd.f32 %v4523, %v4674
    %v4676 = vpop.f32.mrf.mxu0
    %v4677 = vadd.f32 %v4525, %v4676
    %4678 = vdwg.mxu0
    %4679 = vmatprep.subr.mxu0 0.0
    %4680 = vmatpush1.msra.mxu0 0.0
    %4681 = vmatprep.subr.mxu0 0.0
    %4682 = vmatpush1.msra.mxu0 0.0
    %4683 = vmatprep.subr.mxu0 0.0
    %4684 = vmatpush1.msra.mxu0 0.0
    %4685 = vmatprep.subr.mxu0 0.0
    %4686 = vmatpush1.msra.mxu0 0.0
    %4687 = vmatprep.subr.mxu0 0.0
    %4688 = vmatpush1.msra.mxu0 0.0
    %4689 = vmatprep.subr.mxu0 0.0
    %4690 = vmatpush1.msra.mxu0 0.0
    %4691 = vmatprep.subr.mxu0 0.0
    %4692 = vmatpush1.msra.mxu0 0.0
    %4693 = vmatprep.subr.mxu0 0.0
    %4694 = vmatpush1.msra.mxu0 0.0
    %v4695 = vand.u32 %v848, 4294901760
    %v4696 = vsub.f32 %v848, %v4695
    %4697 = vmatprep.subr.mxu0 %v4696
    %v4698 = vand.u32 %v847, 4294901760
    %v4699 = vsub.f32 %v847, %v4698
    %4700 = vmatpush1.msra.mxu0 %v4699
    %v4701 = vand.u32 %v846, 4294901760
    %v4702 = vsub.f32 %v846, %v4701
    %4703 = vmatprep.subr.mxu0 %v4702
    %v4704 = vand.u32 %v845, 4294901760
    %v4705 = vsub.f32 %v845, %v4704
    %4706 = vmatpush1.msra.mxu0 %v4705
    %v4707 = vand.u32 %v844, 4294901760
    %v4708 = vsub.f32 %v844, %v4707
    %4709 = vmatprep.subr.mxu0 %v4708
    %v4710 = vand.u32 %v843, 4294901760
    %v4711 = vsub.f32 %v843, %v4710
    %4712 = vmatpush1.msra.mxu0 %v4711
    %v4713 = vand.u32 %v842, 4294901760
    %v4714 = vsub.f32 %v842, %v4713
    %4715 = vmatprep.subr.mxu0 %v4714
    %v4716 = vand.u32 %v841, 4294901760
    %v4717 = vsub.f32 %v841, %v4716
    %4718 = vmatpush1.msra.mxu0 %v4717
    %v4719 = vand.u32 %v840, 4294901760
    %v4720 = vsub.f32 %v840, %v4719
    %4721 = vmatprep.subr.mxu0 %v4720
    %v4722 = vand.u32 %v839, 4294901760
    %v4723 = vsub.f32 %v839, %v4722
    %4724 = vmatpush1.msra.mxu0 %v4723
    %v4725 = vand.u32 %v838, 4294901760
    %v4726 = vsub.f32 %v838, %v4725
    %4727 = vmatprep.subr.mxu0 %v4726
    %v4728 = vand.u32 %v837, 4294901760
    %v4729 = vsub.f32 %v837, %v4728
    %4730 = vmatpush1.msra.mxu0 %v4729
    %v4731 = vand.u32 %v836, 4294901760
    %v4732 = vsub.f32 %v836, %v4731
    %4733 = vmatprep.subr.mxu0 %v4732
    %v4734 = vand.u32 %v835, 4294901760
    %v4735 = vsub.f32 %v835, %v4734
    %4736 = vmatpush1.msra.mxu0 %v4735
    %v4737 = vand.u32 %v834, 4294901760
    %v4738 = vsub.f32 %v834, %v4737
    %4739 = vmatprep.subr.mxu0 %v4738
    %v4740 = vand.u32 %v833, 4294901760
    %v4741 = vsub.f32 %v833, %v4740
    %4742 = vmatpush1.msra.mxu0 %v4741
    %4743 = vmatprep.subr.mxu0 0.0
    %4744 = vmatpush2.msra.mxu0 0.0
    %4745 = vmatprep.subr.mxu0 0.0
    %4746 = vmatpush2.msra.mxu0 0.0
    %4747 = vmatprep.subr.mxu0 0.0
    %4748 = vmatpush2.msra.mxu0 0.0
    %4749 = vmatprep.subr.mxu0 0.0
    %4750 = vmatpush2.msra.mxu0 0.0
    %4751 = vmatprep.subr.mxu0 0.0
    %4752 = vmatpush2.msra.mxu0 0.0
    %4753 = vmatprep.subr.mxu0 0.0
    %4754 = vmatpush2.msra.mxu0 0.0
    %4755 = vmatprep.subr.mxu0 0.0
    %4756 = vmatpush2.msra.mxu0 0.0
    %4757 = vmatprep.subr.mxu0 0.0
    %4758 = vmatpush2.msra.mxu0 0.0
    %4759 = vmatprep.subr.mxu0 0.0
    %4760 = vmatpush2.msra.mxu0 0.0
    %4761 = vmatprep.subr.mxu0 0.0
    %4762 = vmatpush2.msra.mxu0 0.0
    %4763 = vmatprep.subr.mxu0 0.0
    %4764 = vmatpush2.msra.mxu0 0.0
    %4765 = vmatprep.subr.mxu0 0.0
    %4766 = vmatpush2.msra.mxu0 0.0
    %4767 = vmatprep.subr.mxu0 0.0
    %4768 = vmatpush2.msra.mxu0 0.0
    %4769 = vmatprep.subr.mxu0 0.0
    %4770 = vmatpush2.msra.mxu0 0.0
    %4771 = vmatprep.subr.mxu0 0.0
    %4772 = vmatpush2.msra.mxu0 0.0
    %4773 = vmatprep.subr.mxu0 0.0
    %4774 = vmatpush2.msra.mxu0 0.0
    %4775 = vmatprep.mubr.f32.mxu0 0.0
    %v4776 = vand.u32 %v4433, 4294901760
    %v4777 = vsub.f32 %v4433, %v4776
    %4778 = vmatmul.mubr.f32.gmra.mxu0 %v4777
    %v4779 = vpop.f32.mrf.mxu0
    %v4780 = vadd.f32 %v4675, %v4779
    %v4781 = vpop.f32.mrf.mxu0
    %v4782 = vadd.f32 %v4677, %v4781
    %4783 = vdwg.mxu0
    %4784 = vmatprep.subr.mxu0 0.0
    %4785 = vmatpush1.msra.mxu0 0.0
    %4786 = vmatprep.subr.mxu0 0.0
    %4787 = vmatpush1.msra.mxu0 0.0
    %4788 = vmatprep.subr.mxu0 0.0
    %4789 = vmatpush1.msra.mxu0 0.0
    %4790 = vmatprep.subr.mxu0 0.0
    %4791 = vmatpush1.msra.mxu0 0.0
    %4792 = vmatprep.subr.mxu0 0.0
    %4793 = vmatpush1.msra.mxu0 0.0
    %4794 = vmatprep.subr.mxu0 0.0
    %4795 = vmatpush1.msra.mxu0 0.0
    %4796 = vmatprep.subr.mxu0 0.0
    %4797 = vmatpush1.msra.mxu0 0.0
    %4798 = vmatprep.subr.mxu0 0.0
    %4799 = vmatpush1.msra.mxu0 0.0
    %v4800 = vand.u32 %v848, 4294901760
    %4801 = vmatprep.subr.mxu0 %v4800
    %v4802 = vand.u32 %v847, 4294901760
    %4803 = vmatpush1.msra.mxu0 %v4802
    %v4804 = vand.u32 %v846, 4294901760
    %4805 = vmatprep.subr.mxu0 %v4804
    %v4806 = vand.u32 %v845, 4294901760
    %4807 = vmatpush1.msra.mxu0 %v4806
    %v4808 = vand.u32 %v844, 4294901760
    %4809 = vmatprep.subr.mxu0 %v4808
    %v4810 = vand.u32 %v843, 4294901760
    %4811 = vmatpush1.msra.mxu0 %v4810
    %v4812 = vand.u32 %v842, 4294901760
    %4813 = vmatprep.subr.mxu0 %v4812
    %v4814 = vand.u32 %v841, 4294901760
    %4815 = vmatpush1.msra.mxu0 %v4814
    %v4816 = vand.u32 %v840, 4294901760
    %4817 = vmatprep.subr.mxu0 %v4816
    %v4818 = vand.u32 %v839, 4294901760
    %4819 = vmatpush1.msra.mxu0 %v4818
    %v4820 = vand.u32 %v838, 4294901760
    %4821 = vmatprep.subr.mxu0 %v4820
    %v4822 = vand.u32 %v837, 4294901760
    %4823 = vmatpush1.msra.mxu0 %v4822
    %v4824 = vand.u32 %v836, 4294901760
    %4825 = vmatprep.subr.mxu0 %v4824
    %v4826 = vand.u32 %v835, 4294901760
    %4827 = vmatpush1.msra.mxu0 %v4826
    %v4828 = vand.u32 %v834, 4294901760
    %4829 = vmatprep.subr.mxu0 %v4828
    %v4830 = vand.u32 %v833, 4294901760
    %4831 = vmatpush1.msra.mxu0 %v4830
    %4832 = vmatprep.subr.mxu0 0.0
    %4833 = vmatpush2.msra.mxu0 0.0
    %4834 = vmatprep.subr.mxu0 0.0
    %4835 = vmatpush2.msra.mxu0 0.0
    %4836 = vmatprep.subr.mxu0 0.0
    %4837 = vmatpush2.msra.mxu0 0.0
    %4838 = vmatprep.subr.mxu0 0.0
    %4839 = vmatpush2.msra.mxu0 0.0
    %4840 = vmatprep.subr.mxu0 0.0
    %4841 = vmatpush2.msra.mxu0 0.0
    %4842 = vmatprep.subr.mxu0 0.0
    %4843 = vmatpush2.msra.mxu0 0.0
    %4844 = vmatprep.subr.mxu0 0.0
    %4845 = vmatpush2.msra.mxu0 0.0
    %4846 = vmatprep.subr.mxu0 0.0
    %4847 = vmatpush2.msra.mxu0 0.0
    %4848 = vmatprep.subr.mxu0 0.0
    %4849 = vmatpush2.msra.mxu0 0.0
    %4850 = vmatprep.subr.mxu0 0.0
    %4851 = vmatpush2.msra.mxu0 0.0
    %4852 = vmatprep.subr.mxu0 0.0
    %4853 = vmatpush2.msra.mxu0 0.0
    %4854 = vmatprep.subr.mxu0 0.0
    %4855 = vmatpush2.msra.mxu0 0.0
    %4856 = vmatprep.subr.mxu0 0.0
    %4857 = vmatpush2.msra.mxu0 0.0
    %4858 = vmatprep.subr.mxu0 0.0
    %4859 = vmatpush2.msra.mxu0 0.0
    %4860 = vmatprep.subr.mxu0 0.0
    %4861 = vmatpush2.msra.mxu0 0.0
    %4862 = vmatprep.subr.mxu0 0.0
    %4863 = vmatpush2.msra.mxu0 0.0
    %4864 = vmatprep.mubr.f32.mxu0 0.0
    %v4865 = vand.u32 %v4433, 4294901760
    %v4866 = vsub.f32 %v4433, %v4865
    %v4867 = vand.u32 %v4866, 4294901760
    %4868 = vmatmul.mubr.f32.gmra.mxu0 %v4867
    %v4869 = vpop.f32.mrf.mxu0
    %v4870 = vadd.f32 %v4780, %v4869
    %v4871 = vpop.f32.mrf.mxu0
    %v4872 = vadd.f32 %v4782, %v4871
    %4873 = vdwg.mxu0
    %4874 = vmatprep.subr.mxu0 0.0
    %4875 = vmatpush1.msra.mxu0 0.0
    %4876 = vmatprep.subr.mxu0 0.0
    %4877 = vmatpush1.msra.mxu0 0.0
    %4878 = vmatprep.subr.mxu0 0.0
    %4879 = vmatpush1.msra.mxu0 0.0
    %4880 = vmatprep.subr.mxu0 0.0
    %4881 = vmatpush1.msra.mxu0 0.0
    %4882 = vmatprep.subr.mxu0 0.0
    %4883 = vmatpush1.msra.mxu0 0.0
    %4884 = vmatprep.subr.mxu0 0.0
    %4885 = vmatpush1.msra.mxu0 0.0
    %4886 = vmatprep.subr.mxu0 0.0
    %4887 = vmatpush1.msra.mxu0 0.0
    %4888 = vmatprep.subr.mxu0 0.0
    %4889 = vmatpush1.msra.mxu0 0.0
    %v4890 = vand.u32 %v848, 4294901760
    %v4891 = vsub.f32 %v848, %v4890
    %v4892 = vand.u32 %v4891, 4294901760
    %4893 = vmatprep.subr.mxu0 %v4892
    %v4894 = vand.u32 %v847, 4294901760
    %v4895 = vsub.f32 %v847, %v4894
    %v4896 = vand.u32 %v4895, 4294901760
    %4897 = vmatpush1.msra.mxu0 %v4896
    %v4898 = vand.u32 %v846, 4294901760
    %v4899 = vsub.f32 %v846, %v4898
    %v4900 = vand.u32 %v4899, 4294901760
    %4901 = vmatprep.subr.mxu0 %v4900
    %v4902 = vand.u32 %v845, 4294901760
    %v4903 = vsub.f32 %v845, %v4902
    %v4904 = vand.u32 %v4903, 4294901760
    %4905 = vmatpush1.msra.mxu0 %v4904
    %v4906 = vand.u32 %v844, 4294901760
    %v4907 = vsub.f32 %v844, %v4906
    %v4908 = vand.u32 %v4907, 4294901760
    %4909 = vmatprep.subr.mxu0 %v4908
    %v4910 = vand.u32 %v843, 4294901760
    %v4911 = vsub.f32 %v843, %v4910
    %v4912 = vand.u32 %v4911, 4294901760
    %4913 = vmatpush1.msra.mxu0 %v4912
    %v4914 = vand.u32 %v842, 4294901760
    %v4915 = vsub.f32 %v842, %v4914
    %v4916 = vand.u32 %v4915, 4294901760
    %4917 = vmatprep.subr.mxu0 %v4916
    %v4918 = vand.u32 %v841, 4294901760
    %v4919 = vsub.f32 %v841, %v4918
    %v4920 = vand.u32 %v4919, 4294901760
    %4921 = vmatpush1.msra.mxu0 %v4920
    %v4922 = vand.u32 %v840, 4294901760
    %v4923 = vsub.f32 %v840, %v4922
    %v4924 = vand.u32 %v4923, 4294901760
    %4925 = vmatprep.subr.mxu0 %v4924
    %v4926 = vand.u32 %v839, 4294901760
    %v4927 = vsub.f32 %v839, %v4926
    %v4928 = vand.u32 %v4927, 4294901760
    %4929 = vmatpush1.msra.mxu0 %v4928
    %v4930 = vand.u32 %v838, 4294901760
    %v4931 = vsub.f32 %v838, %v4930
    %v4932 = vand.u32 %v4931, 4294901760
    %4933 = vmatprep.subr.mxu0 %v4932
    %v4934 = vand.u32 %v837, 4294901760
    %v4935 = vsub.f32 %v837, %v4934
    %v4936 = vand.u32 %v4935, 4294901760
    %4937 = vmatpush1.msra.mxu0 %v4936
    %v4938 = vand.u32 %v836, 4294901760
    %v4939 = vsub.f32 %v836, %v4938
    %v4940 = vand.u32 %v4939, 4294901760
    %4941 = vmatprep.subr.mxu0 %v4940
    %v4942 = vand.u32 %v835, 4294901760
    %v4943 = vsub.f32 %v835, %v4942
    %v4944 = vand.u32 %v4943, 4294901760
    %4945 = vmatpush1.msra.mxu0 %v4944
    %v4946 = vand.u32 %v834, 4294901760
    %v4947 = vsub.f32 %v834, %v4946
    %v4948 = vand.u32 %v4947, 4294901760
    %4949 = vmatprep.subr.mxu0 %v4948
    %v4950 = vand.u32 %v833, 4294901760
    %v4951 = vsub.f32 %v833, %v4950
    %v4952 = vand.u32 %v4951, 4294901760
    %4953 = vmatpush1.msra.mxu0 %v4952
    %4954 = vmatprep.subr.mxu0 0.0
    %4955 = vmatpush2.msra.mxu0 0.0
    %4956 = vmatprep.subr.mxu0 0.0
    %4957 = vmatpush2.msra.mxu0 0.0
    %4958 = vmatprep.subr.mxu0 0.0
    %4959 = vmatpush2.msra.mxu0 0.0
    %4960 = vmatprep.subr.mxu0 0.0
    %4961 = vmatpush2.msra.mxu0 0.0
    %4962 = vmatprep.subr.mxu0 0.0
    %4963 = vmatpush2.msra.mxu0 0.0
    %4964 = vmatprep.subr.mxu0 0.0
    %4965 = vmatpush2.msra.mxu0 0.0
    %4966 = vmatprep.subr.mxu0 0.0
    %4967 = vmatpush2.msra.mxu0 0.0
    %4968 = vmatprep.subr.mxu0 0.0
    %4969 = vmatpush2.msra.mxu0 0.0
    %4970 = vmatprep.subr.mxu0 0.0
    %4971 = vmatpush2.msra.mxu0 0.0
    %4972 = vmatprep.subr.mxu0 0.0
    %4973 = vmatpush2.msra.mxu0 0.0
    %4974 = vmatprep.subr.mxu0 0.0
    %4975 = vmatpush2.msra.mxu0 0.0
    %4976 = vmatprep.subr.mxu0 0.0
    %4977 = vmatpush2.msra.mxu0 0.0
    %4978 = vmatprep.subr.mxu0 0.0
    %4979 = vmatpush2.msra.mxu0 0.0
    %4980 = vmatprep.subr.mxu0 0.0
    %4981 = vmatpush2.msra.mxu0 0.0
    %4982 = vmatprep.subr.mxu0 0.0
    %4983 = vmatpush2.msra.mxu0 0.0
    %4984 = vmatprep.subr.mxu0 0.0
    %4985 = vmatpush2.msra.mxu0 0.0
    %4986 = vmatprep.mubr.f32.mxu0 0.0
    %v4987 = vand.u32 %v4433, 4294901760
    %4988 = vmatmul.mubr.f32.gmra.mxu0 %v4987
    %v4989 = vpop.f32.mrf.mxu0
    %v4990 = vadd.f32 %v4870, %v4989
    %v4991 = vpop.f32.mrf.mxu0
    %v4992 = vadd.f32 %v4872, %v4991
    %4993 = vdwg.mxu0
    %4994 = vmatprep.subr.mxu0 0.0
    %4995 = vmatpush1.msra.mxu0 0.0
    %4996 = vmatprep.subr.mxu0 0.0
    %4997 = vmatpush1.msra.mxu0 0.0
    %4998 = vmatprep.subr.mxu0 0.0
    %4999 = vmatpush1.msra.mxu0 0.0
    %5000 = vmatprep.subr.mxu0 0.0
    %5001 = vmatpush1.msra.mxu0 0.0
    %5002 = vmatprep.subr.mxu0 0.0
    %5003 = vmatpush1.msra.mxu0 0.0
    %5004 = vmatprep.subr.mxu0 0.0
    %5005 = vmatpush1.msra.mxu0 0.0
    %5006 = vmatprep.subr.mxu0 0.0
    %5007 = vmatpush1.msra.mxu0 0.0
    %5008 = vmatprep.subr.mxu0 0.0
    %5009 = vmatpush1.msra.mxu0 0.0
    %v5010 = vand.u32 %v848, 4294901760
    %5011 = vmatprep.subr.mxu0 %v5010
    %v5012 = vand.u32 %v847, 4294901760
    %5013 = vmatpush1.msra.mxu0 %v5012
    %v5014 = vand.u32 %v846, 4294901760
    %5015 = vmatprep.subr.mxu0 %v5014
    %v5016 = vand.u32 %v845, 4294901760
    %5017 = vmatpush1.msra.mxu0 %v5016
    %v5018 = vand.u32 %v844, 4294901760
    %5019 = vmatprep.subr.mxu0 %v5018
    %v5020 = vand.u32 %v843, 4294901760
    %5021 = vmatpush1.msra.mxu0 %v5020
    %v5022 = vand.u32 %v842, 4294901760
    %5023 = vmatprep.subr.mxu0 %v5022
    %v5024 = vand.u32 %v841, 4294901760
    %5025 = vmatpush1.msra.mxu0 %v5024
    %v5026 = vand.u32 %v840, 4294901760
    %5027 = vmatprep.subr.mxu0 %v5026
    %v5028 = vand.u32 %v839, 4294901760
    %5029 = vmatpush1.msra.mxu0 %v5028
    %v5030 = vand.u32 %v838, 4294901760
    %5031 = vmatprep.subr.mxu0 %v5030
    %v5032 = vand.u32 %v837, 4294901760
    %5033 = vmatpush1.msra.mxu0 %v5032
    %v5034 = vand.u32 %v836, 4294901760
    %5035 = vmatprep.subr.mxu0 %v5034
    %v5036 = vand.u32 %v835, 4294901760
    %5037 = vmatpush1.msra.mxu0 %v5036
    %v5038 = vand.u32 %v834, 4294901760
    %5039 = vmatprep.subr.mxu0 %v5038
    %v5040 = vand.u32 %v833, 4294901760
    %5041 = vmatpush1.msra.mxu0 %v5040
    %5042 = vmatprep.subr.mxu0 0.0
    %5043 = vmatpush2.msra.mxu0 0.0
    %5044 = vmatprep.subr.mxu0 0.0
    %5045 = vmatpush2.msra.mxu0 0.0
    %5046 = vmatprep.subr.mxu0 0.0
    %5047 = vmatpush2.msra.mxu0 0.0
    %5048 = vmatprep.subr.mxu0 0.0
    %5049 = vmatpush2.msra.mxu0 0.0
    %5050 = vmatprep.subr.mxu0 0.0
    %5051 = vmatpush2.msra.mxu0 0.0
    %5052 = vmatprep.subr.mxu0 0.0
    %5053 = vmatpush2.msra.mxu0 0.0
    %5054 = vmatprep.subr.mxu0 0.0
    %5055 = vmatpush2.msra.mxu0 0.0
    %5056 = vmatprep.subr.mxu0 0.0
    %5057 = vmatpush2.msra.mxu0 0.0
    %5058 = vmatprep.subr.mxu0 0.0
    %5059 = vmatpush2.msra.mxu0 0.0
    %5060 = vmatprep.subr.mxu0 0.0
    %5061 = vmatpush2.msra.mxu0 0.0
    %5062 = vmatprep.subr.mxu0 0.0
    %5063 = vmatpush2.msra.mxu0 0.0
    %5064 = vmatprep.subr.mxu0 0.0
    %5065 = vmatpush2.msra.mxu0 0.0
    %5066 = vmatprep.subr.mxu0 0.0
    %5067 = vmatpush2.msra.mxu0 0.0
    %5068 = vmatprep.subr.mxu0 0.0
    %5069 = vmatpush2.msra.mxu0 0.0
    %5070 = vmatprep.subr.mxu0 0.0
    %5071 = vmatpush2.msra.mxu0 0.0
    %5072 = vmatprep.subr.mxu0 0.0
    %5073 = vmatpush2.msra.mxu0 0.0
    %5074 = vmatprep.mubr.f32.mxu0 0.0
    %v5075 = vand.u32 %v4433, 4294901760
    %5076 = vmatmul.mubr.f32.gmra.mxu0 %v5075
    %v5077 = vpop.f32.mrf.mxu0
    %v5078 = vadd.f32 %v4990, %v5077
    %v5079 = vpop.f32.mrf.mxu0
    %v5080 = vadd.f32 %v4992, %v5079
    %5081 = vdwg.mxu0
    %v5082 = vadd.f32 %v824, %v5078
    %v5083 = vadd.f32 %v1536, %v5080
    %v5084 = vxor.u32 %v5082, 2147483648
    %v5085 = vmul.f32 %v5084, 1.442695
    %v5086 = vpow.pop %v5085
    %v5087 = vadd.f32 %v5086, 1.0
    %v5088 = vrcp.pop %v5087
    %v5089 = vmul.f32 1.0, %v5088
    %v5090 = vtanh.pop %v5082
    %v5091 = vmul.f32 %v5089, %v4392
    %5093 = vrot.lane.b32.xlu0 %v5090, 64
    %v5094 = vpop.permute.xlu0 %5093
    %v5096 = vmul.f32 %v5089, %v5094
    %5098 = vrot.lane.b32.xlu0 %v5096, 32
    %v5099 = vpop.permute.xlu0 %5098
    %v5101 = vadd.f32 %v5091, %v5099
    %v5102 = vtanh.pop %v5101
    %5104 = vrot.lane.b32.xlu0 %v5102, 64
    %v5105 = vpop.permute.xlu0 %5104
    %v5107 = vmul.f32 %v5089, %v5105
    %v5108 = vxor.u32 %v5083, 2147483648
    %v5109 = vmul.f32 %v5108, 1.442695
    %v5110 = vpow.pop %v5109
    %v5111 = vadd.f32 %v5110, 1.0
    %v5112 = vrcp.pop %v5111
    %v5113 = vmul.f32 1.0, %v5112
    %v5114 = vtanh.pop %v5083
    %v5115 = vmul.f32 %v5113, %v4416
    %5117 = vrot.lane.b32.xlu0 %v5114, 64
    %v5118 = vpop.permute.xlu0 %5117
    %v5120 = vmul.f32 %v5113, %v5118
    %5122 = vrot.lane.b32.xlu0 %v5120, 32
    %v5123 = vpop.permute.xlu0 %5122
    %v5125 = vadd.f32 %v5115, %v5123
    %v5126 = vtanh.pop %v5125
    %5128 = vrot.lane.b32.xlu0 %v5126, 64
    %v5129 = vpop.permute.xlu0 %5128
    %v5131 = vmul.f32 %v5113, %v5129
    %5133 = vrot.lane.b32.xlu0 %v5107, 32
    %v5134 = vpop.permute.xlu0 %5133
    %5137 = vrot.lane.b32.xlu0 %v5131, 64
    %v5138 = vpop.permute.xlu0 %5137
    %v5140 = vsel %vm878, %v5134, %v5138
    %v5142 = vsel %vm880, %v5140, 0
    %5144 = vmatprep.subr.mxu0 0.0
    %5145 = vmatpush1.msra.mxu0 0.0
    %5146 = vmatprep.subr.mxu0 0.0
    %5147 = vmatpush1.msra.mxu0 0.0
    %5148 = vmatprep.subr.mxu0 0.0
    %5149 = vmatpush1.msra.mxu0 0.0
    %5150 = vmatprep.subr.mxu0 0.0
    %5151 = vmatpush1.msra.mxu0 0.0
    %5152 = vmatprep.subr.mxu0 0.0
    %5153 = vmatpush1.msra.mxu0 0.0
    %5154 = vmatprep.subr.mxu0 0.0
    %5155 = vmatpush1.msra.mxu0 0.0
    %5156 = vmatprep.subr.mxu0 0.0
    %5157 = vmatpush1.msra.mxu0 0.0
    %5158 = vmatprep.subr.mxu0 0.0
    %5159 = vmatpush1.msra.mxu0 0.0
    %v5160 = vand.u32 %v848, 4294901760
    %5161 = vmatprep.subr.mxu0 %v5160
    %v5162 = vand.u32 %v847, 4294901760
    %5163 = vmatpush1.msra.mxu0 %v5162
    %v5164 = vand.u32 %v846, 4294901760
    %5165 = vmatprep.subr.mxu0 %v5164
    %v5166 = vand.u32 %v845, 4294901760
    %5167 = vmatpush1.msra.mxu0 %v5166
    %v5168 = vand.u32 %v844, 4294901760
    %5169 = vmatprep.subr.mxu0 %v5168
    %v5170 = vand.u32 %v843, 4294901760
    %5171 = vmatpush1.msra.mxu0 %v5170
    %v5172 = vand.u32 %v842, 4294901760
    %5173 = vmatprep.subr.mxu0 %v5172
    %v5174 = vand.u32 %v841, 4294901760
    %5175 = vmatpush1.msra.mxu0 %v5174
    %v5176 = vand.u32 %v840, 4294901760
    %5177 = vmatprep.subr.mxu0 %v5176
    %v5178 = vand.u32 %v839, 4294901760
    %5179 = vmatpush1.msra.mxu0 %v5178
    %v5180 = vand.u32 %v838, 4294901760
    %5181 = vmatprep.subr.mxu0 %v5180
    %v5182 = vand.u32 %v837, 4294901760
    %5183 = vmatpush1.msra.mxu0 %v5182
    %v5184 = vand.u32 %v836, 4294901760
    %5185 = vmatprep.subr.mxu0 %v5184
    %v5186 = vand.u32 %v835, 4294901760
    %5187 = vmatpush1.msra.mxu0 %v5186
    %v5188 = vand.u32 %v834, 4294901760
    %5189 = vmatprep.subr.mxu0 %v5188
    %v5190 = vand.u32 %v833, 4294901760
    %5191 = vmatpush1.msra.mxu0 %v5190
    %5192 = vmatprep.subr.mxu0 0.0
    %5193 = vmatpush2.msra.mxu0 0.0
    %5194 = vmatprep.subr.mxu0 0.0
    %5195 = vmatpush2.msra.mxu0 0.0
    %5196 = vmatprep.subr.mxu0 0.0
    %5197 = vmatpush2.msra.mxu0 0.0
    %5198 = vmatprep.subr.mxu0 0.0
    %5199 = vmatpush2.msra.mxu0 0.0
    %5200 = vmatprep.subr.mxu0 0.0
    %5201 = vmatpush2.msra.mxu0 0.0
    %5202 = vmatprep.subr.mxu0 0.0
    %5203 = vmatpush2.msra.mxu0 0.0
    %5204 = vmatprep.subr.mxu0 0.0
    %5205 = vmatpush2.msra.mxu0 0.0
    %5206 = vmatprep.subr.mxu0 0.0
    %5207 = vmatpush2.msra.mxu0 0.0
    %5208 = vmatprep.subr.mxu0 0.0
    %5209 = vmatpush2.msra.mxu0 0.0
    %5210 = vmatprep.subr.mxu0 0.0
    %5211 = vmatpush2.msra.mxu0 0.0
    %5212 = vmatprep.subr.mxu0 0.0
    %5213 = vmatpush2.msra.mxu0 0.0
    %5214 = vmatprep.subr.mxu0 0.0
    %5215 = vmatpush2.msra.mxu0 0.0
    %5216 = vmatprep.subr.mxu0 0.0
    %5217 = vmatpush2.msra.mxu0 0.0
    %5218 = vmatprep.subr.mxu0 0.0
    %5219 = vmatpush2.msra.mxu0 0.0
    %5220 = vmatprep.subr.mxu0 0.0
    %5221 = vmatpush2.msra.mxu0 0.0
    %5222 = vmatprep.subr.mxu0 0.0
    %5223 = vmatpush2.msra.mxu0 0.0
    %5224 = vmatprep.mubr.f32.mxu0 0.0
    %v5225 = vand.u32 %v5142, 4294901760
    %v5226 = vsub.f32 %v5142, %v5225
    %v5227 = vand.u32 %v5226, 4294901760
    %v5228 = vsub.f32 %v5226, %v5227
    %v5229 = vand.u32 %v5228, 4294901760
    %5230 = vmatmul.mubr.f32.gmra.mxu0 %v5229
    %v5231 = vpop.f32.mrf.mxu0
    %v5232 = vadd.f32 0.0, %v5231
    %v5233 = vpop.f32.mrf.mxu0
    %v5234 = vadd.f32 0.0, %v5233
    %5235 = vdwg.mxu0
    %5236 = vmatprep.subr.mxu0 0.0
    %5237 = vmatpush1.msra.mxu0 0.0
    %5238 = vmatprep.subr.mxu0 0.0
    %5239 = vmatpush1.msra.mxu0 0.0
    %5240 = vmatprep.subr.mxu0 0.0
    %5241 = vmatpush1.msra.mxu0 0.0
    %5242 = vmatprep.subr.mxu0 0.0
    %5243 = vmatpush1.msra.mxu0 0.0
    %5244 = vmatprep.subr.mxu0 0.0
    %5245 = vmatpush1.msra.mxu0 0.0
    %5246 = vmatprep.subr.mxu0 0.0
    %5247 = vmatpush1.msra.mxu0 0.0
    %5248 = vmatprep.subr.mxu0 0.0
    %5249 = vmatpush1.msra.mxu0 0.0
    %5250 = vmatprep.subr.mxu0 0.0
    %5251 = vmatpush1.msra.mxu0 0.0
    %v5252 = vand.u32 %v848, 4294901760
    %v5253 = vsub.f32 %v848, %v5252
    %v5254 = vand.u32 %v5253, 4294901760
    %v5255 = vsub.f32 %v5253, %v5254
    %v5256 = vand.u32 %v5255, 4294901760
    %5257 = vmatprep.subr.mxu0 %v5256
    %v5258 = vand.u32 %v847, 4294901760
    %v5259 = vsub.f32 %v847, %v5258
    %v5260 = vand.u32 %v5259, 4294901760
    %v5261 = vsub.f32 %v5259, %v5260
    %v5262 = vand.u32 %v5261, 4294901760
    %5263 = vmatpush1.msra.mxu0 %v5262
    %v5264 = vand.u32 %v846, 4294901760
    %v5265 = vsub.f32 %v846, %v5264
    %v5266 = vand.u32 %v5265, 4294901760
    %v5267 = vsub.f32 %v5265, %v5266
    %v5268 = vand.u32 %v5267, 4294901760
    %5269 = vmatprep.subr.mxu0 %v5268
    %v5270 = vand.u32 %v845, 4294901760
    %v5271 = vsub.f32 %v845, %v5270
    %v5272 = vand.u32 %v5271, 4294901760
    %v5273 = vsub.f32 %v5271, %v5272
    %v5274 = vand.u32 %v5273, 4294901760
    %5275 = vmatpush1.msra.mxu0 %v5274
    %v5276 = vand.u32 %v844, 4294901760
    %v5277 = vsub.f32 %v844, %v5276
    %v5278 = vand.u32 %v5277, 4294901760
    %v5279 = vsub.f32 %v5277, %v5278
    %v5280 = vand.u32 %v5279, 4294901760
    %5281 = vmatprep.subr.mxu0 %v5280
    %v5282 = vand.u32 %v843, 4294901760
    %v5283 = vsub.f32 %v843, %v5282
    %v5284 = vand.u32 %v5283, 4294901760
    %v5285 = vsub.f32 %v5283, %v5284
    %v5286 = vand.u32 %v5285, 4294901760
    %5287 = vmatpush1.msra.mxu0 %v5286
    %v5288 = vand.u32 %v842, 4294901760
    %v5289 = vsub.f32 %v842, %v5288
    %v5290 = vand.u32 %v5289, 4294901760
    %v5291 = vsub.f32 %v5289, %v5290
    %v5292 = vand.u32 %v5291, 4294901760
    %5293 = vmatprep.subr.mxu0 %v5292
    %v5294 = vand.u32 %v841, 4294901760
    %v5295 = vsub.f32 %v841, %v5294
    %v5296 = vand.u32 %v5295, 4294901760
    %v5297 = vsub.f32 %v5295, %v5296
    %v5298 = vand.u32 %v5297, 4294901760
    %5299 = vmatpush1.msra.mxu0 %v5298
    %v5300 = vand.u32 %v840, 4294901760
    %v5301 = vsub.f32 %v840, %v5300
    %v5302 = vand.u32 %v5301, 4294901760
    %v5303 = vsub.f32 %v5301, %v5302
    %v5304 = vand.u32 %v5303, 4294901760
    %5305 = vmatprep.subr.mxu0 %v5304
    %v5306 = vand.u32 %v839, 4294901760
    %v5307 = vsub.f32 %v839, %v5306
    %v5308 = vand.u32 %v5307, 4294901760
    %v5309 = vsub.f32 %v5307, %v5308
    %v5310 = vand.u32 %v5309, 4294901760
    %5311 = vmatpush1.msra.mxu0 %v5310
    %v5312 = vand.u32 %v838, 4294901760
    %v5313 = vsub.f32 %v838, %v5312
    %v5314 = vand.u32 %v5313, 4294901760
    %v5315 = vsub.f32 %v5313, %v5314
    %v5316 = vand.u32 %v5315, 4294901760
    %5317 = vmatprep.subr.mxu0 %v5316
    %v5318 = vand.u32 %v837, 4294901760
    %v5319 = vsub.f32 %v837, %v5318
    %v5320 = vand.u32 %v5319, 4294901760
    %v5321 = vsub.f32 %v5319, %v5320
    %v5322 = vand.u32 %v5321, 4294901760
    %5323 = vmatpush1.msra.mxu0 %v5322
    %v5324 = vand.u32 %v836, 4294901760
    %v5325 = vsub.f32 %v836, %v5324
    %v5326 = vand.u32 %v5325, 4294901760
    %v5327 = vsub.f32 %v5325, %v5326
    %v5328 = vand.u32 %v5327, 4294901760
    %5329 = vmatprep.subr.mxu0 %v5328
    %v5330 = vand.u32 %v835, 4294901760
    %v5331 = vsub.f32 %v835, %v5330
    %v5332 = vand.u32 %v5331, 4294901760
    %v5333 = vsub.f32 %v5331, %v5332
    %v5334 = vand.u32 %v5333, 4294901760
    %5335 = vmatpush1.msra.mxu0 %v5334
    %v5336 = vand.u32 %v834, 4294901760
    %v5337 = vsub.f32 %v834, %v5336
    %v5338 = vand.u32 %v5337, 4294901760
    %v5339 = vsub.f32 %v5337, %v5338
    %v5340 = vand.u32 %v5339, 4294901760
    %5341 = vmatprep.subr.mxu0 %v5340
    %v5342 = vand.u32 %v833, 4294901760
    %v5343 = vsub.f32 %v833, %v5342
    %v5344 = vand.u32 %v5343, 4294901760
    %v5345 = vsub.f32 %v5343, %v5344
    %v5346 = vand.u32 %v5345, 4294901760
    %5347 = vmatpush1.msra.mxu0 %v5346
    %5348 = vmatprep.subr.mxu0 0.0
    %5349 = vmatpush2.msra.mxu0 0.0
    %5350 = vmatprep.subr.mxu0 0.0
    %5351 = vmatpush2.msra.mxu0 0.0
    %5352 = vmatprep.subr.mxu0 0.0
    %5353 = vmatpush2.msra.mxu0 0.0
    %5354 = vmatprep.subr.mxu0 0.0
    %5355 = vmatpush2.msra.mxu0 0.0
    %5356 = vmatprep.subr.mxu0 0.0
    %5357 = vmatpush2.msra.mxu0 0.0
    %5358 = vmatprep.subr.mxu0 0.0
    %5359 = vmatpush2.msra.mxu0 0.0
    %5360 = vmatprep.subr.mxu0 0.0
    %5361 = vmatpush2.msra.mxu0 0.0
    %5362 = vmatprep.subr.mxu0 0.0
    %5363 = vmatpush2.msra.mxu0 0.0
    %5364 = vmatprep.subr.mxu0 0.0
    %5365 = vmatpush2.msra.mxu0 0.0
    %5366 = vmatprep.subr.mxu0 0.0
    %5367 = vmatpush2.msra.mxu0 0.0
    %5368 = vmatprep.subr.mxu0 0.0
    %5369 = vmatpush2.msra.mxu0 0.0
    %5370 = vmatprep.subr.mxu0 0.0
    %5371 = vmatpush2.msra.mxu0 0.0
    %5372 = vmatprep.subr.mxu0 0.0
    %5373 = vmatpush2.msra.mxu0 0.0
    %5374 = vmatprep.subr.mxu0 0.0
    %5375 = vmatpush2.msra.mxu0 0.0
    %5376 = vmatprep.subr.mxu0 0.0
    %5377 = vmatpush2.msra.mxu0 0.0
    %5378 = vmatprep.subr.mxu0 0.0
    %5379 = vmatpush2.msra.mxu0 0.0
    %5380 = vmatprep.mubr.f32.mxu0 0.0
    %v5381 = vand.u32 %v5142, 4294901760
    %5382 = vmatmul.mubr.f32.gmra.mxu0 %v5381
    %v5383 = vpop.f32.mrf.mxu0
    %v5384 = vadd.f32 %v5232, %v5383
    %v5385 = vpop.f32.mrf.mxu0
    %v5386 = vadd.f32 %v5234, %v5385
    %5387 = vdwg.mxu0
    %5388 = vmatprep.subr.mxu0 0.0
    %5389 = vmatpush1.msra.mxu0 0.0
    %5390 = vmatprep.subr.mxu0 0.0
    %5391 = vmatpush1.msra.mxu0 0.0
    %5392 = vmatprep.subr.mxu0 0.0
    %5393 = vmatpush1.msra.mxu0 0.0
    %5394 = vmatprep.subr.mxu0 0.0
    %5395 = vmatpush1.msra.mxu0 0.0
    %5396 = vmatprep.subr.mxu0 0.0
    %5397 = vmatpush1.msra.mxu0 0.0
    %5398 = vmatprep.subr.mxu0 0.0
    %5399 = vmatpush1.msra.mxu0 0.0
    %5400 = vmatprep.subr.mxu0 0.0
    %5401 = vmatpush1.msra.mxu0 0.0
    %5402 = vmatprep.subr.mxu0 0.0
    %5403 = vmatpush1.msra.mxu0 0.0
    %v5404 = vand.u32 %v848, 4294901760
    %v5405 = vsub.f32 %v848, %v5404
    %5406 = vmatprep.subr.mxu0 %v5405
    %v5407 = vand.u32 %v847, 4294901760
    %v5408 = vsub.f32 %v847, %v5407
    %5409 = vmatpush1.msra.mxu0 %v5408
    %v5410 = vand.u32 %v846, 4294901760
    %v5411 = vsub.f32 %v846, %v5410
    %5412 = vmatprep.subr.mxu0 %v5411
    %v5413 = vand.u32 %v845, 4294901760
    %v5414 = vsub.f32 %v845, %v5413
    %5415 = vmatpush1.msra.mxu0 %v5414
    %v5416 = vand.u32 %v844, 4294901760
    %v5417 = vsub.f32 %v844, %v5416
    %5418 = vmatprep.subr.mxu0 %v5417
    %v5419 = vand.u32 %v843, 4294901760
    %v5420 = vsub.f32 %v843, %v5419
    %5421 = vmatpush1.msra.mxu0 %v5420
    %v5422 = vand.u32 %v842, 4294901760
    %v5423 = vsub.f32 %v842, %v5422
    %5424 = vmatprep.subr.mxu0 %v5423
    %v5425 = vand.u32 %v841, 4294901760
    %v5426 = vsub.f32 %v841, %v5425
    %5427 = vmatpush1.msra.mxu0 %v5426
    %v5428 = vand.u32 %v840, 4294901760
    %v5429 = vsub.f32 %v840, %v5428
    %5430 = vmatprep.subr.mxu0 %v5429
    %v5431 = vand.u32 %v839, 4294901760
    %v5432 = vsub.f32 %v839, %v5431
    %5433 = vmatpush1.msra.mxu0 %v5432
    %v5434 = vand.u32 %v838, 4294901760
    %v5435 = vsub.f32 %v838, %v5434
    %5436 = vmatprep.subr.mxu0 %v5435
    %v5437 = vand.u32 %v837, 4294901760
    %v5438 = vsub.f32 %v837, %v5437
    %5439 = vmatpush1.msra.mxu0 %v5438
    %v5440 = vand.u32 %v836, 4294901760
    %v5441 = vsub.f32 %v836, %v5440
    %5442 = vmatprep.subr.mxu0 %v5441
    %v5443 = vand.u32 %v835, 4294901760
    %v5444 = vsub.f32 %v835, %v5443
    %5445 = vmatpush1.msra.mxu0 %v5444
    %v5446 = vand.u32 %v834, 4294901760
    %v5447 = vsub.f32 %v834, %v5446
    %5448 = vmatprep.subr.mxu0 %v5447
    %v5449 = vand.u32 %v833, 4294901760
    %v5450 = vsub.f32 %v833, %v5449
    %5451 = vmatpush1.msra.mxu0 %v5450
    %5452 = vmatprep.subr.mxu0 0.0
    %5453 = vmatpush2.msra.mxu0 0.0
    %5454 = vmatprep.subr.mxu0 0.0
    %5455 = vmatpush2.msra.mxu0 0.0
    %5456 = vmatprep.subr.mxu0 0.0
    %5457 = vmatpush2.msra.mxu0 0.0
    %5458 = vmatprep.subr.mxu0 0.0
    %5459 = vmatpush2.msra.mxu0 0.0
    %5460 = vmatprep.subr.mxu0 0.0
    %5461 = vmatpush2.msra.mxu0 0.0
    %5462 = vmatprep.subr.mxu0 0.0
    %5463 = vmatpush2.msra.mxu0 0.0
    %5464 = vmatprep.subr.mxu0 0.0
    %5465 = vmatpush2.msra.mxu0 0.0
    %5466 = vmatprep.subr.mxu0 0.0
    %5467 = vmatpush2.msra.mxu0 0.0
    %5468 = vmatprep.subr.mxu0 0.0
    %5469 = vmatpush2.msra.mxu0 0.0
    %5470 = vmatprep.subr.mxu0 0.0
    %5471 = vmatpush2.msra.mxu0 0.0
    %5472 = vmatprep.subr.mxu0 0.0
    %5473 = vmatpush2.msra.mxu0 0.0
    %5474 = vmatprep.subr.mxu0 0.0
    %5475 = vmatpush2.msra.mxu0 0.0
    %5476 = vmatprep.subr.mxu0 0.0
    %5477 = vmatpush2.msra.mxu0 0.0
    %5478 = vmatprep.subr.mxu0 0.0
    %5479 = vmatpush2.msra.mxu0 0.0
    %5480 = vmatprep.subr.mxu0 0.0
    %5481 = vmatpush2.msra.mxu0 0.0
    %5482 = vmatprep.subr.mxu0 0.0
    %5483 = vmatpush2.msra.mxu0 0.0
    %5484 = vmatprep.mubr.f32.mxu0 0.0
    %v5485 = vand.u32 %v5142, 4294901760
    %v5486 = vsub.f32 %v5142, %v5485
    %5487 = vmatmul.mubr.f32.gmra.mxu0 %v5486
    %v5488 = vpop.f32.mrf.mxu0
    %v5489 = vadd.f32 %v5384, %v5488
    %v5490 = vpop.f32.mrf.mxu0
    %v5491 = vadd.f32 %v5386, %v5490
    %5492 = vdwg.mxu0
    %5493 = vmatprep.subr.mxu0 0.0
    %5494 = vmatpush1.msra.mxu0 0.0
    %5495 = vmatprep.subr.mxu0 0.0
    %5496 = vmatpush1.msra.mxu0 0.0
    %5497 = vmatprep.subr.mxu0 0.0
    %5498 = vmatpush1.msra.mxu0 0.0
    %5499 = vmatprep.subr.mxu0 0.0
    %5500 = vmatpush1.msra.mxu0 0.0
    %5501 = vmatprep.subr.mxu0 0.0
    %5502 = vmatpush1.msra.mxu0 0.0
    %5503 = vmatprep.subr.mxu0 0.0
    %5504 = vmatpush1.msra.mxu0 0.0
    %5505 = vmatprep.subr.mxu0 0.0
    %5506 = vmatpush1.msra.mxu0 0.0
    %5507 = vmatprep.subr.mxu0 0.0
    %5508 = vmatpush1.msra.mxu0 0.0
    %v5509 = vand.u32 %v848, 4294901760
    %5510 = vmatprep.subr.mxu0 %v5509
    %v5511 = vand.u32 %v847, 4294901760
    %5512 = vmatpush1.msra.mxu0 %v5511
    %v5513 = vand.u32 %v846, 4294901760
    %5514 = vmatprep.subr.mxu0 %v5513
    %v5515 = vand.u32 %v845, 4294901760
    %5516 = vmatpush1.msra.mxu0 %v5515
    %v5517 = vand.u32 %v844, 4294901760
    %5518 = vmatprep.subr.mxu0 %v5517
    %v5519 = vand.u32 %v843, 4294901760
    %5520 = vmatpush1.msra.mxu0 %v5519
    %v5521 = vand.u32 %v842, 4294901760
    %5522 = vmatprep.subr.mxu0 %v5521
    %v5523 = vand.u32 %v841, 4294901760
    %5524 = vmatpush1.msra.mxu0 %v5523
    %v5525 = vand.u32 %v840, 4294901760
    %5526 = vmatprep.subr.mxu0 %v5525
    %v5527 = vand.u32 %v839, 4294901760
    %5528 = vmatpush1.msra.mxu0 %v5527
    %v5529 = vand.u32 %v838, 4294901760
    %5530 = vmatprep.subr.mxu0 %v5529
    %v5531 = vand.u32 %v837, 4294901760
    %5532 = vmatpush1.msra.mxu0 %v5531
    %v5533 = vand.u32 %v836, 4294901760
    %5534 = vmatprep.subr.mxu0 %v5533
    %v5535 = vand.u32 %v835, 4294901760
    %5536 = vmatpush1.msra.mxu0 %v5535
    %v5537 = vand.u32 %v834, 4294901760
    %5538 = vmatprep.subr.mxu0 %v5537
    %v5539 = vand.u32 %v833, 4294901760
    %5540 = vmatpush1.msra.mxu0 %v5539
    %5541 = vmatprep.subr.mxu0 0.0
    %5542 = vmatpush2.msra.mxu0 0.0
    %5543 = vmatprep.subr.mxu0 0.0
    %5544 = vmatpush2.msra.mxu0 0.0
    %5545 = vmatprep.subr.mxu0 0.0
    %5546 = vmatpush2.msra.mxu0 0.0
    %5547 = vmatprep.subr.mxu0 0.0
    %5548 = vmatpush2.msra.mxu0 0.0
    %5549 = vmatprep.subr.mxu0 0.0
    %5550 = vmatpush2.msra.mxu0 0.0
    %5551 = vmatprep.subr.mxu0 0.0
    %5552 = vmatpush2.msra.mxu0 0.0
    %5553 = vmatprep.subr.mxu0 0.0
    %5554 = vmatpush2.msra.mxu0 0.0
    %5555 = vmatprep.subr.mxu0 0.0
    %5556 = vmatpush2.msra.mxu0 0.0
    %5557 = vmatprep.subr.mxu0 0.0
    %5558 = vmatpush2.msra.mxu0 0.0
    %5559 = vmatprep.subr.mxu0 0.0
    %5560 = vmatpush2.msra.mxu0 0.0
    %5561 = vmatprep.subr.mxu0 0.0
    %5562 = vmatpush2.msra.mxu0 0.0
    %5563 = vmatprep.subr.mxu0 0.0
    %5564 = vmatpush2.msra.mxu0 0.0
    %5565 = vmatprep.subr.mxu0 0.0
    %5566 = vmatpush2.msra.mxu0 0.0
    %5567 = vmatprep.subr.mxu0 0.0
    %5568 = vmatpush2.msra.mxu0 0.0
    %5569 = vmatprep.subr.mxu0 0.0
    %5570 = vmatpush2.msra.mxu0 0.0
    %5571 = vmatprep.subr.mxu0 0.0
    %5572 = vmatpush2.msra.mxu0 0.0
    %5573 = vmatprep.mubr.f32.mxu0 0.0
    %v5574 = vand.u32 %v5142, 4294901760
    %v5575 = vsub.f32 %v5142, %v5574
    %v5576 = vand.u32 %v5575, 4294901760
    %5577 = vmatmul.mubr.f32.gmra.mxu0 %v5576
    %v5578 = vpop.f32.mrf.mxu0
    %v5579 = vadd.f32 %v5489, %v5578
    %v5580 = vpop.f32.mrf.mxu0
    %v5581 = vadd.f32 %v5491, %v5580
    %5582 = vdwg.mxu0
    %5583 = vmatprep.subr.mxu0 0.0
    %5584 = vmatpush1.msra.mxu0 0.0
    %5585 = vmatprep.subr.mxu0 0.0
    %5586 = vmatpush1.msra.mxu0 0.0
    %5587 = vmatprep.subr.mxu0 0.0
    %5588 = vmatpush1.msra.mxu0 0.0
    %5589 = vmatprep.subr.mxu0 0.0
    %5590 = vmatpush1.msra.mxu0 0.0
    %5591 = vmatprep.subr.mxu0 0.0
    %5592 = vmatpush1.msra.mxu0 0.0
    %5593 = vmatprep.subr.mxu0 0.0
    %5594 = vmatpush1.msra.mxu0 0.0
    %5595 = vmatprep.subr.mxu0 0.0
    %5596 = vmatpush1.msra.mxu0 0.0
    %5597 = vmatprep.subr.mxu0 0.0
    %5598 = vmatpush1.msra.mxu0 0.0
    %v5599 = vand.u32 %v848, 4294901760
    %v5600 = vsub.f32 %v848, %v5599
    %v5601 = vand.u32 %v5600, 4294901760
    %5602 = vmatprep.subr.mxu0 %v5601
    %v5603 = vand.u32 %v847, 4294901760
    %v5604 = vsub.f32 %v847, %v5603
    %v5605 = vand.u32 %v5604, 4294901760
    %5606 = vmatpush1.msra.mxu0 %v5605
    %v5607 = vand.u32 %v846, 4294901760
    %v5608 = vsub.f32 %v846, %v5607
    %v5609 = vand.u32 %v5608, 4294901760
    %5610 = vmatprep.subr.mxu0 %v5609
    %v5611 = vand.u32 %v845, 4294901760
    %v5612 = vsub.f32 %v845, %v5611
    %v5613 = vand.u32 %v5612, 4294901760
    %5614 = vmatpush1.msra.mxu0 %v5613
    %v5615 = vand.u32 %v844, 4294901760
    %v5616 = vsub.f32 %v844, %v5615
    %v5617 = vand.u32 %v5616, 4294901760
    %5618 = vmatprep.subr.mxu0 %v5617
    %v5619 = vand.u32 %v843, 4294901760
    %v5620 = vsub.f32 %v843, %v5619
    %v5621 = vand.u32 %v5620, 4294901760
    %5622 = vmatpush1.msra.mxu0 %v5621
    %v5623 = vand.u32 %v842, 4294901760
    %v5624 = vsub.f32 %v842, %v5623
    %v5625 = vand.u32 %v5624, 4294901760
    %5626 = vmatprep.subr.mxu0 %v5625
    %v5627 = vand.u32 %v841, 4294901760
    %v5628 = vsub.f32 %v841, %v5627
    %v5629 = vand.u32 %v5628, 4294901760
    %5630 = vmatpush1.msra.mxu0 %v5629
    %v5631 = vand.u32 %v840, 4294901760
    %v5632 = vsub.f32 %v840, %v5631
    %v5633 = vand.u32 %v5632, 4294901760
    %5634 = vmatprep.subr.mxu0 %v5633
    %v5635 = vand.u32 %v839, 4294901760
    %v5636 = vsub.f32 %v839, %v5635
    %v5637 = vand.u32 %v5636, 4294901760
    %5638 = vmatpush1.msra.mxu0 %v5637
    %v5639 = vand.u32 %v838, 4294901760
    %v5640 = vsub.f32 %v838, %v5639
    %v5641 = vand.u32 %v5640, 4294901760
    %5642 = vmatprep.subr.mxu0 %v5641
    %v5643 = vand.u32 %v837, 4294901760
    %v5644 = vsub.f32 %v837, %v5643
    %v5645 = vand.u32 %v5644, 4294901760
    %5646 = vmatpush1.msra.mxu0 %v5645
    %v5647 = vand.u32 %v836, 4294901760
    %v5648 = vsub.f32 %v836, %v5647
    %v5649 = vand.u32 %v5648, 4294901760
    %5650 = vmatprep.subr.mxu0 %v5649
    %v5651 = vand.u32 %v835, 4294901760
    %v5652 = vsub.f32 %v835, %v5651
    %v5653 = vand.u32 %v5652, 4294901760
    %5654 = vmatpush1.msra.mxu0 %v5653
    %v5655 = vand.u32 %v834, 4294901760
    %v5656 = vsub.f32 %v834, %v5655
    %v5657 = vand.u32 %v5656, 4294901760
    %5658 = vmatprep.subr.mxu0 %v5657
    %v5659 = vand.u32 %v833, 4294901760
    %v5660 = vsub.f32 %v833, %v5659
    %v5661 = vand.u32 %v5660, 4294901760
    %5662 = vmatpush1.msra.mxu0 %v5661
    %5663 = vmatprep.subr.mxu0 0.0
    %5664 = vmatpush2.msra.mxu0 0.0
    %5665 = vmatprep.subr.mxu0 0.0
    %5666 = vmatpush2.msra.mxu0 0.0
    %5667 = vmatprep.subr.mxu0 0.0
    %5668 = vmatpush2.msra.mxu0 0.0
    %5669 = vmatprep.subr.mxu0 0.0
    %5670 = vmatpush2.msra.mxu0 0.0
    %5671 = vmatprep.subr.mxu0 0.0
    %5672 = vmatpush2.msra.mxu0 0.0
    %5673 = vmatprep.subr.mxu0 0.0
    %5674 = vmatpush2.msra.mxu0 0.0
    %5675 = vmatprep.subr.mxu0 0.0
    %5676 = vmatpush2.msra.mxu0 0.0
    %5677 = vmatprep.subr.mxu0 0.0
    %5678 = vmatpush2.msra.mxu0 0.0
    %5679 = vmatprep.subr.mxu0 0.0
    %5680 = vmatpush2.msra.mxu0 0.0
    %5681 = vmatprep.subr.mxu0 0.0
    %5682 = vmatpush2.msra.mxu0 0.0
    %5683 = vmatprep.subr.mxu0 0.0
    %5684 = vmatpush2.msra.mxu0 0.0
    %5685 = vmatprep.subr.mxu0 0.0
    %5686 = vmatpush2.msra.mxu0 0.0
    %5687 = vmatprep.subr.mxu0 0.0
    %5688 = vmatpush2.msra.mxu0 0.0
    %5689 = vmatprep.subr.mxu0 0.0
    %5690 = vmatpush2.msra.mxu0 0.0
    %5691 = vmatprep.subr.mxu0 0.0
    %5692 = vmatpush2.msra.mxu0 0.0
    %5693 = vmatprep.subr.mxu0 0.0
    %5694 = vmatpush2.msra.mxu0 0.0
    %5695 = vmatprep.mubr.f32.mxu0 0.0
    %v5696 = vand.u32 %v5142, 4294901760
    %5697 = vmatmul.mubr.f32.gmra.mxu0 %v5696
    %v5698 = vpop.f32.mrf.mxu0
    %v5699 = vadd.f32 %v5579, %v5698
    %v5700 = vpop.f32.mrf.mxu0
    %v5701 = vadd.f32 %v5581, %v5700
    %5702 = vdwg.mxu0
    %5703 = vmatprep.subr.mxu0 0.0
    %5704 = vmatpush1.msra.mxu0 0.0
    %5705 = vmatprep.subr.mxu0 0.0
    %5706 = vmatpush1.msra.mxu0 0.0
    %5707 = vmatprep.subr.mxu0 0.0
    %5708 = vmatpush1.msra.mxu0 0.0
    %5709 = vmatprep.subr.mxu0 0.0
    %5710 = vmatpush1.msra.mxu0 0.0
    %5711 = vmatprep.subr.mxu0 0.0
    %5712 = vmatpush1.msra.mxu0 0.0
    %5713 = vmatprep.subr.mxu0 0.0
    %5714 = vmatpush1.msra.mxu0 0.0
    %5715 = vmatprep.subr.mxu0 0.0
    %5716 = vmatpush1.msra.mxu0 0.0
    %5717 = vmatprep.subr.mxu0 0.0
    %5718 = vmatpush1.msra.mxu0 0.0
    %v5719 = vand.u32 %v848, 4294901760
    %5720 = vmatprep.subr.mxu0 %v5719
    %v5721 = vand.u32 %v847, 4294901760
    %5722 = vmatpush1.msra.mxu0 %v5721
    %v5723 = vand.u32 %v846, 4294901760
    %5724 = vmatprep.subr.mxu0 %v5723
    %v5725 = vand.u32 %v845, 4294901760
    %5726 = vmatpush1.msra.mxu0 %v5725
    %v5727 = vand.u32 %v844, 4294901760
    %5728 = vmatprep.subr.mxu0 %v5727
    %v5729 = vand.u32 %v843, 4294901760
    %5730 = vmatpush1.msra.mxu0 %v5729
    %v5731 = vand.u32 %v842, 4294901760
    %5732 = vmatprep.subr.mxu0 %v5731
    %v5733 = vand.u32 %v841, 4294901760
    %5734 = vmatpush1.msra.mxu0 %v5733
    %v5735 = vand.u32 %v840, 4294901760
    %5736 = vmatprep.subr.mxu0 %v5735
    %v5737 = vand.u32 %v839, 4294901760
    %5738 = vmatpush1.msra.mxu0 %v5737
    %v5739 = vand.u32 %v838, 4294901760
    %5740 = vmatprep.subr.mxu0 %v5739
    %v5741 = vand.u32 %v837, 4294901760
    %5742 = vmatpush1.msra.mxu0 %v5741
    %v5743 = vand.u32 %v836, 4294901760
    %5744 = vmatprep.subr.mxu0 %v5743
    %v5745 = vand.u32 %v835, 4294901760
    %5746 = vmatpush1.msra.mxu0 %v5745
    %v5747 = vand.u32 %v834, 4294901760
    %5748 = vmatprep.subr.mxu0 %v5747
    %v5749 = vand.u32 %v833, 4294901760
    %5750 = vmatpush1.msra.mxu0 %v5749
    %5751 = vmatprep.subr.mxu0 0.0
    %5752 = vmatpush2.msra.mxu0 0.0
    %5753 = vmatprep.subr.mxu0 0.0
    %5754 = vmatpush2.msra.mxu0 0.0
    %5755 = vmatprep.subr.mxu0 0.0
    %5756 = vmatpush2.msra.mxu0 0.0
    %5757 = vmatprep.subr.mxu0 0.0
    %5758 = vmatpush2.msra.mxu0 0.0
    %5759 = vmatprep.subr.mxu0 0.0
    %5760 = vmatpush2.msra.mxu0 0.0
    %5761 = vmatprep.subr.mxu0 0.0
    %5762 = vmatpush2.msra.mxu0 0.0
    %5763 = vmatprep.subr.mxu0 0.0
    %5764 = vmatpush2.msra.mxu0 0.0
    %5765 = vmatprep.subr.mxu0 0.0
    %5766 = vmatpush2.msra.mxu0 0.0
    %5767 = vmatprep.subr.mxu0 0.0
    %5768 = vmatpush2.msra.mxu0 0.0
    %5769 = vmatprep.subr.mxu0 0.0
    %5770 = vmatpush2.msra.mxu0 0.0
    %5771 = vmatprep.subr.mxu0 0.0
    %5772 = vmatpush2.msra.mxu0 0.0
    %5773 = vmatprep.subr.mxu0 0.0
    %5774 = vmatpush2.msra.mxu0 0.0
    %5775 = vmatprep.subr.mxu0 0.0
    %5776 = vmatpush2.msra.mxu0 0.0
    %5777 = vmatprep.subr.mxu0 0.0
    %5778 = vmatpush2.msra.mxu0 0.0
    %5779 = vmatprep.subr.mxu0 0.0
    %5780 = vmatpush2.msra.mxu0 0.0
    %5781 = vmatprep.subr.mxu0 0.0
    %5782 = vmatpush2.msra.mxu0 0.0
    %5783 = vmatprep.mubr.f32.mxu0 0.0
    %v5784 = vand.u32 %v5142, 4294901760
    %5785 = vmatmul.mubr.f32.gmra.mxu0 %v5784
    %v5786 = vpop.f32.mrf.mxu0
    %v5787 = vadd.f32 %v5699, %v5786
    %v5788 = vpop.f32.mrf.mxu0
    %v5789 = vadd.f32 %v5701, %v5788
    %5790 = vdwg.mxu0
    %v5791 = vadd.f32 %v830, %v5787
    %v5792 = vadd.f32 %v1536, %v5789
    %v5793 = vxor.u32 %v5791, 2147483648
    %v5794 = vmul.f32 %v5793, 1.442695
    %v5795 = vpow.pop %v5794
    %v5796 = vadd.f32 %v5795, 1.0
    %v5797 = vrcp.pop %v5796
    %v5798 = vmul.f32 1.0, %v5797
    %v5799 = vtanh.pop %v5791
    %v5800 = vmul.f32 %v5798, %v5101
    %5802 = vrot.lane.b32.xlu0 %v5799, 64
    %v5803 = vpop.permute.xlu0 %5802
    %v5805 = vmul.f32 %v5798, %v5803
    %5807 = vrot.lane.b32.xlu0 %v5805, 32
    %v5808 = vpop.permute.xlu0 %5807
    %v5810 = vadd.f32 %v5800, %v5808
    %v5811 = vtanh.pop %v5810
    %5813 = vrot.lane.b32.xlu0 %v5811, 64
    %v5814 = vpop.permute.xlu0 %5813
    %v5816 = vmul.f32 %v5798, %v5814
    %v5817 = vxor.u32 %v5792, 2147483648
    %v5818 = vmul.f32 %v5817, 1.442695
    %v5819 = vpow.pop %v5818
    %v5820 = vadd.f32 %v5819, 1.0
    %v5821 = vrcp.pop %v5820
    %v5822 = vmul.f32 1.0, %v5821
    %v5823 = vtanh.pop %v5792
    %v5824 = vmul.f32 %v5822, %v5125
    %5826 = vrot.lane.b32.xlu0 %v5823, 64
    %v5827 = vpop.permute.xlu0 %5826
    %v5829 = vmul.f32 %v5822, %v5827
    %5831 = vrot.lane.b32.xlu0 %v5829, 32
    %v5832 = vpop.permute.xlu0 %5831
    %v5834 = vadd.f32 %v5824, %v5832
    %v5835 = vtanh.pop %v5834
    %5837 = vrot.lane.b32.xlu0 %v5835, 64
    %v5838 = vpop.permute.xlu0 %5837
    %v5840 = vmul.f32 %v5822, %v5838
    %5842 = vrot.lane.b32.xlu0 %v5816, 32
    %v5843 = vpop.permute.xlu0 %5842
    %5846 = vrot.lane.b32.xlu0 %v5840, 64
    %v5847 = vpop.permute.xlu0 %5846
    %v5849 = vsel %vm878, %v5843, %v5847
    %v5851 = vsel %vm880, %v5849, 0
    %5853 = vmatprep.subr.mxu0 0.0
    %5854 = vmatpush1.msra.mxu0 0.0
    %5855 = vmatprep.subr.mxu0 0.0
    %5856 = vmatpush1.msra.mxu0 0.0
    %5857 = vmatprep.subr.mxu0 0.0
    %5858 = vmatpush1.msra.mxu0 0.0
    %5859 = vmatprep.subr.mxu0 0.0
    %5860 = vmatpush1.msra.mxu0 0.0
    %5861 = vmatprep.subr.mxu0 0.0
    %5862 = vmatpush1.msra.mxu0 0.0
    %5863 = vmatprep.subr.mxu0 0.0
    %5864 = vmatpush1.msra.mxu0 0.0
    %5865 = vmatprep.subr.mxu0 0.0
    %5866 = vmatpush1.msra.mxu0 0.0
    %5867 = vmatprep.subr.mxu0 0.0
    %5868 = vmatpush1.msra.mxu0 0.0
    %v5869 = vand.u32 %v848, 4294901760
    %5870 = vmatprep.subr.mxu0 %v5869
    %v5871 = vand.u32 %v847, 4294901760
    %5872 = vmatpush1.msra.mxu0 %v5871
    %v5873 = vand.u32 %v846, 4294901760
    %5874 = vmatprep.subr.mxu0 %v5873
    %v5875 = vand.u32 %v845, 4294901760
    %5876 = vmatpush1.msra.mxu0 %v5875
    %v5877 = vand.u32 %v844, 4294901760
    %5878 = vmatprep.subr.mxu0 %v5877
    %v5879 = vand.u32 %v843, 4294901760
    %5880 = vmatpush1.msra.mxu0 %v5879
    %v5881 = vand.u32 %v842, 4294901760
    %5882 = vmatprep.subr.mxu0 %v5881
    %v5883 = vand.u32 %v841, 4294901760
    %5884 = vmatpush1.msra.mxu0 %v5883
    %v5885 = vand.u32 %v840, 4294901760
    %5886 = vmatprep.subr.mxu0 %v5885
    %v5887 = vand.u32 %v839, 4294901760
    %5888 = vmatpush1.msra.mxu0 %v5887
    %v5889 = vand.u32 %v838, 4294901760
    %5890 = vmatprep.subr.mxu0 %v5889
    %v5891 = vand.u32 %v837, 4294901760
    %5892 = vmatpush1.msra.mxu0 %v5891
    %v5893 = vand.u32 %v836, 4294901760
    %5894 = vmatprep.subr.mxu0 %v5893
    %v5895 = vand.u32 %v835, 4294901760
    %5896 = vmatpush1.msra.mxu0 %v5895
    %v5897 = vand.u32 %v834, 4294901760
    %5898 = vmatprep.subr.mxu0 %v5897
    %v5899 = vand.u32 %v833, 4294901760
    %5900 = vmatpush1.msra.mxu0 %v5899
    %5901 = vmatprep.subr.mxu0 0.0
    %5902 = vmatpush2.msra.mxu0 0.0
    %5903 = vmatprep.subr.mxu0 0.0
    %5904 = vmatpush2.msra.mxu0 0.0
    %5905 = vmatprep.subr.mxu0 0.0
    %5906 = vmatpush2.msra.mxu0 0.0
    %5907 = vmatprep.subr.mxu0 0.0
    %5908 = vmatpush2.msra.mxu0 0.0
    %5909 = vmatprep.subr.mxu0 0.0
    %5910 = vmatpush2.msra.mxu0 0.0
    %5911 = vmatprep.subr.mxu0 0.0
    %5912 = vmatpush2.msra.mxu0 0.0
    %5913 = vmatprep.subr.mxu0 0.0
    %5914 = vmatpush2.msra.mxu0 0.0
    %5915 = vmatprep.subr.mxu0 0.0
    %5916 = vmatpush2.msra.mxu0 0.0
    %5917 = vmatprep.subr.mxu0 0.0
    %5918 = vmatpush2.msra.mxu0 0.0
    %5919 = vmatprep.subr.mxu0 0.0
    %5920 = vmatpush2.msra.mxu0 0.0
    %5921 = vmatprep.subr.mxu0 0.0
    %5922 = vmatpush2.msra.mxu0 0.0
    %5923 = vmatprep.subr.mxu0 0.0
    %5924 = vmatpush2.msra.mxu0 0.0
    %5925 = vmatprep.subr.mxu0 0.0
    %5926 = vmatpush2.msra.mxu0 0.0
    %5927 = vmatprep.subr.mxu0 0.0
    %5928 = vmatpush2.msra.mxu0 0.0
    %5929 = vmatprep.subr.mxu0 0.0
    %5930 = vmatpush2.msra.mxu0 0.0
    %5931 = vmatprep.subr.mxu0 0.0
    %5932 = vmatpush2.msra.mxu0 0.0
    %5933 = vmatprep.mubr.f32.mxu0 0.0
    %v5934 = vand.u32 %v5851, 4294901760
    %v5935 = vsub.f32 %v5851, %v5934
    %v5936 = vand.u32 %v5935, 4294901760
    %v5937 = vsub.f32 %v5935, %v5936
    %v5938 = vand.u32 %v5937, 4294901760
    %5939 = vmatmul.mubr.f32.gmra.mxu0 %v5938
    %v5940 = vpop.f32.mrf.mxu0
    %v5941 = vpop.f32.mrf.mxu0
    %v5942 = vadd.f32 0.0, %v5941
    %5943 = vdwg.mxu0
    %5944 = vmatprep.subr.mxu0 0.0
    %5945 = vmatpush1.msra.mxu0 0.0
    %5946 = vmatprep.subr.mxu0 0.0
    %5947 = vmatpush1.msra.mxu0 0.0
    %5948 = vmatprep.subr.mxu0 0.0
    %5949 = vmatpush1.msra.mxu0 0.0
    %5950 = vmatprep.subr.mxu0 0.0
    %5951 = vmatpush1.msra.mxu0 0.0
    %5952 = vmatprep.subr.mxu0 0.0
    %5953 = vmatpush1.msra.mxu0 0.0
    %5954 = vmatprep.subr.mxu0 0.0
    %5955 = vmatpush1.msra.mxu0 0.0
    %5956 = vmatprep.subr.mxu0 0.0
    %5957 = vmatpush1.msra.mxu0 0.0
    %5958 = vmatprep.subr.mxu0 0.0
    %5959 = vmatpush1.msra.mxu0 0.0
    %v5960 = vand.u32 %v848, 4294901760
    %v5961 = vsub.f32 %v848, %v5960
    %v5962 = vand.u32 %v5961, 4294901760
    %v5963 = vsub.f32 %v5961, %v5962
    %v5964 = vand.u32 %v5963, 4294901760
    %5965 = vmatprep.subr.mxu0 %v5964
    %v5966 = vand.u32 %v847, 4294901760
    %v5967 = vsub.f32 %v847, %v5966
    %v5968 = vand.u32 %v5967, 4294901760
    %v5969 = vsub.f32 %v5967, %v5968
    %v5970 = vand.u32 %v5969, 4294901760
    %5971 = vmatpush1.msra.mxu0 %v5970
    %v5972 = vand.u32 %v846, 4294901760
    %v5973 = vsub.f32 %v846, %v5972
    %v5974 = vand.u32 %v5973, 4294901760
    %v5975 = vsub.f32 %v5973, %v5974
    %v5976 = vand.u32 %v5975, 4294901760
    %5977 = vmatprep.subr.mxu0 %v5976
    %v5978 = vand.u32 %v845, 4294901760
    %v5979 = vsub.f32 %v845, %v5978
    %v5980 = vand.u32 %v5979, 4294901760
    %v5981 = vsub.f32 %v5979, %v5980
    %v5982 = vand.u32 %v5981, 4294901760
    %5983 = vmatpush1.msra.mxu0 %v5982
    %v5984 = vand.u32 %v844, 4294901760
    %v5985 = vsub.f32 %v844, %v5984
    %v5986 = vand.u32 %v5985, 4294901760
    %v5987 = vsub.f32 %v5985, %v5986
    %v5988 = vand.u32 %v5987, 4294901760
    %5989 = vmatprep.subr.mxu0 %v5988
    %v5990 = vand.u32 %v843, 4294901760
    %v5991 = vsub.f32 %v843, %v5990
    %v5992 = vand.u32 %v5991, 4294901760
    %v5993 = vsub.f32 %v5991, %v5992
    %v5994 = vand.u32 %v5993, 4294901760
    %5995 = vmatpush1.msra.mxu0 %v5994
    %v5996 = vand.u32 %v842, 4294901760
    %v5997 = vsub.f32 %v842, %v5996
    %v5998 = vand.u32 %v5997, 4294901760
    %v5999 = vsub.f32 %v5997, %v5998
    %v6000 = vand.u32 %v5999, 4294901760
    %6001 = vmatprep.subr.mxu0 %v6000
    %v6002 = vand.u32 %v841, 4294901760
    %v6003 = vsub.f32 %v841, %v6002
    %v6004 = vand.u32 %v6003, 4294901760
    %v6005 = vsub.f32 %v6003, %v6004
    %v6006 = vand.u32 %v6005, 4294901760
    %6007 = vmatpush1.msra.mxu0 %v6006
    %v6008 = vand.u32 %v840, 4294901760
    %v6009 = vsub.f32 %v840, %v6008
    %v6010 = vand.u32 %v6009, 4294901760
    %v6011 = vsub.f32 %v6009, %v6010
    %v6012 = vand.u32 %v6011, 4294901760
    %6013 = vmatprep.subr.mxu0 %v6012
    %v6014 = vand.u32 %v839, 4294901760
    %v6015 = vsub.f32 %v839, %v6014
    %v6016 = vand.u32 %v6015, 4294901760
    %v6017 = vsub.f32 %v6015, %v6016
    %v6018 = vand.u32 %v6017, 4294901760
    %6019 = vmatpush1.msra.mxu0 %v6018
    %v6020 = vand.u32 %v838, 4294901760
    %v6021 = vsub.f32 %v838, %v6020
    %v6022 = vand.u32 %v6021, 4294901760
    %v6023 = vsub.f32 %v6021, %v6022
    %v6024 = vand.u32 %v6023, 4294901760
    %6025 = vmatprep.subr.mxu0 %v6024
    %v6026 = vand.u32 %v837, 4294901760
    %v6027 = vsub.f32 %v837, %v6026
    %v6028 = vand.u32 %v6027, 4294901760
    %v6029 = vsub.f32 %v6027, %v6028
    %v6030 = vand.u32 %v6029, 4294901760
    %6031 = vmatpush1.msra.mxu0 %v6030
    %v6032 = vand.u32 %v836, 4294901760
    %v6033 = vsub.f32 %v836, %v6032
    %v6034 = vand.u32 %v6033, 4294901760
    %v6035 = vsub.f32 %v6033, %v6034
    %v6036 = vand.u32 %v6035, 4294901760
    %6037 = vmatprep.subr.mxu0 %v6036
    %v6038 = vand.u32 %v835, 4294901760
    %v6039 = vsub.f32 %v835, %v6038
    %v6040 = vand.u32 %v6039, 4294901760
    %v6041 = vsub.f32 %v6039, %v6040
    %v6042 = vand.u32 %v6041, 4294901760
    %6043 = vmatpush1.msra.mxu0 %v6042
    %v6044 = vand.u32 %v834, 4294901760
    %v6045 = vsub.f32 %v834, %v6044
    %v6046 = vand.u32 %v6045, 4294901760
    %v6047 = vsub.f32 %v6045, %v6046
    %v6048 = vand.u32 %v6047, 4294901760
    %6049 = vmatprep.subr.mxu0 %v6048
    %v6050 = vand.u32 %v833, 4294901760
    %v6051 = vsub.f32 %v833, %v6050
    %v6052 = vand.u32 %v6051, 4294901760
    %v6053 = vsub.f32 %v6051, %v6052
    %v6054 = vand.u32 %v6053, 4294901760
    %6055 = vmatpush1.msra.mxu0 %v6054
    %6056 = vmatprep.subr.mxu0 0.0
    %6057 = vmatpush2.msra.mxu0 0.0
    %6058 = vmatprep.subr.mxu0 0.0
    %6059 = vmatpush2.msra.mxu0 0.0
    %6060 = vmatprep.subr.mxu0 0.0
    %6061 = vmatpush2.msra.mxu0 0.0
    %6062 = vmatprep.subr.mxu0 0.0
    %6063 = vmatpush2.msra.mxu0 0.0
    %6064 = vmatprep.subr.mxu0 0.0
    %6065 = vmatpush2.msra.mxu0 0.0
    %6066 = vmatprep.subr.mxu0 0.0
    %6067 = vmatpush2.msra.mxu0 0.0
    %6068 = vmatprep.subr.mxu0 0.0
    %6069 = vmatpush2.msra.mxu0 0.0
    %6070 = vmatprep.subr.mxu0 0.0
    %6071 = vmatpush2.msra.mxu0 0.0
    %6072 = vmatprep.subr.mxu0 0.0
    %6073 = vmatpush2.msra.mxu0 0.0
    %6074 = vmatprep.subr.mxu0 0.0
    %6075 = vmatpush2.msra.mxu0 0.0
    %6076 = vmatprep.subr.mxu0 0.0
    %6077 = vmatpush2.msra.mxu0 0.0
    %6078 = vmatprep.subr.mxu0 0.0
    %6079 = vmatpush2.msra.mxu0 0.0
    %6080 = vmatprep.subr.mxu0 0.0
    %6081 = vmatpush2.msra.mxu0 0.0
    %6082 = vmatprep.subr.mxu0 0.0
    %6083 = vmatpush2.msra.mxu0 0.0
    %6084 = vmatprep.subr.mxu0 0.0
    %6085 = vmatpush2.msra.mxu0 0.0
    %6086 = vmatprep.subr.mxu0 0.0
    %6087 = vmatpush2.msra.mxu0 0.0
    %6088 = vmatprep.mubr.f32.mxu0 0.0
    %v6089 = vand.u32 %v5851, 4294901760
    %6090 = vmatmul.mubr.f32.gmra.mxu0 %v6089
    %v6091 = vpop.f32.mrf.mxu0
    %v6092 = vpop.f32.mrf.mxu0
    %v6093 = vadd.f32 %v5942, %v6092
    %6094 = vdwg.mxu0
    %6095 = vmatprep.subr.mxu0 0.0
    %6096 = vmatpush1.msra.mxu0 0.0
    %6097 = vmatprep.subr.mxu0 0.0
    %6098 = vmatpush1.msra.mxu0 0.0
    %6099 = vmatprep.subr.mxu0 0.0
    %6100 = vmatpush1.msra.mxu0 0.0
    %6101 = vmatprep.subr.mxu0 0.0
    %6102 = vmatpush1.msra.mxu0 0.0
    %6103 = vmatprep.subr.mxu0 0.0
    %6104 = vmatpush1.msra.mxu0 0.0
    %6105 = vmatprep.subr.mxu0 0.0
    %6106 = vmatpush1.msra.mxu0 0.0
    %6107 = vmatprep.subr.mxu0 0.0
    %6108 = vmatpush1.msra.mxu0 0.0
    %6109 = vmatprep.subr.mxu0 0.0
    %6110 = vmatpush1.msra.mxu0 0.0
    %v6111 = vand.u32 %v848, 4294901760
    %v6112 = vsub.f32 %v848, %v6111
    %6113 = vmatprep.subr.mxu0 %v6112
    %v6114 = vand.u32 %v847, 4294901760
    %v6115 = vsub.f32 %v847, %v6114
    %6116 = vmatpush1.msra.mxu0 %v6115
    %v6117 = vand.u32 %v846, 4294901760
    %v6118 = vsub.f32 %v846, %v6117
    %6119 = vmatprep.subr.mxu0 %v6118
    %v6120 = vand.u32 %v845, 4294901760
    %v6121 = vsub.f32 %v845, %v6120
    %6122 = vmatpush1.msra.mxu0 %v6121
    %v6123 = vand.u32 %v844, 4294901760
    %v6124 = vsub.f32 %v844, %v6123
    %6125 = vmatprep.subr.mxu0 %v6124
    %v6126 = vand.u32 %v843, 4294901760
    %v6127 = vsub.f32 %v843, %v6126
    %6128 = vmatpush1.msra.mxu0 %v6127
    %v6129 = vand.u32 %v842, 4294901760
    %v6130 = vsub.f32 %v842, %v6129
    %6131 = vmatprep.subr.mxu0 %v6130
    %v6132 = vand.u32 %v841, 4294901760
    %v6133 = vsub.f32 %v841, %v6132
    %6134 = vmatpush1.msra.mxu0 %v6133
    %v6135 = vand.u32 %v840, 4294901760
    %v6136 = vsub.f32 %v840, %v6135
    %6137 = vmatprep.subr.mxu0 %v6136
    %v6138 = vand.u32 %v839, 4294901760
    %v6139 = vsub.f32 %v839, %v6138
    %6140 = vmatpush1.msra.mxu0 %v6139
    %v6141 = vand.u32 %v838, 4294901760
    %v6142 = vsub.f32 %v838, %v6141
    %6143 = vmatprep.subr.mxu0 %v6142
    %v6144 = vand.u32 %v837, 4294901760
    %v6145 = vsub.f32 %v837, %v6144
    %6146 = vmatpush1.msra.mxu0 %v6145
    %v6147 = vand.u32 %v836, 4294901760
    %v6148 = vsub.f32 %v836, %v6147
    %6149 = vmatprep.subr.mxu0 %v6148
    %v6150 = vand.u32 %v835, 4294901760
    %v6151 = vsub.f32 %v835, %v6150
    %6152 = vmatpush1.msra.mxu0 %v6151
    %v6153 = vand.u32 %v834, 4294901760
    %v6154 = vsub.f32 %v834, %v6153
    %6155 = vmatprep.subr.mxu0 %v6154
    %v6156 = vand.u32 %v833, 4294901760
    %v6157 = vsub.f32 %v833, %v6156
    %6158 = vmatpush1.msra.mxu0 %v6157
    %6159 = vmatprep.subr.mxu0 0.0
    %6160 = vmatpush2.msra.mxu0 0.0
    %6161 = vmatprep.subr.mxu0 0.0
    %6162 = vmatpush2.msra.mxu0 0.0
    %6163 = vmatprep.subr.mxu0 0.0
    %6164 = vmatpush2.msra.mxu0 0.0
    %6165 = vmatprep.subr.mxu0 0.0
    %6166 = vmatpush2.msra.mxu0 0.0
    %6167 = vmatprep.subr.mxu0 0.0
    %6168 = vmatpush2.msra.mxu0 0.0
    %6169 = vmatprep.subr.mxu0 0.0
    %6170 = vmatpush2.msra.mxu0 0.0
    %6171 = vmatprep.subr.mxu0 0.0
    %6172 = vmatpush2.msra.mxu0 0.0
    %6173 = vmatprep.subr.mxu0 0.0
    %6174 = vmatpush2.msra.mxu0 0.0
    %6175 = vmatprep.subr.mxu0 0.0
    %6176 = vmatpush2.msra.mxu0 0.0
    %6177 = vmatprep.subr.mxu0 0.0
    %6178 = vmatpush2.msra.mxu0 0.0
    %6179 = vmatprep.subr.mxu0 0.0
    %6180 = vmatpush2.msra.mxu0 0.0
    %6181 = vmatprep.subr.mxu0 0.0
    %6182 = vmatpush2.msra.mxu0 0.0
    %6183 = vmatprep.subr.mxu0 0.0
    %6184 = vmatpush2.msra.mxu0 0.0
    %6185 = vmatprep.subr.mxu0 0.0
    %6186 = vmatpush2.msra.mxu0 0.0
    %6187 = vmatprep.subr.mxu0 0.0
    %6188 = vmatpush2.msra.mxu0 0.0
    %6189 = vmatprep.subr.mxu0 0.0
    %6190 = vmatpush2.msra.mxu0 0.0
    %6191 = vmatprep.mubr.f32.mxu0 0.0
    %v6192 = vand.u32 %v5851, 4294901760
    %v6193 = vsub.f32 %v5851, %v6192
    %6194 = vmatmul.mubr.f32.gmra.mxu0 %v6193
    %v6195 = vpop.f32.mrf.mxu0
    %v6196 = vpop.f32.mrf.mxu0
    %v6197 = vadd.f32 %v6093, %v6196
    %6198 = vdwg.mxu0
    %6199 = vmatprep.subr.mxu0 0.0
    %6200 = vmatpush1.msra.mxu0 0.0
    %6201 = vmatprep.subr.mxu0 0.0
    %6202 = vmatpush1.msra.mxu0 0.0
    %6203 = vmatprep.subr.mxu0 0.0
    %6204 = vmatpush1.msra.mxu0 0.0
    %6205 = vmatprep.subr.mxu0 0.0
    %6206 = vmatpush1.msra.mxu0 0.0
    %6207 = vmatprep.subr.mxu0 0.0
    %6208 = vmatpush1.msra.mxu0 0.0
    %6209 = vmatprep.subr.mxu0 0.0
    %6210 = vmatpush1.msra.mxu0 0.0
    %6211 = vmatprep.subr.mxu0 0.0
    %6212 = vmatpush1.msra.mxu0 0.0
    %6213 = vmatprep.subr.mxu0 0.0
    %6214 = vmatpush1.msra.mxu0 0.0
    %v6215 = vand.u32 %v848, 4294901760
    %6216 = vmatprep.subr.mxu0 %v6215
    %v6217 = vand.u32 %v847, 4294901760
    %6218 = vmatpush1.msra.mxu0 %v6217
    %v6219 = vand.u32 %v846, 4294901760
    %6220 = vmatprep.subr.mxu0 %v6219
    %v6221 = vand.u32 %v845, 4294901760
    %6222 = vmatpush1.msra.mxu0 %v6221
    %v6223 = vand.u32 %v844, 4294901760
    %6224 = vmatprep.subr.mxu0 %v6223
    %v6225 = vand.u32 %v843, 4294901760
    %6226 = vmatpush1.msra.mxu0 %v6225
    %v6227 = vand.u32 %v842, 4294901760
    %6228 = vmatprep.subr.mxu0 %v6227
    %v6229 = vand.u32 %v841, 4294901760
    %6230 = vmatpush1.msra.mxu0 %v6229
    %v6231 = vand.u32 %v840, 4294901760
    %6232 = vmatprep.subr.mxu0 %v6231
    %v6233 = vand.u32 %v839, 4294901760
    %6234 = vmatpush1.msra.mxu0 %v6233
    %v6235 = vand.u32 %v838, 4294901760
    %6236 = vmatprep.subr.mxu0 %v6235
    %v6237 = vand.u32 %v837, 4294901760
    %6238 = vmatpush1.msra.mxu0 %v6237
    %v6239 = vand.u32 %v836, 4294901760
    %6240 = vmatprep.subr.mxu0 %v6239
    %v6241 = vand.u32 %v835, 4294901760
    %6242 = vmatpush1.msra.mxu0 %v6241
    %v6243 = vand.u32 %v834, 4294901760
    %6244 = vmatprep.subr.mxu0 %v6243
    %v6245 = vand.u32 %v833, 4294901760
    %6246 = vmatpush1.msra.mxu0 %v6245
    %6247 = vmatprep.subr.mxu0 0.0
    %6248 = vmatpush2.msra.mxu0 0.0
    %6249 = vmatprep.subr.mxu0 0.0
    %6250 = vmatpush2.msra.mxu0 0.0
    %6251 = vmatprep.subr.mxu0 0.0
    %6252 = vmatpush2.msra.mxu0 0.0
    %6253 = vmatprep.subr.mxu0 0.0
    %6254 = vmatpush2.msra.mxu0 0.0
    %6255 = vmatprep.subr.mxu0 0.0
    %6256 = vmatpush2.msra.mxu0 0.0
    %6257 = vmatprep.subr.mxu0 0.0
    %6258 = vmatpush2.msra.mxu0 0.0
    %6259 = vmatprep.subr.mxu0 0.0
    %6260 = vmatpush2.msra.mxu0 0.0
    %6261 = vmatprep.subr.mxu0 0.0
    %6262 = vmatpush2.msra.mxu0 0.0
    %6263 = vmatprep.subr.mxu0 0.0
    %6264 = vmatpush2.msra.mxu0 0.0
    %6265 = vmatprep.subr.mxu0 0.0
    %6266 = vmatpush2.msra.mxu0 0.0
    %6267 = vmatprep.subr.mxu0 0.0
    %6268 = vmatpush2.msra.mxu0 0.0
    %6269 = vmatprep.subr.mxu0 0.0
    %6270 = vmatpush2.msra.mxu0 0.0
    %6271 = vmatprep.subr.mxu0 0.0
    %6272 = vmatpush2.msra.mxu0 0.0
    %6273 = vmatprep.subr.mxu0 0.0
    %6274 = vmatpush2.msra.mxu0 0.0
    %6275 = vmatprep.subr.mxu0 0.0
    %6276 = vmatpush2.msra.mxu0 0.0
    %6277 = vmatprep.subr.mxu0 0.0
    %6278 = vmatpush2.msra.mxu0 0.0
    %6279 = vmatprep.mubr.f32.mxu0 0.0
    %v6280 = vand.u32 %v5851, 4294901760
    %v6281 = vsub.f32 %v5851, %v6280
    %v6282 = vand.u32 %v6281, 4294901760
    %6283 = vmatmul.mubr.f32.gmra.mxu0 %v6282
    %v6284 = vpop.f32.mrf.mxu0
    %v6285 = vpop.f32.mrf.mxu0
    %v6286 = vadd.f32 %v6197, %v6285
    %6287 = vdwg.mxu0
    %6288 = vmatprep.subr.mxu0 0.0
    %6289 = vmatpush1.msra.mxu0 0.0
    %6290 = vmatprep.subr.mxu0 0.0
    %6291 = vmatpush1.msra.mxu0 0.0
    %6292 = vmatprep.subr.mxu0 0.0
    %6293 = vmatpush1.msra.mxu0 0.0
    %6294 = vmatprep.subr.mxu0 0.0
    %6295 = vmatpush1.msra.mxu0 0.0
    %6296 = vmatprep.subr.mxu0 0.0
    %6297 = vmatpush1.msra.mxu0 0.0
    %6298 = vmatprep.subr.mxu0 0.0
    %6299 = vmatpush1.msra.mxu0 0.0
    %6300 = vmatprep.subr.mxu0 0.0
    %6301 = vmatpush1.msra.mxu0 0.0
    %6302 = vmatprep.subr.mxu0 0.0
    %6303 = vmatpush1.msra.mxu0 0.0
    %v6304 = vand.u32 %v848, 4294901760
    %v6305 = vsub.f32 %v848, %v6304
    %v6306 = vand.u32 %v6305, 4294901760
    %6307 = vmatprep.subr.mxu0 %v6306
    %v6308 = vand.u32 %v847, 4294901760
    %v6309 = vsub.f32 %v847, %v6308
    %v6310 = vand.u32 %v6309, 4294901760
    %6311 = vmatpush1.msra.mxu0 %v6310
    %v6312 = vand.u32 %v846, 4294901760
    %v6313 = vsub.f32 %v846, %v6312
    %v6314 = vand.u32 %v6313, 4294901760
    %6315 = vmatprep.subr.mxu0 %v6314
    %v6316 = vand.u32 %v845, 4294901760
    %v6317 = vsub.f32 %v845, %v6316
    %v6318 = vand.u32 %v6317, 4294901760
    %6319 = vmatpush1.msra.mxu0 %v6318
    %v6320 = vand.u32 %v844, 4294901760
    %v6321 = vsub.f32 %v844, %v6320
    %v6322 = vand.u32 %v6321, 4294901760
    %6323 = vmatprep.subr.mxu0 %v6322
    %v6324 = vand.u32 %v843, 4294901760
    %v6325 = vsub.f32 %v843, %v6324
    %v6326 = vand.u32 %v6325, 4294901760
    %6327 = vmatpush1.msra.mxu0 %v6326
    %v6328 = vand.u32 %v842, 4294901760
    %v6329 = vsub.f32 %v842, %v6328
    %v6330 = vand.u32 %v6329, 4294901760
    %6331 = vmatprep.subr.mxu0 %v6330
    %v6332 = vand.u32 %v841, 4294901760
    %v6333 = vsub.f32 %v841, %v6332
    %v6334 = vand.u32 %v6333, 4294901760
    %6335 = vmatpush1.msra.mxu0 %v6334
    %v6336 = vand.u32 %v840, 4294901760
    %v6337 = vsub.f32 %v840, %v6336
    %v6338 = vand.u32 %v6337, 4294901760
    %6339 = vmatprep.subr.mxu0 %v6338
    %v6340 = vand.u32 %v839, 4294901760
    %v6341 = vsub.f32 %v839, %v6340
    %v6342 = vand.u32 %v6341, 4294901760
    %6343 = vmatpush1.msra.mxu0 %v6342
    %v6344 = vand.u32 %v838, 4294901760
    %v6345 = vsub.f32 %v838, %v6344
    %v6346 = vand.u32 %v6345, 4294901760
    %6347 = vmatprep.subr.mxu0 %v6346
    %v6348 = vand.u32 %v837, 4294901760
    %v6349 = vsub.f32 %v837, %v6348
    %v6350 = vand.u32 %v6349, 4294901760
    %6351 = vmatpush1.msra.mxu0 %v6350
    %v6352 = vand.u32 %v836, 4294901760
    %v6353 = vsub.f32 %v836, %v6352
    %v6354 = vand.u32 %v6353, 4294901760
    %6355 = vmatprep.subr.mxu0 %v6354
    %v6356 = vand.u32 %v835, 4294901760
    %v6357 = vsub.f32 %v835, %v6356
    %v6358 = vand.u32 %v6357, 4294901760
    %6359 = vmatpush1.msra.mxu0 %v6358
    %v6360 = vand.u32 %v834, 4294901760
    %v6361 = vsub.f32 %v834, %v6360
    %v6362 = vand.u32 %v6361, 4294901760
    %6363 = vmatprep.subr.mxu0 %v6362
    %v6364 = vand.u32 %v833, 4294901760
    %v6365 = vsub.f32 %v833, %v6364
    %v6366 = vand.u32 %v6365, 4294901760
    %6367 = vmatpush1.msra.mxu0 %v6366
    %6368 = vmatprep.subr.mxu0 0.0
    %6369 = vmatpush2.msra.mxu0 0.0
    %6370 = vmatprep.subr.mxu0 0.0
    %6371 = vmatpush2.msra.mxu0 0.0
    %6372 = vmatprep.subr.mxu0 0.0
    %6373 = vmatpush2.msra.mxu0 0.0
    %6374 = vmatprep.subr.mxu0 0.0
    %6375 = vmatpush2.msra.mxu0 0.0
    %6376 = vmatprep.subr.mxu0 0.0
    %6377 = vmatpush2.msra.mxu0 0.0
    %6378 = vmatprep.subr.mxu0 0.0
    %6379 = vmatpush2.msra.mxu0 0.0
    %6380 = vmatprep.subr.mxu0 0.0
    %6381 = vmatpush2.msra.mxu0 0.0
    %6382 = vmatprep.subr.mxu0 0.0
    %6383 = vmatpush2.msra.mxu0 0.0
    %6384 = vmatprep.subr.mxu0 0.0
    %6385 = vmatpush2.msra.mxu0 0.0
    %6386 = vmatprep.subr.mxu0 0.0
    %6387 = vmatpush2.msra.mxu0 0.0
    %6388 = vmatprep.subr.mxu0 0.0
    %6389 = vmatpush2.msra.mxu0 0.0
    %6390 = vmatprep.subr.mxu0 0.0
    %6391 = vmatpush2.msra.mxu0 0.0
    %6392 = vmatprep.subr.mxu0 0.0
    %6393 = vmatpush2.msra.mxu0 0.0
    %6394 = vmatprep.subr.mxu0 0.0
    %6395 = vmatpush2.msra.mxu0 0.0
    %6396 = vmatprep.subr.mxu0 0.0
    %6397 = vmatpush2.msra.mxu0 0.0
    %6398 = vmatprep.subr.mxu0 0.0
    %6399 = vmatpush2.msra.mxu0 0.0
    %6400 = vmatprep.mubr.f32.mxu0 0.0
    %v6401 = vand.u32 %v5851, 4294901760
    %6402 = vmatmul.mubr.f32.gmra.mxu0 %v6401
    %v6403 = vpop.f32.mrf.mxu0
    %v6404 = vpop.f32.mrf.mxu0
    %v6405 = vadd.f32 %v6286, %v6404
    %6406 = vdwg.mxu0
    %6407 = vmatprep.subr.mxu0 0.0
    %6408 = vmatpush1.msra.mxu0 0.0
    %6409 = vmatprep.subr.mxu0 0.0
    %6410 = vmatpush1.msra.mxu0 0.0
    %6411 = vmatprep.subr.mxu0 0.0
    %6412 = vmatpush1.msra.mxu0 0.0
    %6413 = vmatprep.subr.mxu0 0.0
    %6414 = vmatpush1.msra.mxu0 0.0
    %6415 = vmatprep.subr.mxu0 0.0
    %6416 = vmatpush1.msra.mxu0 0.0
    %6417 = vmatprep.subr.mxu0 0.0
    %6418 = vmatpush1.msra.mxu0 0.0
    %6419 = vmatprep.subr.mxu0 0.0
    %6420 = vmatpush1.msra.mxu0 0.0
    %6421 = vmatprep.subr.mxu0 0.0
    %6422 = vmatpush1.msra.mxu0 0.0
    %v6423 = vand.u32 %v848, 4294901760
    %6424 = vmatprep.subr.mxu0 %v6423
    %v6425 = vand.u32 %v847, 4294901760
    %6426 = vmatpush1.msra.mxu0 %v6425
    %v6427 = vand.u32 %v846, 4294901760
    %6428 = vmatprep.subr.mxu0 %v6427
    %v6429 = vand.u32 %v845, 4294901760
    %6430 = vmatpush1.msra.mxu0 %v6429
    %v6431 = vand.u32 %v844, 4294901760
    %6432 = vmatprep.subr.mxu0 %v6431
    %v6433 = vand.u32 %v843, 4294901760
    %6434 = vmatpush1.msra.mxu0 %v6433
    %v6435 = vand.u32 %v842, 4294901760
    %6436 = vmatprep.subr.mxu0 %v6435
    %v6437 = vand.u32 %v841, 4294901760
    %6438 = vmatpush1.msra.mxu0 %v6437
    %v6439 = vand.u32 %v840, 4294901760
    %6440 = vmatprep.subr.mxu0 %v6439
    %v6441 = vand.u32 %v839, 4294901760
    %6442 = vmatpush1.msra.mxu0 %v6441
    %v6443 = vand.u32 %v838, 4294901760
    %6444 = vmatprep.subr.mxu0 %v6443
    %v6445 = vand.u32 %v837, 4294901760
    %6446 = vmatpush1.msra.mxu0 %v6445
    %v6447 = vand.u32 %v836, 4294901760
    %6448 = vmatprep.subr.mxu0 %v6447
    %v6449 = vand.u32 %v835, 4294901760
    %6450 = vmatpush1.msra.mxu0 %v6449
    %v6451 = vand.u32 %v834, 4294901760
    %6452 = vmatprep.subr.mxu0 %v6451
    %v6453 = vand.u32 %v833, 4294901760
    %6454 = vmatpush1.msra.mxu0 %v6453
    %6455 = vmatprep.subr.mxu0 0.0
    %6456 = vmatpush2.msra.mxu0 0.0
    %6457 = vmatprep.subr.mxu0 0.0
    %6458 = vmatpush2.msra.mxu0 0.0
    %6459 = vmatprep.subr.mxu0 0.0
    %6460 = vmatpush2.msra.mxu0 0.0
    %6461 = vmatprep.subr.mxu0 0.0
    %6462 = vmatpush2.msra.mxu0 0.0
    %6463 = vmatprep.subr.mxu0 0.0
    %6464 = vmatpush2.msra.mxu0 0.0
    %6465 = vmatprep.subr.mxu0 0.0
    %6466 = vmatpush2.msra.mxu0 0.0
    %6467 = vmatprep.subr.mxu0 0.0
    %6468 = vmatpush2.msra.mxu0 0.0
    %6469 = vmatprep.subr.mxu0 0.0
    %6470 = vmatpush2.msra.mxu0 0.0
    %6471 = vmatprep.subr.mxu0 0.0
    %6472 = vmatpush2.msra.mxu0 0.0
    %6473 = vmatprep.subr.mxu0 0.0
    %6474 = vmatpush2.msra.mxu0 0.0
    %6475 = vmatprep.subr.mxu0 0.0
    %6476 = vmatpush2.msra.mxu0 0.0
    %6477 = vmatprep.subr.mxu0 0.0
    %6478 = vmatpush2.msra.mxu0 0.0
    %6479 = vmatprep.subr.mxu0 0.0
    %6480 = vmatpush2.msra.mxu0 0.0
    %6481 = vmatprep.subr.mxu0 0.0
    %6482 = vmatpush2.msra.mxu0 0.0
    %6483 = vmatprep.subr.mxu0 0.0
    %6484 = vmatpush2.msra.mxu0 0.0
    %6485 = vmatprep.subr.mxu0 0.0
    %6486 = vmatpush2.msra.mxu0 0.0
    %6487 = vmatprep.mubr.f32.mxu0 0.0
    %v6488 = vand.u32 %v5851, 4294901760
    %6489 = vmatmul.mubr.f32.gmra.mxu0 %v6488
    %v6490 = vpop.f32.mrf.mxu0
    %v6491 = vpop.f32.mrf.mxu0
    %v6492 = vadd.f32 %v6405, %v6491
    %6493 = vdwg.mxu0
    %v6494 = vadd.f32 %v1536, %v6492
    %v6495 = vxor.u32 %v6494, 2147483648
    %v6496 = vmul.f32 %v6495, 1.442695
    %v6497 = vpow.pop %v6496
    %v6498 = vadd.f32 %v6497, 1.0
    %v6499 = vrcp.pop %v6498
    %v6500 = vmul.f32 1.0, %v6499
    %v6501 = vtanh.pop %v6494
    %v6502 = vmul.f32 %v6500, %v5834
    %6504 = vrot.lane.b32.xlu0 %v6501, 64
    %v6505 = vpop.permute.xlu0 %6504
    %v6507 = vmul.f32 %v6500, %v6505
    %6509 = vrot.lane.b32.xlu0 %v6507, 32
    %v6510 = vpop.permute.xlu0 %6509
    %v6512 = vadd.f32 %v6502, %v6510
    %v6513 = vtanh.pop %v6512
    %6515 = vrot.lane.b32.xlu0 %v6513, 64
    %v6516 = vpop.permute.xlu0 %6515
    %v6518 = vmul.f32 %v6500, %v6516
    %v6519 = vld [vmem:[%s5] sm:$0xff]
    %v6520 = vld [vmem:[%s5 + $0x8] sm:$0xff]
    %v6521 = vld [vmem:[%s5 + $0x10] sm:$0xff]
    %v6522 = vld [vmem:[%s5 + $0x18] sm:$0xff]
    %v6523 = vld [vmem:[%s6] sm:$0x1]
    %v6525 = vlaneseq
    %v6526 = vshrl.u32 %v6525, 7
    %v6527 = vsub.s32 0, %v6526
    %v6528 = vrot.slane %v6523, %v6527
    %6531 = vrot.lane.b32.xlu0 %v6518, 32
    %v6532 = vpop.permute.xlu0 %6531
    %v6533 = vsel %vm878, %v6532, 0
    %6535 = vmatprep.subr.mxu0 0.0
    %6536 = vmatpush1.msra.mxu0 0.0
    %6537 = vmatprep.subr.mxu0 0.0
    %6538 = vmatpush1.msra.mxu0 0.0
    %6539 = vmatprep.subr.mxu0 0.0
    %6540 = vmatpush1.msra.mxu0 0.0
    %6541 = vmatprep.subr.mxu0 0.0
    %6542 = vmatpush1.msra.mxu0 0.0
    %6543 = vmatprep.subr.mxu0 0.0
    %6544 = vmatpush1.msra.mxu0 0.0
    %6545 = vmatprep.subr.mxu0 0.0
    %6546 = vmatpush1.msra.mxu0 0.0
    %6547 = vmatprep.subr.mxu0 0.0
    %6548 = vmatpush1.msra.mxu0 0.0
    %6549 = vmatprep.subr.mxu0 0.0
    %6550 = vmatpush1.msra.mxu0 0.0
    %6551 = vmatprep.subr.mxu0 0.0
    %6552 = vmatpush1.msra.mxu0 0.0
    %6553 = vmatprep.subr.mxu0 0.0
    %6554 = vmatpush1.msra.mxu0 0.0
    %6555 = vmatprep.subr.mxu0 0.0
    %6556 = vmatpush1.msra.mxu0 0.0
    %6557 = vmatprep.subr.mxu0 0.0
    %6558 = vmatpush1.msra.mxu0 0.0
    %6559 = vmatprep.subr.mxu0 0.0
    %v6560 = vand.u32 %v6522, 4294901760
    %6561 = vmatpush1.msra.mxu0 %v6560
    %6562 = vmatprep.subr.mxu0 0.0
    %v6563 = vand.u32 %v6521, 4294901760
    %6564 = vmatpush1.msra.mxu0 %v6563
    %6565 = vmatprep.subr.mxu0 0.0
    %v6566 = vand.u32 %v6520, 4294901760
    %6567 = vmatpush1.msra.mxu0 %v6566
    %6568 = vmatprep.subr.mxu0 0.0
    %v6569 = vand.u32 %v6519, 4294901760
    %6570 = vmatpush1.msra.mxu0 %v6569
    %6571 = vmatprep.subr.mxu0 0.0
    %6572 = vmatpush2.msra.mxu0 0.0
    %6573 = vmatprep.subr.mxu0 0.0
    %6574 = vmatpush2.msra.mxu0 0.0
    %6575 = vmatprep.subr.mxu0 0.0
    %6576 = vmatpush2.msra.mxu0 0.0
    %6577 = vmatprep.subr.mxu0 0.0
    %6578 = vmatpush2.msra.mxu0 0.0
    %6579 = vmatprep.subr.mxu0 0.0
    %6580 = vmatpush2.msra.mxu0 0.0
    %6581 = vmatprep.subr.mxu0 0.0
    %6582 = vmatpush2.msra.mxu0 0.0
    %6583 = vmatprep.subr.mxu0 0.0
    %6584 = vmatpush2.msra.mxu0 0.0
    %6585 = vmatprep.subr.mxu0 0.0
    %6586 = vmatpush2.msra.mxu0 0.0
    %6587 = vmatprep.subr.mxu0 0.0
    %6588 = vmatpush2.msra.mxu0 0.0
    %6589 = vmatprep.subr.mxu0 0.0
    %6590 = vmatpush2.msra.mxu0 0.0
    %6591 = vmatprep.subr.mxu0 0.0
    %6592 = vmatpush2.msra.mxu0 0.0
    %6593 = vmatprep.subr.mxu0 0.0
    %6594 = vmatpush2.msra.mxu0 0.0
    %6595 = vmatprep.subr.mxu0 0.0
    %6596 = vmatpush2.msra.mxu0 0.0
    %6597 = vmatprep.subr.mxu0 0.0
    %6598 = vmatpush2.msra.mxu0 0.0
    %6599 = vmatprep.subr.mxu0 0.0
    %6600 = vmatpush2.msra.mxu0 0.0
    %6601 = vmatprep.subr.mxu0 0.0
    %6602 = vmatpush2.msra.mxu0 0.0
    %6603 = vmatprep.mubr.f32.mxu0 0.0
    %v6604 = vand.u32 %v6533, 4294901760
    %v6605 = vsub.f32 %v6533, %v6604
    %v6606 = vand.u32 %v6605, 4294901760
    %v6607 = vsub.f32 %v6605, %v6606
    %v6608 = vand.u32 %v6607, 4294901760
    %6609 = vmatmul.mubr.f32.gmra.mxu0 %v6608
    %v6610 = vpop.f32.mrf.mxu0
    %v6611 = vadd.f32 %v6528, %v6610
    %v6612 = vpop.f32.mrf.mxu0
    %6613 = vdwg.mxu0
    %6614 = vmatprep.subr.mxu0 0.0
    %6615 = vmatpush1.msra.mxu0 0.0
    %6616 = vmatprep.subr.mxu0 0.0
    %6617 = vmatpush1.msra.mxu0 0.0
    %6618 = vmatprep.subr.mxu0 0.0
    %6619 = vmatpush1.msra.mxu0 0.0
    %6620 = vmatprep.subr.mxu0 0.0
    %6621 = vmatpush1.msra.mxu0 0.0
    %6622 = vmatprep.subr.mxu0 0.0
    %6623 = vmatpush1.msra.mxu0 0.0
    %6624 = vmatprep.subr.mxu0 0.0
    %6625 = vmatpush1.msra.mxu0 0.0
    %6626 = vmatprep.subr.mxu0 0.0
    %6627 = vmatpush1.msra.mxu0 0.0
    %6628 = vmatprep.subr.mxu0 0.0
    %6629 = vmatpush1.msra.mxu0 0.0
    %6630 = vmatprep.subr.mxu0 0.0
    %6631 = vmatpush1.msra.mxu0 0.0
    %6632 = vmatprep.subr.mxu0 0.0
    %6633 = vmatpush1.msra.mxu0 0.0
    %6634 = vmatprep.subr.mxu0 0.0
    %6635 = vmatpush1.msra.mxu0 0.0
    %6636 = vmatprep.subr.mxu0 0.0
    %6637 = vmatpush1.msra.mxu0 0.0
    %6638 = vmatprep.subr.mxu0 0.0
    %v6639 = vand.u32 %v6522, 4294901760
    %v6640 = vsub.f32 %v6522, %v6639
    %v6641 = vand.u32 %v6640, 4294901760
    %v6642 = vsub.f32 %v6640, %v6641
    %v6643 = vand.u32 %v6642, 4294901760
    %6644 = vmatpush1.msra.mxu0 %v6643
    %6645 = vmatprep.subr.mxu0 0.0
    %v6646 = vand.u32 %v6521, 4294901760
    %v6647 = vsub.f32 %v6521, %v6646
    %v6648 = vand.u32 %v6647, 4294901760
    %v6649 = vsub.f32 %v6647, %v6648
    %v6650 = vand.u32 %v6649, 4294901760
    %6651 = vmatpush1.msra.mxu0 %v6650
    %6652 = vmatprep.subr.mxu0 0.0
    %v6653 = vand.u32 %v6520, 4294901760
    %v6654 = vsub.f32 %v6520, %v6653
    %v6655 = vand.u32 %v6654, 4294901760
    %v6656 = vsub.f32 %v6654, %v6655
    %v6657 = vand.u32 %v6656, 4294901760
    %6658 = vmatpush1.msra.mxu0 %v6657
    %6659 = vmatprep.subr.mxu0 0.0
    %v6660 = vand.u32 %v6519, 4294901760
    %v6661 = vsub.f32 %v6519, %v6660
    %v6662 = vand.u32 %v6661, 4294901760
    %v6663 = vsub.f32 %v6661, %v6662
    %v6664 = vand.u32 %v6663, 4294901760
    %6665 = vmatpush1.msra.mxu0 %v6664
    %6666 = vmatprep.subr.mxu0 0.0
    %6667 = vmatpush2.msra.mxu0 0.0
    %6668 = vmatprep.subr.mxu0 0.0
    %6669 = vmatpush2.msra.mxu0 0.0
    %6670 = vmatprep.subr.mxu0 0.0
    %6671 = vmatpush2.msra.mxu0 0.0
    %6672 = vmatprep.subr.mxu0 0.0
    %6673 = vmatpush2.msra.mxu0 0.0
    %6674 = vmatprep.subr.mxu0 0.0
    %6675 = vmatpush2.msra.mxu0 0.0
    %6676 = vmatprep.subr.mxu0 0.0
    %6677 = vmatpush2.msra.mxu0 0.0
    %6678 = vmatprep.subr.mxu0 0.0
    %6679 = vmatpush2.msra.mxu0 0.0
    %6680 = vmatprep.subr.mxu0 0.0
    %6681 = vmatpush2.msra.mxu0 0.0
    %6682 = vmatprep.subr.mxu0 0.0
    %6683 = vmatpush2.msra.mxu0 0.0
    %6684 = vmatprep.subr.mxu0 0.0
    %6685 = vmatpush2.msra.mxu0 0.0
    %6686 = vmatprep.subr.mxu0 0.0
    %6687 = vmatpush2.msra.mxu0 0.0
    %6688 = vmatprep.subr.mxu0 0.0
    %6689 = vmatpush2.msra.mxu0 0.0
    %6690 = vmatprep.subr.mxu0 0.0
    %6691 = vmatpush2.msra.mxu0 0.0
    %6692 = vmatprep.subr.mxu0 0.0
    %6693 = vmatpush2.msra.mxu0 0.0
    %6694 = vmatprep.subr.mxu0 0.0
    %6695 = vmatpush2.msra.mxu0 0.0
    %6696 = vmatprep.subr.mxu0 0.0
    %6697 = vmatpush2.msra.mxu0 0.0
    %6698 = vmatprep.mubr.f32.mxu0 0.0
    %v6699 = vand.u32 %v6533, 4294901760
    %6700 = vmatmul.mubr.f32.gmra.mxu0 %v6699
    %v6701 = vpop.f32.mrf.mxu0
    %v6702 = vadd.f32 %v6611, %v6701
    %v6703 = vpop.f32.mrf.mxu0
    %6704 = vdwg.mxu0
    %6705 = vmatprep.subr.mxu0 0.0
    %6706 = vmatpush1.msra.mxu0 0.0
    %6707 = vmatprep.subr.mxu0 0.0
    %6708 = vmatpush1.msra.mxu0 0.0
    %6709 = vmatprep.subr.mxu0 0.0
    %6710 = vmatpush1.msra.mxu0 0.0
    %6711 = vmatprep.subr.mxu0 0.0
    %6712 = vmatpush1.msra.mxu0 0.0
    %6713 = vmatprep.subr.mxu0 0.0
    %6714 = vmatpush1.msra.mxu0 0.0
    %6715 = vmatprep.subr.mxu0 0.0
    %6716 = vmatpush1.msra.mxu0 0.0
    %6717 = vmatprep.subr.mxu0 0.0
    %6718 = vmatpush1.msra.mxu0 0.0
    %6719 = vmatprep.subr.mxu0 0.0
    %6720 = vmatpush1.msra.mxu0 0.0
    %6721 = vmatprep.subr.mxu0 0.0
    %6722 = vmatpush1.msra.mxu0 0.0
    %6723 = vmatprep.subr.mxu0 0.0
    %6724 = vmatpush1.msra.mxu0 0.0
    %6725 = vmatprep.subr.mxu0 0.0
    %6726 = vmatpush1.msra.mxu0 0.0
    %6727 = vmatprep.subr.mxu0 0.0
    %6728 = vmatpush1.msra.mxu0 0.0
    %6729 = vmatprep.subr.mxu0 0.0
    %v6730 = vand.u32 %v6522, 4294901760
    %v6731 = vsub.f32 %v6522, %v6730
    %6732 = vmatpush1.msra.mxu0 %v6731
    %6733 = vmatprep.subr.mxu0 0.0
    %v6734 = vand.u32 %v6521, 4294901760
    %v6735 = vsub.f32 %v6521, %v6734
    %6736 = vmatpush1.msra.mxu0 %v6735
    %6737 = vmatprep.subr.mxu0 0.0
    %v6738 = vand.u32 %v6520, 4294901760
    %v6739 = vsub.f32 %v6520, %v6738
    %6740 = vmatpush1.msra.mxu0 %v6739
    %6741 = vmatprep.subr.mxu0 0.0
    %v6742 = vand.u32 %v6519, 4294901760
    %v6743 = vsub.f32 %v6519, %v6742
    %6744 = vmatpush1.msra.mxu0 %v6743
    %6745 = vmatprep.subr.mxu0 0.0
    %6746 = vmatpush2.msra.mxu0 0.0
    %6747 = vmatprep.subr.mxu0 0.0
    %6748 = vmatpush2.msra.mxu0 0.0
    %6749 = vmatprep.subr.mxu0 0.0
    %6750 = vmatpush2.msra.mxu0 0.0
    %6751 = vmatprep.subr.mxu0 0.0
    %6752 = vmatpush2.msra.mxu0 0.0
    %6753 = vmatprep.subr.mxu0 0.0
    %6754 = vmatpush2.msra.mxu0 0.0
    %6755 = vmatprep.subr.mxu0 0.0
    %6756 = vmatpush2.msra.mxu0 0.0
    %6757 = vmatprep.subr.mxu0 0.0
    %6758 = vmatpush2.msra.mxu0 0.0
    %6759 = vmatprep.subr.mxu0 0.0
    %6760 = vmatpush2.msra.mxu0 0.0
    %6761 = vmatprep.subr.mxu0 0.0
    %6762 = vmatpush2.msra.mxu0 0.0
    %6763 = vmatprep.subr.mxu0 0.0
    %6764 = vmatpush2.msra.mxu0 0.0
    %6765 = vmatprep.subr.mxu0 0.0
    %6766 = vmatpush2.msra.mxu0 0.0
    %6767 = vmatprep.subr.mxu0 0.0
    %6768 = vmatpush2.msra.mxu0 0.0
    %6769 = vmatprep.subr.mxu0 0.0
    %6770 = vmatpush2.msra.mxu0 0.0
    %6771 = vmatprep.subr.mxu0 0.0
    %6772 = vmatpush2.msra.mxu0 0.0
    %6773 = vmatprep.subr.mxu0 0.0
    %6774 = vmatpush2.msra.mxu0 0.0
    %6775 = vmatprep.subr.mxu0 0.0
    %6776 = vmatpush2.msra.mxu0 0.0
    %6777 = vmatprep.mubr.f32.mxu0 0.0
    %v6778 = vand.u32 %v6533, 4294901760
    %v6779 = vsub.f32 %v6533, %v6778
    %6780 = vmatmul.mubr.f32.gmra.mxu0 %v6779
    %v6781 = vpop.f32.mrf.mxu0
    %v6782 = vadd.f32 %v6702, %v6781
    %v6783 = vpop.f32.mrf.mxu0
    %6784 = vdwg.mxu0
    %6785 = vmatprep.subr.mxu0 0.0
    %6786 = vmatpush1.msra.mxu0 0.0
    %6787 = vmatprep.subr.mxu0 0.0
    %6788 = vmatpush1.msra.mxu0 0.0
    %6789 = vmatprep.subr.mxu0 0.0
    %6790 = vmatpush1.msra.mxu0 0.0
    %6791 = vmatprep.subr.mxu0 0.0
    %6792 = vmatpush1.msra.mxu0 0.0
    %6793 = vmatprep.subr.mxu0 0.0
    %6794 = vmatpush1.msra.mxu0 0.0
    %6795 = vmatprep.subr.mxu0 0.0
    %6796 = vmatpush1.msra.mxu0 0.0
    %6797 = vmatprep.subr.mxu0 0.0
    %6798 = vmatpush1.msra.mxu0 0.0
    %6799 = vmatprep.subr.mxu0 0.0
    %6800 = vmatpush1.msra.mxu0 0.0
    %6801 = vmatprep.subr.mxu0 0.0
    %6802 = vmatpush1.msra.mxu0 0.0
    %6803 = vmatprep.subr.mxu0 0.0
    %6804 = vmatpush1.msra.mxu0 0.0
    %6805 = vmatprep.subr.mxu0 0.0
    %6806 = vmatpush1.msra.mxu0 0.0
    %6807 = vmatprep.subr.mxu0 0.0
    %6808 = vmatpush1.msra.mxu0 0.0
    %6809 = vmatprep.subr.mxu0 0.0
    %v6810 = vand.u32 %v6522, 4294901760
    %6811 = vmatpush1.msra.mxu0 %v6810
    %6812 = vmatprep.subr.mxu0 0.0
    %v6813 = vand.u32 %v6521, 4294901760
    %6814 = vmatpush1.msra.mxu0 %v6813
    %6815 = vmatprep.subr.mxu0 0.0
    %v6816 = vand.u32 %v6520, 4294901760
    %6817 = vmatpush1.msra.mxu0 %v6816
    %6818 = vmatprep.subr.mxu0 0.0
    %v6819 = vand.u32 %v6519, 4294901760
    %6820 = vmatpush1.msra.mxu0 %v6819
    %6821 = vmatprep.subr.mxu0 0.0
    %6822 = vmatpush2.msra.mxu0 0.0
    %6823 = vmatprep.subr.mxu0 0.0
    %6824 = vmatpush2.msra.mxu0 0.0
    %6825 = vmatprep.subr.mxu0 0.0
    %6826 = vmatpush2.msra.mxu0 0.0
    %6827 = vmatprep.subr.mxu0 0.0
    %6828 = vmatpush2.msra.mxu0 0.0
    %6829 = vmatprep.subr.mxu0 0.0
    %6830 = vmatpush2.msra.mxu0 0.0
    %6831 = vmatprep.subr.mxu0 0.0
    %6832 = vmatpush2.msra.mxu0 0.0
    %6833 = vmatprep.subr.mxu0 0.0
    %6834 = vmatpush2.msra.mxu0 0.0
    %6835 = vmatprep.subr.mxu0 0.0
    %6836 = vmatpush2.msra.mxu0 0.0
    %6837 = vmatprep.subr.mxu0 0.0
    %6838 = vmatpush2.msra.mxu0 0.0
    %6839 = vmatprep.subr.mxu0 0.0
    %6840 = vmatpush2.msra.mxu0 0.0
    %6841 = vmatprep.subr.mxu0 0.0
    %6842 = vmatpush2.msra.mxu0 0.0
    %6843 = vmatprep.subr.mxu0 0.0
    %6844 = vmatpush2.msra.mxu0 0.0
    %6845 = vmatprep.subr.mxu0 0.0
    %6846 = vmatpush2.msra.mxu0 0.0
    %6847 = vmatprep.subr.mxu0 0.0
    %6848 = vmatpush2.msra.mxu0 0.0
    %6849 = vmatprep.subr.mxu0 0.0
    %6850 = vmatpush2.msra.mxu0 0.0
    %6851 = vmatprep.subr.mxu0 0.0
    %6852 = vmatpush2.msra.mxu0 0.0
    %6853 = vmatprep.mubr.f32.mxu0 0.0
    %v6854 = vand.u32 %v6533, 4294901760
    %v6855 = vsub.f32 %v6533, %v6854
    %v6856 = vand.u32 %v6855, 4294901760
    %6857 = vmatmul.mubr.f32.gmra.mxu0 %v6856
    %v6858 = vpop.f32.mrf.mxu0
    %v6859 = vadd.f32 %v6782, %v6858
    %v6860 = vpop.f32.mrf.mxu0
    %6861 = vdwg.mxu0
    %6862 = vmatprep.subr.mxu0 0.0
    %6863 = vmatpush1.msra.mxu0 0.0
    %6864 = vmatprep.subr.mxu0 0.0
    %6865 = vmatpush1.msra.mxu0 0.0
    %6866 = vmatprep.subr.mxu0 0.0
    %6867 = vmatpush1.msra.mxu0 0.0
    %6868 = vmatprep.subr.mxu0 0.0
    %6869 = vmatpush1.msra.mxu0 0.0
    %6870 = vmatprep.subr.mxu0 0.0
    %6871 = vmatpush1.msra.mxu0 0.0
    %6872 = vmatprep.subr.mxu0 0.0
    %6873 = vmatpush1.msra.mxu0 0.0
    %6874 = vmatprep.subr.mxu0 0.0
    %6875 = vmatpush1.msra.mxu0 0.0
    %6876 = vmatprep.subr.mxu0 0.0
    %6877 = vmatpush1.msra.mxu0 0.0
    %6878 = vmatprep.subr.mxu0 0.0
    %6879 = vmatpush1.msra.mxu0 0.0
    %6880 = vmatprep.subr.mxu0 0.0
    %6881 = vmatpush1.msra.mxu0 0.0
    %6882 = vmatprep.subr.mxu0 0.0
    %6883 = vmatpush1.msra.mxu0 0.0
    %6884 = vmatprep.subr.mxu0 0.0
    %6885 = vmatpush1.msra.mxu0 0.0
    %6886 = vmatprep.subr.mxu0 0.0
    %v6887 = vand.u32 %v6522, 4294901760
    %v6888 = vsub.f32 %v6522, %v6887
    %v6889 = vand.u32 %v6888, 4294901760
    %6890 = vmatpush1.msra.mxu0 %v6889
    %6891 = vmatprep.subr.mxu0 0.0
    %v6892 = vand.u32 %v6521, 4294901760
    %v6893 = vsub.f32 %v6521, %v6892
    %v6894 = vand.u32 %v6893, 4294901760
    %6895 = vmatpush1.msra.mxu0 %v6894
    %6896 = vmatprep.subr.mxu0 0.0
    %v6897 = vand.u32 %v6520, 4294901760
    %v6898 = vsub.f32 %v6520, %v6897
    %v6899 = vand.u32 %v6898, 4294901760
    %6900 = vmatpush1.msra.mxu0 %v6899
    %6901 = vmatprep.subr.mxu0 0.0
    %v6902 = vand.u32 %v6519, 4294901760
    %v6903 = vsub.f32 %v6519, %v6902
    %v6904 = vand.u32 %v6903, 4294901760
    %6905 = vmatpush1.msra.mxu0 %v6904
    %6906 = vmatprep.subr.mxu0 0.0
    %6907 = vmatpush2.msra.mxu0 0.0
    %6908 = vmatprep.subr.mxu0 0.0
    %6909 = vmatpush2.msra.mxu0 0.0
    %6910 = vmatprep.subr.mxu0 0.0
    %6911 = vmatpush2.msra.mxu0 0.0
    %6912 = vmatprep.subr.mxu0 0.0
    %6913 = vmatpush2.msra.mxu0 0.0
    %6914 = vmatprep.subr.mxu0 0.0
    %6915 = vmatpush2.msra.mxu0 0.0
    %6916 = vmatprep.subr.mxu0 0.0
    %6917 = vmatpush2.msra.mxu0 0.0
    %6918 = vmatprep.subr.mxu0 0.0
    %6919 = vmatpush2.msra.mxu0 0.0
    %6920 = vmatprep.subr.mxu0 0.0
    %6921 = vmatpush2.msra.mxu0 0.0
    %6922 = vmatprep.subr.mxu0 0.0
    %6923 = vmatpush2.msra.mxu0 0.0
    %6924 = vmatprep.subr.mxu0 0.0
    %6925 = vmatpush2.msra.mxu0 0.0
    %6926 = vmatprep.subr.mxu0 0.0
    %6927 = vmatpush2.msra.mxu0 0.0
    %6928 = vmatprep.subr.mxu0 0.0
    %6929 = vmatpush2.msra.mxu0 0.0
    %6930 = vmatprep.subr.mxu0 0.0
    %6931 = vmatpush2.msra.mxu0 0.0
    %6932 = vmatprep.subr.mxu0 0.0
    %6933 = vmatpush2.msra.mxu0 0.0
    %6934 = vmatprep.subr.mxu0 0.0
    %6935 = vmatpush2.msra.mxu0 0.0
    %6936 = vmatprep.subr.mxu0 0.0
    %6937 = vmatpush2.msra.mxu0 0.0
    %6938 = vmatprep.mubr.f32.mxu0 0.0
    %v6939 = vand.u32 %v6533, 4294901760
    %6940 = vmatmul.mubr.f32.gmra.mxu0 %v6939
    %v6941 = vpop.f32.mrf.mxu0
    %v6942 = vadd.f32 %v6859, %v6941
    %v6943 = vpop.f32.mrf.mxu0
    %6944 = vdwg.mxu0
    %6945 = vmatprep.subr.mxu0 0.0
    %6946 = vmatpush1.msra.mxu0 0.0
    %6947 = vmatprep.subr.mxu0 0.0
    %6948 = vmatpush1.msra.mxu0 0.0
    %6949 = vmatprep.subr.mxu0 0.0
    %6950 = vmatpush1.msra.mxu0 0.0
    %6951 = vmatprep.subr.mxu0 0.0
    %6952 = vmatpush1.msra.mxu0 0.0
    %6953 = vmatprep.subr.mxu0 0.0
    %6954 = vmatpush1.msra.mxu0 0.0
    %6955 = vmatprep.subr.mxu0 0.0
    %6956 = vmatpush1.msra.mxu0 0.0
    %6957 = vmatprep.subr.mxu0 0.0
    %6958 = vmatpush1.msra.mxu0 0.0
    %6959 = vmatprep.subr.mxu0 0.0
    %6960 = vmatpush1.msra.mxu0 0.0
    %6961 = vmatprep.subr.mxu0 0.0
    %6962 = vmatpush1.msra.mxu0 0.0
    %6963 = vmatprep.subr.mxu0 0.0
    %6964 = vmatpush1.msra.mxu0 0.0
    %6965 = vmatprep.subr.mxu0 0.0
    %6966 = vmatpush1.msra.mxu0 0.0
    %6967 = vmatprep.subr.mxu0 0.0
    %6968 = vmatpush1.msra.mxu0 0.0
    %6969 = vmatprep.subr.mxu0 0.0
    %v6970 = vand.u32 %v6522, 4294901760
    %6971 = vmatpush1.msra.mxu0 %v6970
    %6972 = vmatprep.subr.mxu0 0.0
    %v6973 = vand.u32 %v6521, 4294901760
    %6974 = vmatpush1.msra.mxu0 %v6973
    %6975 = vmatprep.subr.mxu0 0.0
    %v6976 = vand.u32 %v6520, 4294901760
    %6977 = vmatpush1.msra.mxu0 %v6976
    %6978 = vmatprep.subr.mxu0 0.0
    %v6979 = vand.u32 %v6519, 4294901760
    %6980 = vmatpush1.msra.mxu0 %v6979
    %6981 = vmatprep.subr.mxu0 0.0
    %6982 = vmatpush2.msra.mxu0 0.0
    %6983 = vmatprep.subr.mxu0 0.0
    %6984 = vmatpush2.msra.mxu0 0.0
    %6985 = vmatprep.subr.mxu0 0.0
    %6986 = vmatpush2.msra.mxu0 0.0
    %6987 = vmatprep.subr.mxu0 0.0
    %6988 = vmatpush2.msra.mxu0 0.0
    %6989 = vmatprep.subr.mxu0 0.0
    %6990 = vmatpush2.msra.mxu0 0.0
    %6991 = vmatprep.subr.mxu0 0.0
    %6992 = vmatpush2.msra.mxu0 0.0
    %6993 = vmatprep.subr.mxu0 0.0
    %6994 = vmatpush2.msra.mxu0 0.0
    %6995 = vmatprep.subr.mxu0 0.0
    %6996 = vmatpush2.msra.mxu0 0.0
    %6997 = vmatprep.subr.mxu0 0.0
    %6998 = vmatpush2.msra.mxu0 0.0
    %6999 = vmatprep.subr.mxu0 0.0
    %7000 = vmatpush2.msra.mxu0 0.0
    %7001 = vmatprep.subr.mxu0 0.0
    %7002 = vmatpush2.msra.mxu0 0.0
    %7003 = vmatprep.subr.mxu0 0.0
    %7004 = vmatpush2.msra.mxu0 0.0
    %7005 = vmatprep.subr.mxu0 0.0
    %7006 = vmatpush2.msra.mxu0 0.0
    %7007 = vmatprep.subr.mxu0 0.0
    %7008 = vmatpush2.msra.mxu0 0.0
    %7009 = vmatprep.subr.mxu0 0.0
    %7010 = vmatpush2.msra.mxu0 0.0
    %7011 = vmatprep.subr.mxu0 0.0
    %7012 = vmatpush2.msra.mxu0 0.0
    %7013 = vmatprep.mubr.f32.mxu0 0.0
    %v7014 = vand.u32 %v6533, 4294901760
    %7015 = vmatmul.mubr.f32.gmra.mxu0 %v7014
    %v7016 = vpop.f32.mrf.mxu0
    %v7017 = vadd.f32 %v6942, %v7016
    %v7018 = vpop.f32.mrf.mxu0
    %7019 = vdwg.mxu0
    %7020 = vst [vmem:[#allocation5] sm:$0xff] %v7017
    // Predicated region
    $region34: #{tpu_custom_call.1} parent=1 // pred_check
      _
    $region35: #{tpu_custom_call.1} parent=1 // pred_check_branch
      %7022 = sbr.rel (0) target = $region37
    $region36: #{tpu_custom_call.1} parent=1 // pred_region
      %s7024 = ssub.s32 128, 128
      %7025 = vsyncadd [#allocation4], %s7024
      %s7027 = sshll.u32 [#allocation5], 4
      %s7028 = int_to_ptr.vmem [resolvable:$true] %s7027
      %7030 = dma.vmem_to_hbm [thread:$0]  %s7028, 128, %s7, [#allocation4]
    $region37: #{tpu_custom_call.1} parent=1 // pred_fallthru
      _
    // Predicated region
    $region38: #{tpu_custom_call.1} parent=1 // pred_check
      _
    $region39: #{tpu_custom_call.1} parent=1 // pred_check_branch
      %7032 = sbr.rel (0) target = $region41
    $region40: #{tpu_custom_call.1} parent=1 // pred_region
      %7033 = dma.done [#allocation4], 128
    $region41: #{tpu_custom_call.1} parent=1 // pred_fallthru
      _
    %7034 = vsyncpa [#allocation3], 1
    %7035 = vsyncpa [#allocation4], 1

</llo_original>
